<compile_context>
chip_gen: v7x
topology: tpu7x:2x2x1
jax: 0.10.0
libtpu: 0.0.40
codegen_flags: <defaults>
</compile_context>

<pallas_src>
import functools

import jax
import jax.numpy as jnp
from jax.experimental import pallas as pl
from jax.experimental.pallas import tpu as pltpu


def _round_up(x, m):
    return (x + m - 1) // m * m


@functools.lru_cache(maxsize=None)
def _vmem_limit_bytes():
    cap = 128 * 1024 * 1024
    try:
        cap = int(pltpu.get_tpu_info().vmem_capacity_bytes)
    except Exception:
        cap = 128 * 1024 * 1024
    # <= 48 MiB on v7x (64 MiB physical), 64 MiB on v5e/v6e (128 MiB physical).
    return min(64 * 1024 * 1024, (cap * 3) // 4)


# ----------------------------------------------------------------------------
# Layer 1: single lane-dense GEMM over the wrapper-built im2col
# ----------------------------------------------------------------------------
def _l1_kernel(x_ref, w_ref, b_ref, o_ref):
    # x_ref: (1, rblk, 2K) bf16    two spatial positions packed per row
    # w_ref: (2K, 2*Cout) bf16     block-diagonal weights
    # b_ref: (1, 2*Cout)  f32
    # o_ref: (1, rblk, 2*Cout)
    y = jnp.dot(x_ref[0], w_ref[...], preferred_element_type=jnp.float32)
    y = y + b_ref[...]
    y = jnp.where(y > 0, y, 0.2 * y)                      # LeakyReLU(0.2)
    o_ref[0] = y.astype(o_ref.dtype)


def conv_layer_first(x, w, b, *, out_dtype=jnp.bfloat16):
    """First layer: 4x4 stride-2 conv, Cin small, no norm, LeakyReLU."""
    N, H, W, Cin = x.shape
    KH, KW, _, Cout = w.shape
    assert KH == 4 and KW == 4 and H % 2 == 0 and W % 2 == 0
    Ho, Wo = H // 2, W // 2
    K = 16 * Cin

    xp = jnp.pad(x, ((0, 0), (1, 1), (1, 1), (0, 0)))
    # im2col: feature order (kh, kw, ci) to match w.reshape(16*Cin, Cout).
    cols = [xp[:, kh:kh + 2 * Ho:2, kw:kw + 2 * Wo:2, :]
            for kh in range(4) for kw in range(4)]
    patch = jnp.concatenate(cols, axis=-1)                # (N, Ho, Wo, K)

    Lr = Ho * Wo
    assert Lr % 2 == 0
    Lhalf = Lr // 2
    lhs = patch.reshape(N, Lhalf, 2 * K)                  # 2 positions / row

    rblk = min(512, _round_up(Lhalf, 8))                  # row tiling (v7x)
    Lpad = _round_up(Lhalf, rblk)
    if Lpad > Lhalf:
        lhs = jnp.pad(lhs, ((0, 0), (0, Lpad - Lhalf), (0, 0)))
    lhs = lhs.astype(jnp.bfloat16)

    wk = w.reshape(K, Cout).astype(jnp.float32)
    wbd = jnp.zeros((2 * K, 2 * Cout), jnp.float32)
    wbd = wbd.at[:K, :Cout].set(wk).at[K:, Cout:].set(wk).astype(jnp.bfloat16)
    bb = jnp.concatenate([b, b]).reshape(1, 2 * Cout).astype(jnp.float32)

    flops = 2 * N * Lpad * (2 * K) * (2 * Cout)
    bytes_acc = (lhs.size * 2 + wbd.size * 2 + bb.size * 4
                 + N * Lpad * 2 * Cout * jnp.dtype(out_dtype).itemsize)

    out = pl.pallas_call(
        _l1_kernel,
        out_shape=jax.ShapeDtypeStruct((N, Lpad, 2 * Cout), out_dtype),
        grid=(N, Lpad // rblk),
        in_specs=[
            pl.BlockSpec((1, rblk, 2 * K), lambda n, r: (n, r, 0)),
            pl.BlockSpec((2 * K, 2 * Cout), lambda n, r: (0, 0)),
            pl.BlockSpec((1, 2 * Cout), lambda n, r: (0, 0)),
        ],
        out_specs=pl.BlockSpec((1, rblk, 2 * Cout), lambda n, r: (n, r, 0)),
        compiler_params=pltpu.CompilerParams(
            dimension_semantics=("parallel", "parallel"),
            vmem_limit_bytes=_vmem_limit_bytes(),
        ),
        cost_estimate=pl.CostEstimate(
            flops=flops, transcendentals=0, bytes_accessed=bytes_acc),
    )(lhs, wbd, bb)

    # unpack: lanes [0:Cout] = position 2r, lanes [Cout:2Cout] = position 2r+1
    return out[:, :Lhalf, :].reshape(N, Ho, Wo, Cout)


# ----------------------------------------------------------------------------
# Layers 2-5: tap-sum GEMM -> (InstanceNorm) -> (LeakyReLU), per-sample and
# per-Cout-block.
# ----------------------------------------------------------------------------
def _conv_kernel(x_ref, w_ref, b_ref, o_ref, *,
                 ke, wcols, ho, wo, ce, head, use_norm, use_lrelu):
    # x_ref: (1, Lp, Ce)          flattened padded activation (bf16)
    # w_ref: (ke*ke, Ce, cb)      bf16   (or (ke*ke, 1, Ce) when head)
    # b_ref: (1, cb)              f32
    # o_ref: (1, Lrows, cb)       Lrows = ho * wcols (cols >= wo are garbage)
    lrows = ho * wcols

    if head:
        # Cout == 1: per-tap VPU multiply + lane reduction; (lrows,1) accum.
        acc = jnp.zeros((lrows, 1), jnp.float32)
        for t in range(ke * ke):
            di, dj = t // ke, t % ke
            lhs = x_ref[0, pl.ds(di * wcols + dj, lrows), :].astype(jnp.float32)
            acc = acc + jnp.sum(lhs * w_ref[t].astype(jnp.float32),
                                axis=-1, keepdims=True)
        y = acc
    else:
        cb = o_ref.shape[-1]
        acc = jnp.zeros((lrows, cb), jnp.float32)
        for t in range(ke * ke):
            di, dj = t // ke, t % ke
            lhs = x_ref[0, pl.ds(di * wcols + dj, lrows), :]   # (Lrows, Ce) bf16
            acc = acc + jnp.dot(lhs, w_ref[t],
                                preferred_element_type=jnp.float32)
        y = acc

    y = y + b_ref[...]

    if use_norm:
        # In-kernel validity mask (no HBM operand): col = row % wcols < wo.
        col = jax.lax.broadcasted_iota(jnp.int32, (lrows, 1), 0) % wcols
        mask = (col < wo).astype(jnp.float32)
        inv_cnt = 1.0 / float(ho * wo)
        mean = jnp.sum(y * mask, axis=0, keepdims=True) * inv_cnt
        d = (y - mean) * mask
        var = jnp.sum(d * d, axis=0, keepdims=True) * inv_cnt
        y = (y - mean) * jax.lax.rsqrt(var + 1e-5)

    if use_lrelu:
        y = jnp.where(y > 0, y, 0.2 * y)

    o_ref[0] = y.astype(o_ref.dtype)


def conv_layer_general(x, w, b, stride, *, use_norm, use_lrelu,
                       out_dtype=jnp.bfloat16):
    """x: (N,H,W,Cin) NHWC bf16; w: (4,4,Cin,Cout) f32; b: (Cout,) f32."""
    N, H, W, Cin = x.shape
    KH, KW, _, Cout = w.shape
    assert KH == 4 and KW == 4
    xp = jnp.pad(x, ((0, 0), (1, 1), (1, 1), (0, 0)))

    if stride == 2:
        assert H % 2 == 0 and W % 2 == 0
        H2, W2 = (H + 2) // 2, (W + 2) // 2
        # stride-2 4x4 conv == stride-1 2x2 conv over space-to-depth input.
        x2 = xp.reshape(N, H2, 2, W2, 2, Cin).transpose(0, 1, 3, 2, 4, 5)
        x2 = x2.reshape(N, H2, W2, 4 * Cin)
        w2 = w.reshape(2, 2, 2, 2, Cin, Cout).transpose(0, 2, 1, 3, 4, 5)
        w2 = w2.reshape(2, 2, 4 * Cin, Cout)
        ke, ce = 2, 4 * Cin
        Ho, Wo = H // 2, W // 2
    else:
        H2, W2 = H + 2, W + 2
        x2, w2 = xp, w
        ke, ce = 4, Cin
        Ho, Wo = H - 1, W - 1
    assert Ho == H2 - ke + 1 and Wo == W2 - ke + 1

    # Sublane-aligned row pitch: pad width to a multiple of 8 so tap slices
    # for dj == 0 start on tile boundaries.
    wcols = _round_up(W2, 8)
    if wcols > W2:
        x2 = jnp.pad(x2, ((0, 0), (0, 0), (0, wcols - W2), (0, 0)))

    lrows = Ho * wcols                 # full-width rows (incl. wrap columns)
    lp = H2 * wcols + ke               # flattened input + OOB margin

    xf = x2.reshape(N, H2 * wcols, ce)
    xf = jnp.pad(xf, ((0, 0), (0, lp - H2 * wcols), (0, 0))).astype(jnp.bfloat16)

    wf = w2.reshape(ke * ke, ce, Cout)
    head = (Cout == 1)
    if head:
        wf = wf.transpose(0, 2, 1)     # (T, 1, Ce) for the VPU head path
    wf = wf.astype(jnp.bfloat16)
    bf = b.reshape(1, Cout).astype(jnp.float32)

    # Cout blocking (exact for InstanceNorm: per-channel stats).
    cb = 128 if (Cout > 128 and Cout % 128 == 0) else Cout
    ncb = Cout // cb

    kern = functools.partial(
        _conv_kernel, ke=ke, wcols=wcols, ho=Ho, wo=Wo, ce=ce, head=head,
        use_norm=use_norm, use_lrelu=use_lrelu)

    if head:
        w_spec = pl.BlockSpec(wf.shape, lambda n, c: (0, 0, 0))
    else:
        w_spec = pl.BlockSpec((ke * ke, ce, cb), lambda n, c: (0, 0, c))

    flops = 2 * N * lrows * ce * Cout * ke * ke
    bytes_acc = (xf.size * 2 + wf.size * 2 + bf.size * 4
                 + N * lrows * Cout * jnp.dtype(out_dtype).itemsize)

    out = pl.pallas_call(
        kern,
        out_shape=jax.ShapeDtypeStruct((N, lrows, Cout), out_dtype),
        grid=(N, ncb),
        in_specs=[
            pl.BlockSpec((1, lp, ce), lambda n, c: (n, 0, 0)),
            w_spec,
            pl.BlockSpec((1, cb), lambda n, c: (0, c)),
        ],
        out_specs=pl.BlockSpec((1, lrows, cb), lambda n, c: (n, 0, c)),
        compiler_params=pltpu.CompilerParams(
            dimension_semantics=("parallel", "parallel"),
            vmem_limit_bytes=_vmem_limit_bytes(),
        ),
        cost_estimate=pl.CostEstimate(
            flops=flops, transcendentals=0, bytes_accessed=bytes_acc),
    )(xf, wf, bf)

    # Drop wrap/alignment columns and restore NHWC.
    return out.reshape(N, Ho, wcols, Cout)[:, :, :Wo, :]


# ----------------------------------------------------------------------------
# Parameters (Conv weights ~ N(0, 0.02) per _init_weights; biases keep
# PyTorch's default uniform(-1/sqrt(fan_in), 1/sqrt(fan_in)))
# ----------------------------------------------------------------------------
_LAYER_CFG = [
    # (Cin, Cout, stride, instance_norm, leaky_relu)
    (3,   64,  2, False, True),
    (64,  128, 2, True,  True),
    (128, 256, 2, True,  True),
    (256, 512, 1, True,  True),
    (512, 1,   1, False, False),
]


def init_params(key):
    params = []
    for (cin, cout, _, _, _) in _LAYER_CFG:
        key, wk, bk = jax.random.split(key, 3)
        w = 0.02 * jax.random.normal(wk, (4, 4, cin, cout), dtype=jnp.float32)
        bound = 1.0 / float((cin * 16) ** 0.5)
        b = jax.random.uniform(bk, (cout,), jnp.float32, -bound, bound)
        params.append((w, b))
    return params


# ----------------------------------------------------------------------------
# Discriminator forward (NCHW in, NCHW out — like the PyTorch module)
# ----------------------------------------------------------------------------
def discriminator_forward(x_nchw, params):
    x = jnp.transpose(x_nchw, (0, 2, 3, 1)).astype(jnp.bfloat16)   # NCHW->NHWC
    w0, b0 = params[0]
    x = conv_layer_first(x, w0, b0, out_dtype=jnp.bfloat16)
    n_layers = len(_LAYER_CFG)
    for li in range(1, n_layers):
        w, b = params[li]
        _, _, stride, use_norm, use_lrelu = _LAYER_CFG[li]
        last = (li == n_layers - 1)
        x = conv_layer_general(x, w, b, stride,
                               use_norm=use_norm, use_lrelu=use_lrelu,
                               out_dtype=jnp.float32 if last else jnp.bfloat16)
    return jnp.transpose(x, (0, 3, 1, 2))                          # NHWC->NCHW


if __name__ == "__main__":
    key = jax.random.PRNGKey(0)
    pkey, xkey = jax.random.split(key)
    params = init_params(pkey)

    # Five convs with strides 2,2,2,1,1 (k=4, p=1): (2,3,32,32) -> (2,1,2,2).
    x = jax.random.normal(xkey, (2, 3, 32, 32), dtype=jnp.float32)

    fwd = jax.jit(lambda inp: discriminator_forward(inp, params))
    out = fwd(x)
    jax.block_until_ready(out)
    assert out.shape == (2, 1, 2, 2), out.shape
    assert bool(jnp.all(jnp.isfinite(out)))
    print("KERNEL_OK")
</pallas_src>

<mosaic_0001>
module attributes {stable_mosaic.version = 11 : i64} {
  func.func @_l1_kernel(%arg0: i32, %arg1: i32, %arg2: memref<1x128x96xbf16, #tpu.memory_space<vmem>>, %arg3: memref<96x128xbf16, #tpu.memory_space<vmem>>, %arg4: memref<1x128xf32, #tpu.memory_space<vmem>>, %arg5: memref<1x128x128xbf16, #tpu.memory_space<vmem>>) attributes {dimension_semantics = [#tpu.dimension_semantics<parallel>, #tpu.dimension_semantics<parallel>], iteration_bounds = array<i64: 2, 1>, scalar_prefetch = 0 : i64, scratch_operands = 0 : i64, tpu.core_type = #tpu.core_type<tc>, window_params = [{transform_indices = @transform_0, window_bounds = array<i64: 1, 128, 96>}, {pipeline_mode = #tpu.pipeline_mode<synchronous>, transform_indices = @transform_1, window_bounds = array<i64: 96, 128>}, {pipeline_mode = #tpu.pipeline_mode<synchronous>, transform_indices = @transform_2, window_bounds = array<i64: 1, 128>}, {transform_indices = @transform_3, window_bounds = array<i64: 1, 128, 128>}]} {
    %c0 = arith.constant 0 : index
    %c0_0 = arith.constant 0 : index
    %c0_1 = arith.constant 0 : index
    %0 = vector.load %arg2[%c0, %c0_0, %c0_1] : memref<1x128x96xbf16, #tpu.memory_space<vmem>>, vector<1x128x96xbf16>
    %1 = vector.shape_cast %0 : vector<1x128x96xbf16> to vector<128x96xbf16>
    %c0_2 = arith.constant 0 : index
    %c0_3 = arith.constant 0 : index
    %2 = vector.load %arg3[%c0_2, %c0_3] : memref<96x128xbf16, #tpu.memory_space<vmem>>, vector<96x128xbf16>
    %cst = arith.constant dense<0.000000e+00> : vector<128x128xf32>
    %3 = tpu.matmul %1, %2, %cst {dimension_numbers = #tpu.dot_dimension_numbers<[1], [0], [0], [1], [0, 0, 1, 1], [], []>} : vector<128x96xbf16>, vector<96x128xbf16>, vector<128x128xf32> -> vector<128x128xf32>
    %c0_4 = arith.constant 0 : index
    %c0_5 = arith.constant 0 : index
    %4 = vector.load %arg4[%c0_4, %c0_5] : memref<1x128xf32, #tpu.memory_space<vmem>>, vector<1x128xf32>
    %5 = vector.broadcast %4 : vector<1x128xf32> to vector<128x128xf32>
    %6 = arith.addf %3, %5 : vector<128x128xf32>
    %cst_6 = arith.constant 0.000000e+00 : f32
    %7 = vector.broadcast %cst_6 : f32 to vector<128x128xf32>
    %8 = arith.cmpf ogt, %6, %7 : vector<128x128xf32>
    %cst_7 = arith.constant 2.000000e-01 : f32
    %9 = vector.broadcast %cst_7 : f32 to vector<128x128xf32>
    %10 = arith.mulf %9, %6 : vector<128x128xf32>
    %11 = arith.select %8, %6, %10 : vector<128x128xi1>, vector<128x128xf32>
    %12 = arith.truncf %11 : vector<128x128xf32> to vector<128x128xbf16>
    %c0_8 = arith.constant 0 : index
    %c0_9 = arith.constant 0 : index
    %c0_10 = arith.constant 0 : index
    %13 = vector.load %arg5[%c0_8, %c0_9, %c0_10] : memref<1x128x128xbf16, #tpu.memory_space<vmem>>, vector<1x128x128xbf16>
    %14 = vector.shape_cast %13 : vector<1x128x128xbf16> to vector<128x128xbf16>
    %15 = vector.shape_cast %12 : vector<128x128xbf16> to vector<1x128x128xbf16>
    tpu.vector_store %arg5[%c0_8, %c0_9, %c0_10], %15 {strides = array<i32>} : memref<1x128x128xbf16, #tpu.memory_space<vmem>>, vector<1x128x128xbf16>,
    return
  }
  func.func @transform_0(%arg0: i32, %arg1: i32) -> (i32, i32, i32) {
    %c0_i32 = arith.constant 0 : i32
    %c0_i32_0 = arith.constant 0 : i32
    return %arg0, %arg1, %c0_i32 : i32, i32, i32
  }
  func.func @transform_1(%arg0: i32, %arg1: i32) -> (i32, i32) {
    %c0_i32 = arith.constant 0 : i32
    %c0_i32_0 = arith.constant 0 : i32
    %c0_i32_1 = arith.constant 0 : i32
    return %c0_i32, %c0_i32_0 : i32, i32
  }
  func.func @transform_2(%arg0: i32, %arg1: i32) -> (i32, i32) {
    %c0_i32 = arith.constant 0 : i32
    %c0_i32_0 = arith.constant 0 : i32
    %c0_i32_1 = arith.constant 0 : i32
    return %c0_i32, %c0_i32_0 : i32, i32
  }
  func.func @transform_3(%arg0: i32, %arg1: i32) -> (i32, i32, i32) {
    %c0_i32 = arith.constant 0 : i32
    %c0_i32_0 = arith.constant 0 : i32
    return %arg0, %arg1, %c0_i32 : i32, i32, i32
  }
}

module attributes {stable_mosaic.version = 11 : i64} {
  func.func @_conv_kernel(%arg0: i32, %arg1: i32, %arg2: memref<1x146x256xbf16, #tpu.memory_space<vmem>>, %arg3: memref<4x256x128xbf16, #tpu.memory_space<vmem>>, %arg4: memref<1x128xf32, #tpu.memory_space<vmem>>, %arg5: memref<1x128x128xbf16, #tpu.memory_space<vmem>>) attributes {dimension_semantics = [#tpu.dimension_semantics<parallel>, #tpu.dimension_semantics<parallel>], iteration_bounds = array<i64: 2, 1>, scalar_prefetch = 0 : i64, scratch_operands = 0 : i64, tpu.core_type = #tpu.core_type<tc>, window_params = [{transform_indices = @transform_0, window_bounds = array<i64: 1, 146, 256>}, {transform_indices = @transform_1, window_bounds = array<i64: 4, 256, 128>}, {transform_indices = @transform_2, window_bounds = array<i64: 1, 128>}, {transform_indices = @transform_3, window_bounds = array<i64: 1, 128, 128>}]} {
    %cst = arith.constant 0.000000e+00 : f32
    %0 = vector.broadcast %cst : f32 to vector<128x128xf32>
    %c0 = arith.constant 0 : index
    %c0_0 = arith.constant 0 : index
    %c0_1 = arith.constant 0 : index
    %1 = vector.load %arg2[%c0, %c0_0, %c0_1] : memref<1x146x256xbf16, #tpu.memory_space<vmem>>, vector<1x128x256xbf16>
    %2 = vector.shape_cast %1 : vector<1x128x256xbf16> to vector<128x256xbf16>
    %c0_2 = arith.constant 0 : index
    %c0_3 = arith.constant 0 : index
    %c0_4 = arith.constant 0 : index
    %3 = vector.load %arg3[%c0_2, %c0_3, %c0_4] : memref<4x256x128xbf16, #tpu.memory_space<vmem>>, vector<1x256x128xbf16>
    %4 = vector.shape_cast %3 : vector<1x256x128xbf16> to vector<256x128xbf16>
    %cst_5 = arith.constant dense<0.000000e+00> : vector<128x128xf32>
    %5 = tpu.matmul %2, %4, %cst_5 {dimension_numbers = #tpu.dot_dimension_numbers<[1], [0], [0], [1], [0, 0, 1, 1], [], []>} : vector<128x256xbf16>, vector<256x128xbf16>, vector<128x128xf32> -> vector<128x128xf32>
    %6 = arith.addf %0, %5 : vector<128x128xf32>
    %c0_6 = arith.constant 0 : index
    %c1 = arith.constant 1 : index
    %c0_7 = arith.constant 0 : index
    %7 = vector.load %arg2[%c0_6, %c1, %c0_7] : memref<1x146x256xbf16, #tpu.memory_space<vmem>>, vector<1x128x256xbf16>
    %8 = vector.shape_cast %7 : vector<1x128x256xbf16> to vector<128x256xbf16>
    %c1_8 = arith.constant 1 : index
    %c0_9 = arith.constant 0 : index
    %c0_10 = arith.constant 0 : index
    %9 = vector.load %arg3[%c1_8, %c0_9, %c0_10] : memref<4x256x128xbf16, #tpu.memory_space<vmem>>, vector<1x256x128xbf16>
    %10 = vector.shape_cast %9 : vector<1x256x128xbf16> to vector<256x128xbf16>
    %cst_11 = arith.constant dense<0.000000e+00> : vector<128x128xf32>
    %11 = tpu.matmul %8, %10, %cst_11 {dimension_numbers = #tpu.dot_dimension_numbers<[1], [0], [0], [1], [0, 0, 1, 1], [], []>} : vector<128x256xbf16>, vector<256x128xbf16>, vector<128x128xf32> -> vector<128x128xf32>
    %12 = arith.addf %6, %11 : vector<128x128xf32>
    %c0_12 = arith.constant 0 : index
    %c16 = arith.constant 16 : index
    %c0_13 = arith.constant 0 : index
    %13 = vector.load %arg2[%c0_12, %c16, %c0_13] : memref<1x146x256xbf16, #tpu.memory_space<vmem>>, vector<1x128x256xbf16>
    %14 = vector.shape_cast %13 : vector<1x128x256xbf16> to vector<128x256xbf16>
    %c2 = arith.constant 2 : index
    %c0_14 = arith.constant 0 : index
    %c0_15 = arith.constant 0 : index
    %15 = vector.load %arg3[%c2, %c0_14, %c0_15] : memref<4x256x128xbf16, #tpu.memory_space<vmem>>, vector<1x256x128xbf16>
    %16 = vector.shape_cast %15 : vector<1x256x128xbf16> to vector<256x128xbf16>
    %cst_16 = arith.constant dense<0.000000e+00> : vector<128x128xf32>
    %17 = tpu.matmul %14, %16, %cst_16 {dimension_numbers = #tpu.dot_dimension_numbers<[1], [0], [0], [1], [0, 0, 1, 1], [], []>} : vector<128x256xbf16>, vector<256x128xbf16>, vector<128x128xf32> -> vector<128x128xf32>
    %18 = arith.addf %12, %17 : vector<128x128xf32>
    %c0_17 = arith.constant 0 : index
    %c17 = arith.constant 17 : index
    %c0_18 = arith.constant 0 : index
    %19 = vector.load %arg2[%c0_17, %c17, %c0_18] : memref<1x146x256xbf16, #tpu.memory_space<vmem>>, vector<1x128x256xbf16>
    %20 = vector.shape_cast %19 : vector<1x128x256xbf16> to vector<128x256xbf16>
    %c3 = arith.constant 3 : index
    %c0_19 = arith.constant 0 : index
    %c0_20 = arith.constant 0 : index
    %21 = vector.load %arg3[%c3, %c0_19, %c0_20] : memref<4x256x128xbf16, #tpu.memory_space<vmem>>, vector<1x256x128xbf16>
    %22 = vector.shape_cast %21 : vector<1x256x128xbf16> to vector<256x128xbf16>
    %cst_21 = arith.constant dense<0.000000e+00> : vector<128x128xf32>
    %23 = tpu.matmul %20, %22, %cst_21 {dimension_numbers = #tpu.dot_dimension_numbers<[1], [0], [0], [1], [0, 0, 1, 1], [], []>} : vector<128x256xbf16>, vector<256x128xbf16>, vector<128x128xf32> -> vector<128x128xf32>
    %24 = arith.addf %18, %23 : vector<128x128xf32>
    %c0_22 = arith.constant 0 : index
    %c0_23 = arith.constant 0 : index
    %25 = vector.load %arg4[%c0_22, %c0_23] : memref<1x128xf32, #tpu.memory_space<vmem>>, vector<1x128xf32>
    %26 = vector.broadcast %25 : vector<1x128xf32> to vector<128x128xf32>
    %27 = arith.addf %24, %26 : vector<128x128xf32>
    %28 = tpu.iota {dimensions = array<i32: 0>} : vector<128x1xi32>
    %c16_i32 = arith.constant 16 : i32
    %c0_i32 = arith.constant 0 : i32
    %29 = arith.cmpi eq, %c16_i32, %c0_i32 : i32
    %c1_i32 = arith.constant 1 : i32
    %30 = arith.select %29, %c1_i32, %c16_i32 : i32
    %31 = vector.broadcast %30 : i32 to vector<128x1xi32>
    %32 = arith.remsi %28, %31 : vector<128x1xi32>
    %c0_i32_24 = arith.constant 0 : i32
    %33 = vector.broadcast %c0_i32_24 : i32 to vector<128x1xi32>
    %34 = arith.cmpi ne, %32, %33 : vector<128x1xi32>
    %c0_i32_25 = arith.constant 0 : i32
    %35 = vector.broadcast %c0_i32_25 : i32 to vector<128x1xi32>
    %36 = arith.cmpi slt, %32, %35 : vector<128x1xi32>
    %c0_i32_26 = arith.constant 0 : i32
    %37 = arith.cmpi slt, %30, %c0_i32_26 : i32
    %38 = vector.broadcast %37 : i1 to vector<128x1xi1>
    %39 = vector.broadcast %38 : vector<128x1xi1> to vector<128x1xi1>
    %40 = arith.xori %36, %39 : vector<128x1xi1>
    %41 = arith.andi %40, %34 : vector<128x1xi1>
    %42 = vector.broadcast %30 : i32 to vector<128x1xi32>
    %43 = arith.addi %32, %42 : vector<128x1xi32>
    %44 = arith.select %41, %43, %32 : vector<128x1xi1>, vector<128x1xi32>
    %c8_i32 = arith.constant 8 : i32
    %45 = vector.broadcast %c8_i32 : i32 to vector<128x1xi32>
    %46 = arith.cmpi slt, %44, %45 : vector<128x1xi32>
    %47 = arith.extui %46 : vector<128x1xi1> to vector<128x1xi32>
    %48 = arith.sitofp %47 : vector<128x1xi32> to vector<128x1xf32>
    %49 = vector.broadcast %48 : vector<128x1xf32> to vector<128x128xf32>
    %50 = arith.mulf %27, %49 : vector<128x128xf32>
    %cst_27 = arith.constant dense<0.000000e+00> : vector<128xf32>
    %51 = vector.multi_reduction <add>, %50, %cst_27 [0] : vector<128x128xf32> to vector<128xf32>
    %52 = vector.shape_cast %51 : vector<128xf32> to vector<1x128xf32>
    %cst_28 = arith.constant 1.562500e-02 : f32
    %53 = vector.broadcast %cst_28 : f32 to vector<1x128xf32>
    %54 = arith.mulf %52, %53 : vector<1x128xf32>
    %55 = vector.broadcast %54 : vector<1x128xf32> to vector<128x128xf32>
    %56 = arith.subf %27, %55 : vector<128x128xf32>
    %57 = vector.broadcast %48 : vector<128x1xf32> to vector<128x128xf32>
    %58 = arith.mulf %56, %57 : vector<128x128xf32>
    %59 = arith.mulf %58, %58 : vector<128x128xf32>
    %cst_29 = arith.constant dense<0.000000e+00> : vector<128xf32>
    %60 = vector.multi_reduction <add>, %59, %cst_29 [0] : vector<128x128xf32> to vector<128xf32>
    %61 = vector.shape_cast %60 : vector<128xf32> to vector<1x128xf32>
    %cst_30 = arith.constant 1.562500e-02 : f32
    %62 = vector.broadcast %cst_30 : f32 to vector<1x128xf32>
    %63 = arith.mulf %61, %62 : vector<1x128xf32>
    %64 = vector.broadcast %54 : vector<1x128xf32> to vector<128x128xf32>
    %65 = arith.subf %27, %64 : vector<128x128xf32>
    %cst_31 = arith.constant 9.99999974E-6 : f32
    %66 = vector.broadcast %cst_31 : f32 to vector<1x128xf32>
    %67 = arith.addf %63, %66 : vector<1x128xf32>
    %68 = math.rsqrt %67 : vector<1x128xf32>
    %69 = vector.broadcast %68 : vector<1x128xf32> to vector<128x128xf32>
    %70 = arith.mulf %65, %69 : vector<128x128xf32>
    %cst_32 = arith.constant 0.000000e+00 : f32
    %71 = vector.broadcast %cst_32 : f32 to vector<128x128xf32>
    %72 = arith.cmpf ogt, %70, %71 : vector<128x128xf32>
    %cst_33 = arith.constant 2.000000e-01 : f32
    %73 = vector.broadcast %cst_33 : f32 to vector<128x128xf32>
    %74 = arith.mulf %73, %70 : vector<128x128xf32>
    %75 = arith.select %72, %70, %74 : vector<128x128xi1>, vector<128x128xf32>
    %76 = arith.truncf %75 : vector<128x128xf32> to vector<128x128xbf16>
    %c0_34 = arith.constant 0 : index
    %c0_35 = arith.constant 0 : index
    %c0_36 = arith.constant 0 : index
    %77 = vector.load %arg5[%c0_34, %c0_35, %c0_36] : memref<1x128x128xbf16, #tpu.memory_space<vmem>>, vector<1x128x128xbf16>
    %78 = vector.shape_cast %77 : vector<1x128x128xbf16> to vector<128x128xbf16>
    %79 = vector.shape_cast %76 : vector<128x128xbf16> to vector<1x128x128xbf16>
    tpu.vector_store %arg5[%c0_34, %c0_35, %c0_36], %79 {strides = array<i32>} : memref<1x128x128xbf16, #tpu.memory_space<vmem>>, vector<1x128x128xbf16>,
    return
  }
  func.func @transform_0(%arg0: i32, %arg1: i32) -> (i32, i32, i32) {
    %c0_i32 = arith.constant 0 : i32
    %c0_i32_0 = arith.constant 0 : i32
    %c0_i32_1 = arith.constant 0 : i32
    return %arg0, %c0_i32, %c0_i32_0 : i32, i32, i32
  }
  func.func @transform_1(%arg0: i32, %arg1: i32) -> (i32, i32, i32) {
    %c0_i32 = arith.constant 0 : i32
    %c0_i32_0 = arith.constant 0 : i32
    %c0_i32_1 = arith.constant 0 : i32
    return %c0_i32, %c0_i32_0, %arg1 : i32, i32, i32
  }
  func.func @transform_2(%arg0: i32, %arg1: i32) -> (i32, i32) {
    %c0_i32 = arith.constant 0 : i32
    %c0_i32_0 = arith.constant 0 : i32
    return %c0_i32, %arg1 : i32, i32
  }
  func.func @transform_3(%arg0: i32, %arg1: i32) -> (i32, i32, i32) {
    %c0_i32 = arith.constant 0 : i32
    %c0_i32_0 = arith.constant 0 : i32
    return %arg0, %c0_i32, %arg1 : i32, i32, i32
  }
}

module attributes {stable_mosaic.version = 11 : i64} {
  func.func @_conv_kernel(%arg0: i32, %arg1: i32, %arg2: memref<1x42x512xbf16, #tpu.memory_space<vmem>>, %arg3: memref<4x512x128xbf16, #tpu.memory_space<vmem>>, %arg4: memref<1x128xf32, #tpu.memory_space<vmem>>, %arg5: memref<1x32x128xbf16, #tpu.memory_space<vmem>>) attributes {dimension_semantics = [#tpu.dimension_semantics<parallel>, #tpu.dimension_semantics<parallel>], iteration_bounds = array<i64: 2, 2>, scalar_prefetch = 0 : i64, scratch_operands = 0 : i64, tpu.core_type = #tpu.core_type<tc>, window_params = [{transform_indices = @transform_0, window_bounds = array<i64: 1, 42, 512>}, {transform_indices = @transform_1, window_bounds = array<i64: 4, 512, 128>}, {transform_indices = @transform_2, window_bounds = array<i64: 1, 128>}, {transform_indices = @transform_3, window_bounds = array<i64: 1, 32, 128>}]} {
    %cst = arith.constant 0.000000e+00 : f32
    %0 = vector.broadcast %cst : f32 to vector<32x128xf32>
    %c0 = arith.constant 0 : index
    %c0_0 = arith.constant 0 : index
    %c0_1 = arith.constant 0 : index
    %1 = vector.load %arg2[%c0, %c0_0, %c0_1] : memref<1x42x512xbf16, #tpu.memory_space<vmem>>, vector<1x32x512xbf16>
    %2 = vector.shape_cast %1 : vector<1x32x512xbf16> to vector<32x512xbf16>
    %c0_2 = arith.constant 0 : index
    %c0_3 = arith.constant 0 : index
    %c0_4 = arith.constant 0 : index
    %3 = vector.load %arg3[%c0_2, %c0_3, %c0_4] : memref<4x512x128xbf16, #tpu.memory_space<vmem>>, vector<1x512x128xbf16>
    %4 = vector.shape_cast %3 : vector<1x512x128xbf16> to vector<512x128xbf16>
    %cst_5 = arith.constant dense<0.000000e+00> : vector<32x128xf32>
    %5 = tpu.matmul %2, %4, %cst_5 {dimension_numbers = #tpu.dot_dimension_numbers<[1], [0], [0], [1], [0, 0, 1, 1], [], []>} : vector<32x512xbf16>, vector<512x128xbf16>, vector<32x128xf32> -> vector<32x128xf32>
    %6 = arith.addf %0, %5 : vector<32x128xf32>
    %c0_6 = arith.constant 0 : index
    %c1 = arith.constant 1 : index
    %c0_7 = arith.constant 0 : index
    %7 = vector.load %arg2[%c0_6, %c1, %c0_7] : memref<1x42x512xbf16, #tpu.memory_space<vmem>>, vector<1x32x512xbf16>
    %8 = vector.shape_cast %7 : vector<1x32x512xbf16> to vector<32x512xbf16>
    %c1_8 = arith.constant 1 : index
    %c0_9 = arith.constant 0 : index
    %c0_10 = arith.constant 0 : index
    %9 = vector.load %arg3[%c1_8, %c0_9, %c0_10] : memref<4x512x128xbf16, #tpu.memory_space<vmem>>, vector<1x512x128xbf16>
    %10 = vector.shape_cast %9 : vector<1x512x128xbf16> to vector<512x128xbf16>
    %cst_11 = arith.constant dense<0.000000e+00> : vector<32x128xf32>
    %11 = tpu.matmul %8, %10, %cst_11 {dimension_numbers = #tpu.dot_dimension_numbers<[1], [0], [0], [1], [0, 0, 1, 1], [], []>} : vector<32x512xbf16>, vector<512x128xbf16>, vector<32x128xf32> -> vector<32x128xf32>
    %12 = arith.addf %6, %11 : vector<32x128xf32>
    %c0_12 = arith.constant 0 : index
    %c8 = arith.constant 8 : index
    %c0_13 = arith.constant 0 : index
    %13 = vector.load %arg2[%c0_12, %c8, %c0_13] : memref<1x42x512xbf16, #tpu.memory_space<vmem>>, vector<1x32x512xbf16>
    %14 = vector.shape_cast %13 : vector<1x32x512xbf16> to vector<32x512xbf16>
    %c2 = arith.constant 2 : index
    %c0_14 = arith.constant 0 : index
    %c0_15 = arith.constant 0 : index
    %15 = vector.load %arg3[%c2, %c0_14, %c0_15] : memref<4x512x128xbf16, #tpu.memory_space<vmem>>, vector<1x512x128xbf16>
    %16 = vector.shape_cast %15 : vector<1x512x128xbf16> to vector<512x128xbf16>
    %cst_16 = arith.constant dense<0.000000e+00> : vector<32x128xf32>
    %17 = tpu.matmul %14, %16, %cst_16 {dimension_numbers = #tpu.dot_dimension_numbers<[1], [0], [0], [1], [0, 0, 1, 1], [], []>} : vector<32x512xbf16>, vector<512x128xbf16>, vector<32x128xf32> -> vector<32x128xf32>
    %18 = arith.addf %12, %17 : vector<32x128xf32>
    %c0_17 = arith.constant 0 : index
    %c9 = arith.constant 9 : index
    %c0_18 = arith.constant 0 : index
    %19 = vector.load %arg2[%c0_17, %c9, %c0_18] : memref<1x42x512xbf16, #tpu.memory_space<vmem>>, vector<1x32x512xbf16>
    %20 = vector.shape_cast %19 : vector<1x32x512xbf16> to vector<32x512xbf16>
    %c3 = arith.constant 3 : index
    %c0_19 = arith.constant 0 : index
    %c0_20 = arith.constant 0 : index
    %21 = vector.load %arg3[%c3, %c0_19, %c0_20] : memref<4x512x128xbf16, #tpu.memory_space<vmem>>, vector<1x512x128xbf16>
    %22 = vector.shape_cast %21 : vector<1x512x128xbf16> to vector<512x128xbf16>
    %cst_21 = arith.constant dense<0.000000e+00> : vector<32x128xf32>
    %23 = tpu.matmul %20, %22, %cst_21 {dimension_numbers = #tpu.dot_dimension_numbers<[1], [0], [0], [1], [0, 0, 1, 1], [], []>} : vector<32x512xbf16>, vector<512x128xbf16>, vector<32x128xf32> -> vector<32x128xf32>
    %24 = arith.addf %18, %23 : vector<32x128xf32>
    %c0_22 = arith.constant 0 : index
    %c0_23 = arith.constant 0 : index
    %25 = vector.load %arg4[%c0_22, %c0_23] : memref<1x128xf32, #tpu.memory_space<vmem>>, vector<1x128xf32>
    %26 = vector.broadcast %25 : vector<1x128xf32> to vector<32x128xf32>
    %27 = arith.addf %24, %26 : vector<32x128xf32>
    %28 = tpu.iota {dimensions = array<i32: 0>} : vector<32x1xi32>
    %c8_i32 = arith.constant 8 : i32
    %c0_i32 = arith.constant 0 : i32
    %29 = arith.cmpi eq, %c8_i32, %c0_i32 : i32
    %c1_i32 = arith.constant 1 : i32
    %30 = arith.select %29, %c1_i32, %c8_i32 : i32
    %31 = vector.broadcast %30 : i32 to vector<32x1xi32>
    %32 = arith.remsi %28, %31 : vector<32x1xi32>
    %c0_i32_24 = arith.constant 0 : i32
    %33 = vector.broadcast %c0_i32_24 : i32 to vector<32x1xi32>
    %34 = arith.cmpi ne, %32, %33 : vector<32x1xi32>
    %c0_i32_25 = arith.constant 0 : i32
    %35 = vector.broadcast %c0_i32_25 : i32 to vector<32x1xi32>
    %36 = arith.cmpi slt, %32, %35 : vector<32x1xi32>
    %c0_i32_26 = arith.constant 0 : i32
    %37 = arith.cmpi slt, %30, %c0_i32_26 : i32
    %38 = vector.broadcast %37 : i1 to vector<32x1xi1>
    %39 = vector.broadcast %38 : vector<32x1xi1> to vector<32x1xi1>
    %40 = arith.xori %36, %39 : vector<32x1xi1>
    %41 = arith.andi %40, %34 : vector<32x1xi1>
    %42 = vector.broadcast %30 : i32 to vector<32x1xi32>
    %43 = arith.addi %32, %42 : vector<32x1xi32>
    %44 = arith.select %41, %43, %32 : vector<32x1xi1>, vector<32x1xi32>
    %c4_i32 = arith.constant 4 : i32
    %45 = vector.broadcast %c4_i32 : i32 to vector<32x1xi32>
    %46 = arith.cmpi slt, %44, %45 : vector<32x1xi32>
    %47 = arith.extui %46 : vector<32x1xi1> to vector<32x1xi32>
    %48 = arith.sitofp %47 : vector<32x1xi32> to vector<32x1xf32>
    %49 = vector.broadcast %48 : vector<32x1xf32> to vector<32x128xf32>
    %50 = arith.mulf %27, %49 : vector<32x128xf32>
    %cst_27 = arith.constant dense<0.000000e+00> : vector<128xf32>
    %51 = vector.multi_reduction <add>, %50, %cst_27 [0] : vector<32x128xf32> to vector<128xf32>
    %52 = vector.shape_cast %51 : vector<128xf32> to vector<1x128xf32>
    %cst_28 = arith.constant 6.250000e-02 : f32
    %53 = vector.broadcast %cst_28 : f32 to vector<1x128xf32>
    %54 = arith.mulf %52, %53 : vector<1x128xf32>
    %55 = vector.broadcast %54 : vector<1x128xf32> to vector<32x128xf32>
    %56 = arith.subf %27, %55 : vector<32x128xf32>
    %57 = vector.broadcast %48 : vector<32x1xf32> to vector<32x128xf32>
    %58 = arith.mulf %56, %57 : vector<32x128xf32>
    %59 = arith.mulf %58, %58 : vector<32x128xf32>
    %cst_29 = arith.constant dense<0.000000e+00> : vector<128xf32>
    %60 = vector.multi_reduction <add>, %59, %cst_29 [0] : vector<32x128xf32> to vector<128xf32>
    %61 = vector.shape_cast %60 : vector<128xf32> to vector<1x128xf32>
    %cst_30 = arith.constant 6.250000e-02 : f32
    %62 = vector.broadcast %cst_30 : f32 to vector<1x128xf32>
    %63 = arith.mulf %61, %62 : vector<1x128xf32>
    %64 = vector.broadcast %54 : vector<1x128xf32> to vector<32x128xf32>
    %65 = arith.subf %27, %64 : vector<32x128xf32>
    %cst_31 = arith.constant 9.99999974E-6 : f32
    %66 = vector.broadcast %cst_31 : f32 to vector<1x128xf32>
    %67 = arith.addf %63, %66 : vector<1x128xf32>
    %68 = math.rsqrt %67 : vector<1x128xf32>
    %69 = vector.broadcast %68 : vector<1x128xf32> to vector<32x128xf32>
    %70 = arith.mulf %65, %69 : vector<32x128xf32>
    %cst_32 = arith.constant 0.000000e+00 : f32
    %71 = vector.broadcast %cst_32 : f32 to vector<32x128xf32>
    %72 = arith.cmpf ogt, %70, %71 : vector<32x128xf32>
    %cst_33 = arith.constant 2.000000e-01 : f32
    %73 = vector.broadcast %cst_33 : f32 to vector<32x128xf32>
    %74 = arith.mulf %73, %70 : vector<32x128xf32>
    %75 = arith.select %72, %70, %74 : vector<32x128xi1>, vector<32x128xf32>
    %76 = arith.truncf %75 : vector<32x128xf32> to vector<32x128xbf16>
    %c0_34 = arith.constant 0 : index
    %c0_35 = arith.constant 0 : index
    %c0_36 = arith.constant 0 : index
    %77 = vector.load %arg5[%c0_34, %c0_35, %c0_36] : memref<1x32x128xbf16, #tpu.memory_space<vmem>>, vector<1x32x128xbf16>
    %78 = vector.shape_cast %77 : vector<1x32x128xbf16> to vector<32x128xbf16>
    %79 = vector.shape_cast %76 : vector<32x128xbf16> to vector<1x32x128xbf16>
    tpu.vector_store %arg5[%c0_34, %c0_35, %c0_36], %79 {strides = array<i32>} : memref<1x32x128xbf16, #tpu.memory_space<vmem>>, vector<1x32x128xbf16>,
    return
  }
  func.func @transform_0(%arg0: i32, %arg1: i32) -> (i32, i32, i32) {
    %c0_i32 = arith.constant 0 : i32
    %c0_i32_0 = arith.constant 0 : i32
    %c0_i32_1 = arith.constant 0 : i32
    return %arg0, %c0_i32, %c0_i32_0 : i32, i32, i32
  }
  func.func @transform_1(%arg0: i32, %arg1: i32) -> (i32, i32, i32) {
    %c0_i32 = arith.constant 0 : i32
    %c0_i32_0 = arith.constant 0 : i32
    %c0_i32_1 = arith.constant 0 : i32
    return %c0_i32, %c0_i32_0, %arg1 : i32, i32, i32
  }
  func.func @transform_2(%arg0: i32, %arg1: i32) -> (i32, i32) {
    %c0_i32 = arith.constant 0 : i32
    %c0_i32_0 = arith.constant 0 : i32
    return %c0_i32, %arg1 : i32, i32
  }
  func.func @transform_3(%arg0: i32, %arg1: i32) -> (i32, i32, i32) {
    %c0_i32 = arith.constant 0 : i32
    %c0_i32_0 = arith.constant 0 : i32
    return %arg0, %c0_i32, %arg1 : i32, i32, i32
  }
}

module attributes {stable_mosaic.version = 11 : i64} {
  func.func @_conv_kernel(%arg0: i32, %arg1: i32, %arg2: memref<1x52x256xbf16, #tpu.memory_space<vmem>>, %arg3: memref<16x256x128xbf16, #tpu.memory_space<vmem>>, %arg4: memref<1x128xf32, #tpu.memory_space<vmem>>, %arg5: memref<1x24x128xbf16, #tpu.memory_space<vmem>>) attributes {dimension_semantics = [#tpu.dimension_semantics<parallel>, #tpu.dimension_semantics<parallel>], iteration_bounds = array<i64: 2, 4>, scalar_prefetch = 0 : i64, scratch_operands = 0 : i64, tpu.core_type = #tpu.core_type<tc>, window_params = [{transform_indices = @transform_0, window_bounds = array<i64: 1, 52, 256>}, {transform_indices = @transform_1, window_bounds = array<i64: 16, 256, 128>}, {transform_indices = @transform_2, window_bounds = array<i64: 1, 128>}, {transform_indices = @transform_3, window_bounds = array<i64: 1, 24, 128>}]} {
    %cst = arith.constant 0.000000e+00 : f32
    %0 = vector.broadcast %cst : f32 to vector<24x128xf32>
    %c0 = arith.constant 0 : index
    %c0_0 = arith.constant 0 : index
    %c0_1 = arith.constant 0 : index
    %1 = vector.load %arg2[%c0, %c0_0, %c0_1] : memref<1x52x256xbf16, #tpu.memory_space<vmem>>, vector<1x24x256xbf16>
    %2 = vector.shape_cast %1 : vector<1x24x256xbf16> to vector<24x256xbf16>
    %c0_2 = arith.constant 0 : index
    %c0_3 = arith.constant 0 : index
    %c0_4 = arith.constant 0 : index
    %3 = vector.load %arg3[%c0_2, %c0_3, %c0_4] : memref<16x256x128xbf16, #tpu.memory_space<vmem>>, vector<1x256x128xbf16>
    %4 = vector.shape_cast %3 : vector<1x256x128xbf16> to vector<256x128xbf16>
    %cst_5 = arith.constant dense<0.000000e+00> : vector<24x128xf32>
    %5 = tpu.matmul %2, %4, %cst_5 {dimension_numbers = #tpu.dot_dimension_numbers<[1], [0], [0], [1], [0, 0, 1, 1], [], []>} : vector<24x256xbf16>, vector<256x128xbf16>, vector<24x128xf32> -> vector<24x128xf32>
    %6 = arith.addf %0, %5 : vector<24x128xf32>
    %c0_6 = arith.constant 0 : index
    %c1 = arith.constant 1 : index
    %c0_7 = arith.constant 0 : index
    %7 = vector.load %arg2[%c0_6, %c1, %c0_7] : memref<1x52x256xbf16, #tpu.memory_space<vmem>>, vector<1x24x256xbf16>
    %8 = vector.shape_cast %7 : vector<1x24x256xbf16> to vector<24x256xbf16>
    %c1_8 = arith.constant 1 : index
    %c0_9 = arith.constant 0 : index
    %c0_10 = arith.constant 0 : index
    %9 = vector.load %arg3[%c1_8, %c0_9, %c0_10] : memref<16x256x128xbf16, #tpu.memory_space<vmem>>, vector<1x256x128xbf16>
    %10 = vector.shape_cast %9 : vector<1x256x128xbf16> to vector<256x128xbf16>
    %cst_11 = arith.constant dense<0.000000e+00> : vector<24x128xf32>
    %11 = tpu.matmul %8, %10, %cst_11 {dimension_numbers = #tpu.dot_dimension_numbers<[1], [0], [0], [1], [0, 0, 1, 1], [], []>} : vector<24x256xbf16>, vector<256x128xbf16>, vector<24x128xf32> -> vector<24x128xf32>
    %12 = arith.addf %6, %11 : vector<24x128xf32>
    %c0_12 = arith.constant 0 : index
    %c2 = arith.constant 2 : index
    %c0_13 = arith.constant 0 : index
    %13 = vector.load %arg2[%c0_12, %c2, %c0_13] : memref<1x52x256xbf16, #tpu.memory_space<vmem>>, vector<1x24x256xbf16>
    %14 = vector.shape_cast %13 : vector<1x24x256xbf16> to vector<24x256xbf16>
    %c2_14 = arith.constant 2 : index
    %c0_15 = arith.constant 0 : index
    %c0_16 = arith.constant 0 : index
    %15 = vector.load %arg3[%c2_14, %c0_15, %c0_16] : memref<16x256x128xbf16, #tpu.memory_space<vmem>>, vector<1x256x128xbf16>
    %16 = vector.shape_cast %15 : vector<1x256x128xbf16> to vector<256x128xbf16>
    %cst_17 = arith.constant dense<0.000000e+00> : vector<24x128xf32>
    %17 = tpu.matmul %14, %16, %cst_17 {dimension_numbers = #tpu.dot_dimension_numbers<[1], [0], [0], [1], [0, 0, 1, 1], [], []>} : vector<24x256xbf16>, vector<256x128xbf16>, vector<24x128xf32> -> vector<24x128xf32>
    %18 = arith.addf %12, %17 : vector<24x128xf32>
    %c0_18 = arith.constant 0 : index
    %c3 = arith.constant 3 : index
    %c0_19 = arith.constant 0 : index
    %19 = vector.load %arg2[%c0_18, %c3, %c0_19] : memref<1x52x256xbf16, #tpu.memory_space<vmem>>, vector<1x24x256xbf16>
    %20 = vector.shape_cast %19 : vector<1x24x256xbf16> to vector<24x256xbf16>
    %c3_20 = arith.constant 3 : index
    %c0_21 = arith.constant 0 : index
    %c0_22 = arith.constant 0 : index
    %21 = vector.load %arg3[%c3_20, %c0_21, %c0_22] : memref<16x256x128xbf16, #tpu.memory_space<vmem>>, vector<1x256x128xbf16>
    %22 = vector.shape_cast %21 : vector<1x256x128xbf16> to vector<256x128xbf16>
    %cst_23 = arith.constant dense<0.000000e+00> : vector<24x128xf32>
    %23 = tpu.matmul %20, %22, %cst_23 {dimension_numbers = #tpu.dot_dimension_numbers<[1], [0], [0], [1], [0, 0, 1, 1], [], []>} : vector<24x256xbf16>, vector<256x128xbf16>, vector<24x128xf32> -> vector<24x128xf32>
    %24 = arith.addf %18, %23 : vector<24x128xf32>
    %c0_24 = arith.constant 0 : index
    %c8 = arith.constant 8 : index
    %c0_25 = arith.constant 0 : index
    %25 = vector.load %arg2[%c0_24, %c8, %c0_25] : memref<1x52x256xbf16, #tpu.memory_space<vmem>>, vector<1x24x256xbf16>
    %26 = vector.shape_cast %25 : vector<1x24x256xbf16> to vector<24x256xbf16>
    %c4 = arith.constant 4 : index
    %c0_26 = arith.constant 0 : index
    %c0_27 = arith.constant 0 : index
    %27 = vector.load %arg3[%c4, %c0_26, %c0_27] : memref<16x256x128xbf16, #tpu.memory_space<vmem>>, vector<1x256x128xbf16>
    %28 = vector.shape_cast %27 : vector<1x256x128xbf16> to vector<256x128xbf16>
    %cst_28 = arith.constant dense<0.000000e+00> : vector<24x128xf32>
    %29 = tpu.matmul %26, %28, %cst_28 {dimension_numbers = #tpu.dot_dimension_numbers<[1], [0], [0], [1], [0, 0, 1, 1], [], []>} : vector<24x256xbf16>, vector<256x128xbf16>, vector<24x128xf32> -> vector<24x128xf32>
    %30 = arith.addf %24, %29 : vector<24x128xf32>
    %c0_29 = arith.constant 0 : index
    %c9 = arith.constant 9 : index
    %c0_30 = arith.constant 0 : index
    %31 = vector.load %arg2[%c0_29, %c9, %c0_30] : memref<1x52x256xbf16, #tpu.memory_space<vmem>>, vector<1x24x256xbf16>
    %32 = vector.shape_cast %31 : vector<1x24x256xbf16> to vector<24x256xbf16>
    %c5 = arith.constant 5 : index
    %c0_31 = arith.constant 0 : index
    %c0_32 = arith.constant 0 : index
    %33 = vector.load %arg3[%c5, %c0_31, %c0_32] : memref<16x256x128xbf16, #tpu.memory_space<vmem>>, vector<1x256x128xbf16>
    %34 = vector.shape_cast %33 : vector<1x256x128xbf16> to vector<256x128xbf16>
    %cst_33 = arith.constant dense<0.000000e+00> : vector<24x128xf32>
    %35 = tpu.matmul %32, %34, %cst_33 {dimension_numbers = #tpu.dot_dimension_numbers<[1], [0], [0], [1], [0, 0, 1, 1], [], []>} : vector<24x256xbf16>, vector<256x128xbf16>, vector<24x128xf32> -> vector<24x128xf32>
    %36 = arith.addf %30, %35 : vector<24x128xf32>
    %c0_34 = arith.constant 0 : index
    %c10 = arith.constant 10 : index
    %c0_35 = arith.constant 0 : index
    %37 = vector.load %arg2[%c0_34, %c10, %c0_35] : memref<1x52x256xbf16, #tpu.memory_space<vmem>>, vector<1x24x256xbf16>
    %38 = vector.shape_cast %37 : vector<1x24x256xbf16> to vector<24x256xbf16>
    %c6 = arith.constant 6 : index
    %c0_36 = arith.constant 0 : index
    %c0_37 = arith.constant 0 : index
    %39 = vector.load %arg3[%c6, %c0_36, %c0_37] : memref<16x256x128xbf16, #tpu.memory_space<vmem>>, vector<1x256x128xbf16>
    %40 = vector.shape_cast %39 : vector<1x256x128xbf16> to vector<256x128xbf16>
    %cst_38 = arith.constant dense<0.000000e+00> : vector<24x128xf32>
    %41 = tpu.matmul %38, %40, %cst_38 {dimension_numbers = #tpu.dot_dimension_numbers<[1], [0], [0], [1], [0, 0, 1, 1], [], []>} : vector<24x256xbf16>, vector<256x128xbf16>, vector<24x128xf32> -> vector<24x128xf32>
    %42 = arith.addf %36, %41 : vector<24x128xf32>
    %c0_39 = arith.constant 0 : index
    %c11 = arith.constant 11 : index
    %c0_40 = arith.constant 0 : index
    %43 = vector.load %arg2[%c0_39, %c11, %c0_40] : memref<1x52x256xbf16, #tpu.memory_space<vmem>>, vector<1x24x256xbf16>
    %44 = vector.shape_cast %43 : vector<1x24x256xbf16> to vector<24x256xbf16>
    %c7 = arith.constant 7 : index
    %c0_41 = arith.constant 0 : index
    %c0_42 = arith.constant 0 : index
    %45 = vector.load %arg3[%c7, %c0_41, %c0_42] : memref<16x256x128xbf16, #tpu.memory_space<vmem>>, vector<1x256x128xbf16>
    %46 = vector.shape_cast %45 : vector<1x256x128xbf16> to vector<256x128xbf16>
    %cst_43 = arith.constant dense<0.000000e+00> : vector<24x128xf32>
    %47 = tpu.matmul %44, %46, %cst_43 {dimension_numbers = #tpu.dot_dimension_numbers<[1], [0], [0], [1], [0, 0, 1, 1], [], []>} : vector<24x256xbf16>, vector<256x128xbf16>, vector<24x128xf32> -> vector<24x128xf32>
    %48 = arith.addf %42, %47 : vector<24x128xf32>
    %c0_44 = arith.constant 0 : index
    %c16 = arith.constant 16 : index
    %c0_45 = arith.constant 0 : index
    %49 = vector.load %arg2[%c0_44, %c16, %c0_45] : memref<1x52x256xbf16, #tpu.memory_space<vmem>>, vector<1x24x256xbf16>
    %50 = vector.shape_cast %49 : vector<1x24x256xbf16> to vector<24x256xbf16>
    %c8_46 = arith.constant 8 : index
    %c0_47 = arith.constant 0 : index
    %c0_48 = arith.constant 0 : index
    %51 = vector.load %arg3[%c8_46, %c0_47, %c0_48] : memref<16x256x128xbf16, #tpu.memory_space<vmem>>, vector<1x256x128xbf16>
    %52 = vector.shape_cast %51 : vector<1x256x128xbf16> to vector<256x128xbf16>
    %cst_49 = arith.constant dense<0.000000e+00> : vector<24x128xf32>
    %53 = tpu.matmul %50, %52, %cst_49 {dimension_numbers = #tpu.dot_dimension_numbers<[1], [0], [0], [1], [0, 0, 1, 1], [], []>} : vector<24x256xbf16>, vector<256x128xbf16>, vector<24x128xf32> -> vector<24x128xf32>
    %54 = arith.addf %48, %53 : vector<24x128xf32>
    %c0_50 = arith.constant 0 : index
    %c17 = arith.constant 17 : index
    %c0_51 = arith.constant 0 : index
    %55 = vector.load %arg2[%c0_50, %c17, %c0_51] : memref<1x52x256xbf16, #tpu.memory_space<vmem>>, vector<1x24x256xbf16>
    %56 = vector.shape_cast %55 : vector<1x24x256xbf16> to vector<24x256xbf16>
    %c9_52 = arith.constant 9 : index
    %c0_53 = arith.constant 0 : index
    %c0_54 = arith.constant 0 : index
    %57 = vector.load %arg3[%c9_52, %c0_53, %c0_54] : memref<16x256x128xbf16, #tpu.memory_space<vmem>>, vector<1x256x128xbf16>
    %58 = vector.shape_cast %57 : vector<1x256x128xbf16> to vector<256x128xbf16>
    %cst_55 = arith.constant dense<0.000000e+00> : vector<24x128xf32>
    %59 = tpu.matmul %56, %58, %cst_55 {dimension_numbers = #tpu.dot_dimension_numbers<[1], [0], [0], [1], [0, 0, 1, 1], [], []>} : vector<24x256xbf16>, vector<256x128xbf16>, vector<24x128xf32> -> vector<24x128xf32>
    %60 = arith.addf %54, %59 : vector<24x128xf32>
    %c0_56 = arith.constant 0 : index
    %c18 = arith.constant 18 : index
    %c0_57 = arith.constant 0 : index
    %61 = vector.load %arg2[%c0_56, %c18, %c0_57] : memref<1x52x256xbf16, #tpu.memory_space<vmem>>, vector<1x24x256xbf16>
    %62 = vector.shape_cast %61 : vector<1x24x256xbf16> to vector<24x256xbf16>
    %c10_58 = arith.constant 10 : index
    %c0_59 = arith.constant 0 : index
    %c0_60 = arith.constant 0 : index
    %63 = vector.load %arg3[%c10_58, %c0_59, %c0_60] : memref<16x256x128xbf16, #tpu.memory_space<vmem>>, vector<1x256x128xbf16>
    %64 = vector.shape_cast %63 : vector<1x256x128xbf16> to vector<256x128xbf16>
    %cst_61 = arith.constant dense<0.000000e+00> : vector<24x128xf32>
    %65 = tpu.matmul %62, %64, %cst_61 {dimension_numbers = #tpu.dot_dimension_numbers<[1], [0], [0], [1], [0, 0, 1, 1], [], []>} : vector<24x256xbf16>, vector<256x128xbf16>, vector<24x128xf32> -> vector<24x128xf32>
    %66 = arith.addf %60, %65 : vector<24x128xf32>
    %c0_62 = arith.constant 0 : index
    %c19 = arith.constant 19 : index
    %c0_63 = arith.constant 0 : index
    %67 = vector.load %arg2[%c0_62, %c19, %c0_63] : memref<1x52x256xbf16, #tpu.memory_space<vmem>>, vector<1x24x256xbf16>
    %68 = vector.shape_cast %67 : vector<1x24x256xbf16> to vector<24x256xbf16>
    %c11_64 = arith.constant 11 : index
    %c0_65 = arith.constant 0 : index
    %c0_66 = arith.constant 0 : index
    %69 = vector.load %arg3[%c11_64, %c0_65, %c0_66] : memref<16x256x128xbf16, #tpu.memory_space<vmem>>, vector<1x256x128xbf16>
    %70 = vector.shape_cast %69 : vector<1x256x128xbf16> to vector<256x128xbf16>
    %cst_67 = arith.constant dense<0.000000e+00> : vector<24x128xf32>
    %71 = tpu.matmul %68, %70, %cst_67 {dimension_numbers = #tpu.dot_dimension_numbers<[1], [0], [0], [1], [0, 0, 1, 1], [], []>} : vector<24x256xbf16>, vector<256x128xbf16>, vector<24x128xf32> -> vector<24x128xf32>
    %72 = arith.addf %66, %71 : vector<24x128xf32>
    %c0_68 = arith.constant 0 : index
    %c24 = arith.constant 24 : index
    %c0_69 = arith.constant 0 : index
    %73 = vector.load %arg2[%c0_68, %c24, %c0_69] : memref<1x52x256xbf16, #tpu.memory_space<vmem>>, vector<1x24x256xbf16>
    %74 = vector.shape_cast %73 : vector<1x24x256xbf16> to vector<24x256xbf16>
    %c12 = arith.constant 12 : index
    %c0_70 = arith.constant 0 : index
    %c0_71 = arith.constant 0 : index
    %75 = vector.load %arg3[%c12, %c0_70, %c0_71] : memref<16x256x128xbf16, #tpu.memory_space<vmem>>, vector<1x256x128xbf16>
    %76 = vector.shape_cast %75 : vector<1x256x128xbf16> to vector<256x128xbf16>
    %cst_72 = arith.constant dense<0.000000e+00> : vector<24x128xf32>
    %77 = tpu.matmul %74, %76, %cst_72 {dimension_numbers = #tpu.dot_dimension_numbers<[1], [0], [0], [1], [0, 0, 1, 1], [], []>} : vector<24x256xbf16>, vector<256x128xbf16>, vector<24x128xf32> -> vector<24x128xf32>
    %78 = arith.addf %72, %77 : vector<24x128xf32>
    %c0_73 = arith.constant 0 : index
    %c25 = arith.constant 25 : index
    %c0_74 = arith.constant 0 : index
    %79 = vector.load %arg2[%c0_73, %c25, %c0_74] : memref<1x52x256xbf16, #tpu.memory_space<vmem>>, vector<1x24x256xbf16>
    %80 = vector.shape_cast %79 : vector<1x24x256xbf16> to vector<24x256xbf16>
    %c13 = arith.constant 13 : index
    %c0_75 = arith.constant 0 : index
    %c0_76 = arith.constant 0 : index
    %81 = vector.load %arg3[%c13, %c0_75, %c0_76] : memref<16x256x128xbf16, #tpu.memory_space<vmem>>, vector<1x256x128xbf16>
    %82 = vector.shape_cast %81 : vector<1x256x128xbf16> to vector<256x128xbf16>
    %cst_77 = arith.constant dense<0.000000e+00> : vector<24x128xf32>
    %83 = tpu.matmul %80, %82, %cst_77 {dimension_numbers = #tpu.dot_dimension_numbers<[1], [0], [0], [1], [0, 0, 1, 1], [], []>} : vector<24x256xbf16>, vector<256x128xbf16>, vector<24x128xf32> -> vector<24x128xf32>
    %84 = arith.addf %78, %83 : vector<24x128xf32>
    %c0_78 = arith.constant 0 : index
    %c26 = arith.constant 26 : index
    %c0_79 = arith.constant 0 : index
    %85 = vector.load %arg2[%c0_78, %c26, %c0_79] : memref<1x52x256xbf16, #tpu.memory_space<vmem>>, vector<1x24x256xbf16>
    %86 = vector.shape_cast %85 : vector<1x24x256xbf16> to vector<24x256xbf16>
    %c14 = arith.constant 14 : index
    %c0_80 = arith.constant 0 : index
    %c0_81 = arith.constant 0 : index
    %87 = vector.load %arg3[%c14, %c0_80, %c0_81] : memref<16x256x128xbf16, #tpu.memory_space<vmem>>, vector<1x256x128xbf16>
    %88 = vector.shape_cast %87 : vector<1x256x128xbf16> to vector<256x128xbf16>
    %cst_82 = arith.constant dense<0.000000e+00> : vector<24x128xf32>
    %89 = tpu.matmul %86, %88, %cst_82 {dimension_numbers = #tpu.dot_dimension_numbers<[1], [0], [0], [1], [0, 0, 1, 1], [], []>} : vector<24x256xbf16>, vector<256x128xbf16>, vector<24x128xf32> -> vector<24x128xf32>
    %90 = arith.addf %84, %89 : vector<24x128xf32>
    %c0_83 = arith.constant 0 : index
    %c27 = arith.constant 27 : index
    %c0_84 = arith.constant 0 : index
    %91 = vector.load %arg2[%c0_83, %c27, %c0_84] : memref<1x52x256xbf16, #tpu.memory_space<vmem>>, vector<1x24x256xbf16>
    %92 = vector.shape_cast %91 : vector<1x24x256xbf16> to vector<24x256xbf16>
    %c15 = arith.constant 15 : index
    %c0_85 = arith.constant 0 : index
    %c0_86 = arith.constant 0 : index
    %93 = vector.load %arg3[%c15, %c0_85, %c0_86] : memref<16x256x128xbf16, #tpu.memory_space<vmem>>, vector<1x256x128xbf16>
    %94 = vector.shape_cast %93 : vector<1x256x128xbf16> to vector<256x128xbf16>
    %cst_87 = arith.constant dense<0.000000e+00> : vector<24x128xf32>
    %95 = tpu.matmul %92, %94, %cst_87 {dimension_numbers = #tpu.dot_dimension_numbers<[1], [0], [0], [1], [0, 0, 1, 1], [], []>} : vector<24x256xbf16>, vector<256x128xbf16>, vector<24x128xf32> -> vector<24x128xf32>
    %96 = arith.addf %90, %95 : vector<24x128xf32>
    %c0_88 = arith.constant 0 : index
    %c0_89 = arith.constant 0 : index
    %97 = vector.load %arg4[%c0_88, %c0_89] : memref<1x128xf32, #tpu.memory_space<vmem>>, vector<1x128xf32>
    %98 = vector.broadcast %97 : vector<1x128xf32> to vector<24x128xf32>
    %99 = arith.addf %96, %98 : vector<24x128xf32>
    %100 = tpu.iota {dimensions = array<i32: 0>} : vector<24x1xi32>
    %c8_i32 = arith.constant 8 : i32
    %c0_i32 = arith.constant 0 : i32
    %101 = arith.cmpi eq, %c8_i32, %c0_i32 : i32
    %c1_i32 = arith.constant 1 : i32
    %102 = arith.select %101, %c1_i32, %c8_i32 : i32
    %103 = vector.broadcast %102 : i32 to vector<24x1xi32>
    %104 = arith.remsi %100, %103 : vector<24x1xi32>
    %c0_i32_90 = arith.constant 0 : i32
    %105 = vector.broadcast %c0_i32_90 : i32 to vector<24x1xi32>
    %106 = arith.cmpi ne, %104, %105 : vector<24x1xi32>
    %c0_i32_91 = arith.constant 0 : i32
    %107 = vector.broadcast %c0_i32_91 : i32 to vector<24x1xi32>
    %108 = arith.cmpi slt, %104, %107 : vector<24x1xi32>
    %c0_i32_92 = arith.constant 0 : i32
    %109 = arith.cmpi slt, %102, %c0_i32_92 : i32
    %110 = vector.broadcast %109 : i1 to vector<24x1xi1>
    %111 = vector.broadcast %110 : vector<24x1xi1> to vector<24x1xi1>
    %112 = arith.xori %108, %111 : vector<24x1xi1>
    %113 = arith.andi %112, %106 : vector<24x1xi1>
    %114 = vector.broadcast %102 : i32 to vector<24x1xi32>
    %115 = arith.addi %104, %114 : vector<24x1xi32>
    %116 = arith.select %113, %115, %104 : vector<24x1xi1>, vector<24x1xi32>
    %c3_i32 = arith.constant 3 : i32
    %117 = vector.broadcast %c3_i32 : i32 to vector<24x1xi32>
    %118 = arith.cmpi slt, %116, %117 : vector<24x1xi32>
    %119 = arith.extui %118 : vector<24x1xi1> to vector<24x1xi32>
    %120 = arith.sitofp %119 : vector<24x1xi32> to vector<24x1xf32>
    %121 = vector.broadcast %120 : vector<24x1xf32> to vector<24x128xf32>
    %122 = arith.mulf %99, %121 : vector<24x128xf32>
    %cst_93 = arith.constant dense<0.000000e+00> : vector<128xf32>
    %123 = vector.multi_reduction <add>, %122, %cst_93 [0] : vector<24x128xf32> to vector<128xf32>
    %124 = vector.shape_cast %123 : vector<128xf32> to vector<1x128xf32>
    %cst_94 = arith.constant 0.111111112 : f32
    %125 = vector.broadcast %cst_94 : f32 to vector<1x128xf32>
    %126 = arith.mulf %124, %125 : vector<1x128xf32>
    %127 = vector.broadcast %126 : vector<1x128xf32> to vector<24x128xf32>
    %128 = arith.subf %99, %127 : vector<24x128xf32>
    %129 = vector.broadcast %120 : vector<24x1xf32> to vector<24x128xf32>
    %130 = arith.mulf %128, %129 : vector<24x128xf32>
    %131 = arith.mulf %130, %130 : vector<24x128xf32>
    %cst_95 = arith.constant dense<0.000000e+00> : vector<128xf32>
    %132 = vector.multi_reduction <add>, %131, %cst_95 [0] : vector<24x128xf32> to vector<128xf32>
    %133 = vector.shape_cast %132 : vector<128xf32> to vector<1x128xf32>
    %cst_96 = arith.constant 0.111111112 : f32
    %134 = vector.broadcast %cst_96 : f32 to vector<1x128xf32>
    %135 = arith.mulf %133, %134 : vector<1x128xf32>
    %136 = vector.broadcast %126 : vector<1x128xf32> to vector<24x128xf32>
    %137 = arith.subf %99, %136 : vector<24x128xf32>
    %cst_97 = arith.constant 9.99999974E-6 : f32
    %138 = vector.broadcast %cst_97 : f32 to vector<1x128xf32>
    %139 = arith.addf %135, %138 : vector<1x128xf32>
    %140 = math.rsqrt %139 : vector<1x128xf32>
    %141 = vector.broadcast %140 : vector<1x128xf32> to vector<24x128xf32>
    %142 = arith.mulf %137, %141 : vector<24x128xf32>
    %cst_98 = arith.constant 0.000000e+00 : f32
    %143 = vector.broadcast %cst_98 : f32 to vector<24x128xf32>
    %144 = arith.cmpf ogt, %142, %143 : vector<24x128xf32>
    %cst_99 = arith.constant 2.000000e-01 : f32
    %145 = vector.broadcast %cst_99 : f32 to vector<24x128xf32>
    %146 = arith.mulf %145, %142 : vector<24x128xf32>
    %147 = arith.select %144, %142, %146 : vector<24x128xi1>, vector<24x128xf32>
    %148 = arith.truncf %147 : vector<24x128xf32> to vector<24x128xbf16>
    %c0_100 = arith.constant 0 : index
    %c0_101 = arith.constant 0 : index
    %c0_102 = arith.constant 0 : index
    %149 = vector.load %arg5[%c0_100, %c0_101, %c0_102] : memref<1x24x128xbf16, #tpu.memory_space<vmem>>, vector<1x24x128xbf16>
    %150 = vector.shape_cast %149 : vector<1x24x128xbf16> to vector<24x128xbf16>
    %151 = vector.shape_cast %148 : vector<24x128xbf16> to vector<1x24x128xbf16>
    tpu.vector_store %arg5[%c0_100, %c0_101, %c0_102], %151 {strides = array<i32>} : memref<1x24x128xbf16, #tpu.memory_space<vmem>>, vector<1x24x128xbf16>,
    return
  }
  func.func @transform_0(%arg0: i32, %arg1: i32) -> (i32, i32, i32) {
    %c0_i32 = arith.constant 0 : i32
    %c0_i32_0 = arith.constant 0 : i32
    %c0_i32_1 = arith.constant 0 : i32
    return %arg0, %c0_i32, %c0_i32_0 : i32, i32, i32
  }
  func.func @transform_1(%arg0: i32, %arg1: i32) -> (i32, i32, i32) {
    %c0_i32 = arith.constant 0 : i32
    %c0_i32_0 = arith.constant 0 : i32
    %c0_i32_1 = arith.constant 0 : i32
    return %c0_i32, %c0_i32_0, %arg1 : i32, i32, i32
  }
  func.func @transform_2(%arg0: i32, %arg1: i32) -> (i32, i32) {
    %c0_i32 = arith.constant 0 : i32
    %c0_i32_0 = arith.constant 0 : i32
    return %c0_i32, %arg1 : i32, i32
  }
  func.func @transform_3(%arg0: i32, %arg1: i32) -> (i32, i32, i32) {
    %c0_i32 = arith.constant 0 : i32
    %c0_i32_0 = arith.constant 0 : i32
    return %arg0, %c0_i32, %arg1 : i32, i32, i32
  }
}

module attributes {stable_mosaic.version = 11 : i64} {
  func.func @_conv_kernel(%arg0: i32, %arg1: i32, %arg2: memref<1x44x512xbf16, #tpu.memory_space<vmem>>, %arg3: memref<16x1x512xbf16, #tpu.memory_space<vmem>>, %arg4: memref<1x1xf32, #tpu.memory_space<vmem>>, %arg5: memref<1x16x1xf32, #tpu.memory_space<vmem>>) attributes {dimension_semantics = [#tpu.dimension_semantics<parallel>, #tpu.dimension_semantics<parallel>], iteration_bounds = array<i64: 2, 1>, scalar_prefetch = 0 : i64, scratch_operands = 0 : i64, tpu.core_type = #tpu.core_type<tc>, window_params = [{transform_indices = @transform_0, window_bounds = array<i64: 1, 44, 512>}, {pipeline_mode = #tpu.pipeline_mode<synchronous>, transform_indices = @transform_1, window_bounds = array<i64: 16, 1, 512>}, {transform_indices = @transform_2, window_bounds = array<i64: 1, 1>}, {transform_indices = @transform_3, window_bounds = array<i64: 1, 16, 1>}]} {
    %cst = arith.constant 0.000000e+00 : f32
    %0 = vector.broadcast %cst : f32 to vector<16x1xf32>
    %c0 = arith.constant 0 : index
    %c0_0 = arith.constant 0 : index
    %c0_1 = arith.constant 0 : index
    %1 = vector.load %arg2[%c0, %c0_0, %c0_1] : memref<1x44x512xbf16, #tpu.memory_space<vmem>>, vector<1x16x512xbf16>
    %2 = vector.shape_cast %1 : vector<1x16x512xbf16> to vector<16x512xbf16>
    %3 = arith.extf %2 : vector<16x512xbf16> to vector<16x512xf32>
    %c0_2 = arith.constant 0 : index
    %c0_3 = arith.constant 0 : index
    %c0_4 = arith.constant 0 : index
    %4 = vector.load %arg3[%c0_2, %c0_3, %c0_4] : memref<16x1x512xbf16, #tpu.memory_space<vmem>>, vector<1x1x512xbf16>
    %5 = vector.shape_cast %4 : vector<1x1x512xbf16> to vector<1x512xbf16>
    %6 = arith.extf %5 : vector<1x512xbf16> to vector<1x512xf32>
    %7 = vector.broadcast %6 : vector<1x512xf32> to vector<16x512xf32>
    %8 = arith.mulf %3, %7 : vector<16x512xf32>
    %cst_5 = arith.constant dense<0.000000e+00> : vector<16xf32>
    %9 = vector.multi_reduction <add>, %8, %cst_5 [1] : vector<16x512xf32> to vector<16xf32>
    %10 = vector.shape_cast %9 : vector<16xf32> to vector<16x1xf32>
    %11 = arith.addf %0, %10 : vector<16x1xf32>
    %c0_6 = arith.constant 0 : index
    %c1 = arith.constant 1 : index
    %c0_7 = arith.constant 0 : index
    %12 = vector.load %arg2[%c0_6, %c1, %c0_7] : memref<1x44x512xbf16, #tpu.memory_space<vmem>>, vector<1x16x512xbf16>
    %13 = vector.shape_cast %12 : vector<1x16x512xbf16> to vector<16x512xbf16>
    %14 = arith.extf %13 : vector<16x512xbf16> to vector<16x512xf32>
    %c1_8 = arith.constant 1 : index
    %c0_9 = arith.constant 0 : index
    %c0_10 = arith.constant 0 : index
    %15 = vector.load %arg3[%c1_8, %c0_9, %c0_10] : memref<16x1x512xbf16, #tpu.memory_space<vmem>>, vector<1x1x512xbf16>
    %16 = vector.shape_cast %15 : vector<1x1x512xbf16> to vector<1x512xbf16>
    %17 = arith.extf %16 : vector<1x512xbf16> to vector<1x512xf32>
    %18 = vector.broadcast %17 : vector<1x512xf32> to vector<16x512xf32>
    %19 = arith.mulf %14, %18 : vector<16x512xf32>
    %cst_11 = arith.constant dense<0.000000e+00> : vector<16xf32>
    %20 = vector.multi_reduction <add>, %19, %cst_11 [1] : vector<16x512xf32> to vector<16xf32>
    %21 = vector.shape_cast %20 : vector<16xf32> to vector<16x1xf32>
    %22 = arith.addf %11, %21 : vector<16x1xf32>
    %c0_12 = arith.constant 0 : index
    %c2 = arith.constant 2 : index
    %c0_13 = arith.constant 0 : index
    %23 = vector.load %arg2[%c0_12, %c2, %c0_13] : memref<1x44x512xbf16, #tpu.memory_space<vmem>>, vector<1x16x512xbf16>
    %24 = vector.shape_cast %23 : vector<1x16x512xbf16> to vector<16x512xbf16>
    %25 = arith.extf %24 : vector<16x512xbf16> to vector<16x512xf32>
    %c2_14 = arith.constant 2 : index
    %c0_15 = arith.constant 0 : index
    %c0_16 = arith.constant 0 : index
    %26 = vector.load %arg3[%c2_14, %c0_15, %c0_16] : memref<16x1x512xbf16, #tpu.memory_space<vmem>>, vector<1x1x512xbf16>
    %27 = vector.shape_cast %26 : vector<1x1x512xbf16> to vector<1x512xbf16>
    %28 = arith.extf %27 : vector<1x512xbf16> to vector<1x512xf32>
    %29 = vector.broadcast %28 : vector<1x512xf32> to vector<16x512xf32>
    %30 = arith.mulf %25, %29 : vector<16x512xf32>
    %cst_17 = arith.constant dense<0.000000e+00> : vector<16xf32>
    %31 = vector.multi_reduction <add>, %30, %cst_17 [1] : vector<16x512xf32> to vector<16xf32>
    %32 = vector.shape_cast %31 : vector<16xf32> to vector<16x1xf32>
    %33 = arith.addf %22, %32 : vector<16x1xf32>
    %c0_18 = arith.constant 0 : index
    %c3 = arith.constant 3 : index
    %c0_19 = arith.constant 0 : index
    %34 = vector.load %arg2[%c0_18, %c3, %c0_19] : memref<1x44x512xbf16, #tpu.memory_space<vmem>>, vector<1x16x512xbf16>
    %35 = vector.shape_cast %34 : vector<1x16x512xbf16> to vector<16x512xbf16>
    %36 = arith.extf %35 : vector<16x512xbf16> to vector<16x512xf32>
    %c3_20 = arith.constant 3 : index
    %c0_21 = arith.constant 0 : index
    %c0_22 = arith.constant 0 : index
    %37 = vector.load %arg3[%c3_20, %c0_21, %c0_22] : memref<16x1x512xbf16, #tpu.memory_space<vmem>>, vector<1x1x512xbf16>
    %38 = vector.shape_cast %37 : vector<1x1x512xbf16> to vector<1x512xbf16>
    %39 = arith.extf %38 : vector<1x512xbf16> to vector<1x512xf32>
    %40 = vector.broadcast %39 : vector<1x512xf32> to vector<16x512xf32>
    %41 = arith.mulf %36, %40 : vector<16x512xf32>
    %cst_23 = arith.constant dense<0.000000e+00> : vector<16xf32>
    %42 = vector.multi_reduction <add>, %41, %cst_23 [1] : vector<16x512xf32> to vector<16xf32>
    %43 = vector.shape_cast %42 : vector<16xf32> to vector<16x1xf32>
    %44 = arith.addf %33, %43 : vector<16x1xf32>
    %c0_24 = arith.constant 0 : index
    %c8 = arith.constant 8 : index
    %c0_25 = arith.constant 0 : index
    %45 = vector.load %arg2[%c0_24, %c8, %c0_25] : memref<1x44x512xbf16, #tpu.memory_space<vmem>>, vector<1x16x512xbf16>
    %46 = vector.shape_cast %45 : vector<1x16x512xbf16> to vector<16x512xbf16>
    %47 = arith.extf %46 : vector<16x512xbf16> to vector<16x512xf32>
    %c4 = arith.constant 4 : index
    %c0_26 = arith.constant 0 : index
    %c0_27 = arith.constant 0 : index
    %48 = vector.load %arg3[%c4, %c0_26, %c0_27] : memref<16x1x512xbf16, #tpu.memory_space<vmem>>, vector<1x1x512xbf16>
    %49 = vector.shape_cast %48 : vector<1x1x512xbf16> to vector<1x512xbf16>
    %50 = arith.extf %49 : vector<1x512xbf16> to vector<1x512xf32>
    %51 = vector.broadcast %50 : vector<1x512xf32> to vector<16x512xf32>
    %52 = arith.mulf %47, %51 : vector<16x512xf32>
    %cst_28 = arith.constant dense<0.000000e+00> : vector<16xf32>
    %53 = vector.multi_reduction <add>, %52, %cst_28 [1] : vector<16x512xf32> to vector<16xf32>
    %54 = vector.shape_cast %53 : vector<16xf32> to vector<16x1xf32>
    %55 = arith.addf %44, %54 : vector<16x1xf32>
    %c0_29 = arith.constant 0 : index
    %c9 = arith.constant 9 : index
    %c0_30 = arith.constant 0 : index
    %56 = vector.load %arg2[%c0_29, %c9, %c0_30] : memref<1x44x512xbf16, #tpu.memory_space<vmem>>, vector<1x16x512xbf16>
    %57 = vector.shape_cast %56 : vector<1x16x512xbf16> to vector<16x512xbf16>
    %58 = arith.extf %57 : vector<16x512xbf16> to vector<16x512xf32>
    %c5 = arith.constant 5 : index
    %c0_31 = arith.constant 0 : index
    %c0_32 = arith.constant 0 : index
    %59 = vector.load %arg3[%c5, %c0_31, %c0_32] : memref<16x1x512xbf16, #tpu.memory_space<vmem>>, vector<1x1x512xbf16>
    %60 = vector.shape_cast %59 : vector<1x1x512xbf16> to vector<1x512xbf16>
    %61 = arith.extf %60 : vector<1x512xbf16> to vector<1x512xf32>
    %62 = vector.broadcast %61 : vector<1x512xf32> to vector<16x512xf32>
    %63 = arith.mulf %58, %62 : vector<16x512xf32>
    %cst_33 = arith.constant dense<0.000000e+00> : vector<16xf32>
    %64 = vector.multi_reduction <add>, %63, %cst_33 [1] : vector<16x512xf32> to vector<16xf32>
    %65 = vector.shape_cast %64 : vector<16xf32> to vector<16x1xf32>
    %66 = arith.addf %55, %65 : vector<16x1xf32>
    %c0_34 = arith.constant 0 : index
    %c10 = arith.constant 10 : index
    %c0_35 = arith.constant 0 : index
    %67 = vector.load %arg2[%c0_34, %c10, %c0_35] : memref<1x44x512xbf16, #tpu.memory_space<vmem>>, vector<1x16x512xbf16>
    %68 = vector.shape_cast %67 : vector<1x16x512xbf16> to vector<16x512xbf16>
    %69 = arith.extf %68 : vector<16x512xbf16> to vector<16x512xf32>
    %c6 = arith.constant 6 : index
    %c0_36 = arith.constant 0 : index
    %c0_37 = arith.constant 0 : index
    %70 = vector.load %arg3[%c6, %c0_36, %c0_37] : memref<16x1x512xbf16, #tpu.memory_space<vmem>>, vector<1x1x512xbf16>
    %71 = vector.shape_cast %70 : vector<1x1x512xbf16> to vector<1x512xbf16>
    %72 = arith.extf %71 : vector<1x512xbf16> to vector<1x512xf32>
    %73 = vector.broadcast %72 : vector<1x512xf32> to vector<16x512xf32>
    %74 = arith.mulf %69, %73 : vector<16x512xf32>
    %cst_38 = arith.constant dense<0.000000e+00> : vector<16xf32>
    %75 = vector.multi_reduction <add>, %74, %cst_38 [1] : vector<16x512xf32> to vector<16xf32>
    %76 = vector.shape_cast %75 : vector<16xf32> to vector<16x1xf32>
    %77 = arith.addf %66, %76 : vector<16x1xf32>
    %c0_39 = arith.constant 0 : index
    %c11 = arith.constant 11 : index
    %c0_40 = arith.constant 0 : index
    %78 = vector.load %arg2[%c0_39, %c11, %c0_40] : memref<1x44x512xbf16, #tpu.memory_space<vmem>>, vector<1x16x512xbf16>
    %79 = vector.shape_cast %78 : vector<1x16x512xbf16> to vector<16x512xbf16>
    %80 = arith.extf %79 : vector<16x512xbf16> to vector<16x512xf32>
    %c7 = arith.constant 7 : index
    %c0_41 = arith.constant 0 : index
    %c0_42 = arith.constant 0 : index
    %81 = vector.load %arg3[%c7, %c0_41, %c0_42] : memref<16x1x512xbf16, #tpu.memory_space<vmem>>, vector<1x1x512xbf16>
    %82 = vector.shape_cast %81 : vector<1x1x512xbf16> to vector<1x512xbf16>
    %83 = arith.extf %82 : vector<1x512xbf16> to vector<1x512xf32>
    %84 = vector.broadcast %83 : vector<1x512xf32> to vector<16x512xf32>
    %85 = arith.mulf %80, %84 : vector<16x512xf32>
    %cst_43 = arith.constant dense<0.000000e+00> : vector<16xf32>
    %86 = vector.multi_reduction <add>, %85, %cst_43 [1] : vector<16x512xf32> to vector<16xf32>
    %87 = vector.shape_cast %86 : vector<16xf32> to vector<16x1xf32>
    %88 = arith.addf %77, %87 : vector<16x1xf32>
    %c0_44 = arith.constant 0 : index
    %c16 = arith.constant 16 : index
    %c0_45 = arith.constant 0 : index
    %89 = vector.load %arg2[%c0_44, %c16, %c0_45] : memref<1x44x512xbf16, #tpu.memory_space<vmem>>, vector<1x16x512xbf16>
    %90 = vector.shape_cast %89 : vector<1x16x512xbf16> to vector<16x512xbf16>
    %91 = arith.extf %90 : vector<16x512xbf16> to vector<16x512xf32>
    %c8_46 = arith.constant 8 : index
    %c0_47 = arith.constant 0 : index
    %c0_48 = arith.constant 0 : index
    %92 = vector.load %arg3[%c8_46, %c0_47, %c0_48] : memref<16x1x512xbf16, #tpu.memory_space<vmem>>, vector<1x1x512xbf16>
    %93 = vector.shape_cast %92 : vector<1x1x512xbf16> to vector<1x512xbf16>
    %94 = arith.extf %93 : vector<1x512xbf16> to vector<1x512xf32>
    %95 = vector.broadcast %94 : vector<1x512xf32> to vector<16x512xf32>
    %96 = arith.mulf %91, %95 : vector<16x512xf32>
    %cst_49 = arith.constant dense<0.000000e+00> : vector<16xf32>
    %97 = vector.multi_reduction <add>, %96, %cst_49 [1] : vector<16x512xf32> to vector<16xf32>
    %98 = vector.shape_cast %97 : vector<16xf32> to vector<16x1xf32>
    %99 = arith.addf %88, %98 : vector<16x1xf32>
    %c0_50 = arith.constant 0 : index
    %c17 = arith.constant 17 : index
    %c0_51 = arith.constant 0 : index
    %100 = vector.load %arg2[%c0_50, %c17, %c0_51] : memref<1x44x512xbf16, #tpu.memory_space<vmem>>, vector<1x16x512xbf16>
    %101 = vector.shape_cast %100 : vector<1x16x512xbf16> to vector<16x512xbf16>
    %102 = arith.extf %101 : vector<16x512xbf16> to vector<16x512xf32>
    %c9_52 = arith.constant 9 : index
    %c0_53 = arith.constant 0 : index
    %c0_54 = arith.constant 0 : index
    %103 = vector.load %arg3[%c9_52, %c0_53, %c0_54] : memref<16x1x512xbf16, #tpu.memory_space<vmem>>, vector<1x1x512xbf16>
    %104 = vector.shape_cast %103 : vector<1x1x512xbf16> to vector<1x512xbf16>
    %105 = arith.extf %104 : vector<1x512xbf16> to vector<1x512xf32>
    %106 = vector.broadcast %105 : vector<1x512xf32> to vector<16x512xf32>
    %107 = arith.mulf %102, %106 : vector<16x512xf32>
    %cst_55 = arith.constant dense<0.000000e+00> : vector<16xf32>
    %108 = vector.multi_reduction <add>, %107, %cst_55 [1] : vector<16x512xf32> to vector<16xf32>
    %109 = vector.shape_cast %108 : vector<16xf32> to vector<16x1xf32>
    %110 = arith.addf %99, %109 : vector<16x1xf32>
    %c0_56 = arith.constant 0 : index
    %c18 = arith.constant 18 : index
    %c0_57 = arith.constant 0 : index
    %111 = vector.load %arg2[%c0_56, %c18, %c0_57] : memref<1x44x512xbf16, #tpu.memory_space<vmem>>, vector<1x16x512xbf16>
    %112 = vector.shape_cast %111 : vector<1x16x512xbf16> to vector<16x512xbf16>
    %113 = arith.extf %112 : vector<16x512xbf16> to vector<16x512xf32>
    %c10_58 = arith.constant 10 : index
    %c0_59 = arith.constant 0 : index
    %c0_60 = arith.constant 0 : index
    %114 = vector.load %arg3[%c10_58, %c0_59, %c0_60] : memref<16x1x512xbf16, #tpu.memory_space<vmem>>, vector<1x1x512xbf16>
    %115 = vector.shape_cast %114 : vector<1x1x512xbf16> to vector<1x512xbf16>
    %116 = arith.extf %115 : vector<1x512xbf16> to vector<1x512xf32>
    %117 = vector.broadcast %116 : vector<1x512xf32> to vector<16x512xf32>
    %118 = arith.mulf %113, %117 : vector<16x512xf32>
    %cst_61 = arith.constant dense<0.000000e+00> : vector<16xf32>
    %119 = vector.multi_reduction <add>, %118, %cst_61 [1] : vector<16x512xf32> to vector<16xf32>
    %120 = vector.shape_cast %119 : vector<16xf32> to vector<16x1xf32>
    %121 = arith.addf %110, %120 : vector<16x1xf32>
    %c0_62 = arith.constant 0 : index
    %c19 = arith.constant 19 : index
    %c0_63 = arith.constant 0 : index
    %122 = vector.load %arg2[%c0_62, %c19, %c0_63] : memref<1x44x512xbf16, #tpu.memory_space<vmem>>, vector<1x16x512xbf16>
    %123 = vector.shape_cast %122 : vector<1x16x512xbf16> to vector<16x512xbf16>
    %124 = arith.extf %123 : vector<16x512xbf16> to vector<16x512xf32>
    %c11_64 = arith.constant 11 : index
    %c0_65 = arith.constant 0 : index
    %c0_66 = arith.constant 0 : index
    %125 = vector.load %arg3[%c11_64, %c0_65, %c0_66] : memref<16x1x512xbf16, #tpu.memory_space<vmem>>, vector<1x1x512xbf16>
    %126 = vector.shape_cast %125 : vector<1x1x512xbf16> to vector<1x512xbf16>
    %127 = arith.extf %126 : vector<1x512xbf16> to vector<1x512xf32>
    %128 = vector.broadcast %127 : vector<1x512xf32> to vector<16x512xf32>
    %129 = arith.mulf %124, %128 : vector<16x512xf32>
    %cst_67 = arith.constant dense<0.000000e+00> : vector<16xf32>
    %130 = vector.multi_reduction <add>, %129, %cst_67 [1] : vector<16x512xf32> to vector<16xf32>
    %131 = vector.shape_cast %130 : vector<16xf32> to vector<16x1xf32>
    %132 = arith.addf %121, %131 : vector<16x1xf32>
    %c0_68 = arith.constant 0 : index
    %c24 = arith.constant 24 : index
    %c0_69 = arith.constant 0 : index
    %133 = vector.load %arg2[%c0_68, %c24, %c0_69] : memref<1x44x512xbf16, #tpu.memory_space<vmem>>, vector<1x16x512xbf16>
    %134 = vector.shape_cast %133 : vector<1x16x512xbf16> to vector<16x512xbf16>
    %135 = arith.extf %134 : vector<16x512xbf16> to vector<16x512xf32>
    %c12 = arith.constant 12 : index
    %c0_70 = arith.constant 0 : index
    %c0_71 = arith.constant 0 : index
    %136 = vector.load %arg3[%c12, %c0_70, %c0_71] : memref<16x1x512xbf16, #tpu.memory_space<vmem>>, vector<1x1x512xbf16>
    %137 = vector.shape_cast %136 : vector<1x1x512xbf16> to vector<1x512xbf16>
    %138 = arith.extf %137 : vector<1x512xbf16> to vector<1x512xf32>
    %139 = vector.broadcast %138 : vector<1x512xf32> to vector<16x512xf32>
    %140 = arith.mulf %135, %139 : vector<16x512xf32>
    %cst_72 = arith.constant dense<0.000000e+00> : vector<16xf32>
    %141 = vector.multi_reduction <add>, %140, %cst_72 [1] : vector<16x512xf32> to vector<16xf32>
    %142 = vector.shape_cast %141 : vector<16xf32> to vector<16x1xf32>
    %143 = arith.addf %132, %142 : vector<16x1xf32>
    %c0_73 = arith.constant 0 : index
    %c25 = arith.constant 25 : index
    %c0_74 = arith.constant 0 : index
    %144 = vector.load %arg2[%c0_73, %c25, %c0_74] : memref<1x44x512xbf16, #tpu.memory_space<vmem>>, vector<1x16x512xbf16>
    %145 = vector.shape_cast %144 : vector<1x16x512xbf16> to vector<16x512xbf16>
    %146 = arith.extf %145 : vector<16x512xbf16> to vector<16x512xf32>
    %c13 = arith.constant 13 : index
    %c0_75 = arith.constant 0 : index
    %c0_76 = arith.constant 0 : index
    %147 = vector.load %arg3[%c13, %c0_75, %c0_76] : memref<16x1x512xbf16, #tpu.memory_space<vmem>>, vector<1x1x512xbf16>
    %148 = vector.shape_cast %147 : vector<1x1x512xbf16> to vector<1x512xbf16>
    %149 = arith.extf %148 : vector<1x512xbf16> to vector<1x512xf32>
    %150 = vector.broadcast %149 : vector<1x512xf32> to vector<16x512xf32>
    %151 = arith.mulf %146, %150 : vector<16x512xf32>
    %cst_77 = arith.constant dense<0.000000e+00> : vector<16xf32>
    %152 = vector.multi_reduction <add>, %151, %cst_77 [1] : vector<16x512xf32> to vector<16xf32>
    %153 = vector.shape_cast %152 : vector<16xf32> to vector<16x1xf32>
    %154 = arith.addf %143, %153 : vector<16x1xf32>
    %c0_78 = arith.constant 0 : index
    %c26 = arith.constant 26 : index
    %c0_79 = arith.constant 0 : index
    %155 = vector.load %arg2[%c0_78, %c26, %c0_79] : memref<1x44x512xbf16, #tpu.memory_space<vmem>>, vector<1x16x512xbf16>
    %156 = vector.shape_cast %155 : vector<1x16x512xbf16> to vector<16x512xbf16>
    %157 = arith.extf %156 : vector<16x512xbf16> to vector<16x512xf32>
    %c14 = arith.constant 14 : index
    %c0_80 = arith.constant 0 : index
    %c0_81 = arith.constant 0 : index
    %158 = vector.load %arg3[%c14, %c0_80, %c0_81] : memref<16x1x512xbf16, #tpu.memory_space<vmem>>, vector<1x1x512xbf16>
    %159 = vector.shape_cast %158 : vector<1x1x512xbf16> to vector<1x512xbf16>
    %160 = arith.extf %159 : vector<1x512xbf16> to vector<1x512xf32>
    %161 = vector.broadcast %160 : vector<1x512xf32> to vector<16x512xf32>
    %162 = arith.mulf %157, %161 : vector<16x512xf32>
    %cst_82 = arith.constant dense<0.000000e+00> : vector<16xf32>
    %163 = vector.multi_reduction <add>, %162, %cst_82 [1] : vector<16x512xf32> to vector<16xf32>
    %164 = vector.shape_cast %163 : vector<16xf32> to vector<16x1xf32>
    %165 = arith.addf %154, %164 : vector<16x1xf32>
    %c0_83 = arith.constant 0 : index
    %c27 = arith.constant 27 : index
    %c0_84 = arith.constant 0 : index
    %166 = vector.load %arg2[%c0_83, %c27, %c0_84] : memref<1x44x512xbf16, #tpu.memory_space<vmem>>, vector<1x16x512xbf16>
    %167 = vector.shape_cast %166 : vector<1x16x512xbf16> to vector<16x512xbf16>
    %168 = arith.extf %167 : vector<16x512xbf16> to vector<16x512xf32>
    %c15 = arith.constant 15 : index
    %c0_85 = arith.constant 0 : index
    %c0_86 = arith.constant 0 : index
    %169 = vector.load %arg3[%c15, %c0_85, %c0_86] : memref<16x1x512xbf16, #tpu.memory_space<vmem>>, vector<1x1x512xbf16>
    %170 = vector.shape_cast %169 : vector<1x1x512xbf16> to vector<1x512xbf16>
    %171 = arith.extf %170 : vector<1x512xbf16> to vector<1x512xf32>
    %172 = vector.broadcast %171 : vector<1x512xf32> to vector<16x512xf32>
    %173 = arith.mulf %168, %172 : vector<16x512xf32>
    %cst_87 = arith.constant dense<0.000000e+00> : vector<16xf32>
    %174 = vector.multi_reduction <add>, %173, %cst_87 [1] : vector<16x512xf32> to vector<16xf32>
    %175 = vector.shape_cast %174 : vector<16xf32> to vector<16x1xf32>
    %176 = arith.addf %165, %175 : vector<16x1xf32>
    %c0_88 = arith.constant 0 : index
    %c0_89 = arith.constant 0 : index
    %177 = vector.load %arg4[%c0_88, %c0_89] : memref<1x1xf32, #tpu.memory_space<vmem>>, vector<1x1xf32>
    %178 = vector.broadcast %177 : vector<1x1xf32> to vector<16x1xf32>
    %179 = arith.addf %176, %178 : vector<16x1xf32>
    %c0_90 = arith.constant 0 : index
    %c0_91 = arith.constant 0 : index
    %c0_92 = arith.constant 0 : index
    %180 = vector.load %arg5[%c0_90, %c0_91, %c0_92] : memref<1x16x1xf32, #tpu.memory_space<vmem>>, vector<1x16x1xf32>
    %181 = vector.shape_cast %180 : vector<1x16x1xf32> to vector<16x1xf32>
    %182 = vector.shape_cast %179 : vector<16x1xf32> to vector<1x16x1xf32>
    tpu.vector_store %arg5[%c0_90, %c0_91, %c0_92], %182 {strides = array<i32>} : memref<1x16x1xf32, #tpu.memory_space<vmem>>, vector<1x16x1xf32>,
    return
  }
  func.func @transform_0(%arg0: i32, %arg1: i32) -> (i32, i32, i32) {
    %c0_i32 = arith.constant 0 : i32
    %c0_i32_0 = arith.constant 0 : i32
    %c0_i32_1 = arith.constant 0 : i32
    return %arg0, %c0_i32, %c0_i32_0 : i32, i32, i32
  }
  func.func @transform_1(%arg0: i32, %arg1: i32) -> (i32, i32, i32) {
    %c0_i32 = arith.constant 0 : i32
    %c0_i32_0 = arith.constant 0 : i32
    %c0_i32_1 = arith.constant 0 : i32
    %c0_i32_2 = arith.constant 0 : i32
    return %c0_i32, %c0_i32_0, %c0_i32_1 : i32, i32, i32
  }
  func.func @transform_2(%arg0: i32, %arg1: i32) -> (i32, i32) {
    %c0_i32 = arith.constant 0 : i32
    %c0_i32_0 = arith.constant 0 : i32
    return %c0_i32, %arg1 : i32, i32
  }
  func.func @transform_3(%arg0: i32, %arg1: i32) -> (i32, i32, i32) {
    %c0_i32 = arith.constant 0 : i32
    %c0_i32_0 = arith.constant 0 : i32
    return %arg0, %c0_i32, %arg1 : i32, i32, i32
  }
}

</mosaic_0001>

<llo_original>
// kernel: _lambda_.5
$region0: #{_lambda_.5}
  #allocation0 [shape = 'u32[]', space=smem, size = 0x4, offset = 0x4, fixed_abs, tag = 'smem constant byte address 0x4 - core index']
  #allocation1 [shape = 'u32[144,128]{1,0:T(1,128)}', space=vmem, size = 0x12000, scoped, tag = 'internal scratch']
  %s0 = inlined_call_operand.hbm [shape: bf16[2,128,96], index: 0, kind: input, shape index: {}]
  %s1 = inlined_call_operand.hbm [shape: bf16[96,128], index: 1, kind: input, shape index: {}]
  %s2 = inlined_call_operand.hbm [shape: f32[1,128], index: 2, kind: input, shape index: {}]
  %s3 = inlined_call_operand.hbm [shape: bf16[2,128,128], index: 3, kind: output, shape index: {}]
  %s4 = sld [smem:[#allocation0]]
  $region57: #{_lambda_.5} parent=0
    _
  %s6 = ssub.s32 1, %s4
  %s7 = scalar_select 0, %s6, %s4
  $region1: #{_lambda_.5} parent=0
    #allocation2 [shape = 'u8[65536]{0}', space=vmem, size = 0x10000, scoped, tag = 'input window, operand 0']
    #allocation3 [shape = 's32[2]{0}', space=sflag, size = 0x8, scoped, tag = 'scoped memory for _lambda_.5']
    #allocation4 [shape = 's32[2]{0}', space=sflag, size = 0x8, scoped, tag = 'scoped memory for _lambda_.5']
    #allocation5 [shape = 'u8[24576]{0}', space=vmem, size = 0x6000, scoped, tag = 'input window, operand 1, single buffered']
    #allocation6 [shape = 's32[1]{0}', space=sflag, size = 0x4, scoped, tag = 'scoped memory for _lambda_.5']
    #allocation7 [shape = 'u8[512]{0}', space=vmem, size = 0x400, scoped, tag = 'input window, operand 2, single buffered']
    #allocation8 [shape = 'u8[65536]{0}', space=vmem, size = 0x10000, scoped, tag = 'output window, operand 0']
    %8 = vsyncpa [#allocation3], 0
    %s9 = scalar_lea.sflag [#allocation3], 1
    %10 = vsyncpa %s9, 0
    %11 = vsyncpa [#allocation6], 0
    %12 = vsyncpa [#allocation4], 0
    %s13 = scalar_lea.sflag [#allocation4], 1
    %14 = vsyncpa %s13, 0
    loop: start=0, step=1, limit=4
    $region2: #{_lambda_.5} parent=1 // loop_pre_header
      _
    $region3: #{_lambda_.5} parent=1 // loop_header
      %s16 = sphi 0, %s20
      %p17 = scmp.ge.s32.totalorder %s16, 4
      %s23 = sphi 0, %s35
      %s24 = sphi 0, %s31
      %s25 = sphi 0, %s23
      %s26 = sphi 0, %s24
      %s27 = sphi 0, %s25
      %s28 = sphi 0, %s26
      %s40 = sphi 0, %s42
      %s43 = sphi 0, %s40
      %s44 = sphi 0, %s43
      %s60 = sphi 0, %s44
      %s64 = sphi 0, %s64
      %s66 = sphi 0, %s64
      %s67 = sphi 0, %s66
      %s81 = sphi 0, %s67
      %s85 = sphi 0, %s85
      %s87 = sphi 0, %s85
      %s88 = sphi 0, %s87
      %s102 = sphi 0, %s88
      %s110 = sphi 0, %s112
      %s113 = sphi 0, %s110
      %s114 = sphi 0, %s113
      %s130 = sphi 0, %s114
    $region4: #{_lambda_.5} parent=1 // loop_header_branch
      %19 = sbr.rel (%p17) target = $region8
    $region5: #{_lambda_.5} parent=1 // loop_body
      %s21 = ssub.s32 %s16, 1
      %s22 = ssub.s32 %s16, 2
      %s29 = sadd.s32 1, %s24
      %p30 = scmp.ge.s32.totalorder %s29, 1
      %s31 = scalar_select %p30, 0, %s29
      %s32 = sadd.s32 1, %s23
      %s33 = scalar_select %p30, %s32, %s23
      %p34 = scmp.ge.s32.totalorder %s33, 2
      %s35 = scalar_select %p34, 0, %s33
      %s36 = ssub.s32 %s23, %s35
      %s37 = ssub.s32 %s24, %s31
      %s38 = sor.u32 %s36, %s37
      %p39 = scmp.eq.s32.totalorder %s38, 0
      %s41 = sadd.s32 %s40, 1
      %s42 = scalar_select %p39, %s40, %s41
      %p45 = pneg %p39
      %p46 = scmp.eq.s32.totalorder %s16, 1
      %p47 = por %p45, %p46
      %p48 = scmp.ne.s32.totalorder %s40, %s43
      %p49 = scmp.eq.s32.totalorder %s16, 0
      %p50 = por %p48, %p49
      %p51 = scmp.ne.s32.totalorder %s40, %s43
      %p52 = scmp.eq.s32.totalorder %s21, 1
      %p53 = por %p51, %p52
      %p54 = scmp.ne.s32.totalorder %s43, %s44
      %p55 = scmp.eq.s32.totalorder %s21, 0
      %p56 = por %p54, %p55
      %p57 = scmp.ne.s32.totalorder %s43, %s44
      %p58 = scmp.eq.s32.totalorder %s22, 1
      %p59 = por %p57, %p58
      %p61 = scmp.ne.s32.totalorder %s44, %s60
      %p62 = scmp.eq.s32.totalorder %s22, 0
      %p63 = por %p61, %p62
      %s65 = sadd.s32 %s64, 1
      %p68 = scmp.eq.s32.totalorder %s16, 1
      %p69 = scmp.ne.s32.totalorder %s64, %s66
      %p70 = scmp.eq.s32.totalorder %s16, 0
      %p71 = por %p69, %p70
      %p72 = scmp.ne.s32.totalorder %s64, %s66
      %p73 = scmp.eq.s32.totalorder %s21, 1
      %p74 = por %p72, %p73
      %p75 = scmp.ne.s32.totalorder %s66, %s67
      %p76 = scmp.eq.s32.totalorder %s21, 0
      %p77 = por %p75, %p76
      %p78 = scmp.ne.s32.totalorder %s66, %s67
      %p79 = scmp.eq.s32.totalorder %s22, 1
      %p80 = por %p78, %p79
      %p82 = scmp.ne.s32.totalorder %s67, %s81
      %p83 = scmp.eq.s32.totalorder %s22, 0
      %p84 = por %p82, %p83
      %s86 = sadd.s32 %s85, 1
      %p89 = scmp.eq.s32.totalorder %s16, 1
      %p90 = scmp.ne.s32.totalorder %s85, %s87
      %p91 = scmp.eq.s32.totalorder %s16, 0
      %p92 = por %p90, %p91
      %p93 = scmp.ne.s32.totalorder %s85, %s87
      %p94 = scmp.eq.s32.totalorder %s21, 1
      %p95 = por %p93, %p94
      %p96 = scmp.ne.s32.totalorder %s87, %s88
      %p97 = scmp.eq.s32.totalorder %s21, 0
      %p98 = por %p96, %p97
      %p99 = scmp.ne.s32.totalorder %s87, %s88
      %p100 = scmp.eq.s32.totalorder %s22, 1
      %p101 = por %p99, %p100
      %p103 = scmp.ne.s32.totalorder %s88, %s102
      %p104 = scmp.eq.s32.totalorder %s22, 0
      %p105 = por %p103, %p104
      %s106 = ssub.s32 %s23, %s35
      %s107 = ssub.s32 %s24, %s31
      %s108 = sor.u32 %s106, %s107
      %p109 = scmp.eq.s32.totalorder %s108, 0
      %s111 = sadd.s32 %s110, 1
      %s112 = scalar_select %p109, %s110, %s111
      %p115 = pneg %p109
      %p116 = scmp.eq.s32.totalorder %s16, 1
      %p117 = por %p115, %p116
      %p118 = scmp.ne.s32.totalorder %s110, %s113
      %p119 = scmp.eq.s32.totalorder %s16, 0
      %p120 = por %p118, %p119
      %p121 = scmp.ne.s32.totalorder %s110, %s113
      %p122 = scmp.eq.s32.totalorder %s21, 1
      %p123 = por %p121, %p122
      %p124 = scmp.ne.s32.totalorder %s113, %s114
      %p125 = scmp.eq.s32.totalorder %s21, 0
      %p126 = por %p124, %p125
      %p127 = scmp.ne.s32.totalorder %s113, %s114
      %p128 = scmp.eq.s32.totalorder %s22, 1
      %p129 = por %p127, %p128
      %p131 = scmp.ne.s32.totalorder %s114, %s130
      %p132 = scmp.eq.s32.totalorder %s22, 0
      %p133 = por %p131, %p132
      %p134 = scmp.le.s32.totalorder 1, %s16
      %p135 = scmp.lt.s32.totalorder %s16, 3
      %p136 = pnand %p134, %p135
      %p137 = pneg %p136
      // Predicated region
      $region9: #{_lambda_.5} parent=5 // pred_check
        _
      $region10: #{_lambda_.5} parent=5 // pred_check_branch
        %139 = sbr.rel (%p136) target = $region12
      $region11: #{_lambda_.5} parent=5 // pred_region
        %s140 = ssub.s32 %s16, 1
        // Predicated region
        $region13: #{_lambda_.5} parent=11 // pred_check
          %p141 = pneg %p77
        $region14: #{_lambda_.5} parent=11 // pred_check_branch
          %143 = sbr.rel (%p141) target = $region16
        $region15: #{_lambda_.5} parent=11 // pred_region
          %s145 = ssub.s32 768, 768
          %146 = vsyncadd [#allocation6], %s145
          %s147 = sshll.u32 [#allocation5], 4
          %s148 = int_to_ptr.vmem [resolvable:$true] %s147
          %153 = dma.hbm_to_vmem [thread:$0]  %s1, 768, %s148, [#allocation6], 64, 64, 4
        $region16: #{_lambda_.5} parent=11 // pred_fallthru
          _
        // Predicated region
        $region17: #{_lambda_.5} parent=11 // pred_check
          %p154 = pneg %p98
        $region18: #{_lambda_.5} parent=11 // pred_check_branch
          %156 = sbr.rel (%p154) target = $region20
        $region19: #{_lambda_.5} parent=11 // pred_region
          %s158 = ssub.s32 16, 16
          %159 = vsyncadd [#allocation6], %s158
          %s161 = sshll.u32 [#allocation7], 4
          %s162 = int_to_ptr.vmem [resolvable:$true] %s161
          %164 = dma.hbm_to_vmem [thread:$0]  %s2, 16, %s162, [#allocation6]
        $region20: #{_lambda_.5} parent=11 // pred_fallthru
          _
      $region12: #{_lambda_.5} parent=5 // pred_fallthru
        _
      %p165 = scmp.lt.s32.totalorder %s16, 2
      // Predicated region
      $region21: #{_lambda_.5} parent=5 // pred_check
        %p166 = pneg %p165
      $region22: #{_lambda_.5} parent=5 // pred_check_branch
        %168 = sbr.rel (%p166) target = $region24
      $region23: #{_lambda_.5} parent=5 // pred_region
        // Predicated region
        $region25: #{_lambda_.5} parent=23 // pred_check
          %p169 = pneg %p50
        $region26: #{_lambda_.5} parent=23 // pred_check_branch
          %171 = sbr.rel (%p169) target = $region28
        $region27: #{_lambda_.5} parent=23 // pred_region
          %s172 = sand.u32 %s40, 1
          %s173 = scalar_lea.sflag [#allocation3], %s172
          %s174 = sand.u32 %s40, 1
          %s175 = smul.addr %s174, 64
          %s176 = scalar_lea.vmem [#allocation2], %s175
          %s177 = smul.u32 16, %s24
          %s179 = ssub.s32 1024, 1024
          %180 = vsyncadd %s173, %s179
          %s181 = smul.addr %s23, 16
          %s182 = sadd.s32 %s177, %s181
          %s183 = smul.addr %s182, 64
          %s184 = scalar_lea.hbm %s0, %s183
          %s185 = sshll.u32 %s176, 4
          %s186 = int_to_ptr.vmem [resolvable:$true] %s185
          %191 = dma.hbm_to_vmem [thread:$0]  %s184, 1024, %s186, %s173, 64, 64, 4
        $region28: #{_lambda_.5} parent=23 // pred_fallthru
          _
      $region24: #{_lambda_.5} parent=5 // pred_fallthru
        _
      %p192 = scmp.le.s32.totalorder 1, %s16
      %p193 = scmp.lt.s32.totalorder %s16, 3
      %p194 = pnand %p192, %p193
      %p195 = pneg %p194
      // Predicated region
      $region29: #{_lambda_.5} parent=5 // pred_check
        _
      $region30: #{_lambda_.5} parent=5 // pred_check_branch
        %197 = sbr.rel (%p194) target = $region32
      $region31: #{_lambda_.5} parent=5 // pred_region
        %s198 = ssub.s32 %s16, 1
        %s199 = sand.u32 %s43, 1
        %s200 = scalar_lea.sflag [#allocation3], %s199
        %s201 = sand.u32 %s43, 1
        %s202 = smul.addr %s201, 64
        %s203 = scalar_lea.vmem [#allocation2], %s202
        // Predicated region
        $region33: #{_lambda_.5} parent=31 // pred_check
          %p204 = pneg %p56
        $region34: #{_lambda_.5} parent=31 // pred_check_branch
          %206 = sbr.rel (%p204) target = $region36
        $region35: #{_lambda_.5} parent=31 // pred_region
          %207 = dma.done %s200, 1024
        $region36: #{_lambda_.5} parent=31 // pred_fallthru
          _
        // Predicated region
        $region37: #{_lambda_.5} parent=31 // pred_check
          %p208 = pneg %p77
        $region38: #{_lambda_.5} parent=31 // pred_check_branch
          %210 = sbr.rel (%p208) target = $region40
        $region39: #{_lambda_.5} parent=31 // pred_region
          %211 = dma.done [#allocation6], 768
        $region40: #{_lambda_.5} parent=31 // pred_fallthru
          _
        // Predicated region
        $region41: #{_lambda_.5} parent=31 // pred_check
          %p212 = pneg %p98
        $region42: #{_lambda_.5} parent=31 // pred_check_branch
          %214 = sbr.rel (%p212) target = $region44
        $region43: #{_lambda_.5} parent=31 // pred_region
          %215 = dma.done [#allocation6], 16
        $region44: #{_lambda_.5} parent=31 // pred_fallthru
          _
        %s216 = sand.u32 %s43, 1
        %s217 = scalar_lea.sflag [#allocation3], %s216
        %s218 = sand.u32 %s43, 1
        %s219 = smul.addr %s218, 64
        %s220 = scalar_lea.vmem [#allocation2], %s219
        %p221 = pneg %p56
        %p222 = pneg %p53
        %p223 = pneg %p77
        %p224 = pneg %p74
        %p225 = pneg %p98
        %p226 = pneg %p95
        %p227 = pneg %p126
        %p228 = pneg %p123
        %s229 = sand.u32 %s113, 1
        %s230 = scalar_lea.sflag [#allocation4], %s229
        %s231 = sand.u32 %s113, 1
        %s232 = smul.addr %s231, 64
        %s233 = scalar_lea.vmem [#allocation8], %s232
        %s234 = smul.u32 16, %s26
        %s235 = smul.u32 16, %s26
        %v237 = vld [vmem:[%s203] sm:$0xf]
        %v238 = vld [vmem:[%s203 + $0x4] sm:$0xf]
        %v239 = vld [vmem:[%s203 + $0x8] sm:$0xf]
        %v240 = vld [vmem:[%s203 + $0xc] sm:$0xf]
        %v241 = vld [vmem:[%s203 + $0x10] sm:$0xf]
        %v242 = vld [vmem:[%s203 + $0x14] sm:$0xf]
        %v243 = vld [vmem:[%s203 + $0x18] sm:$0xf]
        %v244 = vld [vmem:[%s203 + $0x1c] sm:$0xf]
        %v245 = vld [vmem:[%s203 + $0x20] sm:$0xf]
        %v246 = vld [vmem:[%s203 + $0x24] sm:$0xf]
        %v247 = vld [vmem:[%s203 + $0x28] sm:$0xf]
        %v248 = vld [vmem:[%s203 + $0x2c] sm:$0xf]
        %v249 = vld [vmem:[%s203 + $0x30] sm:$0xf]
        %v250 = vld [vmem:[%s203 + $0x34] sm:$0xf]
        %v251 = vld [vmem:[%s203 + $0x38] sm:$0xf]
        %v252 = vld [vmem:[%s203 + $0x3c] sm:$0xf]
        %v253 = vld [vmem:[#allocation5] sm:$0xf]
        %v254 = vld [vmem:[#allocation5 + $0x4] sm:$0xf]
        %v255 = vld [vmem:[#allocation5 + $0x8] sm:$0xf]
        %v256 = vld [vmem:[#allocation5 + $0xc] sm:$0xf]
        %v257 = vld [vmem:[#allocation5 + $0x10] sm:$0xf]
        %v258 = vld [vmem:[#allocation5 + $0x14] sm:$0xf]
        %v259 = vld [vmem:[#allocation5 + $0x18] sm:$0xf]
        %v260 = vld [vmem:[#allocation5 + $0x1c] sm:$0xf]
        %v261 = vld [vmem:[#allocation5 + $0x20] sm:$0xf]
        %v262 = vld [vmem:[#allocation5 + $0x24] sm:$0xf]
        %v263 = vld [vmem:[#allocation5 + $0x28] sm:$0xf]
        %v264 = vld [vmem:[#allocation5 + $0x2c] sm:$0xf]
        %v265 = vld [vmem:[#allocation7] sm:$0x1]
        %v267 = vlaneseq
        %v268 = vshrl.u32 %v267, 7
        %v269 = vsub.s32 0, %v268
        %v270 = vrot.slane %v265, %v269
        %v288 = vunpack.c.l.b16 %v237
        %v289 = vunpack.c.l.b16 %v238
        %v290 = vunpack.c.l.b16 %v239
        %v291 = vunpack.c.l.b16 %v240
        %v292 = vunpack.c.l.b16 %v241
        %v293 = vunpack.c.l.b16 %v242
        %v294 = vunpack.c.l.b16 %v243
        %v295 = vunpack.c.l.b16 %v244
        %v296 = vunpack.c.l.b16 %v245
        %v297 = vunpack.c.l.b16 %v246
        %v298 = vunpack.c.l.b16 %v247
        %v299 = vunpack.c.l.b16 %v248
        %v300 = vunpack.c.l.b16 %v249
        %v301 = vunpack.c.l.b16 %v250
        %v302 = vunpack.c.l.b16 %v251
        %v303 = vunpack.c.l.b16 %v252
        %v304 = vpack.c.b16 %v289, %v288
        %v305 = vpack.c.b16 %v291, %v290
        %v306 = vpack.c.b16 %v293, %v292
        %v307 = vpack.c.b16 %v295, %v294
        %v308 = vpack.c.b16 %v297, %v296
        %v309 = vpack.c.b16 %v299, %v298
        %v310 = vpack.c.b16 %v301, %v300
        %v311 = vpack.c.b16 %v303, %v302
        %v324 = vunpack.c.l.b16 %v253
        %v325 = vunpack.c.l.b16 %v254
        %v326 = vunpack.c.l.b16 %v255
        %v327 = vunpack.c.l.b16 %v256
        %v328 = vunpack.c.l.b16 %v257
        %v329 = vunpack.c.l.b16 %v258
        %v330 = vunpack.c.l.b16 %v259
        %v331 = vunpack.c.l.b16 %v260
        %v332 = vunpack.c.l.b16 %v261
        %v333 = vunpack.c.l.b16 %v262
        %v334 = vunpack.c.l.b16 %v263
        %v335 = vunpack.c.l.b16 %v264
        %v336 = vpack.c.b16 %v325, %v324
        %v337 = vpack.c.b16 %v327, %v326
        %v338 = vpack.c.b16 %v329, %v328
        %v339 = vpack.c.b16 %v331, %v330
        %v340 = vpack.c.b16 %v333, %v332
        %v341 = vpack.c.b16 %v335, %v334
        %vm348 = vcmask 785408
        %v350 = vsel %vm348, %v304, 0
        %v353 = vsel %vm348, %v305, 0
        %v356 = vsel %vm348, %v306, 0
        %v359 = vsel %vm348, %v307, 0
        %v362 = vsel %vm348, %v308, 0
        %v365 = vsel %vm348, %v309, 0
        %v368 = vsel %vm348, %v310, 0
        %v371 = vsel %vm348, %v311, 0
        %373 = vmatprep.subr.bf16.mxu0 0
        %374 = vmatpush1.bf16.msra.mxu0 %v336
        %375 = vmatprep.subr.bf16.mxu0 0
        %376 = vmatpush1.bf16.msra.mxu0 %v337
        %377 = vmatprep.subr.bf16.mxu0 0
        %378 = vmatpush1.bf16.msra.mxu0 %v338
        %379 = vmatprep.subr.bf16.mxu0 0
        %380 = vmatpush1.bf16.msra.mxu0 %v339
        %381 = vmatprep.subr.bf16.mxu0 0
        %382 = vmatpush1.bf16.msra.mxu0 %v340
        %383 = vmatprep.subr.bf16.mxu0 0
        %384 = vmatpush1.bf16.msra.mxu0 %v341
        %385 = vmatprep.subr.bf16.mxu0 0
        %386 = vmatpush1.bf16.msra.mxu0 0
        %387 = vmatprep.subr.bf16.mxu0 0
        %388 = vmatpush1.bf16.msra.mxu0 0
        %389 = vmatprep.subr.bf16.mxu0 0
        %390 = vmatpush1.bf16.msra.mxu0 0
        %391 = vmatprep.subr.bf16.mxu0 0
        %392 = vmatpush1.bf16.msra.mxu0 0
        %393 = vmatprep.subr.bf16.mxu0 0
        %394 = vmatpush1.bf16.msra.mxu0 0
        %395 = vmatprep.subr.bf16.mxu0 0
        %396 = vmatpush1.bf16.msra.mxu0 0
        %397 = vmatprep.subr.bf16.mxu0 0
        %398 = vmatpush1.bf16.msra.mxu0 0
        %399 = vmatprep.subr.bf16.mxu0 0
        %400 = vmatpush1.bf16.msra.mxu0 0
        %401 = vmatprep.subr.bf16.mxu0 0
        %402 = vmatpush1.bf16.msra.mxu0 0
        %403 = vmatprep.subr.bf16.mxu0 0
        %404 = vmatpush1.bf16.msra.mxu0 0
        %405 = vmatprep.mubr.bf16.mxu0 0
        %406 = vmatmul.mubr.bf16.gmra.mrb[0].mxu0 %v350
        %v407 = vpop.f32.mrb[0].mxu0
        %v408 = vadd.f32 %v270, %v407
        %v409 = vpop.f32.mrb[0].mxu0
        %v410 = vpop.f32.mrb[0].mxu0
        %v411 = vadd.f32 %v270, %v410
        %v412 = vpop.f32.mrb[0].mxu0
        %413 = vmatprep.mubr.bf16.mxu0 0
        %414 = vmatmul.mubr.bf16.gmra.mrb[0].mxu0 %v353
        %v415 = vpop.f32.mrb[0].mxu0
        %v416 = vadd.f32 %v270, %v415
        %v417 = vpop.f32.mrb[0].mxu0
        %v418 = vpop.f32.mrb[0].mxu0
        %v419 = vadd.f32 %v270, %v418
        %v420 = vpop.f32.mrb[0].mxu0
        %421 = vmatprep.mubr.bf16.mxu0 0
        %422 = vmatmul.mubr.bf16.gmra.mrb[0].mxu0 %v356
        %v423 = vpop.f32.mrb[0].mxu0
        %v424 = vadd.f32 %v270, %v423
        %v425 = vpop.f32.mrb[0].mxu0
        %v426 = vpop.f32.mrb[0].mxu0
        %v427 = vadd.f32 %v270, %v426
        %v428 = vpop.f32.mrb[0].mxu0
        %429 = vmatprep.mubr.bf16.mxu0 0
        %430 = vmatmul.mubr.bf16.gmra.mrb[0].mxu0 %v359
        %v431 = vpop.f32.mrb[0].mxu0
        %v432 = vadd.f32 %v270, %v431
        %v433 = vpop.f32.mrb[0].mxu0
        %v434 = vpop.f32.mrb[0].mxu0
        %v435 = vadd.f32 %v270, %v434
        %v436 = vpop.f32.mrb[0].mxu0
        %437 = vmatprep.mubr.bf16.mxu0 0
        %438 = vmatmul.mubr.bf16.gmra.mrb[0].mxu0 %v362
        %v439 = vpop.f32.mrb[0].mxu0
        %v440 = vadd.f32 %v270, %v439
        %v441 = vpop.f32.mrb[0].mxu0
        %v442 = vpop.f32.mrb[0].mxu0
        %v443 = vadd.f32 %v270, %v442
        %v444 = vpop.f32.mrb[0].mxu0
        %445 = vmatprep.mubr.bf16.mxu0 0
        %446 = vmatmul.mubr.bf16.gmra.mrb[0].mxu0 %v365
        %v447 = vpop.f32.mrb[0].mxu0
        %v448 = vadd.f32 %v270, %v447
        %v449 = vpop.f32.mrb[0].mxu0
        %v450 = vpop.f32.mrb[0].mxu0
        %v451 = vadd.f32 %v270, %v450
        %v452 = vpop.f32.mrb[0].mxu0
        %453 = vmatprep.mubr.bf16.mxu0 0
        %454 = vmatmul.mubr.bf16.gmra.mrb[0].mxu0 %v368
        %v455 = vpop.f32.mrb[0].mxu0
        %v456 = vadd.f32 %v270, %v455
        %v457 = vpop.f32.mrb[0].mxu0
        %v458 = vpop.f32.mrb[0].mxu0
        %v459 = vadd.f32 %v270, %v458
        %v460 = vpop.f32.mrb[0].mxu0
        %461 = vmatprep.mubr.bf16.mxu0 0
        %462 = vmatmul.mubr.bf16.gmra.mrb[0].mxu0 %v371
        %v463 = vpop.f32.mrb[0].mxu0
        %v464 = vadd.f32 %v270, %v463
        %v465 = vpop.f32.mrb[0].mxu0
        %v466 = vpop.f32.mrb[0].mxu0
        %v467 = vadd.f32 %v270, %v466
        %v468 = vpop.f32.mrb[0].mxu0
        %469 = vdwg.mxu0
        %vm470 = vcmp.gt.f32.partialorder %v408, 0.0
        %vm471 = vcmp.gt.f32.partialorder %v411, 0.0
        %vm472 = vcmp.gt.f32.partialorder %v416, 0.0
        %vm473 = vcmp.gt.f32.partialorder %v419, 0.0
        %vm474 = vcmp.gt.f32.partialorder %v424, 0.0
        %vm475 = vcmp.gt.f32.partialorder %v427, 0.0
        %vm476 = vcmp.gt.f32.partialorder %v432, 0.0
        %vm477 = vcmp.gt.f32.partialorder %v435, 0.0
        %vm478 = vcmp.gt.f32.partialorder %v440, 0.0
        %vm479 = vcmp.gt.f32.partialorder %v443, 0.0
        %vm480 = vcmp.gt.f32.partialorder %v448, 0.0
        %vm481 = vcmp.gt.f32.partialorder %v451, 0.0
        %vm482 = vcmp.gt.f32.partialorder %v456, 0.0
        %vm483 = vcmp.gt.f32.partialorder %v459, 0.0
        %vm484 = vcmp.gt.f32.partialorder %v464, 0.0
        %vm485 = vcmp.gt.f32.partialorder %v467, 0.0
        %v486 = vmul.f32 %v408, 0.2
        %v487 = vmul.f32 %v411, 0.2
        %v488 = vmul.f32 %v416, 0.2
        %v489 = vmul.f32 %v419, 0.2
        %v490 = vmul.f32 %v424, 0.2
        %v491 = vmul.f32 %v427, 0.2
        %v492 = vmul.f32 %v432, 0.2
        %v493 = vmul.f32 %v435, 0.2
        %v494 = vmul.f32 %v440, 0.2
        %v495 = vmul.f32 %v443, 0.2
        %v496 = vmul.f32 %v448, 0.2
        %v497 = vmul.f32 %v451, 0.2
        %v498 = vmul.f32 %v456, 0.2
        %v499 = vmul.f32 %v459, 0.2
        %v500 = vmul.f32 %v464, 0.2
        %v501 = vmul.f32 %v467, 0.2
        %v502 = vsel %vm470, %v408, %v486
        %v503 = vsel %vm471, %v411, %v487
        %v504 = vsel %vm472, %v416, %v488
        %v505 = vsel %vm473, %v419, %v489
        %v506 = vsel %vm474, %v424, %v490
        %v507 = vsel %vm475, %v427, %v491
        %v508 = vsel %vm476, %v432, %v492
        %v509 = vsel %vm477, %v435, %v493
        %v510 = vsel %vm478, %v440, %v494
        %v511 = vsel %vm479, %v443, %v495
        %v512 = vsel %vm480, %v448, %v496
        %v513 = vsel %vm481, %v451, %v497
        %v514 = vsel %vm482, %v456, %v498
        %v515 = vsel %vm483, %v459, %v499
        %v516 = vsel %vm484, %v464, %v500
        %v517 = vsel %vm485, %v467, %v501
        %v518 = vpack.c.bf16 %v503, %v502
        %v519 = vpack.c.bf16 %v505, %v504
        %v520 = vpack.c.bf16 %v507, %v506
        %v521 = vpack.c.bf16 %v509, %v508
        %v522 = vpack.c.bf16 %v511, %v510
        %v523 = vpack.c.bf16 %v513, %v512
        %v524 = vpack.c.bf16 %v515, %v514
        %v525 = vpack.c.bf16 %v517, %v516
        %v534 = vunpack.c.l.b16 %v518
        %v535 = vunpack.c.h.b16 %v518
        %v536 = vunpack.c.l.b16 %v519
        %v537 = vunpack.c.h.b16 %v519
        %v538 = vunpack.c.l.b16 %v520
        %v539 = vunpack.c.h.b16 %v520
        %v540 = vunpack.c.l.b16 %v521
        %v541 = vunpack.c.h.b16 %v521
        %v542 = vunpack.c.l.b16 %v522
        %v543 = vunpack.c.h.b16 %v522
        %v544 = vunpack.c.l.b16 %v523
        %v545 = vunpack.c.h.b16 %v523
        %v546 = vunpack.c.l.b16 %v524
        %v547 = vunpack.c.h.b16 %v524
        %v548 = vunpack.c.l.b16 %v525
        %v549 = vunpack.c.h.b16 %v525
        %v550 = vpack.c.b16 %v534, %v534
        %v551 = vpack.c.b16 %v535, %v535
        %v552 = vpack.c.b16 %v536, %v536
        %v553 = vpack.c.b16 %v537, %v537
        %v554 = vpack.c.b16 %v538, %v538
        %v555 = vpack.c.b16 %v539, %v539
        %v556 = vpack.c.b16 %v540, %v540
        %v557 = vpack.c.b16 %v541, %v541
        %v558 = vpack.c.b16 %v542, %v542
        %v559 = vpack.c.b16 %v543, %v543
        %v560 = vpack.c.b16 %v544, %v544
        %v561 = vpack.c.b16 %v545, %v545
        %v562 = vpack.c.b16 %v546, %v546
        %v563 = vpack.c.b16 %v547, %v547
        %v564 = vpack.c.b16 %v548, %v548
        %v565 = vpack.c.b16 %v549, %v549
        %582 = vst [vmem:[%s233] sm:$0xf] %v550
        %583 = vst [vmem:[%s233 + $0x4] sm:$0xf] %v551
        %584 = vst [vmem:[%s233 + $0x8] sm:$0xf] %v552
        %585 = vst [vmem:[%s233 + $0xc] sm:$0xf] %v553
        %586 = vst [vmem:[%s233 + $0x10] sm:$0xf] %v554
        %587 = vst [vmem:[%s233 + $0x14] sm:$0xf] %v555
        %588 = vst [vmem:[%s233 + $0x18] sm:$0xf] %v556
        %589 = vst [vmem:[%s233 + $0x1c] sm:$0xf] %v557
        %590 = vst [vmem:[%s233 + $0x20] sm:$0xf] %v558
        %591 = vst [vmem:[%s233 + $0x24] sm:$0xf] %v559
        %592 = vst [vmem:[%s233 + $0x28] sm:$0xf] %v560
        %593 = vst [vmem:[%s233 + $0x2c] sm:$0xf] %v561
        %594 = vst [vmem:[%s233 + $0x30] sm:$0xf] %v562
        %595 = vst [vmem:[%s233 + $0x34] sm:$0xf] %v563
        %596 = vst [vmem:[%s233 + $0x38] sm:$0xf] %v564
        %597 = vst [vmem:[%s233 + $0x3c] sm:$0xf] %v565
        %s598 = sand.u32 %s113, 1
        %s599 = scalar_lea.sflag [#allocation4], %s598
        %s600 = sand.u32 %s113, 1
        %s601 = smul.addr %s600, 64
        %s602 = scalar_lea.vmem [#allocation8], %s601
        // Predicated region
        $region45: #{_lambda_.5} parent=31 // pred_check
          %p603 = pneg %p123
        $region46: #{_lambda_.5} parent=31 // pred_check_branch
          %605 = sbr.rel (%p603) target = $region48
        $region47: #{_lambda_.5} parent=31 // pred_region
          %s606 = smul.u32 16, %s26
          %s608 = ssub.s32 1024, 1024
          %609 = vsyncadd %s599, %s608
          %s610 = smul.addr %s25, 16
          %s611 = sadd.s32 %s606, %s610
          %s612 = smul.addr %s611, 64
          %s613 = scalar_lea.hbm %s3, %s612
          %s614 = sshll.u32 %s602, 4
          %s615 = int_to_ptr.vmem [resolvable:$true] %s614
          %620 = dma.vmem_to_hbm [thread:$0]  %s615, 1024, %s613, %s599, 64, 64, 4
        $region48: #{_lambda_.5} parent=31 // pred_fallthru
          _
      $region32: #{_lambda_.5} parent=5 // pred_fallthru
        _
      %p621 = scmp.le.s32.totalorder 2, %s16
      // Predicated region
      $region49: #{_lambda_.5} parent=5 // pred_check
        %p622 = pneg %p621
      $region50: #{_lambda_.5} parent=5 // pred_check_branch
        %624 = sbr.rel (%p622) target = $region52
      $region51: #{_lambda_.5} parent=5 // pred_region
        %s625 = ssub.s32 %s16, 2
        // Predicated region
        $region53: #{_lambda_.5} parent=51 // pred_check
          %p626 = pneg %p129
        $region54: #{_lambda_.5} parent=51 // pred_check_branch
          %628 = sbr.rel (%p626) target = $region56
        $region55: #{_lambda_.5} parent=51 // pred_region
          %s629 = sand.u32 %s114, 1
          %s630 = scalar_lea.sflag [#allocation4], %s629
          %s631 = sand.u32 %s114, 1
          %s632 = smul.addr %s631, 64
          %s633 = scalar_lea.vmem [#allocation8], %s632
          %634 = dma.done %s630, 1024
        $region56: #{_lambda_.5} parent=51 // pred_fallthru
          _
      $region52: #{_lambda_.5} parent=5 // pred_fallthru
        _
    $region6: #{_lambda_.5} parent=1 // loop_footer
      %s20 = sadd.s32 1, %s16
    $region7: #{_lambda_.5} parent=1 // loop_footer_branch
      %15 = sbr.rel target = $region3
    $region8: #{_lambda_.5} parent=1 // loop_exit
      _
    %635 = vsyncpa [#allocation3], 1
    %s636 = scalar_lea.sflag [#allocation3], 1
    %637 = vsyncpa %s636, 1
    %638 = vsyncpa [#allocation6], 1
    %639 = vsyncpa [#allocation4], 1
    %s640 = scalar_lea.sflag [#allocation4], 1
    %641 = vsyncpa %s640, 1

// kernel: _lambda_.6
$region0: #{_lambda_.6}
  #allocation0 [shape = 'u32[]', space=smem, size = 0x4, offset = 0x4, fixed_abs, tag = 'smem constant byte address 0x4 - core index']
  #allocation1 [shape = 'u32[144,128]{1,0:T(1,128)}', space=vmem, size = 0x12000, scoped, tag = 'internal scratch']
  %s0 = inlined_call_operand.hbm [shape: bf16[2,146,256], index: 0, kind: input, shape index: {}]
  %s1 = inlined_call_operand.hbm [shape: bf16[4,256,128], index: 1, kind: input, shape index: {}]
  %s2 = inlined_call_operand.hbm [shape: f32[1,128], index: 2, kind: input, shape index: {}]
  %s3 = inlined_call_operand.hbm [shape: bf16[2,128,128], index: 3, kind: output, shape index: {}]
  %s4 = sld [smem:[#allocation0]]
  $region57: #{_lambda_.6} parent=0
    _
  %s6 = ssub.s32 1, %s4
  %s7 = scalar_select 0, %s6, %s4
  $region1: #{_lambda_.6} parent=0
    #allocation2 [shape = 'u8[155648]{0}', space=vmem, size = 0x26000, scoped, tag = 'input window, operand 0']
    #allocation3 [shape = 's32[2]{0}', space=sflag, size = 0x8, scoped, tag = 'scoped memory for _lambda_.6']
    #allocation4 [shape = 's32[2]{0}', space=sflag, size = 0x8, scoped, tag = 'scoped memory for _lambda_.6']
    #allocation5 [shape = 'u8[262144]{0}', space=vmem, size = 0x40000, scoped, tag = 'input window, operand 1, single buffered']
    #allocation6 [shape = 's32[1]{0}', space=sflag, size = 0x4, scoped, tag = 'scoped memory for _lambda_.6']
    #allocation7 [shape = 'u8[512]{0}', space=vmem, size = 0x400, scoped, tag = 'input window, operand 2, single buffered']
    #allocation8 [shape = 'u8[65536]{0}', space=vmem, size = 0x10000, scoped, tag = 'output window, operand 0']
    %8 = vsyncpa [#allocation3], 0
    %s9 = scalar_lea.sflag [#allocation3], 1
    %10 = vsyncpa %s9, 0
    %11 = vsyncpa [#allocation6], 0
    %12 = vsyncpa [#allocation4], 0
    %s13 = scalar_lea.sflag [#allocation4], 1
    %14 = vsyncpa %s13, 0
    loop: start=0, step=1, limit=4
    $region2: #{_lambda_.6} parent=1 // loop_pre_header
      _
    $region3: #{_lambda_.6} parent=1 // loop_header
      %s16 = sphi 0, %s20
      %p17 = scmp.ge.s32.totalorder %s16, 4
      %s23 = sphi 0, %s35
      %s24 = sphi 0, %s31
      %s25 = sphi 0, %s23
      %s26 = sphi 0, %s24
      %s27 = sphi 0, %s25
      %s28 = sphi 0, %s26
      %s38 = sphi 0, %s40
      %s41 = sphi 0, %s38
      %s42 = sphi 0, %s41
      %s58 = sphi 0, %s42
      %s64 = sphi 0, %s66
      %s67 = sphi 0, %s64
      %s68 = sphi 0, %s67
      %s84 = sphi 0, %s68
      %s90 = sphi 0, %s92
      %s93 = sphi 0, %s90
      %s94 = sphi 0, %s93
      %s110 = sphi 0, %s94
      %s118 = sphi 0, %s120
      %s121 = sphi 0, %s118
      %s122 = sphi 0, %s121
      %s138 = sphi 0, %s122
    $region4: #{_lambda_.6} parent=1 // loop_header_branch
      %19 = sbr.rel (%p17) target = $region8
    $region5: #{_lambda_.6} parent=1 // loop_body
      %s21 = ssub.s32 %s16, 1
      %s22 = ssub.s32 %s16, 2
      %s29 = sadd.s32 1, %s24
      %p30 = scmp.ge.s32.totalorder %s29, 1
      %s31 = scalar_select %p30, 0, %s29
      %s32 = sadd.s32 1, %s23
      %s33 = scalar_select %p30, %s32, %s23
      %p34 = scmp.ge.s32.totalorder %s33, 2
      %s35 = scalar_select %p34, 0, %s33
      %s36 = ssub.s32 %s23, %s35
      %p37 = scmp.eq.s32.totalorder %s36, 0
      %s39 = sadd.s32 %s38, 1
      %s40 = scalar_select %p37, %s38, %s39
      %p43 = pneg %p37
      %p44 = scmp.eq.s32.totalorder %s16, 1
      %p45 = por %p43, %p44
      %p46 = scmp.ne.s32.totalorder %s38, %s41
      %p47 = scmp.eq.s32.totalorder %s16, 0
      %p48 = por %p46, %p47
      %p49 = scmp.ne.s32.totalorder %s38, %s41
      %p50 = scmp.eq.s32.totalorder %s21, 1
      %p51 = por %p49, %p50
      %p52 = scmp.ne.s32.totalorder %s41, %s42
      %p53 = scmp.eq.s32.totalorder %s21, 0
      %p54 = por %p52, %p53
      %p55 = scmp.ne.s32.totalorder %s41, %s42
      %p56 = scmp.eq.s32.totalorder %s22, 1
      %p57 = por %p55, %p56
      %p59 = scmp.ne.s32.totalorder %s42, %s58
      %p60 = scmp.eq.s32.totalorder %s22, 0
      %p61 = por %p59, %p60
      %s62 = ssub.s32 %s24, %s31
      %p63 = scmp.eq.s32.totalorder %s62, 0
      %s65 = sadd.s32 %s64, 1
      %s66 = scalar_select %p63, %s64, %s65
      %p69 = pneg %p63
      %p70 = scmp.eq.s32.totalorder %s16, 1
      %p71 = por %p69, %p70
      %p72 = scmp.ne.s32.totalorder %s64, %s67
      %p73 = scmp.eq.s32.totalorder %s16, 0
      %p74 = por %p72, %p73
      %p75 = scmp.ne.s32.totalorder %s64, %s67
      %p76 = scmp.eq.s32.totalorder %s21, 1
      %p77 = por %p75, %p76
      %p78 = scmp.ne.s32.totalorder %s67, %s68
      %p79 = scmp.eq.s32.totalorder %s21, 0
      %p80 = por %p78, %p79
      %p81 = scmp.ne.s32.totalorder %s67, %s68
      %p82 = scmp.eq.s32.totalorder %s22, 1
      %p83 = por %p81, %p82
      %p85 = scmp.ne.s32.totalorder %s68, %s84
      %p86 = scmp.eq.s32.totalorder %s22, 0
      %p87 = por %p85, %p86
      %s88 = ssub.s32 %s24, %s31
      %p89 = scmp.eq.s32.totalorder %s88, 0
      %s91 = sadd.s32 %s90, 1
      %s92 = scalar_select %p89, %s90, %s91
      %p95 = pneg %p89
      %p96 = scmp.eq.s32.totalorder %s16, 1
      %p97 = por %p95, %p96
      %p98 = scmp.ne.s32.totalorder %s90, %s93
      %p99 = scmp.eq.s32.totalorder %s16, 0
      %p100 = por %p98, %p99
      %p101 = scmp.ne.s32.totalorder %s90, %s93
      %p102 = scmp.eq.s32.totalorder %s21, 1
      %p103 = por %p101, %p102
      %p104 = scmp.ne.s32.totalorder %s93, %s94
      %p105 = scmp.eq.s32.totalorder %s21, 0
      %p106 = por %p104, %p105
      %p107 = scmp.ne.s32.totalorder %s93, %s94
      %p108 = scmp.eq.s32.totalorder %s22, 1
      %p109 = por %p107, %p108
      %p111 = scmp.ne.s32.totalorder %s94, %s110
      %p112 = scmp.eq.s32.totalorder %s22, 0
      %p113 = por %p111, %p112
      %s114 = ssub.s32 %s23, %s35
      %s115 = ssub.s32 %s24, %s31
      %s116 = sor.u32 %s114, %s115
      %p117 = scmp.eq.s32.totalorder %s116, 0
      %s119 = sadd.s32 %s118, 1
      %s120 = scalar_select %p117, %s118, %s119
      %p123 = pneg %p117
      %p124 = scmp.eq.s32.totalorder %s16, 1
      %p125 = por %p123, %p124
      %p126 = scmp.ne.s32.totalorder %s118, %s121
      %p127 = scmp.eq.s32.totalorder %s16, 0
      %p128 = por %p126, %p127
      %p129 = scmp.ne.s32.totalorder %s118, %s121
      %p130 = scmp.eq.s32.totalorder %s21, 1
      %p131 = por %p129, %p130
      %p132 = scmp.ne.s32.totalorder %s121, %s122
      %p133 = scmp.eq.s32.totalorder %s21, 0
      %p134 = por %p132, %p133
      %p135 = scmp.ne.s32.totalorder %s121, %s122
      %p136 = scmp.eq.s32.totalorder %s22, 1
      %p137 = por %p135, %p136
      %p139 = scmp.ne.s32.totalorder %s122, %s138
      %p140 = scmp.eq.s32.totalorder %s22, 0
      %p141 = por %p139, %p140
      %p142 = scmp.le.s32.totalorder 1, %s16
      %p143 = scmp.lt.s32.totalorder %s16, 3
      %p144 = pnand %p142, %p143
      %p145 = pneg %p144
      // Predicated region
      $region9: #{_lambda_.6} parent=5 // pred_check
        _
      $region10: #{_lambda_.6} parent=5 // pred_check_branch
        %147 = sbr.rel (%p144) target = $region12
      $region11: #{_lambda_.6} parent=5 // pred_region
        %s148 = ssub.s32 %s16, 1
        // Predicated region
        $region13: #{_lambda_.6} parent=11 // pred_check
          %p149 = pneg %p80
        $region14: #{_lambda_.6} parent=11 // pred_check_branch
          %151 = sbr.rel (%p149) target = $region16
        $region15: #{_lambda_.6} parent=11 // pred_region
          %s153 = ssub.s32 8192, 8192
          %154 = vsyncadd [#allocation6], %s153
          %s155 = smul.addr %s26, 64
          %s156 = scalar_lea.hbm %s1, %s155
          %s157 = sshll.u32 [#allocation5], 4
          %s158 = int_to_ptr.vmem [resolvable:$true] %s157
          %163 = dma.hbm_to_vmem [thread:$0]  %s156, 8192, %s158, [#allocation6], 64, 64, 4
        $region16: #{_lambda_.6} parent=11 // pred_fallthru
          _
        // Predicated region
        $region17: #{_lambda_.6} parent=11 // pred_check
          %p164 = pneg %p106
        $region18: #{_lambda_.6} parent=11 // pred_check_branch
          %166 = sbr.rel (%p164) target = $region20
        $region19: #{_lambda_.6} parent=11 // pred_region
          %s168 = ssub.s32 16, 16
          %169 = vsyncadd [#allocation6], %s168
          %s170 = smul.addr %s26, 16
          %s171 = scalar_lea.hbm %s2, %s170
          %s173 = sshll.u32 [#allocation7], 4
          %s174 = int_to_ptr.vmem [resolvable:$true] %s173
          %176 = dma.hbm_to_vmem [thread:$0]  %s171, 16, %s174, [#allocation6]
        $region20: #{_lambda_.6} parent=11 // pred_fallthru
          _
      $region12: #{_lambda_.6} parent=5 // pred_fallthru
        _
      %p177 = scmp.lt.s32.totalorder %s16, 2
      // Predicated region
      $region21: #{_lambda_.6} parent=5 // pred_check
        %p178 = pneg %p177
      $region22: #{_lambda_.6} parent=5 // pred_check_branch
        %180 = sbr.rel (%p178) target = $region24
      $region23: #{_lambda_.6} parent=5 // pred_region
        // Predicated region
        $region25: #{_lambda_.6} parent=23 // pred_check
          %p181 = pneg %p48
        $region26: #{_lambda_.6} parent=23 // pred_check_branch
          %183 = sbr.rel (%p181) target = $region28
        $region27: #{_lambda_.6} parent=23 // pred_region
          %s184 = sand.u32 %s38, 1
          %s185 = scalar_lea.sflag [#allocation3], %s184
          %s186 = sand.u32 %s38, 1
          %s187 = smul.addr %s186, 152
          %s188 = scalar_lea.vmem [#allocation2], %s187
          %s190 = ssub.s32 2432, 2432
          %191 = vsyncadd %s185, %s190
          %s192 = smul.addr %s23, 38
          %s193 = smul.addr %s192, 64
          %s194 = scalar_lea.hbm %s0, %s193
          %s195 = sshll.u32 %s188, 4
          %s196 = int_to_ptr.vmem [resolvable:$true] %s195
          %201 = dma.hbm_to_vmem [thread:$0]  %s194, 2432, %s196, %s185, 128, 128, 8
        $region28: #{_lambda_.6} parent=23 // pred_fallthru
          _
      $region24: #{_lambda_.6} parent=5 // pred_fallthru
        _
      %p202 = scmp.le.s32.totalorder 1, %s16
      %p203 = scmp.lt.s32.totalorder %s16, 3
      %p204 = pnand %p202, %p203
      %p205 = pneg %p204
      // Predicated region
      $region29: #{_lambda_.6} parent=5 // pred_check
        _
      $region30: #{_lambda_.6} parent=5 // pred_check_branch
        %207 = sbr.rel (%p204) target = $region32
      $region31: #{_lambda_.6} parent=5 // pred_region
        %s208 = ssub.s32 %s16, 1
        %s209 = sand.u32 %s41, 1
        %s210 = scalar_lea.sflag [#allocation3], %s209
        %s211 = sand.u32 %s41, 1
        %s212 = smul.addr %s211, 152
        %s213 = scalar_lea.vmem [#allocation2], %s212
        // Predicated region
        $region33: #{_lambda_.6} parent=31 // pred_check
          %p214 = pneg %p54
        $region34: #{_lambda_.6} parent=31 // pred_check_branch
          %216 = sbr.rel (%p214) target = $region36
        $region35: #{_lambda_.6} parent=31 // pred_region
          %217 = dma.done %s210, 2432
        $region36: #{_lambda_.6} parent=31 // pred_fallthru
          _
        // Predicated region
        $region37: #{_lambda_.6} parent=31 // pred_check
          %p218 = pneg %p80
        $region38: #{_lambda_.6} parent=31 // pred_check_branch
          %220 = sbr.rel (%p218) target = $region40
        $region39: #{_lambda_.6} parent=31 // pred_region
          %221 = dma.done [#allocation6], 8192
        $region40: #{_lambda_.6} parent=31 // pred_fallthru
          _
        // Predicated region
        $region41: #{_lambda_.6} parent=31 // pred_check
          %p222 = pneg %p106
        $region42: #{_lambda_.6} parent=31 // pred_check_branch
          %224 = sbr.rel (%p222) target = $region44
        $region43: #{_lambda_.6} parent=31 // pred_region
          %225 = dma.done [#allocation6], 16
        $region44: #{_lambda_.6} parent=31 // pred_fallthru
          _
        %s226 = sand.u32 %s41, 1
        %s227 = scalar_lea.sflag [#allocation3], %s226
        %s228 = sand.u32 %s41, 1
        %s229 = smul.addr %s228, 152
        %s230 = scalar_lea.vmem [#allocation2], %s229
        %p231 = pneg %p54
        %p232 = pneg %p51
        %p233 = pneg %p80
        %p234 = pneg %p77
        %p235 = pneg %p106
        %p236 = pneg %p103
        %p237 = pneg %p134
        %p238 = pneg %p131
        %s239 = sand.u32 %s121, 1
        %s240 = scalar_lea.sflag [#allocation4], %s239
        %s241 = sand.u32 %s121, 1
        %s242 = smul.addr %s241, 64
        %s243 = scalar_lea.vmem [#allocation8], %s242
        %v245 = vld [vmem:[%s213] sm:$0xff]
        %v246 = vld [vmem:[%s213 + $0x8] sm:$0xff]
        %v247 = vld [vmem:[%s213 + $0x10] sm:$0xff]
        %v248 = vld [vmem:[%s213 + $0x18] sm:$0xff]
        %v249 = vld [vmem:[%s213 + $0x20] sm:$0xff]
        %v250 = vld [vmem:[%s213 + $0x28] sm:$0xff]
        %v251 = vld [vmem:[%s213 + $0x30] sm:$0xff]
        %v252 = vld [vmem:[%s213 + $0x38] sm:$0xff]
        %v253 = vld [vmem:[%s213 + $0x40] sm:$0xff]
        %v254 = vld [vmem:[%s213 + $0x48] sm:$0xff]
        %v255 = vld [vmem:[%s213 + $0x50] sm:$0xff]
        %v256 = vld [vmem:[%s213 + $0x58] sm:$0xff]
        %v257 = vld [vmem:[%s213 + $0x60] sm:$0xff]
        %v258 = vld [vmem:[%s213 + $0x68] sm:$0xff]
        %v259 = vld [vmem:[%s213 + $0x70] sm:$0xff]
        %v260 = vld [vmem:[%s213 + $0x78] sm:$0xff]
        %v261 = vld [vmem:[#allocation5] sm:$0xf]
        %v262 = vld [vmem:[#allocation5 + $0x4] sm:$0xf]
        %v263 = vld [vmem:[#allocation5 + $0x8] sm:$0xf]
        %v264 = vld [vmem:[#allocation5 + $0xc] sm:$0xf]
        %v265 = vld [vmem:[#allocation5 + $0x10] sm:$0xf]
        %v266 = vld [vmem:[#allocation5 + $0x14] sm:$0xf]
        %v267 = vld [vmem:[#allocation5 + $0x18] sm:$0xf]
        %v268 = vld [vmem:[#allocation5 + $0x1c] sm:$0xf]
        %v269 = vld [vmem:[#allocation5 + $0x20] sm:$0xf]
        %v270 = vld [vmem:[#allocation5 + $0x24] sm:$0xf]
        %v271 = vld [vmem:[#allocation5 + $0x28] sm:$0xf]
        %v272 = vld [vmem:[#allocation5 + $0x2c] sm:$0xf]
        %v273 = vld [vmem:[#allocation5 + $0x30] sm:$0xf]
        %v274 = vld [vmem:[#allocation5 + $0x34] sm:$0xf]
        %v275 = vld [vmem:[#allocation5 + $0x38] sm:$0xf]
        %v276 = vld [vmem:[#allocation5 + $0x3c] sm:$0xf]
        %v277 = vld [vmem:[#allocation5 + $0x40] sm:$0xf]
        %v278 = vld [vmem:[#allocation5 + $0x44] sm:$0xf]
        %v279 = vld [vmem:[#allocation5 + $0x48] sm:$0xf]
        %v280 = vld [vmem:[#allocation5 + $0x4c] sm:$0xf]
        %v281 = vld [vmem:[#allocation5 + $0x50] sm:$0xf]
        %v282 = vld [vmem:[#allocation5 + $0x54] sm:$0xf]
        %v283 = vld [vmem:[#allocation5 + $0x58] sm:$0xf]
        %v284 = vld [vmem:[#allocation5 + $0x5c] sm:$0xf]
        %v285 = vld [vmem:[#allocation5 + $0x60] sm:$0xf]
        %v286 = vld [vmem:[#allocation5 + $0x64] sm:$0xf]
        %v287 = vld [vmem:[#allocation5 + $0x68] sm:$0xf]
        %v288 = vld [vmem:[#allocation5 + $0x6c] sm:$0xf]
        %v289 = vld [vmem:[#allocation5 + $0x70] sm:$0xf]
        %v290 = vld [vmem:[#allocation5 + $0x74] sm:$0xf]
        %v291 = vld [vmem:[#allocation5 + $0x78] sm:$0xf]
        %v292 = vld [vmem:[#allocation5 + $0x7c] sm:$0xf]
        %v293 = vld [vmem:[%s213 + $0x80] sm:$0x11]
        %s294 = scalar_lea.vmem [#allocation5], 128
        %v295 = vld [vmem:[%s294] sm:$0xf]
        %v296 = vld [vmem:[%s294 + $0x4] sm:$0xf]
        %v297 = vld [vmem:[%s294 + $0x8] sm:$0xf]
        %v298 = vld [vmem:[%s294 + $0xc] sm:$0xf]
        %v299 = vld [vmem:[%s294 + $0x10] sm:$0xf]
        %v300 = vld [vmem:[%s294 + $0x14] sm:$0xf]
        %v301 = vld [vmem:[%s294 + $0x18] sm:$0xf]
        %v302 = vld [vmem:[%s294 + $0x1c] sm:$0xf]
        %v303 = vld [vmem:[%s294 + $0x20] sm:$0xf]
        %v304 = vld [vmem:[%s294 + $0x24] sm:$0xf]
        %v305 = vld [vmem:[%s294 + $0x28] sm:$0xf]
        %v306 = vld [vmem:[%s294 + $0x2c] sm:$0xf]
        %v307 = vld [vmem:[%s294 + $0x30] sm:$0xf]
        %v308 = vld [vmem:[%s294 + $0x34] sm:$0xf]
        %v309 = vld [vmem:[%s294 + $0x38] sm:$0xf]
        %v310 = vld [vmem:[%s294 + $0x3c] sm:$0xf]
        %v311 = vld [vmem:[%s294 + $0x40] sm:$0xf]
        %v312 = vld [vmem:[%s294 + $0x44] sm:$0xf]
        %v313 = vld [vmem:[%s294 + $0x48] sm:$0xf]
        %v314 = vld [vmem:[%s294 + $0x4c] sm:$0xf]
        %v315 = vld [vmem:[%s294 + $0x50] sm:$0xf]
        %v316 = vld [vmem:[%s294 + $0x54] sm:$0xf]
        %v317 = vld [vmem:[%s294 + $0x58] sm:$0xf]
        %v318 = vld [vmem:[%s294 + $0x5c] sm:$0xf]
        %v319 = vld [vmem:[%s294 + $0x60] sm:$0xf]
        %v320 = vld [vmem:[%s294 + $0x64] sm:$0xf]
        %v321 = vld [vmem:[%s294 + $0x68] sm:$0xf]
        %v322 = vld [vmem:[%s294 + $0x6c] sm:$0xf]
        %v323 = vld [vmem:[%s294 + $0x70] sm:$0xf]
        %v324 = vld [vmem:[%s294 + $0x74] sm:$0xf]
        %v325 = vld [vmem:[%s294 + $0x78] sm:$0xf]
        %v326 = vld [vmem:[%s294 + $0x7c] sm:$0xf]
        %v344 = vunpack.c.l.b16 %v245
        %v345 = vunpack.c.h.b16 %v245
        %v346 = vunpack.c.l.b16 %v246
        %v347 = vunpack.c.h.b16 %v246
        %v348 = vunpack.c.l.b16 %v247
        %v349 = vunpack.c.h.b16 %v247
        %v350 = vunpack.c.l.b16 %v248
        %v351 = vunpack.c.h.b16 %v248
        %v352 = vunpack.c.l.b16 %v249
        %v353 = vunpack.c.h.b16 %v249
        %v354 = vunpack.c.l.b16 %v250
        %v355 = vunpack.c.h.b16 %v250
        %v356 = vunpack.c.l.b16 %v251
        %v357 = vunpack.c.h.b16 %v251
        %v358 = vunpack.c.l.b16 %v252
        %v359 = vunpack.c.h.b16 %v252
        %v360 = vunpack.c.l.b16 %v253
        %v361 = vunpack.c.h.b16 %v253
        %v362 = vunpack.c.l.b16 %v254
        %v363 = vunpack.c.h.b16 %v254
        %v364 = vunpack.c.l.b16 %v255
        %v365 = vunpack.c.h.b16 %v255
        %v366 = vunpack.c.l.b16 %v256
        %v367 = vunpack.c.h.b16 %v256
        %v368 = vunpack.c.l.b16 %v257
        %v369 = vunpack.c.h.b16 %v257
        %v370 = vunpack.c.l.b16 %v258
        %v371 = vunpack.c.h.b16 %v258
        %v372 = vunpack.c.l.b16 %v259
        %v373 = vunpack.c.h.b16 %v259
        %v374 = vunpack.c.l.b16 %v260
        %v375 = vunpack.c.h.b16 %v260
        %v376 = vunpack.c.l.b16 %v293
        %v377 = vunpack.c.h.b16 %v293
        %v378 = vpack.c.b16 %v346, %v344
        %v379 = vpack.c.b16 %v347, %v345
        %v380 = vpack.c.b16 %v350, %v348
        %v381 = vpack.c.b16 %v351, %v349
        %v382 = vpack.c.b16 %v354, %v352
        %v383 = vpack.c.b16 %v355, %v353
        %v384 = vpack.c.b16 %v358, %v356
        %v385 = vpack.c.b16 %v359, %v357
        %v386 = vpack.c.b16 %v362, %v360
        %v387 = vpack.c.b16 %v363, %v361
        %v388 = vpack.c.b16 %v366, %v364
        %v389 = vpack.c.b16 %v367, %v365
        %v390 = vpack.c.b16 %v370, %v368
        %v391 = vpack.c.b16 %v371, %v369
        %v392 = vpack.c.b16 %v374, %v372
        %v393 = vpack.c.b16 %v375, %v373
        %v394 = vpack.c.b16 %v376, %v376
        %v395 = vpack.c.b16 %v377, %v377
        %vm396 = vsmask.f32 7424
        %v398 = vshrl.u32 %v378, 16
        %v400 = vshll.u32 %v378, 16
        %v402 = vrot.slane %v400, 1
        %v403 = vor.u32 %v398, %v402
        %v405 = vshll.u32 %v380, 16
        %v407 = vrot.slane %v405, 1
        %v408 = vsel %vm396, %v403, %v407
        %v410 = vshrl.u32 %v379, 16
        %v412 = vshll.u32 %v379, 16
        %v414 = vrot.slane %v412, 1
        %v415 = vor.u32 %v410, %v414
        %v417 = vshll.u32 %v381, 16
        %v419 = vrot.slane %v417, 1
        %v420 = vsel %vm396, %v415, %v419
        %v421 = vshrl.u32 %v380, 16
        %v423 = vor.u32 %v421, %v407
        %v425 = vshll.u32 %v382, 16
        %v427 = vrot.slane %v425, 1
        %v428 = vsel %vm396, %v423, %v427
        %v429 = vshrl.u32 %v381, 16
        %v431 = vor.u32 %v429, %v419
        %v433 = vshll.u32 %v383, 16
        %v435 = vrot.slane %v433, 1
        %v436 = vsel %vm396, %v431, %v435
        %v437 = vshrl.u32 %v382, 16
        %v439 = vor.u32 %v437, %v427
        %v441 = vshll.u32 %v384, 16
        %v443 = vrot.slane %v441, 1
        %v444 = vsel %vm396, %v439, %v443
        %v445 = vshrl.u32 %v383, 16
        %v447 = vor.u32 %v445, %v435
        %v449 = vshll.u32 %v385, 16
        %v451 = vrot.slane %v449, 1
        %v452 = vsel %vm396, %v447, %v451
        %v453 = vshrl.u32 %v384, 16
        %v455 = vor.u32 %v453, %v443
        %v457 = vshll.u32 %v386, 16
        %v459 = vrot.slane %v457, 1
        %v460 = vsel %vm396, %v455, %v459
        %v461 = vshrl.u32 %v385, 16
        %v463 = vor.u32 %v461, %v451
        %v465 = vshll.u32 %v387, 16
        %v467 = vrot.slane %v465, 1
        %v468 = vsel %vm396, %v463, %v467
        %v469 = vshrl.u32 %v386, 16
        %v471 = vor.u32 %v469, %v459
        %v473 = vshll.u32 %v388, 16
        %v475 = vrot.slane %v473, 1
        %v476 = vsel %vm396, %v471, %v475
        %v477 = vshrl.u32 %v387, 16
        %v479 = vor.u32 %v477, %v467
        %v481 = vshll.u32 %v389, 16
        %v483 = vrot.slane %v481, 1
        %v484 = vsel %vm396, %v479, %v483
        %v485 = vshrl.u32 %v388, 16
        %v487 = vor.u32 %v485, %v475
        %v489 = vshll.u32 %v390, 16
        %v491 = vrot.slane %v489, 1
        %v492 = vsel %vm396, %v487, %v491
        %v493 = vshrl.u32 %v389, 16
        %v495 = vor.u32 %v493, %v483
        %v497 = vshll.u32 %v391, 16
        %v499 = vrot.slane %v497, 1
        %v500 = vsel %vm396, %v495, %v499
        %v501 = vshrl.u32 %v390, 16
        %v503 = vor.u32 %v501, %v491
        %v505 = vshll.u32 %v392, 16
        %v507 = vrot.slane %v505, 1
        %v508 = vsel %vm396, %v503, %v507
        %v509 = vshrl.u32 %v391, 16
        %v511 = vor.u32 %v509, %v499
        %v513 = vshll.u32 %v393, 16
        %v515 = vrot.slane %v513, 1
        %v516 = vsel %vm396, %v511, %v515
        %v517 = vshrl.u32 %v392, 16
        %v519 = vor.u32 %v517, %v507
        %v521 = vshll.u32 %v394, 16
        %v523 = vrot.slane %v521, 1
        %v524 = vsel %vm396, %v519, %v523
        %v525 = vshrl.u32 %v393, 16
        %v527 = vor.u32 %v525, %v515
        %v529 = vshll.u32 %v395, 16
        %v531 = vrot.slane %v529, 1
        %v532 = vsel %vm396, %v527, %v531
        %v581 = vunpack.c.l.b16 %v295
        %v582 = vunpack.c.l.b16 %v296
        %v583 = vunpack.c.l.b16 %v297
        %v584 = vunpack.c.l.b16 %v298
        %v585 = vunpack.c.l.b16 %v299
        %v586 = vunpack.c.l.b16 %v300
        %v587 = vunpack.c.l.b16 %v301
        %v588 = vunpack.c.l.b16 %v302
        %v589 = vunpack.c.l.b16 %v303
        %v590 = vunpack.c.l.b16 %v304
        %v591 = vunpack.c.l.b16 %v305
        %v592 = vunpack.c.l.b16 %v306
        %v593 = vunpack.c.l.b16 %v307
        %v594 = vunpack.c.l.b16 %v308
        %v595 = vunpack.c.l.b16 %v309
        %v596 = vunpack.c.l.b16 %v310
        %v597 = vunpack.c.l.b16 %v311
        %v598 = vunpack.c.l.b16 %v312
        %v599 = vunpack.c.l.b16 %v313
        %v600 = vunpack.c.l.b16 %v314
        %v601 = vunpack.c.l.b16 %v315
        %v602 = vunpack.c.l.b16 %v316
        %v603 = vunpack.c.l.b16 %v317
        %v604 = vunpack.c.l.b16 %v318
        %v605 = vunpack.c.l.b16 %v319
        %v606 = vunpack.c.l.b16 %v320
        %v607 = vunpack.c.l.b16 %v321
        %v608 = vunpack.c.l.b16 %v322
        %v609 = vunpack.c.l.b16 %v323
        %v610 = vunpack.c.l.b16 %v324
        %v611 = vunpack.c.l.b16 %v325
        %v612 = vunpack.c.l.b16 %v326
        %v613 = vpack.c.b16 %v582, %v581
        %v614 = vpack.c.b16 %v584, %v583
        %v615 = vpack.c.b16 %v586, %v585
        %v616 = vpack.c.b16 %v588, %v587
        %v617 = vpack.c.b16 %v590, %v589
        %v618 = vpack.c.b16 %v592, %v591
        %v619 = vpack.c.b16 %v594, %v593
        %v620 = vpack.c.b16 %v596, %v595
        %v621 = vpack.c.b16 %v598, %v597
        %v622 = vpack.c.b16 %v600, %v599
        %v623 = vpack.c.b16 %v602, %v601
        %v624 = vpack.c.b16 %v604, %v603
        %v625 = vpack.c.b16 %v606, %v605
        %v626 = vpack.c.b16 %v608, %v607
        %v627 = vpack.c.b16 %v610, %v609
        %v628 = vpack.c.b16 %v612, %v611
        %645 = vmatprep.subr.bf16.mxu0 0
        %646 = vmatpush1.bf16.msra.mxu0 %v613
        %647 = vmatprep.subr.bf16.mxu0 0
        %648 = vmatpush1.bf16.msra.mxu0 %v614
        %649 = vmatprep.subr.bf16.mxu0 0
        %650 = vmatpush1.bf16.msra.mxu0 %v615
        %651 = vmatprep.subr.bf16.mxu0 0
        %652 = vmatpush1.bf16.msra.mxu0 %v616
        %653 = vmatprep.subr.bf16.mxu0 0
        %654 = vmatpush1.bf16.msra.mxu0 %v617
        %655 = vmatprep.subr.bf16.mxu0 0
        %656 = vmatpush1.bf16.msra.mxu0 %v618
        %657 = vmatprep.subr.bf16.mxu0 0
        %658 = vmatpush1.bf16.msra.mxu0 %v619
        %659 = vmatprep.subr.bf16.mxu0 0
        %660 = vmatpush1.bf16.msra.mxu0 %v620
        %661 = vmatprep.subr.bf16.mxu0 0
        %662 = vmatpush1.bf16.msra.mxu0 %v621
        %663 = vmatprep.subr.bf16.mxu0 0
        %664 = vmatpush1.bf16.msra.mxu0 %v622
        %665 = vmatprep.subr.bf16.mxu0 0
        %666 = vmatpush1.bf16.msra.mxu0 %v623
        %667 = vmatprep.subr.bf16.mxu0 0
        %668 = vmatpush1.bf16.msra.mxu0 %v624
        %669 = vmatprep.subr.bf16.mxu0 0
        %670 = vmatpush1.bf16.msra.mxu0 %v625
        %671 = vmatprep.subr.bf16.mxu0 0
        %672 = vmatpush1.bf16.msra.mxu0 %v626
        %673 = vmatprep.subr.bf16.mxu0 0
        %674 = vmatpush1.bf16.msra.mxu0 %v627
        %675 = vmatprep.subr.bf16.mxu0 0
        %676 = vmatpush1.bf16.msra.mxu0 %v628
        %677 = vmatprep.mubr.bf16.mxu0 %v420
        %678 = vmatmul.mubr.bf16.gmra.mrb[0].mxu0 %v408
        %v679 = vpop.f32.mrb[0].mxu0
        %v680 = vadd.f32 0.0, %v679
        %v681 = vpop.f32.mrb[0].mxu0
        %v682 = vpop.f32.mrb[0].mxu0
        %v683 = vadd.f32 0.0, %v682
        %v684 = vpop.f32.mrb[0].mxu0
        %685 = vmatprep.mubr.bf16.mxu0 %v436
        %686 = vmatmul.mubr.bf16.gmra.mrb[0].mxu0 %v428
        %v687 = vpop.f32.mrb[0].mxu0
        %v688 = vadd.f32 0.0, %v687
        %v689 = vpop.f32.mrb[0].mxu0
        %v690 = vpop.f32.mrb[0].mxu0
        %v691 = vadd.f32 0.0, %v690
        %v692 = vpop.f32.mrb[0].mxu0
        %693 = vmatprep.mubr.bf16.mxu0 %v452
        %694 = vmatmul.mubr.bf16.gmra.mrb[0].mxu0 %v444
        %v695 = vpop.f32.mrb[0].mxu0
        %v696 = vadd.f32 0.0, %v695
        %v697 = vpop.f32.mrb[0].mxu0
        %v698 = vpop.f32.mrb[0].mxu0
        %v699 = vadd.f32 0.0, %v698
        %v700 = vpop.f32.mrb[0].mxu0
        %701 = vmatprep.mubr.bf16.mxu0 %v468
        %702 = vmatmul.mubr.bf16.gmra.mrb[0].mxu0 %v460
        %v703 = vpop.f32.mrb[0].mxu0
        %v704 = vadd.f32 0.0, %v703
        %v705 = vpop.f32.mrb[0].mxu0
        %v706 = vpop.f32.mrb[0].mxu0
        %v707 = vadd.f32 0.0, %v706
        %v708 = vpop.f32.mrb[0].mxu0
        %709 = vmatprep.mubr.bf16.mxu0 %v484
        %710 = vmatmul.mubr.bf16.gmra.mrb[0].mxu0 %v476
        %v711 = vpop.f32.mrb[0].mxu0
        %v712 = vadd.f32 0.0, %v711
        %v713 = vpop.f32.mrb[0].mxu0
        %v714 = vpop.f32.mrb[0].mxu0
        %v715 = vadd.f32 0.0, %v714
        %v716 = vpop.f32.mrb[0].mxu0
        %717 = vmatprep.mubr.bf16.mxu0 %v500
        %718 = vmatmul.mubr.bf16.gmra.mrb[0].mxu0 %v492
        %v719 = vpop.f32.mrb[0].mxu0
        %v720 = vadd.f32 0.0, %v719
        %v721 = vpop.f32.mrb[0].mxu0
        %v722 = vpop.f32.mrb[0].mxu0
        %v723 = vadd.f32 0.0, %v722
        %v724 = vpop.f32.mrb[0].mxu0
        %725 = vmatprep.mubr.bf16.mxu0 %v516
        %726 = vmatmul.mubr.bf16.gmra.mrb[0].mxu0 %v508
        %v727 = vpop.f32.mrb[0].mxu0
        %v728 = vadd.f32 0.0, %v727
        %v729 = vpop.f32.mrb[0].mxu0
        %v730 = vpop.f32.mrb[0].mxu0
        %v731 = vadd.f32 0.0, %v730
        %v732 = vpop.f32.mrb[0].mxu0
        %733 = vmatprep.mubr.bf16.mxu0 %v532
        %734 = vmatmul.mubr.bf16.gmra.mrb[0].mxu0 %v524
        %v735 = vpop.f32.mrb[0].mxu0
        %v736 = vadd.f32 0.0, %v735
        %v737 = vpop.f32.mrb[0].mxu0
        %v738 = vpop.f32.mrb[0].mxu0
        %v739 = vadd.f32 0.0, %v738
        %v740 = vpop.f32.mrb[0].mxu0
        %741 = vdwg.mxu0
        %v790 = vunpack.c.l.b16 %v261
        %v791 = vunpack.c.l.b16 %v262
        %v792 = vunpack.c.l.b16 %v263
        %v793 = vunpack.c.l.b16 %v264
        %v794 = vunpack.c.l.b16 %v265
        %v795 = vunpack.c.l.b16 %v266
        %v796 = vunpack.c.l.b16 %v267
        %v797 = vunpack.c.l.b16 %v268
        %v798 = vunpack.c.l.b16 %v269
        %v799 = vunpack.c.l.b16 %v270
        %v800 = vunpack.c.l.b16 %v271
        %v801 = vunpack.c.l.b16 %v272
        %v802 = vunpack.c.l.b16 %v273
        %v803 = vunpack.c.l.b16 %v274
        %v804 = vunpack.c.l.b16 %v275
        %v805 = vunpack.c.l.b16 %v276
        %v806 = vunpack.c.l.b16 %v277
        %v807 = vunpack.c.l.b16 %v278
        %v808 = vunpack.c.l.b16 %v279
        %v809 = vunpack.c.l.b16 %v280
        %v810 = vunpack.c.l.b16 %v281
        %v811 = vunpack.c.l.b16 %v282
        %v812 = vunpack.c.l.b16 %v283
        %v813 = vunpack.c.l.b16 %v284
        %v814 = vunpack.c.l.b16 %v285
        %v815 = vunpack.c.l.b16 %v286
        %v816 = vunpack.c.l.b16 %v287
        %v817 = vunpack.c.l.b16 %v288
        %v818 = vunpack.c.l.b16 %v289
        %v819 = vunpack.c.l.b16 %v290
        %v820 = vunpack.c.l.b16 %v291
        %v821 = vunpack.c.l.b16 %v292
        %v822 = vpack.c.b16 %v791, %v790
        %v823 = vpack.c.b16 %v793, %v792
        %v824 = vpack.c.b16 %v795, %v794
        %v825 = vpack.c.b16 %v797, %v796
        %v826 = vpack.c.b16 %v799, %v798
        %v827 = vpack.c.b16 %v801, %v800
        %v828 = vpack.c.b16 %v803, %v802
        %v829 = vpack.c.b16 %v805, %v804
        %v830 = vpack.c.b16 %v807, %v806
        %v831 = vpack.c.b16 %v809, %v808
        %v832 = vpack.c.b16 %v811, %v810
        %v833 = vpack.c.b16 %v813, %v812
        %v834 = vpack.c.b16 %v815, %v814
        %v835 = vpack.c.b16 %v817, %v816
        %v836 = vpack.c.b16 %v819, %v818
        %v837 = vpack.c.b16 %v821, %v820
        %854 = vmatprep.subr.bf16.mxu0 0
        %855 = vmatpush1.bf16.msra.mxu0 %v822
        %856 = vmatprep.subr.bf16.mxu0 0
        %857 = vmatpush1.bf16.msra.mxu0 %v823
        %858 = vmatprep.subr.bf16.mxu0 0
        %859 = vmatpush1.bf16.msra.mxu0 %v824
        %860 = vmatprep.subr.bf16.mxu0 0
        %861 = vmatpush1.bf16.msra.mxu0 %v825
        %862 = vmatprep.subr.bf16.mxu0 0
        %863 = vmatpush1.bf16.msra.mxu0 %v826
        %864 = vmatprep.subr.bf16.mxu0 0
        %865 = vmatpush1.bf16.msra.mxu0 %v827
        %866 = vmatprep.subr.bf16.mxu0 0
        %867 = vmatpush1.bf16.msra.mxu0 %v828
        %868 = vmatprep.subr.bf16.mxu0 0
        %869 = vmatpush1.bf16.msra.mxu0 %v829
        %870 = vmatprep.subr.bf16.mxu0 0
        %871 = vmatpush1.bf16.msra.mxu0 %v830
        %872 = vmatprep.subr.bf16.mxu0 0
        %873 = vmatpush1.bf16.msra.mxu0 %v831
        %874 = vmatprep.subr.bf16.mxu0 0
        %875 = vmatpush1.bf16.msra.mxu0 %v832
        %876 = vmatprep.subr.bf16.mxu0 0
        %877 = vmatpush1.bf16.msra.mxu0 %v833
        %878 = vmatprep.subr.bf16.mxu0 0
        %879 = vmatpush1.bf16.msra.mxu0 %v834
        %880 = vmatprep.subr.bf16.mxu0 0
        %881 = vmatpush1.bf16.msra.mxu0 %v835
        %882 = vmatprep.subr.bf16.mxu0 0
        %883 = vmatpush1.bf16.msra.mxu0 %v836
        %884 = vmatprep.subr.bf16.mxu0 0
        %885 = vmatpush1.bf16.msra.mxu0 %v837
        %886 = vmatprep.mubr.bf16.mxu0 %v379
        %887 = vmatmul.mubr.bf16.gmra.mrb[0].mxu0 %v378
        %v888 = vpop.f32.mrb[0].mxu0
        %v889 = vadd.f32 %v680, %v888
        %v890 = vpop.f32.mrb[0].mxu0
        %v891 = vpop.f32.mrb[0].mxu0
        %v892 = vadd.f32 %v683, %v891
        %v893 = vpop.f32.mrb[0].mxu0
        %894 = vmatprep.mubr.bf16.mxu0 %v381
        %895 = vmatmul.mubr.bf16.gmra.mrb[0].mxu0 %v380
        %v896 = vpop.f32.mrb[0].mxu0
        %v897 = vadd.f32 %v688, %v896
        %v898 = vpop.f32.mrb[0].mxu0
        %v899 = vpop.f32.mrb[0].mxu0
        %v900 = vadd.f32 %v691, %v899
        %v901 = vpop.f32.mrb[0].mxu0
        %902 = vmatprep.mubr.bf16.mxu0 %v383
        %903 = vmatmul.mubr.bf16.gmra.mrb[0].mxu0 %v382
        %v904 = vpop.f32.mrb[0].mxu0
        %v905 = vadd.f32 %v696, %v904
        %v906 = vpop.f32.mrb[0].mxu0
        %v907 = vpop.f32.mrb[0].mxu0
        %v908 = vadd.f32 %v699, %v907
        %v909 = vpop.f32.mrb[0].mxu0
        %910 = vmatprep.mubr.bf16.mxu0 %v385
        %911 = vmatmul.mubr.bf16.gmra.mrb[0].mxu0 %v384
        %v912 = vpop.f32.mrb[0].mxu0
        %v913 = vadd.f32 %v704, %v912
        %v914 = vpop.f32.mrb[0].mxu0
        %v915 = vpop.f32.mrb[0].mxu0
        %v916 = vadd.f32 %v707, %v915
        %v917 = vpop.f32.mrb[0].mxu0
        %918 = vmatprep.mubr.bf16.mxu0 %v387
        %919 = vmatmul.mubr.bf16.gmra.mrb[0].mxu0 %v386
        %v920 = vpop.f32.mrb[0].mxu0
        %v921 = vadd.f32 %v712, %v920
        %v922 = vpop.f32.mrb[0].mxu0
        %v923 = vpop.f32.mrb[0].mxu0
        %v924 = vadd.f32 %v715, %v923
        %v925 = vpop.f32.mrb[0].mxu0
        %926 = vmatprep.mubr.bf16.mxu0 %v389
        %927 = vmatmul.mubr.bf16.gmra.mrb[0].mxu0 %v388
        %v928 = vpop.f32.mrb[0].mxu0
        %v929 = vadd.f32 %v720, %v928
        %v930 = vpop.f32.mrb[0].mxu0
        %v931 = vpop.f32.mrb[0].mxu0
        %v932 = vadd.f32 %v723, %v931
        %v933 = vpop.f32.mrb[0].mxu0
        %934 = vmatprep.mubr.bf16.mxu0 %v391
        %935 = vmatmul.mubr.bf16.gmra.mrb[0].mxu0 %v390
        %v936 = vpop.f32.mrb[0].mxu0
        %v937 = vadd.f32 %v728, %v936
        %v938 = vpop.f32.mrb[0].mxu0
        %v939 = vpop.f32.mrb[0].mxu0
        %v940 = vadd.f32 %v731, %v939
        %v941 = vpop.f32.mrb[0].mxu0
        %942 = vmatprep.mubr.bf16.mxu0 %v393
        %943 = vmatmul.mubr.bf16.gmra.mrb[0].mxu0 %v392
        %v944 = vpop.f32.mrb[0].mxu0
        %v945 = vadd.f32 %v736, %v944
        %v946 = vpop.f32.mrb[0].mxu0
        %v947 = vpop.f32.mrb[0].mxu0
        %v948 = vadd.f32 %v739, %v947
        %v949 = vpop.f32.mrb[0].mxu0
        %950 = vdwg.mxu0
        %v951 = vld [vmem:[%s213 + $0x10] sm:$0xff]
        %v952 = vld [vmem:[%s213 + $0x18] sm:$0xff]
        %v953 = vld [vmem:[%s213 + $0x20] sm:$0xff]
        %v954 = vld [vmem:[%s213 + $0x28] sm:$0xff]
        %v955 = vld [vmem:[%s213 + $0x30] sm:$0xff]
        %v956 = vld [vmem:[%s213 + $0x38] sm:$0xff]
        %v957 = vld [vmem:[%s213 + $0x40] sm:$0xff]
        %v958 = vld [vmem:[%s213 + $0x48] sm:$0xff]
        %v959 = vld [vmem:[%s213 + $0x50] sm:$0xff]
        %v960 = vld [vmem:[%s213 + $0x58] sm:$0xff]
        %v961 = vld [vmem:[%s213 + $0x60] sm:$0xff]
        %v962 = vld [vmem:[%s213 + $0x68] sm:$0xff]
        %v963 = vld [vmem:[%s213 + $0x70] sm:$0xff]
        %v964 = vld [vmem:[%s213 + $0x78] sm:$0xff]
        %v965 = vld [vmem:[%s213 + $0x80] sm:$0xff]
        %v966 = vld [vmem:[%s213 + $0x88] sm:$0xff]
        %s967 = scalar_lea.vmem [#allocation5], 256
        %v968 = vld [vmem:[%s967] sm:$0xf]
        %v969 = vld [vmem:[%s967 + $0x4] sm:$0xf]
        %v970 = vld [vmem:[%s967 + $0x8] sm:$0xf]
        %v971 = vld [vmem:[%s967 + $0xc] sm:$0xf]
        %v972 = vld [vmem:[%s967 + $0x10] sm:$0xf]
        %v973 = vld [vmem:[%s967 + $0x14] sm:$0xf]
        %v974 = vld [vmem:[%s967 + $0x18] sm:$0xf]
        %v975 = vld [vmem:[%s967 + $0x1c] sm:$0xf]
        %v976 = vld [vmem:[%s967 + $0x20] sm:$0xf]
        %v977 = vld [vmem:[%s967 + $0x24] sm:$0xf]
        %v978 = vld [vmem:[%s967 + $0x28] sm:$0xf]
        %v979 = vld [vmem:[%s967 + $0x2c] sm:$0xf]
        %v980 = vld [vmem:[%s967 + $0x30] sm:$0xf]
        %v981 = vld [vmem:[%s967 + $0x34] sm:$0xf]
        %v982 = vld [vmem:[%s967 + $0x38] sm:$0xf]
        %v983 = vld [vmem:[%s967 + $0x3c] sm:$0xf]
        %v984 = vld [vmem:[%s967 + $0x40] sm:$0xf]
        %v985 = vld [vmem:[%s967 + $0x44] sm:$0xf]
        %v986 = vld [vmem:[%s967 + $0x48] sm:$0xf]
        %v987 = vld [vmem:[%s967 + $0x4c] sm:$0xf]
        %v988 = vld [vmem:[%s967 + $0x50] sm:$0xf]
        %v989 = vld [vmem:[%s967 + $0x54] sm:$0xf]
        %v990 = vld [vmem:[%s967 + $0x58] sm:$0xf]
        %v991 = vld [vmem:[%s967 + $0x5c] sm:$0xf]
        %v992 = vld [vmem:[%s967 + $0x60] sm:$0xf]
        %v993 = vld [vmem:[%s967 + $0x64] sm:$0xf]
        %v994 = vld [vmem:[%s967 + $0x68] sm:$0xf]
        %v995 = vld [vmem:[%s967 + $0x6c] sm:$0xf]
        %v996 = vld [vmem:[%s967 + $0x70] sm:$0xf]
        %v997 = vld [vmem:[%s967 + $0x74] sm:$0xf]
        %v998 = vld [vmem:[%s967 + $0x78] sm:$0xf]
        %v999 = vld [vmem:[%s967 + $0x7c] sm:$0xf]
        %v1016 = vunpack.c.l.b16 %v951
        %v1017 = vunpack.c.h.b16 %v951
        %v1018 = vunpack.c.l.b16 %v952
        %v1019 = vunpack.c.h.b16 %v952
        %v1020 = vunpack.c.l.b16 %v953
        %v1021 = vunpack.c.h.b16 %v953
        %v1022 = vunpack.c.l.b16 %v954
        %v1023 = vunpack.c.h.b16 %v954
        %v1024 = vunpack.c.l.b16 %v955
        %v1025 = vunpack.c.h.b16 %v955
        %v1026 = vunpack.c.l.b16 %v956
        %v1027 = vunpack.c.h.b16 %v956
        %v1028 = vunpack.c.l.b16 %v957
        %v1029 = vunpack.c.h.b16 %v957
        %v1030 = vunpack.c.l.b16 %v958
        %v1031 = vunpack.c.h.b16 %v958
        %v1032 = vunpack.c.l.b16 %v959
        %v1033 = vunpack.c.h.b16 %v959
        %v1034 = vunpack.c.l.b16 %v960
        %v1035 = vunpack.c.h.b16 %v960
        %v1036 = vunpack.c.l.b16 %v961
        %v1037 = vunpack.c.h.b16 %v961
        %v1038 = vunpack.c.l.b16 %v962
        %v1039 = vunpack.c.h.b16 %v962
        %v1040 = vunpack.c.l.b16 %v963
        %v1041 = vunpack.c.h.b16 %v963
        %v1042 = vunpack.c.l.b16 %v964
        %v1043 = vunpack.c.h.b16 %v964
        %v1044 = vunpack.c.l.b16 %v965
        %v1045 = vunpack.c.h.b16 %v965
        %v1046 = vunpack.c.l.b16 %v966
        %v1047 = vunpack.c.h.b16 %v966
        %v1048 = vpack.c.b16 %v1018, %v1016
        %v1049 = vpack.c.b16 %v1019, %v1017
        %v1050 = vpack.c.b16 %v1022, %v1020
        %v1051 = vpack.c.b16 %v1023, %v1021
        %v1052 = vpack.c.b16 %v1026, %v1024
        %v1053 = vpack.c.b16 %v1027, %v1025
        %v1054 = vpack.c.b16 %v1030, %v1028
        %v1055 = vpack.c.b16 %v1031, %v1029
        %v1056 = vpack.c.b16 %v1034, %v1032
        %v1057 = vpack.c.b16 %v1035, %v1033
        %v1058 = vpack.c.b16 %v1038, %v1036
        %v1059 = vpack.c.b16 %v1039, %v1037
        %v1060 = vpack.c.b16 %v1042, %v1040
        %v1061 = vpack.c.b16 %v1043, %v1041
        %v1062 = vpack.c.b16 %v1046, %v1044
        %v1063 = vpack.c.b16 %v1047, %v1045
        %v1112 = vunpack.c.l.b16 %v968
        %v1113 = vunpack.c.l.b16 %v969
        %v1114 = vunpack.c.l.b16 %v970
        %v1115 = vunpack.c.l.b16 %v971
        %v1116 = vunpack.c.l.b16 %v972
        %v1117 = vunpack.c.l.b16 %v973
        %v1118 = vunpack.c.l.b16 %v974
        %v1119 = vunpack.c.l.b16 %v975
        %v1120 = vunpack.c.l.b16 %v976
        %v1121 = vunpack.c.l.b16 %v977
        %v1122 = vunpack.c.l.b16 %v978
        %v1123 = vunpack.c.l.b16 %v979
        %v1124 = vunpack.c.l.b16 %v980
        %v1125 = vunpack.c.l.b16 %v981
        %v1126 = vunpack.c.l.b16 %v982
        %v1127 = vunpack.c.l.b16 %v983
        %v1128 = vunpack.c.l.b16 %v984
        %v1129 = vunpack.c.l.b16 %v985
        %v1130 = vunpack.c.l.b16 %v986
        %v1131 = vunpack.c.l.b16 %v987
        %v1132 = vunpack.c.l.b16 %v988
        %v1133 = vunpack.c.l.b16 %v989
        %v1134 = vunpack.c.l.b16 %v990
        %v1135 = vunpack.c.l.b16 %v991
        %v1136 = vunpack.c.l.b16 %v992
        %v1137 = vunpack.c.l.b16 %v993
        %v1138 = vunpack.c.l.b16 %v994
        %v1139 = vunpack.c.l.b16 %v995
        %v1140 = vunpack.c.l.b16 %v996
        %v1141 = vunpack.c.l.b16 %v997
        %v1142 = vunpack.c.l.b16 %v998
        %v1143 = vunpack.c.l.b16 %v999
        %v1144 = vpack.c.b16 %v1113, %v1112
        %v1145 = vpack.c.b16 %v1115, %v1114
        %v1146 = vpack.c.b16 %v1117, %v1116
        %v1147 = vpack.c.b16 %v1119, %v1118
        %v1148 = vpack.c.b16 %v1121, %v1120
        %v1149 = vpack.c.b16 %v1123, %v1122
        %v1150 = vpack.c.b16 %v1125, %v1124
        %v1151 = vpack.c.b16 %v1127, %v1126
        %v1152 = vpack.c.b16 %v1129, %v1128
        %v1153 = vpack.c.b16 %v1131, %v1130
        %v1154 = vpack.c.b16 %v1133, %v1132
        %v1155 = vpack.c.b16 %v1135, %v1134
        %v1156 = vpack.c.b16 %v1137, %v1136
        %v1157 = vpack.c.b16 %v1139, %v1138
        %v1158 = vpack.c.b16 %v1141, %v1140
        %v1159 = vpack.c.b16 %v1143, %v1142
        %1176 = vmatprep.subr.bf16.mxu0 0
        %1177 = vmatpush1.bf16.msra.mxu0 %v1144
        %1178 = vmatprep.subr.bf16.mxu0 0
        %1179 = vmatpush1.bf16.msra.mxu0 %v1145
        %1180 = vmatprep.subr.bf16.mxu0 0
        %1181 = vmatpush1.bf16.msra.mxu0 %v1146
        %1182 = vmatprep.subr.bf16.mxu0 0
        %1183 = vmatpush1.bf16.msra.mxu0 %v1147
        %1184 = vmatprep.subr.bf16.mxu0 0
        %1185 = vmatpush1.bf16.msra.mxu0 %v1148
        %1186 = vmatprep.subr.bf16.mxu0 0
        %1187 = vmatpush1.bf16.msra.mxu0 %v1149
        %1188 = vmatprep.subr.bf16.mxu0 0
        %1189 = vmatpush1.bf16.msra.mxu0 %v1150
        %1190 = vmatprep.subr.bf16.mxu0 0
        %1191 = vmatpush1.bf16.msra.mxu0 %v1151
        %1192 = vmatprep.subr.bf16.mxu0 0
        %1193 = vmatpush1.bf16.msra.mxu0 %v1152
        %1194 = vmatprep.subr.bf16.mxu0 0
        %1195 = vmatpush1.bf16.msra.mxu0 %v1153
        %1196 = vmatprep.subr.bf16.mxu0 0
        %1197 = vmatpush1.bf16.msra.mxu0 %v1154
        %1198 = vmatprep.subr.bf16.mxu0 0
        %1199 = vmatpush1.bf16.msra.mxu0 %v1155
        %1200 = vmatprep.subr.bf16.mxu0 0
        %1201 = vmatpush1.bf16.msra.mxu0 %v1156
        %1202 = vmatprep.subr.bf16.mxu0 0
        %1203 = vmatpush1.bf16.msra.mxu0 %v1157
        %1204 = vmatprep.subr.bf16.mxu0 0
        %1205 = vmatpush1.bf16.msra.mxu0 %v1158
        %1206 = vmatprep.subr.bf16.mxu0 0
        %1207 = vmatpush1.bf16.msra.mxu0 %v1159
        %1208 = vmatprep.mubr.bf16.mxu0 %v1049
        %1209 = vmatmul.mubr.bf16.gmra.mrb[0].mxu0 %v1048
        %v1210 = vpop.f32.mrb[0].mxu0
        %v1211 = vadd.f32 0.0, %v1210
        %v1212 = vpop.f32.mrb[0].mxu0
        %v1213 = vpop.f32.mrb[0].mxu0
        %v1214 = vadd.f32 0.0, %v1213
        %v1215 = vpop.f32.mrb[0].mxu0
        %1216 = vmatprep.mubr.bf16.mxu0 %v1051
        %1217 = vmatmul.mubr.bf16.gmra.mrb[0].mxu0 %v1050
        %v1218 = vpop.f32.mrb[0].mxu0
        %v1219 = vadd.f32 0.0, %v1218
        %v1220 = vpop.f32.mrb[0].mxu0
        %v1221 = vpop.f32.mrb[0].mxu0
        %v1222 = vadd.f32 0.0, %v1221
        %v1223 = vpop.f32.mrb[0].mxu0
        %1224 = vmatprep.mubr.bf16.mxu0 %v1053
        %1225 = vmatmul.mubr.bf16.gmra.mrb[0].mxu0 %v1052
        %v1226 = vpop.f32.mrb[0].mxu0
        %v1227 = vadd.f32 0.0, %v1226
        %v1228 = vpop.f32.mrb[0].mxu0
        %v1229 = vpop.f32.mrb[0].mxu0
        %v1230 = vadd.f32 0.0, %v1229
        %v1231 = vpop.f32.mrb[0].mxu0
        %1232 = vmatprep.mubr.bf16.mxu0 %v1055
        %1233 = vmatmul.mubr.bf16.gmra.mrb[0].mxu0 %v1054
        %v1234 = vpop.f32.mrb[0].mxu0
        %v1235 = vadd.f32 0.0, %v1234
        %v1236 = vpop.f32.mrb[0].mxu0
        %v1237 = vpop.f32.mrb[0].mxu0
        %v1238 = vadd.f32 0.0, %v1237
        %v1239 = vpop.f32.mrb[0].mxu0
        %1240 = vmatprep.mubr.bf16.mxu0 %v1057
        %1241 = vmatmul.mubr.bf16.gmra.mrb[0].mxu0 %v1056
        %v1242 = vpop.f32.mrb[0].mxu0
        %v1243 = vadd.f32 0.0, %v1242
        %v1244 = vpop.f32.mrb[0].mxu0
        %v1245 = vpop.f32.mrb[0].mxu0
        %v1246 = vadd.f32 0.0, %v1245
        %v1247 = vpop.f32.mrb[0].mxu0
        %1248 = vmatprep.mubr.bf16.mxu0 %v1059
        %1249 = vmatmul.mubr.bf16.gmra.mrb[0].mxu0 %v1058
        %v1250 = vpop.f32.mrb[0].mxu0
        %v1251 = vadd.f32 0.0, %v1250
        %v1252 = vpop.f32.mrb[0].mxu0
        %v1253 = vpop.f32.mrb[0].mxu0
        %v1254 = vadd.f32 0.0, %v1253
        %v1255 = vpop.f32.mrb[0].mxu0
        %1256 = vmatprep.mubr.bf16.mxu0 %v1061
        %1257 = vmatmul.mubr.bf16.gmra.mrb[0].mxu0 %v1060
        %v1258 = vpop.f32.mrb[0].mxu0
        %v1259 = vadd.f32 0.0, %v1258
        %v1260 = vpop.f32.mrb[0].mxu0
        %v1261 = vpop.f32.mrb[0].mxu0
        %v1262 = vadd.f32 0.0, %v1261
        %v1263 = vpop.f32.mrb[0].mxu0
        %1264 = vmatprep.mubr.bf16.mxu0 %v1063
        %1265 = vmatmul.mubr.bf16.gmra.mrb[0].mxu0 %v1062
        %v1266 = vpop.f32.mrb[0].mxu0
        %v1267 = vadd.f32 0.0, %v1266
        %v1268 = vpop.f32.mrb[0].mxu0
        %v1269 = vpop.f32.mrb[0].mxu0
        %v1270 = vadd.f32 0.0, %v1269
        %v1271 = vpop.f32.mrb[0].mxu0
        %1272 = vdwg.mxu0
        %v1273 = vadd.f32 %v889, %v1211
        %v1274 = vadd.f32 %v892, %v1214
        %v1275 = vadd.f32 %v897, %v1219
        %v1276 = vadd.f32 %v900, %v1222
        %v1277 = vadd.f32 %v905, %v1227
        %v1278 = vadd.f32 %v908, %v1230
        %v1279 = vadd.f32 %v913, %v1235
        %v1280 = vadd.f32 %v916, %v1238
        %v1281 = vadd.f32 %v921, %v1243
        %v1282 = vadd.f32 %v924, %v1246
        %v1283 = vadd.f32 %v929, %v1251
        %v1284 = vadd.f32 %v932, %v1254
        %v1285 = vadd.f32 %v937, %v1259
        %v1286 = vadd.f32 %v940, %v1262
        %v1287 = vadd.f32 %v945, %v1267
        %v1288 = vadd.f32 %v948, %v1270
        %v1289 = vld [vmem:[%s213 + $0x10] sm:$0xff]
        %v1290 = vld [vmem:[%s213 + $0x18] sm:$0xff]
        %v1291 = vld [vmem:[%s213 + $0x20] sm:$0xff]
        %v1292 = vld [vmem:[%s213 + $0x28] sm:$0xff]
        %v1293 = vld [vmem:[%s213 + $0x30] sm:$0xff]
        %v1294 = vld [vmem:[%s213 + $0x38] sm:$0xff]
        %v1295 = vld [vmem:[%s213 + $0x40] sm:$0xff]
        %v1296 = vld [vmem:[%s213 + $0x48] sm:$0xff]
        %v1297 = vld [vmem:[%s213 + $0x50] sm:$0xff]
        %v1298 = vld [vmem:[%s213 + $0x58] sm:$0xff]
        %v1299 = vld [vmem:[%s213 + $0x60] sm:$0xff]
        %v1300 = vld [vmem:[%s213 + $0x68] sm:$0xff]
        %v1301 = vld [vmem:[%s213 + $0x70] sm:$0xff]
        %v1302 = vld [vmem:[%s213 + $0x78] sm:$0xff]
        %v1303 = vld [vmem:[%s213 + $0x80] sm:$0xff]
        %v1304 = vld [vmem:[%s213 + $0x88] sm:$0xff]
        %v1305 = vld [vmem:[%s213 + $0x90] sm:$0x11]
        %s1306 = scalar_lea.vmem [#allocation5], 384
        %v1307 = vld [vmem:[%s1306] sm:$0xf]
        %v1308 = vld [vmem:[%s1306 + $0x4] sm:$0xf]
        %v1309 = vld [vmem:[%s1306 + $0x8] sm:$0xf]
        %v1310 = vld [vmem:[%s1306 + $0xc] sm:$0xf]
        %v1311 = vld [vmem:[%s1306 + $0x10] sm:$0xf]
        %v1312 = vld [vmem:[%s1306 + $0x14] sm:$0xf]
        %v1313 = vld [vmem:[%s1306 + $0x18] sm:$0xf]
        %v1314 = vld [vmem:[%s1306 + $0x1c] sm:$0xf]
        %v1315 = vld [vmem:[%s1306 + $0x20] sm:$0xf]
        %v1316 = vld [vmem:[%s1306 + $0x24] sm:$0xf]
        %v1317 = vld [vmem:[%s1306 + $0x28] sm:$0xf]
        %v1318 = vld [vmem:[%s1306 + $0x2c] sm:$0xf]
        %v1319 = vld [vmem:[%s1306 + $0x30] sm:$0xf]
        %v1320 = vld [vmem:[%s1306 + $0x34] sm:$0xf]
        %v1321 = vld [vmem:[%s1306 + $0x38] sm:$0xf]
        %v1322 = vld [vmem:[%s1306 + $0x3c] sm:$0xf]
        %v1323 = vld [vmem:[%s1306 + $0x40] sm:$0xf]
        %v1324 = vld [vmem:[%s1306 + $0x44] sm:$0xf]
        %v1325 = vld [vmem:[%s1306 + $0x48] sm:$0xf]
        %v1326 = vld [vmem:[%s1306 + $0x4c] sm:$0xf]
        %v1327 = vld [vmem:[%s1306 + $0x50] sm:$0xf]
        %v1328 = vld [vmem:[%s1306 + $0x54] sm:$0xf]
        %v1329 = vld [vmem:[%s1306 + $0x58] sm:$0xf]
        %v1330 = vld [vmem:[%s1306 + $0x5c] sm:$0xf]
        %v1331 = vld [vmem:[%s1306 + $0x60] sm:$0xf]
        %v1332 = vld [vmem:[%s1306 + $0x64] sm:$0xf]
        %v1333 = vld [vmem:[%s1306 + $0x68] sm:$0xf]
        %v1334 = vld [vmem:[%s1306 + $0x6c] sm:$0xf]
        %v1335 = vld [vmem:[%s1306 + $0x70] sm:$0xf]
        %v1336 = vld [vmem:[%s1306 + $0x74] sm:$0xf]
        %v1337 = vld [vmem:[%s1306 + $0x78] sm:$0xf]
        %v1338 = vld [vmem:[%s1306 + $0x7c] sm:$0xf]
        %v1356 = vunpack.c.l.b16 %v1289
        %v1357 = vunpack.c.h.b16 %v1289
        %v1358 = vunpack.c.l.b16 %v1290
        %v1359 = vunpack.c.h.b16 %v1290
        %v1360 = vunpack.c.l.b16 %v1291
        %v1361 = vunpack.c.h.b16 %v1291
        %v1362 = vunpack.c.l.b16 %v1292
        %v1363 = vunpack.c.h.b16 %v1292
        %v1364 = vunpack.c.l.b16 %v1293
        %v1365 = vunpack.c.h.b16 %v1293
        %v1366 = vunpack.c.l.b16 %v1294
        %v1367 = vunpack.c.h.b16 %v1294
        %v1368 = vunpack.c.l.b16 %v1295
        %v1369 = vunpack.c.h.b16 %v1295
        %v1370 = vunpack.c.l.b16 %v1296
        %v1371 = vunpack.c.h.b16 %v1296
        %v1372 = vunpack.c.l.b16 %v1297
        %v1373 = vunpack.c.h.b16 %v1297
        %v1374 = vunpack.c.l.b16 %v1298
        %v1375 = vunpack.c.h.b16 %v1298
        %v1376 = vunpack.c.l.b16 %v1299
        %v1377 = vunpack.c.h.b16 %v1299
        %v1378 = vunpack.c.l.b16 %v1300
        %v1379 = vunpack.c.h.b16 %v1300
        %v1380 = vunpack.c.l.b16 %v1301
        %v1381 = vunpack.c.h.b16 %v1301
        %v1382 = vunpack.c.l.b16 %v1302
        %v1383 = vunpack.c.h.b16 %v1302
        %v1384 = vunpack.c.l.b16 %v1303
        %v1385 = vunpack.c.h.b16 %v1303
        %v1386 = vunpack.c.l.b16 %v1304
        %v1387 = vunpack.c.h.b16 %v1304
        %v1388 = vunpack.c.l.b16 %v1305
        %v1389 = vunpack.c.h.b16 %v1305
        %v1390 = vpack.c.b16 %v1358, %v1356
        %v1391 = vpack.c.b16 %v1359, %v1357
        %v1392 = vpack.c.b16 %v1362, %v1360
        %v1393 = vpack.c.b16 %v1363, %v1361
        %v1394 = vpack.c.b16 %v1366, %v1364
        %v1395 = vpack.c.b16 %v1367, %v1365
        %v1396 = vpack.c.b16 %v1370, %v1368
        %v1397 = vpack.c.b16 %v1371, %v1369
        %v1398 = vpack.c.b16 %v1374, %v1372
        %v1399 = vpack.c.b16 %v1375, %v1373
        %v1400 = vpack.c.b16 %v1378, %v1376
        %v1401 = vpack.c.b16 %v1379, %v1377
        %v1402 = vpack.c.b16 %v1382, %v1380
        %v1403 = vpack.c.b16 %v1383, %v1381
        %v1404 = vpack.c.b16 %v1386, %v1384
        %v1405 = vpack.c.b16 %v1387, %v1385
        %v1406 = vpack.c.b16 %v1388, %v1388
        %v1407 = vpack.c.b16 %v1389, %v1389
        %v1409 = vshrl.u32 %v1390, 16
        %v1411 = vshll.u32 %v1390, 16
        %v1413 = vrot.slane %v1411, 1
        %v1414 = vor.u32 %v1409, %v1413
        %v1416 = vshll.u32 %v1392, 16
        %v1418 = vrot.slane %v1416, 1
        %v1419 = vsel %vm396, %v1414, %v1418
        %v1421 = vshrl.u32 %v1391, 16
        %v1423 = vshll.u32 %v1391, 16
        %v1425 = vrot.slane %v1423, 1
        %v1426 = vor.u32 %v1421, %v1425
        %v1428 = vshll.u32 %v1393, 16
        %v1430 = vrot.slane %v1428, 1
        %v1431 = vsel %vm396, %v1426, %v1430
        %v1432 = vshrl.u32 %v1392, 16
        %v1434 = vor.u32 %v1432, %v1418
        %v1436 = vshll.u32 %v1394, 16
        %v1438 = vrot.slane %v1436, 1
        %v1439 = vsel %vm396, %v1434, %v1438
        %v1440 = vshrl.u32 %v1393, 16
        %v1442 = vor.u32 %v1440, %v1430
        %v1444 = vshll.u32 %v1395, 16
        %v1446 = vrot.slane %v1444, 1
        %v1447 = vsel %vm396, %v1442, %v1446
        %v1448 = vshrl.u32 %v1394, 16
        %v1450 = vor.u32 %v1448, %v1438
        %v1452 = vshll.u32 %v1396, 16
        %v1454 = vrot.slane %v1452, 1
        %v1455 = vsel %vm396, %v1450, %v1454
        %v1456 = vshrl.u32 %v1395, 16
        %v1458 = vor.u32 %v1456, %v1446
        %v1460 = vshll.u32 %v1397, 16
        %v1462 = vrot.slane %v1460, 1
        %v1463 = vsel %vm396, %v1458, %v1462
        %v1464 = vshrl.u32 %v1396, 16
        %v1466 = vor.u32 %v1464, %v1454
        %v1468 = vshll.u32 %v1398, 16
        %v1470 = vrot.slane %v1468, 1
        %v1471 = vsel %vm396, %v1466, %v1470
        %v1472 = vshrl.u32 %v1397, 16
        %v1474 = vor.u32 %v1472, %v1462
        %v1476 = vshll.u32 %v1399, 16
        %v1478 = vrot.slane %v1476, 1
        %v1479 = vsel %vm396, %v1474, %v1478
        %v1480 = vshrl.u32 %v1398, 16
        %v1482 = vor.u32 %v1480, %v1470
        %v1484 = vshll.u32 %v1400, 16
        %v1486 = vrot.slane %v1484, 1
        %v1487 = vsel %vm396, %v1482, %v1486
        %v1488 = vshrl.u32 %v1399, 16
        %v1490 = vor.u32 %v1488, %v1478
        %v1492 = vshll.u32 %v1401, 16
        %v1494 = vrot.slane %v1492, 1
        %v1495 = vsel %vm396, %v1490, %v1494
        %v1496 = vshrl.u32 %v1400, 16
        %v1498 = vor.u32 %v1496, %v1486
        %v1500 = vshll.u32 %v1402, 16
        %v1502 = vrot.slane %v1500, 1
        %v1503 = vsel %vm396, %v1498, %v1502
        %v1504 = vshrl.u32 %v1401, 16
        %v1506 = vor.u32 %v1504, %v1494
        %v1508 = vshll.u32 %v1403, 16
        %v1510 = vrot.slane %v1508, 1
        %v1511 = vsel %vm396, %v1506, %v1510
        %v1512 = vshrl.u32 %v1402, 16
        %v1514 = vor.u32 %v1512, %v1502
        %v1516 = vshll.u32 %v1404, 16
        %v1518 = vrot.slane %v1516, 1
        %v1519 = vsel %vm396, %v1514, %v1518
        %v1520 = vshrl.u32 %v1403, 16
        %v1522 = vor.u32 %v1520, %v1510
        %v1524 = vshll.u32 %v1405, 16
        %v1526 = vrot.slane %v1524, 1
        %v1527 = vsel %vm396, %v1522, %v1526
        %v1528 = vshrl.u32 %v1404, 16
        %v1530 = vor.u32 %v1528, %v1518
        %v1532 = vshll.u32 %v1406, 16
        %v1534 = vrot.slane %v1532, 1
        %v1535 = vsel %vm396, %v1530, %v1534
        %v1536 = vshrl.u32 %v1405, 16
        %v1538 = vor.u32 %v1536, %v1526
        %v1540 = vshll.u32 %v1407, 16
        %v1542 = vrot.slane %v1540, 1
        %v1543 = vsel %vm396, %v1538, %v1542
        %v1592 = vunpack.c.l.b16 %v1307
        %v1593 = vunpack.c.l.b16 %v1308
        %v1594 = vunpack.c.l.b16 %v1309
        %v1595 = vunpack.c.l.b16 %v1310
        %v1596 = vunpack.c.l.b16 %v1311
        %v1597 = vunpack.c.l.b16 %v1312
        %v1598 = vunpack.c.l.b16 %v1313
        %v1599 = vunpack.c.l.b16 %v1314
        %v1600 = vunpack.c.l.b16 %v1315
        %v1601 = vunpack.c.l.b16 %v1316
        %v1602 = vunpack.c.l.b16 %v1317
        %v1603 = vunpack.c.l.b16 %v1318
        %v1604 = vunpack.c.l.b16 %v1319
        %v1605 = vunpack.c.l.b16 %v1320
        %v1606 = vunpack.c.l.b16 %v1321
        %v1607 = vunpack.c.l.b16 %v1322
        %v1608 = vunpack.c.l.b16 %v1323
        %v1609 = vunpack.c.l.b16 %v1324
        %v1610 = vunpack.c.l.b16 %v1325
        %v1611 = vunpack.c.l.b16 %v1326
        %v1612 = vunpack.c.l.b16 %v1327
        %v1613 = vunpack.c.l.b16 %v1328
        %v1614 = vunpack.c.l.b16 %v1329
        %v1615 = vunpack.c.l.b16 %v1330
        %v1616 = vunpack.c.l.b16 %v1331
        %v1617 = vunpack.c.l.b16 %v1332
        %v1618 = vunpack.c.l.b16 %v1333
        %v1619 = vunpack.c.l.b16 %v1334
        %v1620 = vunpack.c.l.b16 %v1335
        %v1621 = vunpack.c.l.b16 %v1336
        %v1622 = vunpack.c.l.b16 %v1337
        %v1623 = vunpack.c.l.b16 %v1338
        %v1624 = vpack.c.b16 %v1593, %v1592
        %v1625 = vpack.c.b16 %v1595, %v1594
        %v1626 = vpack.c.b16 %v1597, %v1596
        %v1627 = vpack.c.b16 %v1599, %v1598
        %v1628 = vpack.c.b16 %v1601, %v1600
        %v1629 = vpack.c.b16 %v1603, %v1602
        %v1630 = vpack.c.b16 %v1605, %v1604
        %v1631 = vpack.c.b16 %v1607, %v1606
        %v1632 = vpack.c.b16 %v1609, %v1608
        %v1633 = vpack.c.b16 %v1611, %v1610
        %v1634 = vpack.c.b16 %v1613, %v1612
        %v1635 = vpack.c.b16 %v1615, %v1614
        %v1636 = vpack.c.b16 %v1617, %v1616
        %v1637 = vpack.c.b16 %v1619, %v1618
        %v1638 = vpack.c.b16 %v1621, %v1620
        %v1639 = vpack.c.b16 %v1623, %v1622
        %1656 = vmatprep.subr.bf16.mxu0 0
        %1657 = vmatpush1.bf16.msra.mxu0 %v1624
        %1658 = vmatprep.subr.bf16.mxu0 0
        %1659 = vmatpush1.bf16.msra.mxu0 %v1625
        %1660 = vmatprep.subr.bf16.mxu0 0
        %1661 = vmatpush1.bf16.msra.mxu0 %v1626
        %1662 = vmatprep.subr.bf16.mxu0 0
        %1663 = vmatpush1.bf16.msra.mxu0 %v1627
        %1664 = vmatprep.subr.bf16.mxu0 0
        %1665 = vmatpush1.bf16.msra.mxu0 %v1628
        %1666 = vmatprep.subr.bf16.mxu0 0
        %1667 = vmatpush1.bf16.msra.mxu0 %v1629
        %1668 = vmatprep.subr.bf16.mxu0 0
        %1669 = vmatpush1.bf16.msra.mxu0 %v1630
        %1670 = vmatprep.subr.bf16.mxu0 0
        %1671 = vmatpush1.bf16.msra.mxu0 %v1631
        %1672 = vmatprep.subr.bf16.mxu0 0
        %1673 = vmatpush1.bf16.msra.mxu0 %v1632
        %1674 = vmatprep.subr.bf16.mxu0 0
        %1675 = vmatpush1.bf16.msra.mxu0 %v1633
        %1676 = vmatprep.subr.bf16.mxu0 0
        %1677 = vmatpush1.bf16.msra.mxu0 %v1634
        %1678 = vmatprep.subr.bf16.mxu0 0
        %1679 = vmatpush1.bf16.msra.mxu0 %v1635
        %1680 = vmatprep.subr.bf16.mxu0 0
        %1681 = vmatpush1.bf16.msra.mxu0 %v1636
        %1682 = vmatprep.subr.bf16.mxu0 0
        %1683 = vmatpush1.bf16.msra.mxu0 %v1637
        %1684 = vmatprep.subr.bf16.mxu0 0
        %1685 = vmatpush1.bf16.msra.mxu0 %v1638
        %1686 = vmatprep.subr.bf16.mxu0 0
        %1687 = vmatpush1.bf16.msra.mxu0 %v1639
        %1688 = vmatprep.mubr.bf16.mxu0 %v1431
        %1689 = vmatmul.mubr.bf16.gmra.mrb[0].mxu0 %v1419
        %v1690 = vpop.f32.mrb[0].mxu0
        %v1691 = vadd.f32 0.0, %v1690
        %v1692 = vpop.f32.mrb[0].mxu0
        %v1693 = vpop.f32.mrb[0].mxu0
        %v1694 = vadd.f32 0.0, %v1693
        %v1695 = vpop.f32.mrb[0].mxu0
        %1696 = vmatprep.mubr.bf16.mxu0 %v1447
        %1697 = vmatmul.mubr.bf16.gmra.mrb[0].mxu0 %v1439
        %v1698 = vpop.f32.mrb[0].mxu0
        %v1699 = vadd.f32 0.0, %v1698
        %v1700 = vpop.f32.mrb[0].mxu0
        %v1701 = vpop.f32.mrb[0].mxu0
        %v1702 = vadd.f32 0.0, %v1701
        %v1703 = vpop.f32.mrb[0].mxu0
        %1704 = vmatprep.mubr.bf16.mxu0 %v1463
        %1705 = vmatmul.mubr.bf16.gmra.mrb[0].mxu0 %v1455
        %v1706 = vpop.f32.mrb[0].mxu0
        %v1707 = vadd.f32 0.0, %v1706
        %v1708 = vpop.f32.mrb[0].mxu0
        %v1709 = vpop.f32.mrb[0].mxu0
        %v1710 = vadd.f32 0.0, %v1709
        %v1711 = vpop.f32.mrb[0].mxu0
        %1712 = vmatprep.mubr.bf16.mxu0 %v1479
        %1713 = vmatmul.mubr.bf16.gmra.mrb[0].mxu0 %v1471
        %v1714 = vpop.f32.mrb[0].mxu0
        %v1715 = vadd.f32 0.0, %v1714
        %v1716 = vpop.f32.mrb[0].mxu0
        %v1717 = vpop.f32.mrb[0].mxu0
        %v1718 = vadd.f32 0.0, %v1717
        %v1719 = vpop.f32.mrb[0].mxu0
        %1720 = vmatprep.mubr.bf16.mxu0 %v1495
        %1721 = vmatmul.mubr.bf16.gmra.mrb[0].mxu0 %v1487
        %v1722 = vpop.f32.mrb[0].mxu0
        %v1723 = vadd.f32 0.0, %v1722
        %v1724 = vpop.f32.mrb[0].mxu0
        %v1725 = vpop.f32.mrb[0].mxu0
        %v1726 = vadd.f32 0.0, %v1725
        %v1727 = vpop.f32.mrb[0].mxu0
        %1728 = vmatprep.mubr.bf16.mxu0 %v1511
        %1729 = vmatmul.mubr.bf16.gmra.mrb[0].mxu0 %v1503
        %v1730 = vpop.f32.mrb[0].mxu0
        %v1731 = vadd.f32 0.0, %v1730
        %v1732 = vpop.f32.mrb[0].mxu0
        %v1733 = vpop.f32.mrb[0].mxu0
        %v1734 = vadd.f32 0.0, %v1733
        %v1735 = vpop.f32.mrb[0].mxu0
        %1736 = vmatprep.mubr.bf16.mxu0 %v1527
        %1737 = vmatmul.mubr.bf16.gmra.mrb[0].mxu0 %v1519
        %v1738 = vpop.f32.mrb[0].mxu0
        %v1739 = vadd.f32 0.0, %v1738
        %v1740 = vpop.f32.mrb[0].mxu0
        %v1741 = vpop.f32.mrb[0].mxu0
        %v1742 = vadd.f32 0.0, %v1741
        %v1743 = vpop.f32.mrb[0].mxu0
        %1744 = vmatprep.mubr.bf16.mxu0 %v1543
        %1745 = vmatmul.mubr.bf16.gmra.mrb[0].mxu0 %v1535
        %v1746 = vpop.f32.mrb[0].mxu0
        %v1747 = vadd.f32 0.0, %v1746
        %v1748 = vpop.f32.mrb[0].mxu0
        %v1749 = vpop.f32.mrb[0].mxu0
        %v1750 = vadd.f32 0.0, %v1749
        %v1751 = vpop.f32.mrb[0].mxu0
        %1752 = vdwg.mxu0
        %v1753 = vadd.f32 %v1273, %v1691
        %v1754 = vadd.f32 %v1274, %v1694
        %v1755 = vadd.f32 %v1275, %v1699
        %v1756 = vadd.f32 %v1276, %v1702
        %v1757 = vadd.f32 %v1277, %v1707
        %v1758 = vadd.f32 %v1278, %v1710
        %v1759 = vadd.f32 %v1279, %v1715
        %v1760 = vadd.f32 %v1280, %v1718
        %v1761 = vadd.f32 %v1281, %v1723
        %v1762 = vadd.f32 %v1282, %v1726
        %v1763 = vadd.f32 %v1283, %v1731
        %v1764 = vadd.f32 %v1284, %v1734
        %v1765 = vadd.f32 %v1285, %v1739
        %v1766 = vadd.f32 %v1286, %v1742
        %v1767 = vadd.f32 %v1287, %v1747
        %v1768 = vadd.f32 %v1288, %v1750
        %v1769 = vld [vmem:[#allocation7] sm:$0x1]
        %v1771 = vlaneseq
        %v1772 = vshrl.u32 %v1771, 7
        %v1773 = vsub.s32 0, %v1772
        %v1774 = vrot.slane %v1769, %v1773
        %v1776 = vadd.f32 %v1753, %v1774
        %v1777 = vadd.f32 %v1754, %v1774
        %v1778 = vadd.f32 %v1755, %v1774
        %v1779 = vadd.f32 %v1756, %v1774
        %v1780 = vadd.f32 %v1757, %v1774
        %v1781 = vadd.f32 %v1758, %v1774
        %v1782 = vadd.f32 %v1759, %v1774
        %v1783 = vadd.f32 %v1760, %v1774
        %v1784 = vadd.f32 %v1761, %v1774
        %v1785 = vadd.f32 %v1762, %v1774
        %v1786 = vadd.f32 %v1763, %v1774
        %v1787 = vadd.f32 %v1764, %v1774
        %v1788 = vadd.f32 %v1765, %v1774
        %v1789 = vadd.f32 %v1766, %v1774
        %v1790 = vadd.f32 %v1767, %v1774
        %v1791 = vadd.f32 %v1768, %v1774
        %v1792 = vlaneseq
        %v1793 = vshrl.u32 %v1792, 7
        %v1794 = vadd.s32 %v1793, 8
        %v1795 = vadd.s32 %v1793, 16
        %v1796 = vadd.s32 %v1793, 24
        %v1797 = vadd.s32 %v1793, 32
        %v1798 = vadd.s32 %v1793, 40
        %v1799 = vadd.s32 %v1793, 48
        %v1800 = vadd.s32 %v1793, 56
        %v1801 = vadd.s32 %v1793, 64
        %v1802 = vadd.s32 %v1793, 72
        %v1803 = vadd.s32 %v1793, 80
        %v1804 = vadd.s32 %v1793, 88
        %v1805 = vadd.s32 %v1793, 96
        %v1806 = vadd.s32 %v1793, 104
        %v1807 = vadd.s32 %v1793, 112
        %v1808 = vadd.s32 %v1793, 120
        %vm1809 = vcmp.lt.s32.totalorder %v1793, 0
        %v1810 = vsub.s32 0, %v1793
        %v1811 = vsel %vm1809, %v1810, %v1793
        %v1812 = vshrl.u32 %v1811, 4
        %v1813 = vand.u32 %v1811, 15
        %v1814 = vsub.s32 0, %v1813
        %v1815 = vsel %vm1809, %v1814, %v1813
        %vm1816 = vcmp.lt.s32.totalorder %v1794, 0
        %v1817 = vsub.s32 0, %v1794
        %v1818 = vsel %vm1816, %v1817, %v1794
        %v1819 = vshrl.u32 %v1818, 4
        %v1820 = vand.u32 %v1818, 15
        %v1821 = vsub.s32 0, %v1820
        %v1822 = vsel %vm1816, %v1821, %v1820
        %vm1823 = vcmp.lt.s32.totalorder %v1795, 0
        %v1824 = vsub.s32 0, %v1795
        %v1825 = vsel %vm1823, %v1824, %v1795
        %v1826 = vshrl.u32 %v1825, 4
        %v1827 = vand.u32 %v1825, 15
        %v1828 = vsub.s32 0, %v1827
        %v1829 = vsel %vm1823, %v1828, %v1827
        %vm1830 = vcmp.lt.s32.totalorder %v1796, 0
        %v1831 = vsub.s32 0, %v1796
        %v1832 = vsel %vm1830, %v1831, %v1796
        %v1833 = vshrl.u32 %v1832, 4
        %v1834 = vand.u32 %v1832, 15
        %v1835 = vsub.s32 0, %v1834
        %v1836 = vsel %vm1830, %v1835, %v1834
        %vm1837 = vcmp.lt.s32.totalorder %v1797, 0
        %v1838 = vsub.s32 0, %v1797
        %v1839 = vsel %vm1837, %v1838, %v1797
        %v1840 = vshrl.u32 %v1839, 4
        %v1841 = vand.u32 %v1839, 15
        %v1842 = vsub.s32 0, %v1841
        %v1843 = vsel %vm1837, %v1842, %v1841
        %vm1844 = vcmp.lt.s32.totalorder %v1798, 0
        %v1845 = vsub.s32 0, %v1798
        %v1846 = vsel %vm1844, %v1845, %v1798
        %v1847 = vshrl.u32 %v1846, 4
        %v1848 = vand.u32 %v1846, 15
        %v1849 = vsub.s32 0, %v1848
        %v1850 = vsel %vm1844, %v1849, %v1848
        %vm1851 = vcmp.lt.s32.totalorder %v1799, 0
        %v1852 = vsub.s32 0, %v1799
        %v1853 = vsel %vm1851, %v1852, %v1799
        %v1854 = vshrl.u32 %v1853, 4
        %v1855 = vand.u32 %v1853, 15
        %v1856 = vsub.s32 0, %v1855
        %v1857 = vsel %vm1851, %v1856, %v1855
        %vm1858 = vcmp.lt.s32.totalorder %v1800, 0
        %v1859 = vsub.s32 0, %v1800
        %v1860 = vsel %vm1858, %v1859, %v1800
        %v1861 = vshrl.u32 %v1860, 4
        %v1862 = vand.u32 %v1860, 15
        %v1863 = vsub.s32 0, %v1862
        %v1864 = vsel %vm1858, %v1863, %v1862
        %vm1865 = vcmp.lt.s32.totalorder %v1801, 0
        %v1866 = vsub.s32 0, %v1801
        %v1867 = vsel %vm1865, %v1866, %v1801
        %v1868 = vshrl.u32 %v1867, 4
        %v1869 = vand.u32 %v1867, 15
        %v1870 = vsub.s32 0, %v1869
        %v1871 = vsel %vm1865, %v1870, %v1869
        %vm1872 = vcmp.lt.s32.totalorder %v1802, 0
        %v1873 = vsub.s32 0, %v1802
        %v1874 = vsel %vm1872, %v1873, %v1802
        %v1875 = vshrl.u32 %v1874, 4
        %v1876 = vand.u32 %v1874, 15
        %v1877 = vsub.s32 0, %v1876
        %v1878 = vsel %vm1872, %v1877, %v1876
        %vm1879 = vcmp.lt.s32.totalorder %v1803, 0
        %v1880 = vsub.s32 0, %v1803
        %v1881 = vsel %vm1879, %v1880, %v1803
        %v1882 = vshrl.u32 %v1881, 4
        %v1883 = vand.u32 %v1881, 15
        %v1884 = vsub.s32 0, %v1883
        %v1885 = vsel %vm1879, %v1884, %v1883
        %vm1886 = vcmp.lt.s32.totalorder %v1804, 0
        %v1887 = vsub.s32 0, %v1804
        %v1888 = vsel %vm1886, %v1887, %v1804
        %v1889 = vshrl.u32 %v1888, 4
        %v1890 = vand.u32 %v1888, 15
        %v1891 = vsub.s32 0, %v1890
        %v1892 = vsel %vm1886, %v1891, %v1890
        %vm1893 = vcmp.lt.s32.totalorder %v1805, 0
        %v1894 = vsub.s32 0, %v1805
        %v1895 = vsel %vm1893, %v1894, %v1805
        %v1896 = vshrl.u32 %v1895, 4
        %v1897 = vand.u32 %v1895, 15
        %v1898 = vsub.s32 0, %v1897
        %v1899 = vsel %vm1893, %v1898, %v1897
        %vm1900 = vcmp.lt.s32.totalorder %v1806, 0
        %v1901 = vsub.s32 0, %v1806
        %v1902 = vsel %vm1900, %v1901, %v1806
        %v1903 = vshrl.u32 %v1902, 4
        %v1904 = vand.u32 %v1902, 15
        %v1905 = vsub.s32 0, %v1904
        %v1906 = vsel %vm1900, %v1905, %v1904
        %vm1907 = vcmp.lt.s32.totalorder %v1807, 0
        %v1908 = vsub.s32 0, %v1807
        %v1909 = vsel %vm1907, %v1908, %v1807
        %v1910 = vshrl.u32 %v1909, 4
        %v1911 = vand.u32 %v1909, 15
        %v1912 = vsub.s32 0, %v1911
        %v1913 = vsel %vm1907, %v1912, %v1911
        %vm1914 = vcmp.lt.s32.totalorder %v1808, 0
        %v1915 = vsub.s32 0, %v1808
        %v1916 = vsel %vm1914, %v1915, %v1808
        %v1917 = vshrl.u32 %v1916, 4
        %v1918 = vand.u32 %v1916, 15
        %v1919 = vsub.s32 0, %v1918
        %v1920 = vsel %vm1914, %v1919, %v1918
        %vm1921 = vcmp.ne.s32.totalorder %v1815, 0
        %vm1922 = vcmp.ne.s32.totalorder %v1822, 0
        %vm1923 = vcmp.ne.s32.totalorder %v1829, 0
        %vm1924 = vcmp.ne.s32.totalorder %v1836, 0
        %vm1925 = vcmp.ne.s32.totalorder %v1843, 0
        %vm1926 = vcmp.ne.s32.totalorder %v1850, 0
        %vm1927 = vcmp.ne.s32.totalorder %v1857, 0
        %vm1928 = vcmp.ne.s32.totalorder %v1864, 0
        %vm1929 = vcmp.ne.s32.totalorder %v1871, 0
        %vm1930 = vcmp.ne.s32.totalorder %v1878, 0
        %vm1931 = vcmp.ne.s32.totalorder %v1885, 0
        %vm1932 = vcmp.ne.s32.totalorder %v1892, 0
        %vm1933 = vcmp.ne.s32.totalorder %v1899, 0
        %vm1934 = vcmp.ne.s32.totalorder %v1906, 0
        %vm1935 = vcmp.ne.s32.totalorder %v1913, 0
        %vm1936 = vcmp.ne.s32.totalorder %v1920, 0
        %vm1937 = vcmp.lt.s32.totalorder %v1815, 0
        %vm1938 = vcmp.lt.s32.totalorder %v1822, 0
        %vm1939 = vcmp.lt.s32.totalorder %v1829, 0
        %vm1940 = vcmp.lt.s32.totalorder %v1836, 0
        %vm1941 = vcmp.lt.s32.totalorder %v1843, 0
        %vm1942 = vcmp.lt.s32.totalorder %v1850, 0
        %vm1943 = vcmp.lt.s32.totalorder %v1857, 0
        %vm1944 = vcmp.lt.s32.totalorder %v1864, 0
        %vm1945 = vcmp.lt.s32.totalorder %v1871, 0
        %vm1946 = vcmp.lt.s32.totalorder %v1878, 0
        %vm1947 = vcmp.lt.s32.totalorder %v1885, 0
        %vm1948 = vcmp.lt.s32.totalorder %v1892, 0
        %vm1949 = vcmp.lt.s32.totalorder %v1899, 0
        %vm1950 = vcmp.lt.s32.totalorder %v1906, 0
        %vm1951 = vcmp.lt.s32.totalorder %v1913, 0
        %vm1952 = vcmp.lt.s32.totalorder %v1920, 0
        %vm1953 = vmand %vm1937, %vm1921
        %vm1954 = vmand %vm1938, %vm1922
        %vm1955 = vmand %vm1939, %vm1923
        %vm1956 = vmand %vm1940, %vm1924
        %vm1957 = vmand %vm1941, %vm1925
        %vm1958 = vmand %vm1942, %vm1926
        %vm1959 = vmand %vm1943, %vm1927
        %vm1960 = vmand %vm1944, %vm1928
        %vm1961 = vmand %vm1945, %vm1929
        %vm1962 = vmand %vm1946, %vm1930
        %vm1963 = vmand %vm1947, %vm1931
        %vm1964 = vmand %vm1948, %vm1932
        %vm1965 = vmand %vm1949, %vm1933
        %vm1966 = vmand %vm1950, %vm1934
        %vm1967 = vmand %vm1951, %vm1935
        %vm1968 = vmand %vm1952, %vm1936
        %v1969 = vadd.s32 %v1815, 16
        %v1970 = vadd.s32 %v1822, 16
        %v1971 = vadd.s32 %v1829, 16
        %v1972 = vadd.s32 %v1836, 16
        %v1973 = vadd.s32 %v1843, 16
        %v1974 = vadd.s32 %v1850, 16
        %v1975 = vadd.s32 %v1857, 16
        %v1976 = vadd.s32 %v1864, 16
        %v1977 = vadd.s32 %v1871, 16
        %v1978 = vadd.s32 %v1878, 16
        %v1979 = vadd.s32 %v1885, 16
        %v1980 = vadd.s32 %v1892, 16
        %v1981 = vadd.s32 %v1899, 16
        %v1982 = vadd.s32 %v1906, 16
        %v1983 = vadd.s32 %v1913, 16
        %v1984 = vadd.s32 %v1920, 16
        %v1985 = vsel %vm1953, %v1969, %v1815
        %v1986 = vsel %vm1954, %v1970, %v1822
        %v1987 = vsel %vm1955, %v1971, %v1829
        %v1988 = vsel %vm1956, %v1972, %v1836
        %v1989 = vsel %vm1957, %v1973, %v1843
        %v1990 = vsel %vm1958, %v1974, %v1850
        %v1991 = vsel %vm1959, %v1975, %v1857
        %v1992 = vsel %vm1960, %v1976, %v1864
        %v1993 = vsel %vm1961, %v1977, %v1871
        %v1994 = vsel %vm1962, %v1978, %v1878
        %v1995 = vsel %vm1963, %v1979, %v1885
        %v1996 = vsel %vm1964, %v1980, %v1892
        %v1997 = vsel %vm1965, %v1981, %v1899
        %v1998 = vsel %vm1966, %v1982, %v1906
        %v1999 = vsel %vm1967, %v1983, %v1913
        %v2000 = vsel %vm1968, %v1984, %v1920
        %vm2001 = vcmp.lt.s32.totalorder %v1985, 8
        %vm2002 = vcmp.lt.s32.totalorder %v1986, 8
        %vm2003 = vcmp.lt.s32.totalorder %v1987, 8
        %vm2004 = vcmp.lt.s32.totalorder %v1988, 8
        %vm2005 = vcmp.lt.s32.totalorder %v1989, 8
        %vm2006 = vcmp.lt.s32.totalorder %v1990, 8
        %vm2007 = vcmp.lt.s32.totalorder %v1991, 8
        %vm2008 = vcmp.lt.s32.totalorder %v1992, 8
        %vm2009 = vcmp.lt.s32.totalorder %v1993, 8
        %vm2010 = vcmp.lt.s32.totalorder %v1994, 8
        %vm2011 = vcmp.lt.s32.totalorder %v1995, 8
        %vm2012 = vcmp.lt.s32.totalorder %v1996, 8
        %vm2013 = vcmp.lt.s32.totalorder %v1997, 8
        %vm2014 = vcmp.lt.s32.totalorder %v1998, 8
        %vm2015 = vcmp.lt.s32.totalorder %v1999, 8
        %vm2016 = vcmp.lt.s32.totalorder %v2000, 8
        %v2017 = vsel %vm2001, 1, 0
        %v2018 = vsel %vm2002, 1, 0
        %v2019 = vsel %vm2003, 1, 0
        %v2020 = vsel %vm2004, 1, 0
        %v2021 = vsel %vm2005, 1, 0
        %v2022 = vsel %vm2006, 1, 0
        %v2023 = vsel %vm2007, 1, 0
        %v2024 = vsel %vm2008, 1, 0
        %v2025 = vsel %vm2009, 1, 0
        %v2026 = vsel %vm2010, 1, 0
        %v2027 = vsel %vm2011, 1, 0
        %v2028 = vsel %vm2012, 1, 0
        %v2029 = vsel %vm2013, 1, 0
        %v2030 = vsel %vm2014, 1, 0
        %v2031 = vsel %vm2015, 1, 0
        %v2032 = vsel %vm2016, 1, 0
        %v2033 = vcvt.s32.f32 %v2017
        %v2034 = vcvt.s32.f32 %v2018
        %v2035 = vcvt.s32.f32 %v2019
        %v2036 = vcvt.s32.f32 %v2020
        %v2037 = vcvt.s32.f32 %v2021
        %v2038 = vcvt.s32.f32 %v2022
        %v2039 = vcvt.s32.f32 %v2023
        %v2040 = vcvt.s32.f32 %v2024
        %v2041 = vcvt.s32.f32 %v2025
        %v2042 = vcvt.s32.f32 %v2026
        %v2043 = vcvt.s32.f32 %v2027
        %v2044 = vcvt.s32.f32 %v2028
        %v2045 = vcvt.s32.f32 %v2029
        %v2046 = vcvt.s32.f32 %v2030
        %v2047 = vcvt.s32.f32 %v2031
        %v2048 = vcvt.s32.f32 %v2032
        %v2049 = vmul.f32 %v1776, %v2033
        %v2050 = vmul.f32 %v1777, %v2034
        %v2051 = vmul.f32 %v1778, %v2035
        %v2052 = vmul.f32 %v1779, %v2036
        %v2053 = vmul.f32 %v1780, %v2037
        %v2054 = vmul.f32 %v1781, %v2038
        %v2055 = vmul.f32 %v1782, %v2039
        %v2056 = vmul.f32 %v1783, %v2040
        %v2057 = vmul.f32 %v1784, %v2041
        %v2058 = vmul.f32 %v1785, %v2042
        %v2059 = vmul.f32 %v1786, %v2043
        %v2060 = vmul.f32 %v1787, %v2044
        %v2061 = vmul.f32 %v1788, %v2045
        %v2062 = vmul.f32 %v1789, %v2046
        %v2063 = vmul.f32 %v1790, %v2047
        %v2064 = vmul.f32 %v1791, %v2048
        %v2065 = vadd.f32 %v2049, %v2050
        %v2066 = vadd.f32 %v2065, %v2051
        %v2067 = vadd.f32 %v2066, %v2052
        %v2068 = vadd.f32 %v2067, %v2053
        %v2069 = vadd.f32 %v2068, %v2054
        %v2070 = vadd.f32 %v2069, %v2055
        %v2071 = vadd.f32 %v2070, %v2056
        %v2072 = vadd.f32 %v2071, %v2057
        %v2073 = vadd.f32 %v2072, %v2058
        %v2074 = vadd.f32 %v2073, %v2059
        %v2075 = vadd.f32 %v2074, %v2060
        %v2076 = vadd.f32 %v2075, %v2061
        %v2077 = vadd.f32 %v2076, %v2062
        %v2078 = vadd.f32 %v2077, %v2063
        %v2079 = vadd.f32 %v2078, %v2064
        %v2080 = vrot.slane %v2079, 4
        %v2081 = vadd.f32 %v2079, %v2080
        %v2082 = vrot.slane %v2081, 2
        %v2083 = vadd.f32 %v2081, %v2082
        %v2084 = vrot.slane %v2083, 1
        %v2085 = vadd.f32 %v2083, %v2084
        %v2086 = vmul.f32 %v2085, 0.015625
        %v2087 = vsub.f32 %v1776, %v2086
        %v2088 = vsub.f32 %v1777, %v2086
        %v2089 = vsub.f32 %v1778, %v2086
        %v2090 = vsub.f32 %v1779, %v2086
        %v2091 = vsub.f32 %v1780, %v2086
        %v2092 = vsub.f32 %v1781, %v2086
        %v2093 = vsub.f32 %v1782, %v2086
        %v2094 = vsub.f32 %v1783, %v2086
        %v2095 = vsub.f32 %v1784, %v2086
        %v2096 = vsub.f32 %v1785, %v2086
        %v2097 = vsub.f32 %v1786, %v2086
        %v2098 = vsub.f32 %v1787, %v2086
        %v2099 = vsub.f32 %v1788, %v2086
        %v2100 = vsub.f32 %v1789, %v2086
        %v2101 = vsub.f32 %v1790, %v2086
        %v2102 = vsub.f32 %v1791, %v2086
        %v2103 = vmul.f32 %v2087, %v2033
        %v2104 = vmul.f32 %v2088, %v2034
        %v2105 = vmul.f32 %v2089, %v2035
        %v2106 = vmul.f32 %v2090, %v2036
        %v2107 = vmul.f32 %v2091, %v2037
        %v2108 = vmul.f32 %v2092, %v2038
        %v2109 = vmul.f32 %v2093, %v2039
        %v2110 = vmul.f32 %v2094, %v2040
        %v2111 = vmul.f32 %v2095, %v2041
        %v2112 = vmul.f32 %v2096, %v2042
        %v2113 = vmul.f32 %v2097, %v2043
        %v2114 = vmul.f32 %v2098, %v2044
        %v2115 = vmul.f32 %v2099, %v2045
        %v2116 = vmul.f32 %v2100, %v2046
        %v2117 = vmul.f32 %v2101, %v2047
        %v2118 = vmul.f32 %v2102, %v2048
        %v2119 = vmul.f32 %v2103, %v2103
        %v2120 = vmul.f32 %v2104, %v2104
        %v2121 = vmul.f32 %v2105, %v2105
        %v2122 = vmul.f32 %v2106, %v2106
        %v2123 = vmul.f32 %v2107, %v2107
        %v2124 = vmul.f32 %v2108, %v2108
        %v2125 = vmul.f32 %v2109, %v2109
        %v2126 = vmul.f32 %v2110, %v2110
        %v2127 = vmul.f32 %v2111, %v2111
        %v2128 = vmul.f32 %v2112, %v2112
        %v2129 = vmul.f32 %v2113, %v2113
        %v2130 = vmul.f32 %v2114, %v2114
        %v2131 = vmul.f32 %v2115, %v2115
        %v2132 = vmul.f32 %v2116, %v2116
        %v2133 = vmul.f32 %v2117, %v2117
        %v2134 = vmul.f32 %v2118, %v2118
        %v2135 = vadd.f32 %v2119, %v2120
        %v2136 = vadd.f32 %v2135, %v2121
        %v2137 = vadd.f32 %v2136, %v2122
        %v2138 = vadd.f32 %v2137, %v2123
        %v2139 = vadd.f32 %v2138, %v2124
        %v2140 = vadd.f32 %v2139, %v2125
        %v2141 = vadd.f32 %v2140, %v2126
        %v2142 = vadd.f32 %v2141, %v2127
        %v2143 = vadd.f32 %v2142, %v2128
        %v2144 = vadd.f32 %v2143, %v2129
        %v2145 = vadd.f32 %v2144, %v2130
        %v2146 = vadd.f32 %v2145, %v2131
        %v2147 = vadd.f32 %v2146, %v2132
        %v2148 = vadd.f32 %v2147, %v2133
        %v2149 = vadd.f32 %v2148, %v2134
        %v2150 = vrot.slane %v2149, 4
        %v2151 = vadd.f32 %v2149, %v2150
        %v2152 = vrot.slane %v2151, 2
        %v2153 = vadd.f32 %v2151, %v2152
        %v2154 = vrot.slane %v2153, 1
        %v2155 = vadd.f32 %v2153, %v2154
        %v2156 = vmul.f32 %v2155, 0.015625
        %v2157 = vadd.f32 %v2156, 1e-05
        %v2158 = vrsqrt.pop %v2157
        %v2159 = vmul.f32 %v2087, %v2158
        %v2160 = vmul.f32 %v2088, %v2158
        %v2161 = vmul.f32 %v2089, %v2158
        %v2162 = vmul.f32 %v2090, %v2158
        %v2163 = vmul.f32 %v2091, %v2158
        %v2164 = vmul.f32 %v2092, %v2158
        %v2165 = vmul.f32 %v2093, %v2158
        %v2166 = vmul.f32 %v2094, %v2158
        %v2167 = vmul.f32 %v2095, %v2158
        %v2168 = vmul.f32 %v2096, %v2158
        %v2169 = vmul.f32 %v2097, %v2158
        %v2170 = vmul.f32 %v2098, %v2158
        %v2171 = vmul.f32 %v2099, %v2158
        %v2172 = vmul.f32 %v2100, %v2158
        %v2173 = vmul.f32 %v2101, %v2158
        %v2174 = vmul.f32 %v2102, %v2158
        %vm2175 = vcmp.gt.f32.partialorder %v2159, 0.0
        %vm2176 = vcmp.gt.f32.partialorder %v2160, 0.0
        %vm2177 = vcmp.gt.f32.partialorder %v2161, 0.0
        %vm2178 = vcmp.gt.f32.partialorder %v2162, 0.0
        %vm2179 = vcmp.gt.f32.partialorder %v2163, 0.0
        %vm2180 = vcmp.gt.f32.partialorder %v2164, 0.0
        %vm2181 = vcmp.gt.f32.partialorder %v2165, 0.0
        %vm2182 = vcmp.gt.f32.partialorder %v2166, 0.0
        %vm2183 = vcmp.gt.f32.partialorder %v2167, 0.0
        %vm2184 = vcmp.gt.f32.partialorder %v2168, 0.0
        %vm2185 = vcmp.gt.f32.partialorder %v2169, 0.0
        %vm2186 = vcmp.gt.f32.partialorder %v2170, 0.0
        %vm2187 = vcmp.gt.f32.partialorder %v2171, 0.0
        %vm2188 = vcmp.gt.f32.partialorder %v2172, 0.0
        %vm2189 = vcmp.gt.f32.partialorder %v2173, 0.0
        %vm2190 = vcmp.gt.f32.partialorder %v2174, 0.0
        %v2191 = vmul.f32 %v2159, 0.2
        %v2192 = vmul.f32 %v2160, 0.2
        %v2193 = vmul.f32 %v2161, 0.2
        %v2194 = vmul.f32 %v2162, 0.2
        %v2195 = vmul.f32 %v2163, 0.2
        %v2196 = vmul.f32 %v2164, 0.2
        %v2197 = vmul.f32 %v2165, 0.2
        %v2198 = vmul.f32 %v2166, 0.2
        %v2199 = vmul.f32 %v2167, 0.2
        %v2200 = vmul.f32 %v2168, 0.2
        %v2201 = vmul.f32 %v2169, 0.2
        %v2202 = vmul.f32 %v2170, 0.2
        %v2203 = vmul.f32 %v2171, 0.2
        %v2204 = vmul.f32 %v2172, 0.2
        %v2205 = vmul.f32 %v2173, 0.2
        %v2206 = vmul.f32 %v2174, 0.2
        %v2207 = vsel %vm2175, %v2159, %v2191
        %v2208 = vsel %vm2176, %v2160, %v2192
        %v2209 = vsel %vm2177, %v2161, %v2193
        %v2210 = vsel %vm2178, %v2162, %v2194
        %v2211 = vsel %vm2179, %v2163, %v2195
        %v2212 = vsel %vm2180, %v2164, %v2196
        %v2213 = vsel %vm2181, %v2165, %v2197
        %v2214 = vsel %vm2182, %v2166, %v2198
        %v2215 = vsel %vm2183, %v2167, %v2199
        %v2216 = vsel %vm2184, %v2168, %v2200
        %v2217 = vsel %vm2185, %v2169, %v2201
        %v2218 = vsel %vm2186, %v2170, %v2202
        %v2219 = vsel %vm2187, %v2171, %v2203
        %v2220 = vsel %vm2188, %v2172, %v2204
        %v2221 = vsel %vm2189, %v2173, %v2205
        %v2222 = vsel %vm2190, %v2174, %v2206
        %v2223 = vpack.c.bf16 %v2208, %v2207
        %v2224 = vpack.c.bf16 %v2210, %v2209
        %v2225 = vpack.c.bf16 %v2212, %v2211
        %v2226 = vpack.c.bf16 %v2214, %v2213
        %v2227 = vpack.c.bf16 %v2216, %v2215
        %v2228 = vpack.c.bf16 %v2218, %v2217
        %v2229 = vpack.c.bf16 %v2220, %v2219
        %v2230 = vpack.c.bf16 %v2222, %v2221
        %v2239 = vunpack.c.l.b16 %v2223
        %v2240 = vunpack.c.h.b16 %v2223
        %v2241 = vunpack.c.l.b16 %v2224
        %v2242 = vunpack.c.h.b16 %v2224
        %v2243 = vunpack.c.l.b16 %v2225
        %v2244 = vunpack.c.h.b16 %v2225
        %v2245 = vunpack.c.l.b16 %v2226
        %v2246 = vunpack.c.h.b16 %v2226
        %v2247 = vunpack.c.l.b16 %v2227
        %v2248 = vunpack.c.h.b16 %v2227
        %v2249 = vunpack.c.l.b16 %v2228
        %v2250 = vunpack.c.h.b16 %v2228
        %v2251 = vunpack.c.l.b16 %v2229
        %v2252 = vunpack.c.h.b16 %v2229
        %v2253 = vunpack.c.l.b16 %v2230
        %v2254 = vunpack.c.h.b16 %v2230
        %v2255 = vpack.c.b16 %v2239, %v2239
        %v2256 = vpack.c.b16 %v2240, %v2240
        %v2257 = vpack.c.b16 %v2241, %v2241
        %v2258 = vpack.c.b16 %v2242, %v2242
        %v2259 = vpack.c.b16 %v2243, %v2243
        %v2260 = vpack.c.b16 %v2244, %v2244
        %v2261 = vpack.c.b16 %v2245, %v2245
        %v2262 = vpack.c.b16 %v2246, %v2246
        %v2263 = vpack.c.b16 %v2247, %v2247
        %v2264 = vpack.c.b16 %v2248, %v2248
        %v2265 = vpack.c.b16 %v2249, %v2249
        %v2266 = vpack.c.b16 %v2250, %v2250
        %v2267 = vpack.c.b16 %v2251, %v2251
        %v2268 = vpack.c.b16 %v2252, %v2252
        %v2269 = vpack.c.b16 %v2253, %v2253
        %v2270 = vpack.c.b16 %v2254, %v2254
        %2287 = vst [vmem:[%s243] sm:$0xf] %v2255
        %2288 = vst [vmem:[%s243 + $0x4] sm:$0xf] %v2256
        %2289 = vst [vmem:[%s243 + $0x8] sm:$0xf] %v2257
        %2290 = vst [vmem:[%s243 + $0xc] sm:$0xf] %v2258
        %2291 = vst [vmem:[%s243 + $0x10] sm:$0xf] %v2259
        %2292 = vst [vmem:[%s243 + $0x14] sm:$0xf] %v2260
        %2293 = vst [vmem:[%s243 + $0x18] sm:$0xf] %v2261
        %2294 = vst [vmem:[%s243 + $0x1c] sm:$0xf] %v2262
        %2295 = vst [vmem:[%s243 + $0x20] sm:$0xf] %v2263
        %2296 = vst [vmem:[%s243 + $0x24] sm:$0xf] %v2264
        %2297 = vst [vmem:[%s243 + $0x28] sm:$0xf] %v2265
        %2298 = vst [vmem:[%s243 + $0x2c] sm:$0xf] %v2266
        %2299 = vst [vmem:[%s243 + $0x30] sm:$0xf] %v2267
        %2300 = vst [vmem:[%s243 + $0x34] sm:$0xf] %v2268
        %2301 = vst [vmem:[%s243 + $0x38] sm:$0xf] %v2269
        %2302 = vst [vmem:[%s243 + $0x3c] sm:$0xf] %v2270
        %s2303 = sand.u32 %s121, 1
        %s2304 = scalar_lea.sflag [#allocation4], %s2303
        %s2305 = sand.u32 %s121, 1
        %s2306 = smul.addr %s2305, 64
        %s2307 = scalar_lea.vmem [#allocation8], %s2306
        // Predicated region
        $region45: #{_lambda_.6} parent=31 // pred_check
          %p2308 = pneg %p131
        $region46: #{_lambda_.6} parent=31 // pred_check_branch
          %2310 = sbr.rel (%p2308) target = $region48
        $region47: #{_lambda_.6} parent=31 // pred_region
          %s2312 = ssub.s32 1024, 1024
          %2313 = vsyncadd %s2304, %s2312
          %s2314 = smul.addr %s25, 16
          %s2315 = sadd.s32 %s26, %s2314
          %s2316 = smul.addr %s2315, 64
          %s2317 = scalar_lea.hbm %s3, %s2316
          %s2318 = sshll.u32 %s2307, 4
          %s2319 = int_to_ptr.vmem [resolvable:$true] %s2318
          %2324 = dma.vmem_to_hbm [thread:$0]  %s2319, 1024, %s2317, %s2304, 64, 64, 4
        $region48: #{_lambda_.6} parent=31 // pred_fallthru
          _
      $region32: #{_lambda_.6} parent=5 // pred_fallthru
        _
      %p2325 = scmp.le.s32.totalorder 2, %s16
      // Predicated region
      $region49: #{_lambda_.6} parent=5 // pred_check
        %p2326 = pneg %p2325
      $region50: #{_lambda_.6} parent=5 // pred_check_branch
        %2328 = sbr.rel (%p2326) target = $region52
      $region51: #{_lambda_.6} parent=5 // pred_region
        %s2329 = ssub.s32 %s16, 2
        // Predicated region
        $region53: #{_lambda_.6} parent=51 // pred_check
          %p2330 = pneg %p137
        $region54: #{_lambda_.6} parent=51 // pred_check_branch
          %2332 = sbr.rel (%p2330) target = $region56
        $region55: #{_lambda_.6} parent=51 // pred_region
          %s2333 = sand.u32 %s122, 1
          %s2334 = scalar_lea.sflag [#allocation4], %s2333
          %s2335 = sand.u32 %s122, 1
          %s2336 = smul.addr %s2335, 64
          %s2337 = scalar_lea.vmem [#allocation8], %s2336
          %2338 = dma.done %s2334, 1024
        $region56: #{_lambda_.6} parent=51 // pred_fallthru
          _
      $region52: #{_lambda_.6} parent=5 // pred_fallthru
        _
    $region6: #{_lambda_.6} parent=1 // loop_footer
      %s20 = sadd.s32 1, %s16
    $region7: #{_lambda_.6} parent=1 // loop_footer_branch
      %15 = sbr.rel target = $region3
    $region8: #{_lambda_.6} parent=1 // loop_exit
      _
    %2339 = vsyncpa [#allocation3], 1
    %s2340 = scalar_lea.sflag [#allocation3], 1
    %2341 = vsyncpa %s2340, 1
    %2342 = vsyncpa [#allocation6], 1
    %2343 = vsyncpa [#allocation4], 1
    %s2344 = scalar_lea.sflag [#allocation4], 1
    %2345 = vsyncpa %s2344, 1

// kernel: _lambda_.7
$region0: #{_lambda_.7}
  #allocation0 [shape = 'u32[]', space=smem, size = 0x4, offset = 0x4, fixed_abs, tag = 'smem constant byte address 0x4 - core index']
  #allocation1 [shape = 'u32[144,128]{1,0:T(1,128)}', space=vmem, size = 0x12000, scoped, tag = 'internal scratch']
  %s0 = inlined_call_operand.hbm [shape: bf16[2,42,512], index: 0, kind: input, shape index: {}]
  %s1 = inlined_call_operand.hbm [shape: bf16[4,512,256], index: 1, kind: input, shape index: {}]
  %s2 = inlined_call_operand.hbm [shape: f32[1,256], index: 2, kind: input, shape index: {}]
  %s3 = inlined_call_operand.hbm [shape: bf16[2,32,256], index: 3, kind: output, shape index: {}]
  %s4 = sld [smem:[#allocation0]]
  $region57: #{_lambda_.7} parent=0
    _
  %s6 = ssub.s32 1, %s4
  %s7 = scalar_select 0, %s6, %s4
  $region1: #{_lambda_.7} parent=0
    #allocation2 [shape = 'u8[98304]{0}', space=vmem, size = 0x18000, scoped, tag = 'input window, operand 0']
    #allocation3 [shape = 's32[2]{0}', space=sflag, size = 0x8, scoped, tag = 'scoped memory for _lambda_.7']
    #allocation4 [shape = 's32[2]{0}', space=sflag, size = 0x8, scoped, tag = 'scoped memory for _lambda_.7']
    #allocation5 [shape = 'u8[1048576]{0}', space=vmem, size = 0x100000, scoped, tag = 'input window, operand 1']
    #allocation6 [shape = 's32[2]{0}', space=sflag, size = 0x8, scoped, tag = 'scoped memory for _lambda_.7']
    #allocation7 [shape = 'u8[1024]{0}', space=vmem, size = 0x400, scoped, tag = 'input window, operand 2']
    #allocation8 [shape = 'u8[16384]{0}', space=vmem, size = 0x4000, scoped, tag = 'output window, operand 0']
    %8 = vsyncpa [#allocation3], 0
    %s9 = scalar_lea.sflag [#allocation3], 1
    %10 = vsyncpa %s9, 0
    %11 = vsyncpa [#allocation6], 0
    %s12 = scalar_lea.sflag [#allocation6], 1
    %13 = vsyncpa %s12, 0
    %14 = vsyncpa [#allocation4], 0
    %s15 = scalar_lea.sflag [#allocation4], 1
    %16 = vsyncpa %s15, 0
    loop: start=0, step=1, limit=6
    $region2: #{_lambda_.7} parent=1 // loop_pre_header
      _
    $region3: #{_lambda_.7} parent=1 // loop_header
      %s18 = sphi 0, %s22
      %p19 = scmp.ge.s32.totalorder %s18, 6
      %s25 = sphi 0, %s37
      %s26 = sphi 0, %s33
      %s27 = sphi 0, %s25
      %s28 = sphi 0, %s26
      %s29 = sphi 0, %s27
      %s30 = sphi 0, %s28
      %s40 = sphi 0, %s42
      %s43 = sphi 0, %s40
      %s44 = sphi 0, %s43
      %s60 = sphi 0, %s44
      %s66 = sphi 0, %s68
      %s69 = sphi 0, %s66
      %s70 = sphi 0, %s69
      %s86 = sphi 0, %s70
      %s92 = sphi 0, %s94
      %s95 = sphi 0, %s92
      %s96 = sphi 0, %s95
      %s112 = sphi 0, %s96
      %s120 = sphi 0, %s122
      %s123 = sphi 0, %s120
      %s124 = sphi 0, %s123
      %s140 = sphi 0, %s124
    $region4: #{_lambda_.7} parent=1 // loop_header_branch
      %21 = sbr.rel (%p19) target = $region8
    $region5: #{_lambda_.7} parent=1 // loop_body
      %s23 = ssub.s32 %s18, 1
      %s24 = ssub.s32 %s18, 2
      %s31 = sadd.s32 1, %s26
      %p32 = scmp.ge.s32.totalorder %s31, 2
      %s33 = scalar_select %p32, 0, %s31
      %s34 = sadd.s32 1, %s25
      %s35 = scalar_select %p32, %s34, %s25
      %p36 = scmp.ge.s32.totalorder %s35, 2
      %s37 = scalar_select %p36, 0, %s35
      %s38 = ssub.s32 %s25, %s37
      %p39 = scmp.eq.s32.totalorder %s38, 0
      %s41 = sadd.s32 %s40, 1
      %s42 = scalar_select %p39, %s40, %s41
      %p45 = pneg %p39
      %p46 = scmp.eq.s32.totalorder %s18, 3
      %p47 = por %p45, %p46
      %p48 = scmp.ne.s32.totalorder %s40, %s43
      %p49 = scmp.eq.s32.totalorder %s18, 0
      %p50 = por %p48, %p49
      %p51 = scmp.ne.s32.totalorder %s40, %s43
      %p52 = scmp.eq.s32.totalorder %s23, 3
      %p53 = por %p51, %p52
      %p54 = scmp.ne.s32.totalorder %s43, %s44
      %p55 = scmp.eq.s32.totalorder %s23, 0
      %p56 = por %p54, %p55
      %p57 = scmp.ne.s32.totalorder %s43, %s44
      %p58 = scmp.eq.s32.totalorder %s24, 3
      %p59 = por %p57, %p58
      %p61 = scmp.ne.s32.totalorder %s44, %s60
      %p62 = scmp.eq.s32.totalorder %s24, 0
      %p63 = por %p61, %p62
      %s64 = ssub.s32 %s26, %s33
      %p65 = scmp.eq.s32.totalorder %s64, 0
      %s67 = sadd.s32 %s66, 1
      %s68 = scalar_select %p65, %s66, %s67
      %p71 = pneg %p65
      %p72 = scmp.eq.s32.totalorder %s18, 3
      %p73 = por %p71, %p72
      %p74 = scmp.ne.s32.totalorder %s66, %s69
      %p75 = scmp.eq.s32.totalorder %s18, 0
      %p76 = por %p74, %p75
      %p77 = scmp.ne.s32.totalorder %s66, %s69
      %p78 = scmp.eq.s32.totalorder %s23, 3
      %p79 = por %p77, %p78
      %p80 = scmp.ne.s32.totalorder %s69, %s70
      %p81 = scmp.eq.s32.totalorder %s23, 0
      %p82 = por %p80, %p81
      %p83 = scmp.ne.s32.totalorder %s69, %s70
      %p84 = scmp.eq.s32.totalorder %s24, 3
      %p85 = por %p83, %p84
      %p87 = scmp.ne.s32.totalorder %s70, %s86
      %p88 = scmp.eq.s32.totalorder %s24, 0
      %p89 = por %p87, %p88
      %s90 = ssub.s32 %s26, %s33
      %p91 = scmp.eq.s32.totalorder %s90, 0
      %s93 = sadd.s32 %s92, 1
      %s94 = scalar_select %p91, %s92, %s93
      %p97 = pneg %p91
      %p98 = scmp.eq.s32.totalorder %s18, 3
      %p99 = por %p97, %p98
      %p100 = scmp.ne.s32.totalorder %s92, %s95
      %p101 = scmp.eq.s32.totalorder %s18, 0
      %p102 = por %p100, %p101
      %p103 = scmp.ne.s32.totalorder %s92, %s95
      %p104 = scmp.eq.s32.totalorder %s23, 3
      %p105 = por %p103, %p104
      %p106 = scmp.ne.s32.totalorder %s95, %s96
      %p107 = scmp.eq.s32.totalorder %s23, 0
      %p108 = por %p106, %p107
      %p109 = scmp.ne.s32.totalorder %s95, %s96
      %p110 = scmp.eq.s32.totalorder %s24, 3
      %p111 = por %p109, %p110
      %p113 = scmp.ne.s32.totalorder %s96, %s112
      %p114 = scmp.eq.s32.totalorder %s24, 0
      %p115 = por %p113, %p114
      %s116 = ssub.s32 %s25, %s37
      %s117 = ssub.s32 %s26, %s33
      %s118 = sor.u32 %s116, %s117
      %p119 = scmp.eq.s32.totalorder %s118, 0
      %s121 = sadd.s32 %s120, 1
      %s122 = scalar_select %p119, %s120, %s121
      %p125 = pneg %p119
      %p126 = scmp.eq.s32.totalorder %s18, 3
      %p127 = por %p125, %p126
      %p128 = scmp.ne.s32.totalorder %s120, %s123
      %p129 = scmp.eq.s32.totalorder %s18, 0
      %p130 = por %p128, %p129
      %p131 = scmp.ne.s32.totalorder %s120, %s123
      %p132 = scmp.eq.s32.totalorder %s23, 3
      %p133 = por %p131, %p132
      %p134 = scmp.ne.s32.totalorder %s123, %s124
      %p135 = scmp.eq.s32.totalorder %s23, 0
      %p136 = por %p134, %p135
      %p137 = scmp.ne.s32.totalorder %s123, %s124
      %p138 = scmp.eq.s32.totalorder %s24, 3
      %p139 = por %p137, %p138
      %p141 = scmp.ne.s32.totalorder %s124, %s140
      %p142 = scmp.eq.s32.totalorder %s24, 0
      %p143 = por %p141, %p142
      %p144 = scmp.le.s32.totalorder 1, %s18
      %p145 = scmp.lt.s32.totalorder %s18, 5
      %p146 = pnand %p144, %p145
      %p147 = pneg %p146
      // Predicated region
      $region9: #{_lambda_.7} parent=5 // pred_check
        _
      $region10: #{_lambda_.7} parent=5 // pred_check_branch
        %149 = sbr.rel (%p146) target = $region12
      $region11: #{_lambda_.7} parent=5 // pred_region
        %s150 = ssub.s32 %s18, 1
      $region12: #{_lambda_.7} parent=5 // pred_fallthru
        _
      %p151 = scmp.lt.s32.totalorder %s18, 4
      // Predicated region
      $region13: #{_lambda_.7} parent=5 // pred_check
        %p152 = pneg %p151
      $region14: #{_lambda_.7} parent=5 // pred_check_branch
        %154 = sbr.rel (%p152) target = $region16
      $region15: #{_lambda_.7} parent=5 // pred_region
        // Predicated region
        $region17: #{_lambda_.7} parent=15 // pred_check
          %p155 = pneg %p50
        $region18: #{_lambda_.7} parent=15 // pred_check_branch
          %157 = sbr.rel (%p155) target = $region20
        $region19: #{_lambda_.7} parent=15 // pred_region
          %s158 = sand.u32 %s40, 1
          %s159 = scalar_lea.sflag [#allocation3], %s158
          %s160 = sand.u32 %s40, 1
          %s161 = smul.addr %s160, 96
          %s162 = scalar_lea.vmem [#allocation2], %s161
          %s164 = ssub.s32 1536, 1536
          %165 = vsyncadd %s159, %s164
          %s166 = smul.addr %s25, 24
          %s167 = smul.addr %s166, 64
          %s168 = scalar_lea.hbm %s0, %s167
          %s169 = sshll.u32 %s162, 4
          %s170 = int_to_ptr.vmem [resolvable:$true] %s169
          %175 = dma.hbm_to_vmem [thread:$0]  %s168, 1536, %s170, %s159, 256, 256, 16
        $region20: #{_lambda_.7} parent=15 // pred_fallthru
          _
        // Predicated region
        $region21: #{_lambda_.7} parent=15 // pred_check
          %p176 = pneg %p76
        $region22: #{_lambda_.7} parent=15 // pred_check_branch
          %178 = sbr.rel (%p176) target = $region24
        $region23: #{_lambda_.7} parent=15 // pred_region
          %s179 = sand.u32 %s18, 1
          %s180 = scalar_lea.sflag [#allocation6], %s179
          %s181 = sand.u32 %s66, 1
          %s182 = smul.addr %s181, 1024
          %s183 = scalar_lea.vmem [#allocation5], %s182
          %s185 = ssub.s32 16384, 16384
          %186 = vsyncadd %s180, %s185
          %s187 = smul.addr %s26, 64
          %s188 = scalar_lea.hbm %s1, %s187
          %s189 = sshll.u32 %s183, 4
          %s190 = int_to_ptr.vmem [resolvable:$true] %s189
          %195 = dma.hbm_to_vmem [thread:$0]  %s188, 16384, %s190, %s180, 128, 64, 4
        $region24: #{_lambda_.7} parent=15 // pred_fallthru
          _
        // Predicated region
        $region25: #{_lambda_.7} parent=15 // pred_check
          %p196 = pneg %p102
        $region26: #{_lambda_.7} parent=15 // pred_check_branch
          %198 = sbr.rel (%p196) target = $region28
        $region27: #{_lambda_.7} parent=15 // pred_region
          %s199 = sand.u32 %s18, 1
          %s200 = scalar_lea.sflag [#allocation6], %s199
          %s201 = sand.u32 %s92, 1
          %s202 = scalar_lea.vmem [#allocation7], %s201
          %s204 = ssub.s32 16, 16
          %205 = vsyncadd %s200, %s204
          %s206 = smul.addr %s26, 16
          %s207 = scalar_lea.hbm %s2, %s206
          %s209 = sshll.u32 %s202, 4
          %s210 = int_to_ptr.vmem [resolvable:$true] %s209
          %212 = dma.hbm_to_vmem [thread:$0]  %s207, 16, %s210, %s200
        $region28: #{_lambda_.7} parent=15 // pred_fallthru
          _
      $region16: #{_lambda_.7} parent=5 // pred_fallthru
        _
      %p213 = scmp.le.s32.totalorder 1, %s18
      %p214 = scmp.lt.s32.totalorder %s18, 5
      %p215 = pnand %p213, %p214
      %p216 = pneg %p215
      // Predicated region
      $region29: #{_lambda_.7} parent=5 // pred_check
        _
      $region30: #{_lambda_.7} parent=5 // pred_check_branch
        %218 = sbr.rel (%p215) target = $region32
      $region31: #{_lambda_.7} parent=5 // pred_region
        %s219 = ssub.s32 %s18, 1
        %s220 = sand.u32 %s43, 1
        %s221 = scalar_lea.sflag [#allocation3], %s220
        %s222 = sand.u32 %s43, 1
        %s223 = smul.addr %s222, 96
        %s224 = scalar_lea.vmem [#allocation2], %s223
        // Predicated region
        $region33: #{_lambda_.7} parent=31 // pred_check
          %p225 = pneg %p56
        $region34: #{_lambda_.7} parent=31 // pred_check_branch
          %227 = sbr.rel (%p225) target = $region36
        $region35: #{_lambda_.7} parent=31 // pred_region
          %228 = dma.done %s221, 1536
        $region36: #{_lambda_.7} parent=31 // pred_fallthru
          _
        %s229 = sand.u32 %s23, 1
        %s230 = scalar_lea.sflag [#allocation6], %s229
        %s231 = sand.u32 %s69, 1
        %s232 = smul.addr %s231, 1024
        %s233 = scalar_lea.vmem [#allocation5], %s232
        // Predicated region
        $region37: #{_lambda_.7} parent=31 // pred_check
          %p234 = pneg %p82
        $region38: #{_lambda_.7} parent=31 // pred_check_branch
          %236 = sbr.rel (%p234) target = $region40
        $region39: #{_lambda_.7} parent=31 // pred_region
          %237 = dma.done %s230, 16384
        $region40: #{_lambda_.7} parent=31 // pred_fallthru
          _
        %s238 = sand.u32 %s23, 1
        %s239 = scalar_lea.sflag [#allocation6], %s238
        %s240 = sand.u32 %s95, 1
        %s241 = scalar_lea.vmem [#allocation7], %s240
        // Predicated region
        $region41: #{_lambda_.7} parent=31 // pred_check
          %p242 = pneg %p108
        $region42: #{_lambda_.7} parent=31 // pred_check_branch
          %244 = sbr.rel (%p242) target = $region44
        $region43: #{_lambda_.7} parent=31 // pred_region
          %245 = dma.done %s239, 16
        $region44: #{_lambda_.7} parent=31 // pred_fallthru
          _
        %s246 = sand.u32 %s43, 1
        %s247 = scalar_lea.sflag [#allocation3], %s246
        %s248 = sand.u32 %s43, 1
        %s249 = smul.addr %s248, 96
        %s250 = scalar_lea.vmem [#allocation2], %s249
        %p251 = pneg %p56
        %p252 = pneg %p53
        %s253 = sand.u32 %s23, 1
        %s254 = scalar_lea.sflag [#allocation6], %s253
        %s255 = sand.u32 %s69, 1
        %s256 = smul.addr %s255, 1024
        %s257 = scalar_lea.vmem [#allocation5], %s256
        %p258 = pneg %p82
        %p259 = pneg %p79
        %s260 = sand.u32 %s23, 1
        %s261 = scalar_lea.sflag [#allocation6], %s260
        %s262 = sand.u32 %s95, 1
        %s263 = scalar_lea.vmem [#allocation7], %s262
        %p264 = pneg %p108
        %p265 = pneg %p105
        %p266 = pneg %p136
        %p267 = pneg %p133
        %s268 = sand.u32 %s123, 1
        %s269 = scalar_lea.sflag [#allocation4], %s268
        %s270 = sand.u32 %s123, 1
        %s271 = smul.addr %s270, 16
        %s272 = scalar_lea.vmem [#allocation8], %s271
        %v274 = vld [vmem:[%s224] sm:$0xff]
        %v275 = vld [vmem:[%s224 + $0x8] sm:$0xff]
        %v276 = vld [vmem:[%s224 + $0x10] sm:$0xff]
        %v277 = vld [vmem:[%s224 + $0x18] sm:$0xff]
        %v278 = vld [vmem:[%s224 + $0x20] sm:$0xff]
        %v279 = vld [vmem:[%s224 + $0x28] sm:$0xff]
        %v280 = vld [vmem:[%s224 + $0x30] sm:$0xff]
        %v281 = vld [vmem:[%s224 + $0x38] sm:$0xff]
        %v282 = vld [vmem:[%s233] sm:$0xf]
        %v283 = vld [vmem:[%s233 + $0x4] sm:$0xf]
        %v284 = vld [vmem:[%s233 + $0x8] sm:$0xf]
        %v285 = vld [vmem:[%s233 + $0xc] sm:$0xf]
        %v286 = vld [vmem:[%s233 + $0x10] sm:$0xf]
        %v287 = vld [vmem:[%s233 + $0x14] sm:$0xf]
        %v288 = vld [vmem:[%s233 + $0x18] sm:$0xf]
        %v289 = vld [vmem:[%s233 + $0x1c] sm:$0xf]
        %v290 = vld [vmem:[%s233 + $0x20] sm:$0xf]
        %v291 = vld [vmem:[%s233 + $0x24] sm:$0xf]
        %v292 = vld [vmem:[%s233 + $0x28] sm:$0xf]
        %v293 = vld [vmem:[%s233 + $0x2c] sm:$0xf]
        %v294 = vld [vmem:[%s233 + $0x30] sm:$0xf]
        %v295 = vld [vmem:[%s233 + $0x34] sm:$0xf]
        %v296 = vld [vmem:[%s233 + $0x38] sm:$0xf]
        %v297 = vld [vmem:[%s233 + $0x3c] sm:$0xf]
        %v298 = vld [vmem:[%s233 + $0x40] sm:$0xf]
        %v299 = vld [vmem:[%s233 + $0x44] sm:$0xf]
        %v300 = vld [vmem:[%s233 + $0x48] sm:$0xf]
        %v301 = vld [vmem:[%s233 + $0x4c] sm:$0xf]
        %v302 = vld [vmem:[%s233 + $0x50] sm:$0xf]
        %v303 = vld [vmem:[%s233 + $0x54] sm:$0xf]
        %v304 = vld [vmem:[%s233 + $0x58] sm:$0xf]
        %v305 = vld [vmem:[%s233 + $0x5c] sm:$0xf]
        %v306 = vld [vmem:[%s233 + $0x60] sm:$0xf]
        %v307 = vld [vmem:[%s233 + $0x64] sm:$0xf]
        %v308 = vld [vmem:[%s233 + $0x68] sm:$0xf]
        %v309 = vld [vmem:[%s233 + $0x6c] sm:$0xf]
        %v310 = vld [vmem:[%s233 + $0x70] sm:$0xf]
        %v311 = vld [vmem:[%s233 + $0x74] sm:$0xf]
        %v312 = vld [vmem:[%s233 + $0x78] sm:$0xf]
        %v313 = vld [vmem:[%s233 + $0x7c] sm:$0xf]
        %v314 = vld [vmem:[%s233 + $0x80] sm:$0xf]
        %v315 = vld [vmem:[%s233 + $0x84] sm:$0xf]
        %v316 = vld [vmem:[%s233 + $0x88] sm:$0xf]
        %v317 = vld [vmem:[%s233 + $0x8c] sm:$0xf]
        %v318 = vld [vmem:[%s233 + $0x90] sm:$0xf]
        %v319 = vld [vmem:[%s233 + $0x94] sm:$0xf]
        %v320 = vld [vmem:[%s233 + $0x98] sm:$0xf]
        %v321 = vld [vmem:[%s233 + $0x9c] sm:$0xf]
        %v322 = vld [vmem:[%s233 + $0xa0] sm:$0xf]
        %v323 = vld [vmem:[%s233 + $0xa4] sm:$0xf]
        %v324 = vld [vmem:[%s233 + $0xa8] sm:$0xf]
        %v325 = vld [vmem:[%s233 + $0xac] sm:$0xf]
        %v326 = vld [vmem:[%s233 + $0xb0] sm:$0xf]
        %v327 = vld [vmem:[%s233 + $0xb4] sm:$0xf]
        %v328 = vld [vmem:[%s233 + $0xb8] sm:$0xf]
        %v329 = vld [vmem:[%s233 + $0xbc] sm:$0xf]
        %v330 = vld [vmem:[%s233 + $0xc0] sm:$0xf]
        %v331 = vld [vmem:[%s233 + $0xc4] sm:$0xf]
        %v332 = vld [vmem:[%s233 + $0xc8] sm:$0xf]
        %v333 = vld [vmem:[%s233 + $0xcc] sm:$0xf]
        %v334 = vld [vmem:[%s233 + $0xd0] sm:$0xf]
        %v335 = vld [vmem:[%s233 + $0xd4] sm:$0xf]
        %v336 = vld [vmem:[%s233 + $0xd8] sm:$0xf]
        %v337 = vld [vmem:[%s233 + $0xdc] sm:$0xf]
        %v338 = vld [vmem:[%s233 + $0xe0] sm:$0xf]
        %v339 = vld [vmem:[%s233 + $0xe4] sm:$0xf]
        %v340 = vld [vmem:[%s233 + $0xe8] sm:$0xf]
        %v341 = vld [vmem:[%s233 + $0xec] sm:$0xf]
        %v342 = vld [vmem:[%s233 + $0xf0] sm:$0xf]
        %v343 = vld [vmem:[%s233 + $0xf4] sm:$0xf]
        %v344 = vld [vmem:[%s233 + $0xf8] sm:$0xf]
        %v345 = vld [vmem:[%s233 + $0xfc] sm:$0xf]
        %v346 = vld [vmem:[%s224 + $0x40] sm:$0x11]
        %v347 = vld [vmem:[%s224 + $0x48] sm:$0x11]
        %s348 = scalar_lea.vmem %s233, 256 [#allocation5]
        %v349 = vld [vmem:[%s348] sm:$0xf]
        %v350 = vld [vmem:[%s348 + $0x4] sm:$0xf]
        %v351 = vld [vmem:[%s348 + $0x8] sm:$0xf]
        %v352 = vld [vmem:[%s348 + $0xc] sm:$0xf]
        %v353 = vld [vmem:[%s348 + $0x10] sm:$0xf]
        %v354 = vld [vmem:[%s348 + $0x14] sm:$0xf]
        %v355 = vld [vmem:[%s348 + $0x18] sm:$0xf]
        %v356 = vld [vmem:[%s348 + $0x1c] sm:$0xf]
        %v357 = vld [vmem:[%s348 + $0x20] sm:$0xf]
        %v358 = vld [vmem:[%s348 + $0x24] sm:$0xf]
        %v359 = vld [vmem:[%s348 + $0x28] sm:$0xf]
        %v360 = vld [vmem:[%s348 + $0x2c] sm:$0xf]
        %v361 = vld [vmem:[%s348 + $0x30] sm:$0xf]
        %v362 = vld [vmem:[%s348 + $0x34] sm:$0xf]
        %v363 = vld [vmem:[%s348 + $0x38] sm:$0xf]
        %v364 = vld [vmem:[%s348 + $0x3c] sm:$0xf]
        %v365 = vld [vmem:[%s348 + $0x40] sm:$0xf]
        %v366 = vld [vmem:[%s348 + $0x44] sm:$0xf]
        %v367 = vld [vmem:[%s348 + $0x48] sm:$0xf]
        %v368 = vld [vmem:[%s348 + $0x4c] sm:$0xf]
        %v369 = vld [vmem:[%s348 + $0x50] sm:$0xf]
        %v370 = vld [vmem:[%s348 + $0x54] sm:$0xf]
        %v371 = vld [vmem:[%s348 + $0x58] sm:$0xf]
        %v372 = vld [vmem:[%s348 + $0x5c] sm:$0xf]
        %v373 = vld [vmem:[%s348 + $0x60] sm:$0xf]
        %v374 = vld [vmem:[%s348 + $0x64] sm:$0xf]
        %v375 = vld [vmem:[%s348 + $0x68] sm:$0xf]
        %v376 = vld [vmem:[%s348 + $0x6c] sm:$0xf]
        %v377 = vld [vmem:[%s348 + $0x70] sm:$0xf]
        %v378 = vld [vmem:[%s348 + $0x74] sm:$0xf]
        %v379 = vld [vmem:[%s348 + $0x78] sm:$0xf]
        %v380 = vld [vmem:[%s348 + $0x7c] sm:$0xf]
        %v381 = vld [vmem:[%s348 + $0x80] sm:$0xf]
        %v382 = vld [vmem:[%s348 + $0x84] sm:$0xf]
        %v383 = vld [vmem:[%s348 + $0x88] sm:$0xf]
        %v384 = vld [vmem:[%s348 + $0x8c] sm:$0xf]
        %v385 = vld [vmem:[%s348 + $0x90] sm:$0xf]
        %v386 = vld [vmem:[%s348 + $0x94] sm:$0xf]
        %v387 = vld [vmem:[%s348 + $0x98] sm:$0xf]
        %v388 = vld [vmem:[%s348 + $0x9c] sm:$0xf]
        %v389 = vld [vmem:[%s348 + $0xa0] sm:$0xf]
        %v390 = vld [vmem:[%s348 + $0xa4] sm:$0xf]
        %v391 = vld [vmem:[%s348 + $0xa8] sm:$0xf]
        %v392 = vld [vmem:[%s348 + $0xac] sm:$0xf]
        %v393 = vld [vmem:[%s348 + $0xb0] sm:$0xf]
        %v394 = vld [vmem:[%s348 + $0xb4] sm:$0xf]
        %v395 = vld [vmem:[%s348 + $0xb8] sm:$0xf]
        %v396 = vld [vmem:[%s348 + $0xbc] sm:$0xf]
        %v397 = vld [vmem:[%s348 + $0xc0] sm:$0xf]
        %v398 = vld [vmem:[%s348 + $0xc4] sm:$0xf]
        %v399 = vld [vmem:[%s348 + $0xc8] sm:$0xf]
        %v400 = vld [vmem:[%s348 + $0xcc] sm:$0xf]
        %v401 = vld [vmem:[%s348 + $0xd0] sm:$0xf]
        %v402 = vld [vmem:[%s348 + $0xd4] sm:$0xf]
        %v403 = vld [vmem:[%s348 + $0xd8] sm:$0xf]
        %v404 = vld [vmem:[%s348 + $0xdc] sm:$0xf]
        %v405 = vld [vmem:[%s348 + $0xe0] sm:$0xf]
        %v406 = vld [vmem:[%s348 + $0xe4] sm:$0xf]
        %v407 = vld [vmem:[%s348 + $0xe8] sm:$0xf]
        %v408 = vld [vmem:[%s348 + $0xec] sm:$0xf]
        %v409 = vld [vmem:[%s348 + $0xf0] sm:$0xf]
        %v410 = vld [vmem:[%s348 + $0xf4] sm:$0xf]
        %v411 = vld [vmem:[%s348 + $0xf8] sm:$0xf]
        %v412 = vld [vmem:[%s348 + $0xfc] sm:$0xf]
        %v423 = vunpack.c.l.b16 %v274
        %v424 = vunpack.c.h.b16 %v274
        %v425 = vunpack.c.l.b16 %v275
        %v426 = vunpack.c.h.b16 %v275
        %v427 = vunpack.c.l.b16 %v276
        %v428 = vunpack.c.h.b16 %v276
        %v429 = vunpack.c.l.b16 %v277
        %v430 = vunpack.c.h.b16 %v277
        %v431 = vunpack.c.l.b16 %v278
        %v432 = vunpack.c.h.b16 %v278
        %v433 = vunpack.c.l.b16 %v279
        %v434 = vunpack.c.h.b16 %v279
        %v435 = vunpack.c.l.b16 %v280
        %v436 = vunpack.c.h.b16 %v280
        %v437 = vunpack.c.l.b16 %v281
        %v438 = vunpack.c.h.b16 %v281
        %v439 = vunpack.c.l.b16 %v346
        %v440 = vunpack.c.h.b16 %v346
        %v441 = vunpack.c.l.b16 %v347
        %v442 = vunpack.c.h.b16 %v347
        %v443 = vpack.c.b16 %v427, %v423
        %v444 = vpack.c.b16 %v428, %v424
        %v445 = vpack.c.b16 %v429, %v425
        %v446 = vpack.c.b16 %v430, %v426
        %v447 = vpack.c.b16 %v435, %v431
        %v448 = vpack.c.b16 %v436, %v432
        %v449 = vpack.c.b16 %v437, %v433
        %v450 = vpack.c.b16 %v438, %v434
        %v451 = vpack.c.b16 %v439, %v439
        %v452 = vpack.c.b16 %v440, %v440
        %v453 = vpack.c.b16 %v441, %v441
        %v454 = vpack.c.b16 %v442, %v442
        %vm455 = vsmask.f32 7424
        %v457 = vshrl.u32 %v443, 16
        %v459 = vshll.u32 %v443, 16
        %v461 = vrot.slane %v459, 1
        %v462 = vor.u32 %v457, %v461
        %v464 = vshll.u32 %v447, 16
        %v466 = vrot.slane %v464, 1
        %v467 = vsel %vm455, %v462, %v466
        %v469 = vshrl.u32 %v444, 16
        %v471 = vshll.u32 %v444, 16
        %v473 = vrot.slane %v471, 1
        %v474 = vor.u32 %v469, %v473
        %v476 = vshll.u32 %v448, 16
        %v478 = vrot.slane %v476, 1
        %v479 = vsel %vm455, %v474, %v478
        %v481 = vshrl.u32 %v445, 16
        %v483 = vshll.u32 %v445, 16
        %v485 = vrot.slane %v483, 1
        %v486 = vor.u32 %v481, %v485
        %v488 = vshll.u32 %v449, 16
        %v490 = vrot.slane %v488, 1
        %v491 = vsel %vm455, %v486, %v490
        %v493 = vshrl.u32 %v446, 16
        %v495 = vshll.u32 %v446, 16
        %v497 = vrot.slane %v495, 1
        %v498 = vor.u32 %v493, %v497
        %v500 = vshll.u32 %v450, 16
        %v502 = vrot.slane %v500, 1
        %v503 = vsel %vm455, %v498, %v502
        %v504 = vshrl.u32 %v447, 16
        %v506 = vor.u32 %v504, %v466
        %v508 = vshll.u32 %v451, 16
        %v510 = vrot.slane %v508, 1
        %v511 = vsel %vm455, %v506, %v510
        %v512 = vshrl.u32 %v448, 16
        %v514 = vor.u32 %v512, %v478
        %v516 = vshll.u32 %v452, 16
        %v518 = vrot.slane %v516, 1
        %v519 = vsel %vm455, %v514, %v518
        %v520 = vshrl.u32 %v449, 16
        %v522 = vor.u32 %v520, %v490
        %v524 = vshll.u32 %v453, 16
        %v526 = vrot.slane %v524, 1
        %v527 = vsel %vm455, %v522, %v526
        %v528 = vshrl.u32 %v450, 16
        %v530 = vor.u32 %v528, %v502
        %v532 = vshll.u32 %v454, 16
        %v534 = vrot.slane %v532, 1
        %v535 = vsel %vm455, %v530, %v534
        %v608 = vunpack.c.l.b16 %v349
        %v609 = vunpack.c.l.b16 %v350
        %v610 = vunpack.c.l.b16 %v351
        %v611 = vunpack.c.l.b16 %v352
        %v612 = vunpack.c.l.b16 %v353
        %v613 = vunpack.c.l.b16 %v354
        %v614 = vunpack.c.l.b16 %v355
        %v615 = vunpack.c.l.b16 %v356
        %v616 = vunpack.c.l.b16 %v357
        %v617 = vunpack.c.l.b16 %v358
        %v618 = vunpack.c.l.b16 %v359
        %v619 = vunpack.c.l.b16 %v360
        %v620 = vunpack.c.l.b16 %v361
        %v621 = vunpack.c.l.b16 %v362
        %v622 = vunpack.c.l.b16 %v363
        %v623 = vunpack.c.l.b16 %v364
        %v624 = vunpack.c.l.b16 %v365
        %v625 = vunpack.c.l.b16 %v366
        %v626 = vunpack.c.l.b16 %v367
        %v627 = vunpack.c.l.b16 %v368
        %v628 = vunpack.c.l.b16 %v369
        %v629 = vunpack.c.l.b16 %v370
        %v630 = vunpack.c.l.b16 %v371
        %v631 = vunpack.c.l.b16 %v372
        %v632 = vunpack.c.l.b16 %v373
        %v633 = vunpack.c.l.b16 %v374
        %v634 = vunpack.c.l.b16 %v375
        %v635 = vunpack.c.l.b16 %v376
        %v636 = vunpack.c.l.b16 %v377
        %v637 = vunpack.c.l.b16 %v378
        %v638 = vunpack.c.l.b16 %v379
        %v639 = vunpack.c.l.b16 %v380
        %v640 = vunpack.c.l.b16 %v381
        %v641 = vunpack.c.l.b16 %v382
        %v642 = vunpack.c.l.b16 %v383
        %v643 = vunpack.c.l.b16 %v384
        %v644 = vunpack.c.l.b16 %v385
        %v645 = vunpack.c.l.b16 %v386
        %v646 = vunpack.c.l.b16 %v387
        %v647 = vunpack.c.l.b16 %v388
        %v648 = vunpack.c.l.b16 %v389
        %v649 = vunpack.c.l.b16 %v390
        %v650 = vunpack.c.l.b16 %v391
        %v651 = vunpack.c.l.b16 %v392
        %v652 = vunpack.c.l.b16 %v393
        %v653 = vunpack.c.l.b16 %v394
        %v654 = vunpack.c.l.b16 %v395
        %v655 = vunpack.c.l.b16 %v396
        %v656 = vunpack.c.l.b16 %v397
        %v657 = vunpack.c.l.b16 %v398
        %v658 = vunpack.c.l.b16 %v399
        %v659 = vunpack.c.l.b16 %v400
        %v660 = vunpack.c.l.b16 %v401
        %v661 = vunpack.c.l.b16 %v402
        %v662 = vunpack.c.l.b16 %v403
        %v663 = vunpack.c.l.b16 %v404
        %v664 = vunpack.c.l.b16 %v405
        %v665 = vunpack.c.l.b16 %v406
        %v666 = vunpack.c.l.b16 %v407
        %v667 = vunpack.c.l.b16 %v408
        %v668 = vunpack.c.l.b16 %v409
        %v669 = vunpack.c.l.b16 %v410
        %v670 = vunpack.c.l.b16 %v411
        %v671 = vunpack.c.l.b16 %v412
        %v672 = vpack.c.b16 %v609, %v608
        %v673 = vpack.c.b16 %v611, %v610
        %v674 = vpack.c.b16 %v613, %v612
        %v675 = vpack.c.b16 %v615, %v614
        %v676 = vpack.c.b16 %v617, %v616
        %v677 = vpack.c.b16 %v619, %v618
        %v678 = vpack.c.b16 %v621, %v620
        %v679 = vpack.c.b16 %v623, %v622
        %v680 = vpack.c.b16 %v625, %v624
        %v681 = vpack.c.b16 %v627, %v626
        %v682 = vpack.c.b16 %v629, %v628
        %v683 = vpack.c.b16 %v631, %v630
        %v684 = vpack.c.b16 %v633, %v632
        %v685 = vpack.c.b16 %v635, %v634
        %v686 = vpack.c.b16 %v637, %v636
        %v687 = vpack.c.b16 %v639, %v638
        %v688 = vpack.c.b16 %v641, %v640
        %v689 = vpack.c.b16 %v643, %v642
        %v690 = vpack.c.b16 %v645, %v644
        %v691 = vpack.c.b16 %v647, %v646
        %v692 = vpack.c.b16 %v649, %v648
        %v693 = vpack.c.b16 %v651, %v650
        %v694 = vpack.c.b16 %v653, %v652
        %v695 = vpack.c.b16 %v655, %v654
        %v696 = vpack.c.b16 %v657, %v656
        %v697 = vpack.c.b16 %v659, %v658
        %v698 = vpack.c.b16 %v661, %v660
        %v699 = vpack.c.b16 %v663, %v662
        %v700 = vpack.c.b16 %v665, %v664
        %v701 = vpack.c.b16 %v667, %v666
        %v702 = vpack.c.b16 %v669, %v668
        %v703 = vpack.c.b16 %v671, %v670
        %736 = vmatprep.subr.bf16.mxu0 0
        %737 = vmatpush1.bf16.msra.mxu0 %v672
        %738 = vmatprep.subr.bf16.mxu0 0
        %739 = vmatpush1.bf16.msra.mxu0 %v673
        %740 = vmatprep.subr.bf16.mxu0 0
        %741 = vmatpush1.bf16.msra.mxu0 %v674
        %742 = vmatprep.subr.bf16.mxu0 0
        %743 = vmatpush1.bf16.msra.mxu0 %v675
        %744 = vmatprep.subr.bf16.mxu0 0
        %745 = vmatpush1.bf16.msra.mxu0 %v676
        %746 = vmatprep.subr.bf16.mxu0 0
        %747 = vmatpush1.bf16.msra.mxu0 %v677
        %748 = vmatprep.subr.bf16.mxu0 0
        %749 = vmatpush1.bf16.msra.mxu0 %v678
        %750 = vmatprep.subr.bf16.mxu0 0
        %751 = vmatpush1.bf16.msra.mxu0 %v679
        %752 = vmatprep.subr.bf16.mxu0 0
        %753 = vmatpush1.bf16.msra.mxu0 %v680
        %754 = vmatprep.subr.bf16.mxu0 0
        %755 = vmatpush1.bf16.msra.mxu0 %v681
        %756 = vmatprep.subr.bf16.mxu0 0
        %757 = vmatpush1.bf16.msra.mxu0 %v682
        %758 = vmatprep.subr.bf16.mxu0 0
        %759 = vmatpush1.bf16.msra.mxu0 %v683
        %760 = vmatprep.subr.bf16.mxu0 0
        %761 = vmatpush1.bf16.msra.mxu0 %v684
        %762 = vmatprep.subr.bf16.mxu0 0
        %763 = vmatpush1.bf16.msra.mxu0 %v685
        %764 = vmatprep.subr.bf16.mxu0 0
        %765 = vmatpush1.bf16.msra.mxu0 %v686
        %766 = vmatprep.subr.bf16.mxu0 0
        %767 = vmatpush1.bf16.msra.mxu0 %v687
        %768 = vmatprep.mubr.bf16.mxu0 %v479
        %769 = vmatmul.mubr.bf16.gmra.mrb[0].mxu0 %v467
        %v770 = vpop.f32.mrb[0].mxu0
        %v771 = vadd.f32 0.0, %v770
        %v772 = vpop.f32.mrb[0].mxu0
        %v773 = vpop.f32.mrb[0].mxu0
        %v774 = vadd.f32 0.0, %v773
        %v775 = vpop.f32.mrb[0].mxu0
        %776 = vmatprep.mubr.bf16.mxu0 %v519
        %777 = vmatmul.mubr.bf16.gmra.mrb[0].mxu0 %v511
        %v778 = vpop.f32.mrb[0].mxu0
        %v779 = vadd.f32 0.0, %v778
        %v780 = vpop.f32.mrb[0].mxu0
        %v781 = vpop.f32.mrb[0].mxu0
        %v782 = vadd.f32 0.0, %v781
        %v783 = vpop.f32.mrb[0].mxu0
        %784 = vdwg.mxu0
        %785 = vmatprep.subr.bf16.mxu0 0
        %786 = vmatpush1.bf16.msra.mxu0 %v688
        %787 = vmatprep.subr.bf16.mxu0 0
        %788 = vmatpush1.bf16.msra.mxu0 %v689
        %789 = vmatprep.subr.bf16.mxu0 0
        %790 = vmatpush1.bf16.msra.mxu0 %v690
        %791 = vmatprep.subr.bf16.mxu0 0
        %792 = vmatpush1.bf16.msra.mxu0 %v691
        %793 = vmatprep.subr.bf16.mxu0 0
        %794 = vmatpush1.bf16.msra.mxu0 %v692
        %795 = vmatprep.subr.bf16.mxu0 0
        %796 = vmatpush1.bf16.msra.mxu0 %v693
        %797 = vmatprep.subr.bf16.mxu0 0
        %798 = vmatpush1.bf16.msra.mxu0 %v694
        %799 = vmatprep.subr.bf16.mxu0 0
        %800 = vmatpush1.bf16.msra.mxu0 %v695
        %801 = vmatprep.subr.bf16.mxu0 0
        %802 = vmatpush1.bf16.msra.mxu0 %v696
        %803 = vmatprep.subr.bf16.mxu0 0
        %804 = vmatpush1.bf16.msra.mxu0 %v697
        %805 = vmatprep.subr.bf16.mxu0 0
        %806 = vmatpush1.bf16.msra.mxu0 %v698
        %807 = vmatprep.subr.bf16.mxu0 0
        %808 = vmatpush1.bf16.msra.mxu0 %v699
        %809 = vmatprep.subr.bf16.mxu0 0
        %810 = vmatpush1.bf16.msra.mxu0 %v700
        %811 = vmatprep.subr.bf16.mxu0 0
        %812 = vmatpush1.bf16.msra.mxu0 %v701
        %813 = vmatprep.subr.bf16.mxu0 0
        %814 = vmatpush1.bf16.msra.mxu0 %v702
        %815 = vmatprep.subr.bf16.mxu0 0
        %816 = vmatpush1.bf16.msra.mxu0 %v703
        %817 = vmatprep.mubr.bf16.mxu0 %v503
        %818 = vmatmul.mubr.bf16.gmra.mrb[0].mxu0 %v491
        %v819 = vpop.f32.mrb[0].mxu0
        %v820 = vadd.f32 %v771, %v819
        %v821 = vpop.f32.mrb[0].mxu0
        %v822 = vpop.f32.mrb[0].mxu0
        %v823 = vadd.f32 %v774, %v822
        %v824 = vpop.f32.mrb[0].mxu0
        %825 = vmatprep.mubr.bf16.mxu0 %v535
        %826 = vmatmul.mubr.bf16.gmra.mrb[0].mxu0 %v527
        %v827 = vpop.f32.mrb[0].mxu0
        %v828 = vadd.f32 %v779, %v827
        %v829 = vpop.f32.mrb[0].mxu0
        %v830 = vpop.f32.mrb[0].mxu0
        %v831 = vadd.f32 %v782, %v830
        %v832 = vpop.f32.mrb[0].mxu0
        %833 = vdwg.mxu0
        %v906 = vunpack.c.l.b16 %v282
        %v907 = vunpack.c.l.b16 %v283
        %v908 = vunpack.c.l.b16 %v284
        %v909 = vunpack.c.l.b16 %v285
        %v910 = vunpack.c.l.b16 %v286
        %v911 = vunpack.c.l.b16 %v287
        %v912 = vunpack.c.l.b16 %v288
        %v913 = vunpack.c.l.b16 %v289
        %v914 = vunpack.c.l.b16 %v290
        %v915 = vunpack.c.l.b16 %v291
        %v916 = vunpack.c.l.b16 %v292
        %v917 = vunpack.c.l.b16 %v293
        %v918 = vunpack.c.l.b16 %v294
        %v919 = vunpack.c.l.b16 %v295
        %v920 = vunpack.c.l.b16 %v296
        %v921 = vunpack.c.l.b16 %v297
        %v922 = vunpack.c.l.b16 %v298
        %v923 = vunpack.c.l.b16 %v299
        %v924 = vunpack.c.l.b16 %v300
        %v925 = vunpack.c.l.b16 %v301
        %v926 = vunpack.c.l.b16 %v302
        %v927 = vunpack.c.l.b16 %v303
        %v928 = vunpack.c.l.b16 %v304
        %v929 = vunpack.c.l.b16 %v305
        %v930 = vunpack.c.l.b16 %v306
        %v931 = vunpack.c.l.b16 %v307
        %v932 = vunpack.c.l.b16 %v308
        %v933 = vunpack.c.l.b16 %v309
        %v934 = vunpack.c.l.b16 %v310
        %v935 = vunpack.c.l.b16 %v311
        %v936 = vunpack.c.l.b16 %v312
        %v937 = vunpack.c.l.b16 %v313
        %v938 = vunpack.c.l.b16 %v314
        %v939 = vunpack.c.l.b16 %v315
        %v940 = vunpack.c.l.b16 %v316
        %v941 = vunpack.c.l.b16 %v317
        %v942 = vunpack.c.l.b16 %v318
        %v943 = vunpack.c.l.b16 %v319
        %v944 = vunpack.c.l.b16 %v320
        %v945 = vunpack.c.l.b16 %v321
        %v946 = vunpack.c.l.b16 %v322
        %v947 = vunpack.c.l.b16 %v323
        %v948 = vunpack.c.l.b16 %v324
        %v949 = vunpack.c.l.b16 %v325
        %v950 = vunpack.c.l.b16 %v326
        %v951 = vunpack.c.l.b16 %v327
        %v952 = vunpack.c.l.b16 %v328
        %v953 = vunpack.c.l.b16 %v329
        %v954 = vunpack.c.l.b16 %v330
        %v955 = vunpack.c.l.b16 %v331
        %v956 = vunpack.c.l.b16 %v332
        %v957 = vunpack.c.l.b16 %v333
        %v958 = vunpack.c.l.b16 %v334
        %v959 = vunpack.c.l.b16 %v335
        %v960 = vunpack.c.l.b16 %v336
        %v961 = vunpack.c.l.b16 %v337
        %v962 = vunpack.c.l.b16 %v338
        %v963 = vunpack.c.l.b16 %v339
        %v964 = vunpack.c.l.b16 %v340
        %v965 = vunpack.c.l.b16 %v341
        %v966 = vunpack.c.l.b16 %v342
        %v967 = vunpack.c.l.b16 %v343
        %v968 = vunpack.c.l.b16 %v344
        %v969 = vunpack.c.l.b16 %v345
        %v970 = vpack.c.b16 %v907, %v906
        %v971 = vpack.c.b16 %v909, %v908
        %v972 = vpack.c.b16 %v911, %v910
        %v973 = vpack.c.b16 %v913, %v912
        %v974 = vpack.c.b16 %v915, %v914
        %v975 = vpack.c.b16 %v917, %v916
        %v976 = vpack.c.b16 %v919, %v918
        %v977 = vpack.c.b16 %v921, %v920
        %v978 = vpack.c.b16 %v923, %v922
        %v979 = vpack.c.b16 %v925, %v924
        %v980 = vpack.c.b16 %v927, %v926
        %v981 = vpack.c.b16 %v929, %v928
        %v982 = vpack.c.b16 %v931, %v930
        %v983 = vpack.c.b16 %v933, %v932
        %v984 = vpack.c.b16 %v935, %v934
        %v985 = vpack.c.b16 %v937, %v936
        %v986 = vpack.c.b16 %v939, %v938
        %v987 = vpack.c.b16 %v941, %v940
        %v988 = vpack.c.b16 %v943, %v942
        %v989 = vpack.c.b16 %v945, %v944
        %v990 = vpack.c.b16 %v947, %v946
        %v991 = vpack.c.b16 %v949, %v948
        %v992 = vpack.c.b16 %v951, %v950
        %v993 = vpack.c.b16 %v953, %v952
        %v994 = vpack.c.b16 %v955, %v954
        %v995 = vpack.c.b16 %v957, %v956
        %v996 = vpack.c.b16 %v959, %v958
        %v997 = vpack.c.b16 %v961, %v960
        %v998 = vpack.c.b16 %v963, %v962
        %v999 = vpack.c.b16 %v965, %v964
        %v1000 = vpack.c.b16 %v967, %v966
        %v1001 = vpack.c.b16 %v969, %v968
        %1034 = vmatprep.subr.bf16.mxu0 0
        %1035 = vmatpush1.bf16.msra.mxu0 %v970
        %1036 = vmatprep.subr.bf16.mxu0 0
        %1037 = vmatpush1.bf16.msra.mxu0 %v971
        %1038 = vmatprep.subr.bf16.mxu0 0
        %1039 = vmatpush1.bf16.msra.mxu0 %v972
        %1040 = vmatprep.subr.bf16.mxu0 0
        %1041 = vmatpush1.bf16.msra.mxu0 %v973
        %1042 = vmatprep.subr.bf16.mxu0 0
        %1043 = vmatpush1.bf16.msra.mxu0 %v974
        %1044 = vmatprep.subr.bf16.mxu0 0
        %1045 = vmatpush1.bf16.msra.mxu0 %v975
        %1046 = vmatprep.subr.bf16.mxu0 0
        %1047 = vmatpush1.bf16.msra.mxu0 %v976
        %1048 = vmatprep.subr.bf16.mxu0 0
        %1049 = vmatpush1.bf16.msra.mxu0 %v977
        %1050 = vmatprep.subr.bf16.mxu0 0
        %1051 = vmatpush1.bf16.msra.mxu0 %v978
        %1052 = vmatprep.subr.bf16.mxu0 0
        %1053 = vmatpush1.bf16.msra.mxu0 %v979
        %1054 = vmatprep.subr.bf16.mxu0 0
        %1055 = vmatpush1.bf16.msra.mxu0 %v980
        %1056 = vmatprep.subr.bf16.mxu0 0
        %1057 = vmatpush1.bf16.msra.mxu0 %v981
        %1058 = vmatprep.subr.bf16.mxu0 0
        %1059 = vmatpush1.bf16.msra.mxu0 %v982
        %1060 = vmatprep.subr.bf16.mxu0 0
        %1061 = vmatpush1.bf16.msra.mxu0 %v983
        %1062 = vmatprep.subr.bf16.mxu0 0
        %1063 = vmatpush1.bf16.msra.mxu0 %v984
        %1064 = vmatprep.subr.bf16.mxu0 0
        %1065 = vmatpush1.bf16.msra.mxu0 %v985
        %1066 = vmatprep.mubr.bf16.mxu0 %v444
        %1067 = vmatmul.mubr.bf16.gmra.mrb[0].mxu0 %v443
        %v1068 = vpop.f32.mrb[0].mxu0
        %v1069 = vadd.f32 %v820, %v1068
        %v1070 = vpop.f32.mrb[0].mxu0
        %v1071 = vpop.f32.mrb[0].mxu0
        %v1072 = vadd.f32 %v823, %v1071
        %v1073 = vpop.f32.mrb[0].mxu0
        %1074 = vmatprep.mubr.bf16.mxu0 %v448
        %1075 = vmatmul.mubr.bf16.gmra.mrb[0].mxu0 %v447
        %v1076 = vpop.f32.mrb[0].mxu0
        %v1077 = vadd.f32 %v828, %v1076
        %v1078 = vpop.f32.mrb[0].mxu0
        %v1079 = vpop.f32.mrb[0].mxu0
        %v1080 = vadd.f32 %v831, %v1079
        %v1081 = vpop.f32.mrb[0].mxu0
        %1082 = vdwg.mxu0
        %1083 = vmatprep.subr.bf16.mxu0 0
        %1084 = vmatpush1.bf16.msra.mxu0 %v986
        %1085 = vmatprep.subr.bf16.mxu0 0
        %1086 = vmatpush1.bf16.msra.mxu0 %v987
        %1087 = vmatprep.subr.bf16.mxu0 0
        %1088 = vmatpush1.bf16.msra.mxu0 %v988
        %1089 = vmatprep.subr.bf16.mxu0 0
        %1090 = vmatpush1.bf16.msra.mxu0 %v989
        %1091 = vmatprep.subr.bf16.mxu0 0
        %1092 = vmatpush1.bf16.msra.mxu0 %v990
        %1093 = vmatprep.subr.bf16.mxu0 0
        %1094 = vmatpush1.bf16.msra.mxu0 %v991
        %1095 = vmatprep.subr.bf16.mxu0 0
        %1096 = vmatpush1.bf16.msra.mxu0 %v992
        %1097 = vmatprep.subr.bf16.mxu0 0
        %1098 = vmatpush1.bf16.msra.mxu0 %v993
        %1099 = vmatprep.subr.bf16.mxu0 0
        %1100 = vmatpush1.bf16.msra.mxu0 %v994
        %1101 = vmatprep.subr.bf16.mxu0 0
        %1102 = vmatpush1.bf16.msra.mxu0 %v995
        %1103 = vmatprep.subr.bf16.mxu0 0
        %1104 = vmatpush1.bf16.msra.mxu0 %v996
        %1105 = vmatprep.subr.bf16.mxu0 0
        %1106 = vmatpush1.bf16.msra.mxu0 %v997
        %1107 = vmatprep.subr.bf16.mxu0 0
        %1108 = vmatpush1.bf16.msra.mxu0 %v998
        %1109 = vmatprep.subr.bf16.mxu0 0
        %1110 = vmatpush1.bf16.msra.mxu0 %v999
        %1111 = vmatprep.subr.bf16.mxu0 0
        %1112 = vmatpush1.bf16.msra.mxu0 %v1000
        %1113 = vmatprep.subr.bf16.mxu0 0
        %1114 = vmatpush1.bf16.msra.mxu0 %v1001
        %1115 = vmatprep.mubr.bf16.mxu0 %v446
        %1116 = vmatmul.mubr.bf16.gmra.mrb[0].mxu0 %v445
        %v1117 = vpop.f32.mrb[0].mxu0
        %v1118 = vadd.f32 %v1069, %v1117
        %v1119 = vpop.f32.mrb[0].mxu0
        %v1120 = vpop.f32.mrb[0].mxu0
        %v1121 = vadd.f32 %v1072, %v1120
        %v1122 = vpop.f32.mrb[0].mxu0
        %1123 = vmatprep.mubr.bf16.mxu0 %v450
        %1124 = vmatmul.mubr.bf16.gmra.mrb[0].mxu0 %v449
        %v1125 = vpop.f32.mrb[0].mxu0
        %v1126 = vadd.f32 %v1077, %v1125
        %v1127 = vpop.f32.mrb[0].mxu0
        %v1128 = vpop.f32.mrb[0].mxu0
        %v1129 = vadd.f32 %v1080, %v1128
        %v1130 = vpop.f32.mrb[0].mxu0
        %1131 = vdwg.mxu0
        %v1132 = vld [vmem:[%s224 + $0x40] sm:$0xff]
        %v1133 = vld [vmem:[%s224 + $0x48] sm:$0xff]
        %s1134 = scalar_lea.vmem %s233, 512 [#allocation5]
        %v1135 = vld [vmem:[%s1134] sm:$0xf]
        %v1136 = vld [vmem:[%s1134 + $0x4] sm:$0xf]
        %v1137 = vld [vmem:[%s1134 + $0x8] sm:$0xf]
        %v1138 = vld [vmem:[%s1134 + $0xc] sm:$0xf]
        %v1139 = vld [vmem:[%s1134 + $0x10] sm:$0xf]
        %v1140 = vld [vmem:[%s1134 + $0x14] sm:$0xf]
        %v1141 = vld [vmem:[%s1134 + $0x18] sm:$0xf]
        %v1142 = vld [vmem:[%s1134 + $0x1c] sm:$0xf]
        %v1143 = vld [vmem:[%s1134 + $0x20] sm:$0xf]
        %v1144 = vld [vmem:[%s1134 + $0x24] sm:$0xf]
        %v1145 = vld [vmem:[%s1134 + $0x28] sm:$0xf]
        %v1146 = vld [vmem:[%s1134 + $0x2c] sm:$0xf]
        %v1147 = vld [vmem:[%s1134 + $0x30] sm:$0xf]
        %v1148 = vld [vmem:[%s1134 + $0x34] sm:$0xf]
        %v1149 = vld [vmem:[%s1134 + $0x38] sm:$0xf]
        %v1150 = vld [vmem:[%s1134 + $0x3c] sm:$0xf]
        %v1151 = vld [vmem:[%s1134 + $0x40] sm:$0xf]
        %v1152 = vld [vmem:[%s1134 + $0x44] sm:$0xf]
        %v1153 = vld [vmem:[%s1134 + $0x48] sm:$0xf]
        %v1154 = vld [vmem:[%s1134 + $0x4c] sm:$0xf]
        %v1155 = vld [vmem:[%s1134 + $0x50] sm:$0xf]
        %v1156 = vld [vmem:[%s1134 + $0x54] sm:$0xf]
        %v1157 = vld [vmem:[%s1134 + $0x58] sm:$0xf]
        %v1158 = vld [vmem:[%s1134 + $0x5c] sm:$0xf]
        %v1159 = vld [vmem:[%s1134 + $0x60] sm:$0xf]
        %v1160 = vld [vmem:[%s1134 + $0x64] sm:$0xf]
        %v1161 = vld [vmem:[%s1134 + $0x68] sm:$0xf]
        %v1162 = vld [vmem:[%s1134 + $0x6c] sm:$0xf]
        %v1163 = vld [vmem:[%s1134 + $0x70] sm:$0xf]
        %v1164 = vld [vmem:[%s1134 + $0x74] sm:$0xf]
        %v1165 = vld [vmem:[%s1134 + $0x78] sm:$0xf]
        %v1166 = vld [vmem:[%s1134 + $0x7c] sm:$0xf]
        %v1167 = vld [vmem:[%s1134 + $0x80] sm:$0xf]
        %v1168 = vld [vmem:[%s1134 + $0x84] sm:$0xf]
        %v1169 = vld [vmem:[%s1134 + $0x88] sm:$0xf]
        %v1170 = vld [vmem:[%s1134 + $0x8c] sm:$0xf]
        %v1171 = vld [vmem:[%s1134 + $0x90] sm:$0xf]
        %v1172 = vld [vmem:[%s1134 + $0x94] sm:$0xf]
        %v1173 = vld [vmem:[%s1134 + $0x98] sm:$0xf]
        %v1174 = vld [vmem:[%s1134 + $0x9c] sm:$0xf]
        %v1175 = vld [vmem:[%s1134 + $0xa0] sm:$0xf]
        %v1176 = vld [vmem:[%s1134 + $0xa4] sm:$0xf]
        %v1177 = vld [vmem:[%s1134 + $0xa8] sm:$0xf]
        %v1178 = vld [vmem:[%s1134 + $0xac] sm:$0xf]
        %v1179 = vld [vmem:[%s1134 + $0xb0] sm:$0xf]
        %v1180 = vld [vmem:[%s1134 + $0xb4] sm:$0xf]
        %v1181 = vld [vmem:[%s1134 + $0xb8] sm:$0xf]
        %v1182 = vld [vmem:[%s1134 + $0xbc] sm:$0xf]
        %v1183 = vld [vmem:[%s1134 + $0xc0] sm:$0xf]
        %v1184 = vld [vmem:[%s1134 + $0xc4] sm:$0xf]
        %v1185 = vld [vmem:[%s1134 + $0xc8] sm:$0xf]
        %v1186 = vld [vmem:[%s1134 + $0xcc] sm:$0xf]
        %v1187 = vld [vmem:[%s1134 + $0xd0] sm:$0xf]
        %v1188 = vld [vmem:[%s1134 + $0xd4] sm:$0xf]
        %v1189 = vld [vmem:[%s1134 + $0xd8] sm:$0xf]
        %v1190 = vld [vmem:[%s1134 + $0xdc] sm:$0xf]
        %v1191 = vld [vmem:[%s1134 + $0xe0] sm:$0xf]
        %v1192 = vld [vmem:[%s1134 + $0xe4] sm:$0xf]
        %v1193 = vld [vmem:[%s1134 + $0xe8] sm:$0xf]
        %v1194 = vld [vmem:[%s1134 + $0xec] sm:$0xf]
        %v1195 = vld [vmem:[%s1134 + $0xf0] sm:$0xf]
        %v1196 = vld [vmem:[%s1134 + $0xf4] sm:$0xf]
        %v1197 = vld [vmem:[%s1134 + $0xf8] sm:$0xf]
        %v1198 = vld [vmem:[%s1134 + $0xfc] sm:$0xf]
        %v1201 = vunpack.c.l.b16 %v1132
        %v1202 = vunpack.c.h.b16 %v1132
        %v1203 = vunpack.c.l.b16 %v1133
        %v1204 = vunpack.c.h.b16 %v1133
        %v1205 = vpack.c.b16 %v431, %v427
        %v1206 = vpack.c.b16 %v432, %v428
        %v1207 = vpack.c.b16 %v433, %v429
        %v1208 = vpack.c.b16 %v434, %v430
        %v1209 = vpack.c.b16 %v1201, %v435
        %v1210 = vpack.c.b16 %v1202, %v436
        %v1211 = vpack.c.b16 %v1203, %v437
        %v1212 = vpack.c.b16 %v1204, %v438
        %v1285 = vunpack.c.l.b16 %v1135
        %v1286 = vunpack.c.l.b16 %v1136
        %v1287 = vunpack.c.l.b16 %v1137
        %v1288 = vunpack.c.l.b16 %v1138
        %v1289 = vunpack.c.l.b16 %v1139
        %v1290 = vunpack.c.l.b16 %v1140
        %v1291 = vunpack.c.l.b16 %v1141
        %v1292 = vunpack.c.l.b16 %v1142
        %v1293 = vunpack.c.l.b16 %v1143
        %v1294 = vunpack.c.l.b16 %v1144
        %v1295 = vunpack.c.l.b16 %v1145
        %v1296 = vunpack.c.l.b16 %v1146
        %v1297 = vunpack.c.l.b16 %v1147
        %v1298 = vunpack.c.l.b16 %v1148
        %v1299 = vunpack.c.l.b16 %v1149
        %v1300 = vunpack.c.l.b16 %v1150
        %v1301 = vunpack.c.l.b16 %v1151
        %v1302 = vunpack.c.l.b16 %v1152
        %v1303 = vunpack.c.l.b16 %v1153
        %v1304 = vunpack.c.l.b16 %v1154
        %v1305 = vunpack.c.l.b16 %v1155
        %v1306 = vunpack.c.l.b16 %v1156
        %v1307 = vunpack.c.l.b16 %v1157
        %v1308 = vunpack.c.l.b16 %v1158
        %v1309 = vunpack.c.l.b16 %v1159
        %v1310 = vunpack.c.l.b16 %v1160
        %v1311 = vunpack.c.l.b16 %v1161
        %v1312 = vunpack.c.l.b16 %v1162
        %v1313 = vunpack.c.l.b16 %v1163
        %v1314 = vunpack.c.l.b16 %v1164
        %v1315 = vunpack.c.l.b16 %v1165
        %v1316 = vunpack.c.l.b16 %v1166
        %v1317 = vunpack.c.l.b16 %v1167
        %v1318 = vunpack.c.l.b16 %v1168
        %v1319 = vunpack.c.l.b16 %v1169
        %v1320 = vunpack.c.l.b16 %v1170
        %v1321 = vunpack.c.l.b16 %v1171
        %v1322 = vunpack.c.l.b16 %v1172
        %v1323 = vunpack.c.l.b16 %v1173
        %v1324 = vunpack.c.l.b16 %v1174
        %v1325 = vunpack.c.l.b16 %v1175
        %v1326 = vunpack.c.l.b16 %v1176
        %v1327 = vunpack.c.l.b16 %v1177
        %v1328 = vunpack.c.l.b16 %v1178
        %v1329 = vunpack.c.l.b16 %v1179
        %v1330 = vunpack.c.l.b16 %v1180
        %v1331 = vunpack.c.l.b16 %v1181
        %v1332 = vunpack.c.l.b16 %v1182
        %v1333 = vunpack.c.l.b16 %v1183
        %v1334 = vunpack.c.l.b16 %v1184
        %v1335 = vunpack.c.l.b16 %v1185
        %v1336 = vunpack.c.l.b16 %v1186
        %v1337 = vunpack.c.l.b16 %v1187
        %v1338 = vunpack.c.l.b16 %v1188
        %v1339 = vunpack.c.l.b16 %v1189
        %v1340 = vunpack.c.l.b16 %v1190
        %v1341 = vunpack.c.l.b16 %v1191
        %v1342 = vunpack.c.l.b16 %v1192
        %v1343 = vunpack.c.l.b16 %v1193
        %v1344 = vunpack.c.l.b16 %v1194
        %v1345 = vunpack.c.l.b16 %v1195
        %v1346 = vunpack.c.l.b16 %v1196
        %v1347 = vunpack.c.l.b16 %v1197
        %v1348 = vunpack.c.l.b16 %v1198
        %v1349 = vpack.c.b16 %v1286, %v1285
        %v1350 = vpack.c.b16 %v1288, %v1287
        %v1351 = vpack.c.b16 %v1290, %v1289
        %v1352 = vpack.c.b16 %v1292, %v1291
        %v1353 = vpack.c.b16 %v1294, %v1293
        %v1354 = vpack.c.b16 %v1296, %v1295
        %v1355 = vpack.c.b16 %v1298, %v1297
        %v1356 = vpack.c.b16 %v1300, %v1299
        %v1357 = vpack.c.b16 %v1302, %v1301
        %v1358 = vpack.c.b16 %v1304, %v1303
        %v1359 = vpack.c.b16 %v1306, %v1305
        %v1360 = vpack.c.b16 %v1308, %v1307
        %v1361 = vpack.c.b16 %v1310, %v1309
        %v1362 = vpack.c.b16 %v1312, %v1311
        %v1363 = vpack.c.b16 %v1314, %v1313
        %v1364 = vpack.c.b16 %v1316, %v1315
        %v1365 = vpack.c.b16 %v1318, %v1317
        %v1366 = vpack.c.b16 %v1320, %v1319
        %v1367 = vpack.c.b16 %v1322, %v1321
        %v1368 = vpack.c.b16 %v1324, %v1323
        %v1369 = vpack.c.b16 %v1326, %v1325
        %v1370 = vpack.c.b16 %v1328, %v1327
        %v1371 = vpack.c.b16 %v1330, %v1329
        %v1372 = vpack.c.b16 %v1332, %v1331
        %v1373 = vpack.c.b16 %v1334, %v1333
        %v1374 = vpack.c.b16 %v1336, %v1335
        %v1375 = vpack.c.b16 %v1338, %v1337
        %v1376 = vpack.c.b16 %v1340, %v1339
        %v1377 = vpack.c.b16 %v1342, %v1341
        %v1378 = vpack.c.b16 %v1344, %v1343
        %v1379 = vpack.c.b16 %v1346, %v1345
        %v1380 = vpack.c.b16 %v1348, %v1347
        %1413 = vmatprep.subr.bf16.mxu0 0
        %1414 = vmatpush1.bf16.msra.mxu0 %v1349
        %1415 = vmatprep.subr.bf16.mxu0 0
        %1416 = vmatpush1.bf16.msra.mxu0 %v1350
        %1417 = vmatprep.subr.bf16.mxu0 0
        %1418 = vmatpush1.bf16.msra.mxu0 %v1351
        %1419 = vmatprep.subr.bf16.mxu0 0
        %1420 = vmatpush1.bf16.msra.mxu0 %v1352
        %1421 = vmatprep.subr.bf16.mxu0 0
        %1422 = vmatpush1.bf16.msra.mxu0 %v1353
        %1423 = vmatprep.subr.bf16.mxu0 0
        %1424 = vmatpush1.bf16.msra.mxu0 %v1354
        %1425 = vmatprep.subr.bf16.mxu0 0
        %1426 = vmatpush1.bf16.msra.mxu0 %v1355
        %1427 = vmatprep.subr.bf16.mxu0 0
        %1428 = vmatpush1.bf16.msra.mxu0 %v1356
        %1429 = vmatprep.subr.bf16.mxu0 0
        %1430 = vmatpush1.bf16.msra.mxu0 %v1357
        %1431 = vmatprep.subr.bf16.mxu0 0
        %1432 = vmatpush1.bf16.msra.mxu0 %v1358
        %1433 = vmatprep.subr.bf16.mxu0 0
        %1434 = vmatpush1.bf16.msra.mxu0 %v1359
        %1435 = vmatprep.subr.bf16.mxu0 0
        %1436 = vmatpush1.bf16.msra.mxu0 %v1360
        %1437 = vmatprep.subr.bf16.mxu0 0
        %1438 = vmatpush1.bf16.msra.mxu0 %v1361
        %1439 = vmatprep.subr.bf16.mxu0 0
        %1440 = vmatpush1.bf16.msra.mxu0 %v1362
        %1441 = vmatprep.subr.bf16.mxu0 0
        %1442 = vmatpush1.bf16.msra.mxu0 %v1363
        %1443 = vmatprep.subr.bf16.mxu0 0
        %1444 = vmatpush1.bf16.msra.mxu0 %v1364
        %1445 = vmatprep.mubr.bf16.mxu0 %v1206
        %1446 = vmatmul.mubr.bf16.gmra.mrb[0].mxu0 %v1205
        %v1447 = vpop.f32.mrb[0].mxu0
        %v1448 = vadd.f32 0.0, %v1447
        %v1449 = vpop.f32.mrb[0].mxu0
        %v1450 = vpop.f32.mrb[0].mxu0
        %v1451 = vadd.f32 0.0, %v1450
        %v1452 = vpop.f32.mrb[0].mxu0
        %1453 = vmatprep.mubr.bf16.mxu0 %v1210
        %1454 = vmatmul.mubr.bf16.gmra.mrb[0].mxu0 %v1209
        %v1455 = vpop.f32.mrb[0].mxu0
        %v1456 = vadd.f32 0.0, %v1455
        %v1457 = vpop.f32.mrb[0].mxu0
        %v1458 = vpop.f32.mrb[0].mxu0
        %v1459 = vadd.f32 0.0, %v1458
        %v1460 = vpop.f32.mrb[0].mxu0
        %1461 = vdwg.mxu0
        %1462 = vmatprep.subr.bf16.mxu0 0
        %1463 = vmatpush1.bf16.msra.mxu0 %v1365
        %1464 = vmatprep.subr.bf16.mxu0 0
        %1465 = vmatpush1.bf16.msra.mxu0 %v1366
        %1466 = vmatprep.subr.bf16.mxu0 0
        %1467 = vmatpush1.bf16.msra.mxu0 %v1367
        %1468 = vmatprep.subr.bf16.mxu0 0
        %1469 = vmatpush1.bf16.msra.mxu0 %v1368
        %1470 = vmatprep.subr.bf16.mxu0 0
        %1471 = vmatpush1.bf16.msra.mxu0 %v1369
        %1472 = vmatprep.subr.bf16.mxu0 0
        %1473 = vmatpush1.bf16.msra.mxu0 %v1370
        %1474 = vmatprep.subr.bf16.mxu0 0
        %1475 = vmatpush1.bf16.msra.mxu0 %v1371
        %1476 = vmatprep.subr.bf16.mxu0 0
        %1477 = vmatpush1.bf16.msra.mxu0 %v1372
        %1478 = vmatprep.subr.bf16.mxu0 0
        %1479 = vmatpush1.bf16.msra.mxu0 %v1373
        %1480 = vmatprep.subr.bf16.mxu0 0
        %1481 = vmatpush1.bf16.msra.mxu0 %v1374
        %1482 = vmatprep.subr.bf16.mxu0 0
        %1483 = vmatpush1.bf16.msra.mxu0 %v1375
        %1484 = vmatprep.subr.bf16.mxu0 0
        %1485 = vmatpush1.bf16.msra.mxu0 %v1376
        %1486 = vmatprep.subr.bf16.mxu0 0
        %1487 = vmatpush1.bf16.msra.mxu0 %v1377
        %1488 = vmatprep.subr.bf16.mxu0 0
        %1489 = vmatpush1.bf16.msra.mxu0 %v1378
        %1490 = vmatprep.subr.bf16.mxu0 0
        %1491 = vmatpush1.bf16.msra.mxu0 %v1379
        %1492 = vmatprep.subr.bf16.mxu0 0
        %1493 = vmatpush1.bf16.msra.mxu0 %v1380
        %1494 = vmatprep.mubr.bf16.mxu0 %v1208
        %1495 = vmatmul.mubr.bf16.gmra.mrb[0].mxu0 %v1207
        %v1496 = vpop.f32.mrb[0].mxu0
        %v1497 = vadd.f32 %v1448, %v1496
        %v1498 = vpop.f32.mrb[0].mxu0
        %v1499 = vpop.f32.mrb[0].mxu0
        %v1500 = vadd.f32 %v1451, %v1499
        %v1501 = vpop.f32.mrb[0].mxu0
        %1502 = vmatprep.mubr.bf16.mxu0 %v1212
        %1503 = vmatmul.mubr.bf16.gmra.mrb[0].mxu0 %v1211
        %v1504 = vpop.f32.mrb[0].mxu0
        %v1505 = vadd.f32 %v1456, %v1504
        %v1506 = vpop.f32.mrb[0].mxu0
        %v1507 = vpop.f32.mrb[0].mxu0
        %v1508 = vadd.f32 %v1459, %v1507
        %v1509 = vpop.f32.mrb[0].mxu0
        %1510 = vdwg.mxu0
        %v1511 = vadd.f32 %v1118, %v1497
        %v1512 = vadd.f32 %v1121, %v1500
        %v1513 = vadd.f32 %v1126, %v1505
        %v1514 = vadd.f32 %v1129, %v1508
        %v1515 = vld [vmem:[%s224 + $0x10] sm:$0xff]
        %v1516 = vld [vmem:[%s224 + $0x18] sm:$0xff]
        %v1517 = vld [vmem:[%s224 + $0x20] sm:$0xff]
        %v1518 = vld [vmem:[%s224 + $0x28] sm:$0xff]
        %v1519 = vld [vmem:[%s224 + $0x30] sm:$0xff]
        %v1520 = vld [vmem:[%s224 + $0x38] sm:$0xff]
        %v1521 = vld [vmem:[%s224 + $0x40] sm:$0xff]
        %v1522 = vld [vmem:[%s224 + $0x48] sm:$0xff]
        %v1523 = vld [vmem:[%s224 + $0x50] sm:$0x11]
        %v1524 = vld [vmem:[%s224 + $0x58] sm:$0x11]
        %s1525 = scalar_lea.vmem %s233, 768 [#allocation5]
        %v1526 = vld [vmem:[%s1525] sm:$0xf]
        %v1527 = vld [vmem:[%s1525 + $0x4] sm:$0xf]
        %v1528 = vld [vmem:[%s1525 + $0x8] sm:$0xf]
        %v1529 = vld [vmem:[%s1525 + $0xc] sm:$0xf]
        %v1530 = vld [vmem:[%s1525 + $0x10] sm:$0xf]
        %v1531 = vld [vmem:[%s1525 + $0x14] sm:$0xf]
        %v1532 = vld [vmem:[%s1525 + $0x18] sm:$0xf]
        %v1533 = vld [vmem:[%s1525 + $0x1c] sm:$0xf]
        %v1534 = vld [vmem:[%s1525 + $0x20] sm:$0xf]
        %v1535 = vld [vmem:[%s1525 + $0x24] sm:$0xf]
        %v1536 = vld [vmem:[%s1525 + $0x28] sm:$0xf]
        %v1537 = vld [vmem:[%s1525 + $0x2c] sm:$0xf]
        %v1538 = vld [vmem:[%s1525 + $0x30] sm:$0xf]
        %v1539 = vld [vmem:[%s1525 + $0x34] sm:$0xf]
        %v1540 = vld [vmem:[%s1525 + $0x38] sm:$0xf]
        %v1541 = vld [vmem:[%s1525 + $0x3c] sm:$0xf]
        %v1542 = vld [vmem:[%s1525 + $0x40] sm:$0xf]
        %v1543 = vld [vmem:[%s1525 + $0x44] sm:$0xf]
        %v1544 = vld [vmem:[%s1525 + $0x48] sm:$0xf]
        %v1545 = vld [vmem:[%s1525 + $0x4c] sm:$0xf]
        %v1546 = vld [vmem:[%s1525 + $0x50] sm:$0xf]
        %v1547 = vld [vmem:[%s1525 + $0x54] sm:$0xf]
        %v1548 = vld [vmem:[%s1525 + $0x58] sm:$0xf]
        %v1549 = vld [vmem:[%s1525 + $0x5c] sm:$0xf]
        %v1550 = vld [vmem:[%s1525 + $0x60] sm:$0xf]
        %v1551 = vld [vmem:[%s1525 + $0x64] sm:$0xf]
        %v1552 = vld [vmem:[%s1525 + $0x68] sm:$0xf]
        %v1553 = vld [vmem:[%s1525 + $0x6c] sm:$0xf]
        %v1554 = vld [vmem:[%s1525 + $0x70] sm:$0xf]
        %v1555 = vld [vmem:[%s1525 + $0x74] sm:$0xf]
        %v1556 = vld [vmem:[%s1525 + $0x78] sm:$0xf]
        %v1557 = vld [vmem:[%s1525 + $0x7c] sm:$0xf]
        %v1558 = vld [vmem:[%s1525 + $0x80] sm:$0xf]
        %v1559 = vld [vmem:[%s1525 + $0x84] sm:$0xf]
        %v1560 = vld [vmem:[%s1525 + $0x88] sm:$0xf]
        %v1561 = vld [vmem:[%s1525 + $0x8c] sm:$0xf]
        %v1562 = vld [vmem:[%s1525 + $0x90] sm:$0xf]
        %v1563 = vld [vmem:[%s1525 + $0x94] sm:$0xf]
        %v1564 = vld [vmem:[%s1525 + $0x98] sm:$0xf]
        %v1565 = vld [vmem:[%s1525 + $0x9c] sm:$0xf]
        %v1566 = vld [vmem:[%s1525 + $0xa0] sm:$0xf]
        %v1567 = vld [vmem:[%s1525 + $0xa4] sm:$0xf]
        %v1568 = vld [vmem:[%s1525 + $0xa8] sm:$0xf]
        %v1569 = vld [vmem:[%s1525 + $0xac] sm:$0xf]
        %v1570 = vld [vmem:[%s1525 + $0xb0] sm:$0xf]
        %v1571 = vld [vmem:[%s1525 + $0xb4] sm:$0xf]
        %v1572 = vld [vmem:[%s1525 + $0xb8] sm:$0xf]
        %v1573 = vld [vmem:[%s1525 + $0xbc] sm:$0xf]
        %v1574 = vld [vmem:[%s1525 + $0xc0] sm:$0xf]
        %v1575 = vld [vmem:[%s1525 + $0xc4] sm:$0xf]
        %v1576 = vld [vmem:[%s1525 + $0xc8] sm:$0xf]
        %v1577 = vld [vmem:[%s1525 + $0xcc] sm:$0xf]
        %v1578 = vld [vmem:[%s1525 + $0xd0] sm:$0xf]
        %v1579 = vld [vmem:[%s1525 + $0xd4] sm:$0xf]
        %v1580 = vld [vmem:[%s1525 + $0xd8] sm:$0xf]
        %v1581 = vld [vmem:[%s1525 + $0xdc] sm:$0xf]
        %v1582 = vld [vmem:[%s1525 + $0xe0] sm:$0xf]
        %v1583 = vld [vmem:[%s1525 + $0xe4] sm:$0xf]
        %v1584 = vld [vmem:[%s1525 + $0xe8] sm:$0xf]
        %v1585 = vld [vmem:[%s1525 + $0xec] sm:$0xf]
        %v1586 = vld [vmem:[%s1525 + $0xf0] sm:$0xf]
        %v1587 = vld [vmem:[%s1525 + $0xf4] sm:$0xf]
        %v1588 = vld [vmem:[%s1525 + $0xf8] sm:$0xf]
        %v1589 = vld [vmem:[%s1525 + $0xfc] sm:$0xf]
        %v1600 = vunpack.c.l.b16 %v1515
        %v1601 = vunpack.c.h.b16 %v1515
        %v1602 = vunpack.c.l.b16 %v1516
        %v1603 = vunpack.c.h.b16 %v1516
        %v1604 = vunpack.c.l.b16 %v1517
        %v1605 = vunpack.c.h.b16 %v1517
        %v1606 = vunpack.c.l.b16 %v1518
        %v1607 = vunpack.c.h.b16 %v1518
        %v1608 = vunpack.c.l.b16 %v1519
        %v1609 = vunpack.c.h.b16 %v1519
        %v1610 = vunpack.c.l.b16 %v1520
        %v1611 = vunpack.c.h.b16 %v1520
        %v1612 = vunpack.c.l.b16 %v1521
        %v1613 = vunpack.c.h.b16 %v1521
        %v1614 = vunpack.c.l.b16 %v1522
        %v1615 = vunpack.c.h.b16 %v1522
        %v1616 = vunpack.c.l.b16 %v1523
        %v1617 = vunpack.c.h.b16 %v1523
        %v1618 = vunpack.c.l.b16 %v1524
        %v1619 = vunpack.c.h.b16 %v1524
        %v1620 = vpack.c.b16 %v1604, %v1600
        %v1621 = vpack.c.b16 %v1605, %v1601
        %v1622 = vpack.c.b16 %v1606, %v1602
        %v1623 = vpack.c.b16 %v1607, %v1603
        %v1624 = vpack.c.b16 %v1612, %v1608
        %v1625 = vpack.c.b16 %v1613, %v1609
        %v1626 = vpack.c.b16 %v1614, %v1610
        %v1627 = vpack.c.b16 %v1615, %v1611
        %v1628 = vpack.c.b16 %v1616, %v1616
        %v1629 = vpack.c.b16 %v1617, %v1617
        %v1630 = vpack.c.b16 %v1618, %v1618
        %v1631 = vpack.c.b16 %v1619, %v1619
        %v1633 = vshrl.u32 %v1620, 16
        %v1635 = vshll.u32 %v1620, 16
        %v1637 = vrot.slane %v1635, 1
        %v1638 = vor.u32 %v1633, %v1637
        %v1640 = vshll.u32 %v1624, 16
        %v1642 = vrot.slane %v1640, 1
        %v1643 = vsel %vm455, %v1638, %v1642
        %v1645 = vshrl.u32 %v1621, 16
        %v1647 = vshll.u32 %v1621, 16
        %v1649 = vrot.slane %v1647, 1
        %v1650 = vor.u32 %v1645, %v1649
        %v1652 = vshll.u32 %v1625, 16
        %v1654 = vrot.slane %v1652, 1
        %v1655 = vsel %vm455, %v1650, %v1654
        %v1657 = vshrl.u32 %v1622, 16
        %v1659 = vshll.u32 %v1622, 16
        %v1661 = vrot.slane %v1659, 1
        %v1662 = vor.u32 %v1657, %v1661
        %v1664 = vshll.u32 %v1626, 16
        %v1666 = vrot.slane %v1664, 1
        %v1667 = vsel %vm455, %v1662, %v1666
        %v1669 = vshrl.u32 %v1623, 16
        %v1671 = vshll.u32 %v1623, 16
        %v1673 = vrot.slane %v1671, 1
        %v1674 = vor.u32 %v1669, %v1673
        %v1676 = vshll.u32 %v1627, 16
        %v1678 = vrot.slane %v1676, 1
        %v1679 = vsel %vm455, %v1674, %v1678
        %v1680 = vshrl.u32 %v1624, 16
        %v1682 = vor.u32 %v1680, %v1642
        %v1684 = vshll.u32 %v1628, 16
        %v1686 = vrot.slane %v1684, 1
        %v1687 = vsel %vm455, %v1682, %v1686
        %v1688 = vshrl.u32 %v1625, 16
        %v1690 = vor.u32 %v1688, %v1654
        %v1692 = vshll.u32 %v1629, 16
        %v1694 = vrot.slane %v1692, 1
        %v1695 = vsel %vm455, %v1690, %v1694
        %v1696 = vshrl.u32 %v1626, 16
        %v1698 = vor.u32 %v1696, %v1666
        %v1700 = vshll.u32 %v1630, 16
        %v1702 = vrot.slane %v1700, 1
        %v1703 = vsel %vm455, %v1698, %v1702
        %v1704 = vshrl.u32 %v1627, 16
        %v1706 = vor.u32 %v1704, %v1678
        %v1708 = vshll.u32 %v1631, 16
        %v1710 = vrot.slane %v1708, 1
        %v1711 = vsel %vm455, %v1706, %v1710
        %v1784 = vunpack.c.l.b16 %v1526
        %v1785 = vunpack.c.l.b16 %v1527
        %v1786 = vunpack.c.l.b16 %v1528
        %v1787 = vunpack.c.l.b16 %v1529
        %v1788 = vunpack.c.l.b16 %v1530
        %v1789 = vunpack.c.l.b16 %v1531
        %v1790 = vunpack.c.l.b16 %v1532
        %v1791 = vunpack.c.l.b16 %v1533
        %v1792 = vunpack.c.l.b16 %v1534
        %v1793 = vunpack.c.l.b16 %v1535
        %v1794 = vunpack.c.l.b16 %v1536
        %v1795 = vunpack.c.l.b16 %v1537
        %v1796 = vunpack.c.l.b16 %v1538
        %v1797 = vunpack.c.l.b16 %v1539
        %v1798 = vunpack.c.l.b16 %v1540
        %v1799 = vunpack.c.l.b16 %v1541
        %v1800 = vunpack.c.l.b16 %v1542
        %v1801 = vunpack.c.l.b16 %v1543
        %v1802 = vunpack.c.l.b16 %v1544
        %v1803 = vunpack.c.l.b16 %v1545
        %v1804 = vunpack.c.l.b16 %v1546
        %v1805 = vunpack.c.l.b16 %v1547
        %v1806 = vunpack.c.l.b16 %v1548
        %v1807 = vunpack.c.l.b16 %v1549
        %v1808 = vunpack.c.l.b16 %v1550
        %v1809 = vunpack.c.l.b16 %v1551
        %v1810 = vunpack.c.l.b16 %v1552
        %v1811 = vunpack.c.l.b16 %v1553
        %v1812 = vunpack.c.l.b16 %v1554
        %v1813 = vunpack.c.l.b16 %v1555
        %v1814 = vunpack.c.l.b16 %v1556
        %v1815 = vunpack.c.l.b16 %v1557
        %v1816 = vunpack.c.l.b16 %v1558
        %v1817 = vunpack.c.l.b16 %v1559
        %v1818 = vunpack.c.l.b16 %v1560
        %v1819 = vunpack.c.l.b16 %v1561
        %v1820 = vunpack.c.l.b16 %v1562
        %v1821 = vunpack.c.l.b16 %v1563
        %v1822 = vunpack.c.l.b16 %v1564
        %v1823 = vunpack.c.l.b16 %v1565
        %v1824 = vunpack.c.l.b16 %v1566
        %v1825 = vunpack.c.l.b16 %v1567
        %v1826 = vunpack.c.l.b16 %v1568
        %v1827 = vunpack.c.l.b16 %v1569
        %v1828 = vunpack.c.l.b16 %v1570
        %v1829 = vunpack.c.l.b16 %v1571
        %v1830 = vunpack.c.l.b16 %v1572
        %v1831 = vunpack.c.l.b16 %v1573
        %v1832 = vunpack.c.l.b16 %v1574
        %v1833 = vunpack.c.l.b16 %v1575
        %v1834 = vunpack.c.l.b16 %v1576
        %v1835 = vunpack.c.l.b16 %v1577
        %v1836 = vunpack.c.l.b16 %v1578
        %v1837 = vunpack.c.l.b16 %v1579
        %v1838 = vunpack.c.l.b16 %v1580
        %v1839 = vunpack.c.l.b16 %v1581
        %v1840 = vunpack.c.l.b16 %v1582
        %v1841 = vunpack.c.l.b16 %v1583
        %v1842 = vunpack.c.l.b16 %v1584
        %v1843 = vunpack.c.l.b16 %v1585
        %v1844 = vunpack.c.l.b16 %v1586
        %v1845 = vunpack.c.l.b16 %v1587
        %v1846 = vunpack.c.l.b16 %v1588
        %v1847 = vunpack.c.l.b16 %v1589
        %v1848 = vpack.c.b16 %v1785, %v1784
        %v1849 = vpack.c.b16 %v1787, %v1786
        %v1850 = vpack.c.b16 %v1789, %v1788
        %v1851 = vpack.c.b16 %v1791, %v1790
        %v1852 = vpack.c.b16 %v1793, %v1792
        %v1853 = vpack.c.b16 %v1795, %v1794
        %v1854 = vpack.c.b16 %v1797, %v1796
        %v1855 = vpack.c.b16 %v1799, %v1798
        %v1856 = vpack.c.b16 %v1801, %v1800
        %v1857 = vpack.c.b16 %v1803, %v1802
        %v1858 = vpack.c.b16 %v1805, %v1804
        %v1859 = vpack.c.b16 %v1807, %v1806
        %v1860 = vpack.c.b16 %v1809, %v1808
        %v1861 = vpack.c.b16 %v1811, %v1810
        %v1862 = vpack.c.b16 %v1813, %v1812
        %v1863 = vpack.c.b16 %v1815, %v1814
        %v1864 = vpack.c.b16 %v1817, %v1816
        %v1865 = vpack.c.b16 %v1819, %v1818
        %v1866 = vpack.c.b16 %v1821, %v1820
        %v1867 = vpack.c.b16 %v1823, %v1822
        %v1868 = vpack.c.b16 %v1825, %v1824
        %v1869 = vpack.c.b16 %v1827, %v1826
        %v1870 = vpack.c.b16 %v1829, %v1828
        %v1871 = vpack.c.b16 %v1831, %v1830
        %v1872 = vpack.c.b16 %v1833, %v1832
        %v1873 = vpack.c.b16 %v1835, %v1834
        %v1874 = vpack.c.b16 %v1837, %v1836
        %v1875 = vpack.c.b16 %v1839, %v1838
        %v1876 = vpack.c.b16 %v1841, %v1840
        %v1877 = vpack.c.b16 %v1843, %v1842
        %v1878 = vpack.c.b16 %v1845, %v1844
        %v1879 = vpack.c.b16 %v1847, %v1846
        %1912 = vmatprep.subr.bf16.mxu0 0
        %1913 = vmatpush1.bf16.msra.mxu0 %v1848
        %1914 = vmatprep.subr.bf16.mxu0 0
        %1915 = vmatpush1.bf16.msra.mxu0 %v1849
        %1916 = vmatprep.subr.bf16.mxu0 0
        %1917 = vmatpush1.bf16.msra.mxu0 %v1850
        %1918 = vmatprep.subr.bf16.mxu0 0
        %1919 = vmatpush1.bf16.msra.mxu0 %v1851
        %1920 = vmatprep.subr.bf16.mxu0 0
        %1921 = vmatpush1.bf16.msra.mxu0 %v1852
        %1922 = vmatprep.subr.bf16.mxu0 0
        %1923 = vmatpush1.bf16.msra.mxu0 %v1853
        %1924 = vmatprep.subr.bf16.mxu0 0
        %1925 = vmatpush1.bf16.msra.mxu0 %v1854
        %1926 = vmatprep.subr.bf16.mxu0 0
        %1927 = vmatpush1.bf16.msra.mxu0 %v1855
        %1928 = vmatprep.subr.bf16.mxu0 0
        %1929 = vmatpush1.bf16.msra.mxu0 %v1856
        %1930 = vmatprep.subr.bf16.mxu0 0
        %1931 = vmatpush1.bf16.msra.mxu0 %v1857
        %1932 = vmatprep.subr.bf16.mxu0 0
        %1933 = vmatpush1.bf16.msra.mxu0 %v1858
        %1934 = vmatprep.subr.bf16.mxu0 0
        %1935 = vmatpush1.bf16.msra.mxu0 %v1859
        %1936 = vmatprep.subr.bf16.mxu0 0
        %1937 = vmatpush1.bf16.msra.mxu0 %v1860
        %1938 = vmatprep.subr.bf16.mxu0 0
        %1939 = vmatpush1.bf16.msra.mxu0 %v1861
        %1940 = vmatprep.subr.bf16.mxu0 0
        %1941 = vmatpush1.bf16.msra.mxu0 %v1862
        %1942 = vmatprep.subr.bf16.mxu0 0
        %1943 = vmatpush1.bf16.msra.mxu0 %v1863
        %1944 = vmatprep.mubr.bf16.mxu0 %v1655
        %1945 = vmatmul.mubr.bf16.gmra.mrb[0].mxu0 %v1643
        %v1946 = vpop.f32.mrb[0].mxu0
        %v1947 = vadd.f32 0.0, %v1946
        %v1948 = vpop.f32.mrb[0].mxu0
        %v1949 = vpop.f32.mrb[0].mxu0
        %v1950 = vadd.f32 0.0, %v1949
        %v1951 = vpop.f32.mrb[0].mxu0
        %1952 = vmatprep.mubr.bf16.mxu0 %v1695
        %1953 = vmatmul.mubr.bf16.gmra.mrb[0].mxu0 %v1687
        %v1954 = vpop.f32.mrb[0].mxu0
        %v1955 = vadd.f32 0.0, %v1954
        %v1956 = vpop.f32.mrb[0].mxu0
        %v1957 = vpop.f32.mrb[0].mxu0
        %v1958 = vadd.f32 0.0, %v1957
        %v1959 = vpop.f32.mrb[0].mxu0
        %1960 = vdwg.mxu0
        %1961 = vmatprep.subr.bf16.mxu0 0
        %1962 = vmatpush1.bf16.msra.mxu0 %v1864
        %1963 = vmatprep.subr.bf16.mxu0 0
        %1964 = vmatpush1.bf16.msra.mxu0 %v1865
        %1965 = vmatprep.subr.bf16.mxu0 0
        %1966 = vmatpush1.bf16.msra.mxu0 %v1866
        %1967 = vmatprep.subr.bf16.mxu0 0
        %1968 = vmatpush1.bf16.msra.mxu0 %v1867
        %1969 = vmatprep.subr.bf16.mxu0 0
        %1970 = vmatpush1.bf16.msra.mxu0 %v1868
        %1971 = vmatprep.subr.bf16.mxu0 0
        %1972 = vmatpush1.bf16.msra.mxu0 %v1869
        %1973 = vmatprep.subr.bf16.mxu0 0
        %1974 = vmatpush1.bf16.msra.mxu0 %v1870
        %1975 = vmatprep.subr.bf16.mxu0 0
        %1976 = vmatpush1.bf16.msra.mxu0 %v1871
        %1977 = vmatprep.subr.bf16.mxu0 0
        %1978 = vmatpush1.bf16.msra.mxu0 %v1872
        %1979 = vmatprep.subr.bf16.mxu0 0
        %1980 = vmatpush1.bf16.msra.mxu0 %v1873
        %1981 = vmatprep.subr.bf16.mxu0 0
        %1982 = vmatpush1.bf16.msra.mxu0 %v1874
        %1983 = vmatprep.subr.bf16.mxu0 0
        %1984 = vmatpush1.bf16.msra.mxu0 %v1875
        %1985 = vmatprep.subr.bf16.mxu0 0
        %1986 = vmatpush1.bf16.msra.mxu0 %v1876
        %1987 = vmatprep.subr.bf16.mxu0 0
        %1988 = vmatpush1.bf16.msra.mxu0 %v1877
        %1989 = vmatprep.subr.bf16.mxu0 0
        %1990 = vmatpush1.bf16.msra.mxu0 %v1878
        %1991 = vmatprep.subr.bf16.mxu0 0
        %1992 = vmatpush1.bf16.msra.mxu0 %v1879
        %1993 = vmatprep.mubr.bf16.mxu0 %v1679
        %1994 = vmatmul.mubr.bf16.gmra.mrb[0].mxu0 %v1667
        %v1995 = vpop.f32.mrb[0].mxu0
        %v1996 = vadd.f32 %v1947, %v1995
        %v1997 = vpop.f32.mrb[0].mxu0
        %v1998 = vpop.f32.mrb[0].mxu0
        %v1999 = vadd.f32 %v1950, %v1998
        %v2000 = vpop.f32.mrb[0].mxu0
        %2001 = vmatprep.mubr.bf16.mxu0 %v1711
        %2002 = vmatmul.mubr.bf16.gmra.mrb[0].mxu0 %v1703
        %v2003 = vpop.f32.mrb[0].mxu0
        %v2004 = vadd.f32 %v1955, %v2003
        %v2005 = vpop.f32.mrb[0].mxu0
        %v2006 = vpop.f32.mrb[0].mxu0
        %v2007 = vadd.f32 %v1958, %v2006
        %v2008 = vpop.f32.mrb[0].mxu0
        %2009 = vdwg.mxu0
        %v2010 = vadd.f32 %v1511, %v1996
        %v2011 = vadd.f32 %v1512, %v1999
        %v2012 = vadd.f32 %v1513, %v2004
        %v2013 = vadd.f32 %v1514, %v2007
        %v2014 = vld [vmem:[%s241] sm:$0x1]
        %v2016 = vlaneseq
        %v2017 = vshrl.u32 %v2016, 7
        %v2018 = vsub.s32 0, %v2017
        %v2019 = vrot.slane %v2014, %v2018
        %v2021 = vadd.f32 %v2010, %v2019
        %v2022 = vadd.f32 %v2011, %v2019
        %v2023 = vadd.f32 %v2012, %v2019
        %v2024 = vadd.f32 %v2013, %v2019
        %v2025 = vlaneseq
        %v2026 = vshrl.u32 %v2025, 7
        %v2027 = vadd.s32 %v2026, 8
        %v2028 = vadd.s32 %v2026, 16
        %v2029 = vadd.s32 %v2026, 24
        %vm2030 = vcmp.lt.s32.totalorder %v2026, 0
        %v2031 = vsub.s32 0, %v2026
        %v2032 = vsel %vm2030, %v2031, %v2026
        %v2033 = vshrl.u32 %v2032, 3
        %v2034 = vand.u32 %v2032, 7
        %v2035 = vsub.s32 0, %v2034
        %v2036 = vsel %vm2030, %v2035, %v2034
        %vm2037 = vcmp.lt.s32.totalorder %v2027, 0
        %v2038 = vsub.s32 0, %v2027
        %v2039 = vsel %vm2037, %v2038, %v2027
        %v2040 = vshrl.u32 %v2039, 3
        %v2041 = vand.u32 %v2039, 7
        %v2042 = vsub.s32 0, %v2041
        %v2043 = vsel %vm2037, %v2042, %v2041
        %vm2044 = vcmp.lt.s32.totalorder %v2028, 0
        %v2045 = vsub.s32 0, %v2028
        %v2046 = vsel %vm2044, %v2045, %v2028
        %v2047 = vshrl.u32 %v2046, 3
        %v2048 = vand.u32 %v2046, 7
        %v2049 = vsub.s32 0, %v2048
        %v2050 = vsel %vm2044, %v2049, %v2048
        %vm2051 = vcmp.lt.s32.totalorder %v2029, 0
        %v2052 = vsub.s32 0, %v2029
        %v2053 = vsel %vm2051, %v2052, %v2029
        %v2054 = vshrl.u32 %v2053, 3
        %v2055 = vand.u32 %v2053, 7
        %v2056 = vsub.s32 0, %v2055
        %v2057 = vsel %vm2051, %v2056, %v2055
        %vm2058 = vcmp.ne.s32.totalorder %v2036, 0
        %vm2059 = vcmp.ne.s32.totalorder %v2043, 0
        %vm2060 = vcmp.ne.s32.totalorder %v2050, 0
        %vm2061 = vcmp.ne.s32.totalorder %v2057, 0
        %vm2062 = vcmp.lt.s32.totalorder %v2036, 0
        %vm2063 = vcmp.lt.s32.totalorder %v2043, 0
        %vm2064 = vcmp.lt.s32.totalorder %v2050, 0
        %vm2065 = vcmp.lt.s32.totalorder %v2057, 0
        %vm2066 = vmand %vm2062, %vm2058
        %vm2067 = vmand %vm2063, %vm2059
        %vm2068 = vmand %vm2064, %vm2060
        %vm2069 = vmand %vm2065, %vm2061
        %v2070 = vadd.s32 %v2036, 8
        %v2071 = vadd.s32 %v2043, 8
        %v2072 = vadd.s32 %v2050, 8
        %v2073 = vadd.s32 %v2057, 8
        %v2074 = vsel %vm2066, %v2070, %v2036
        %v2075 = vsel %vm2067, %v2071, %v2043
        %v2076 = vsel %vm2068, %v2072, %v2050
        %v2077 = vsel %vm2069, %v2073, %v2057
        %vm2078 = vcmp.lt.s32.totalorder %v2074, 4
        %vm2079 = vcmp.lt.s32.totalorder %v2075, 4
        %vm2080 = vcmp.lt.s32.totalorder %v2076, 4
        %vm2081 = vcmp.lt.s32.totalorder %v2077, 4
        %v2082 = vsel %vm2078, 1, 0
        %v2083 = vsel %vm2079, 1, 0
        %v2084 = vsel %vm2080, 1, 0
        %v2085 = vsel %vm2081, 1, 0
        %v2086 = vcvt.s32.f32 %v2082
        %v2087 = vcvt.s32.f32 %v2083
        %v2088 = vcvt.s32.f32 %v2084
        %v2089 = vcvt.s32.f32 %v2085
        %v2090 = vmul.f32 %v2021, %v2086
        %v2091 = vmul.f32 %v2022, %v2087
        %v2092 = vmul.f32 %v2023, %v2088
        %v2093 = vmul.f32 %v2024, %v2089
        %v2094 = vadd.f32 %v2090, %v2091
        %v2095 = vadd.f32 %v2094, %v2092
        %v2096 = vadd.f32 %v2095, %v2093
        %v2097 = vrot.slane %v2096, 4
        %v2098 = vadd.f32 %v2096, %v2097
        %v2099 = vrot.slane %v2098, 2
        %v2100 = vadd.f32 %v2098, %v2099
        %v2101 = vrot.slane %v2100, 1
        %v2102 = vadd.f32 %v2100, %v2101
        %v2103 = vmul.f32 %v2102, 0.0625
        %v2104 = vsub.f32 %v2021, %v2103
        %v2105 = vsub.f32 %v2022, %v2103
        %v2106 = vsub.f32 %v2023, %v2103
        %v2107 = vsub.f32 %v2024, %v2103
        %v2108 = vmul.f32 %v2104, %v2086
        %v2109 = vmul.f32 %v2105, %v2087
        %v2110 = vmul.f32 %v2106, %v2088
        %v2111 = vmul.f32 %v2107, %v2089
        %v2112 = vmul.f32 %v2108, %v2108
        %v2113 = vmul.f32 %v2109, %v2109
        %v2114 = vmul.f32 %v2110, %v2110
        %v2115 = vmul.f32 %v2111, %v2111
        %v2116 = vadd.f32 %v2112, %v2113
        %v2117 = vadd.f32 %v2116, %v2114
        %v2118 = vadd.f32 %v2117, %v2115
        %v2119 = vrot.slane %v2118, 4
        %v2120 = vadd.f32 %v2118, %v2119
        %v2121 = vrot.slane %v2120, 2
        %v2122 = vadd.f32 %v2120, %v2121
        %v2123 = vrot.slane %v2122, 1
        %v2124 = vadd.f32 %v2122, %v2123
        %v2125 = vmul.f32 %v2124, 0.0625
        %v2126 = vadd.f32 %v2125, 1e-05
        %v2127 = vrsqrt.pop %v2126
        %v2128 = vmul.f32 %v2104, %v2127
        %v2129 = vmul.f32 %v2105, %v2127
        %v2130 = vmul.f32 %v2106, %v2127
        %v2131 = vmul.f32 %v2107, %v2127
        %vm2132 = vcmp.gt.f32.partialorder %v2128, 0.0
        %vm2133 = vcmp.gt.f32.partialorder %v2129, 0.0
        %vm2134 = vcmp.gt.f32.partialorder %v2130, 0.0
        %vm2135 = vcmp.gt.f32.partialorder %v2131, 0.0
        %v2136 = vmul.f32 %v2128, 0.2
        %v2137 = vmul.f32 %v2129, 0.2
        %v2138 = vmul.f32 %v2130, 0.2
        %v2139 = vmul.f32 %v2131, 0.2
        %v2140 = vsel %vm2132, %v2128, %v2136
        %v2141 = vsel %vm2133, %v2129, %v2137
        %v2142 = vsel %vm2134, %v2130, %v2138
        %v2143 = vsel %vm2135, %v2131, %v2139
        %v2144 = vpack.c.bf16 %v2141, %v2140
        %v2145 = vpack.c.bf16 %v2143, %v2142
        %v2148 = vunpack.c.l.b16 %v2144
        %v2149 = vunpack.c.h.b16 %v2144
        %v2150 = vunpack.c.l.b16 %v2145
        %v2151 = vunpack.c.h.b16 %v2145
        %v2152 = vpack.c.b16 %v2148, %v2148
        %v2153 = vpack.c.b16 %v2149, %v2149
        %v2154 = vpack.c.b16 %v2150, %v2150
        %v2155 = vpack.c.b16 %v2151, %v2151
        %2160 = vst [vmem:[%s272] sm:$0xf] %v2152
        %2161 = vst [vmem:[%s272 + $0x4] sm:$0xf] %v2153
        %2162 = vst [vmem:[%s272 + $0x8] sm:$0xf] %v2154
        %2163 = vst [vmem:[%s272 + $0xc] sm:$0xf] %v2155
        %s2164 = sand.u32 %s123, 1
        %s2165 = scalar_lea.sflag [#allocation4], %s2164
        %s2166 = sand.u32 %s123, 1
        %s2167 = smul.addr %s2166, 16
        %s2168 = scalar_lea.vmem [#allocation8], %s2167
        // Predicated region
        $region45: #{_lambda_.7} parent=31 // pred_check
          %p2169 = pneg %p133
        $region46: #{_lambda_.7} parent=31 // pred_check_branch
          %2171 = sbr.rel (%p2169) target = $region48
        $region47: #{_lambda_.7} parent=31 // pred_region
          %s2173 = ssub.s32 256, 256
          %2174 = vsyncadd %s2165, %s2173
          %s2175 = smul.addr %s27, 8
          %s2176 = sadd.s32 %s28, %s2175
          %s2177 = smul.addr %s2176, 64
          %s2178 = scalar_lea.hbm %s3, %s2177
          %s2179 = sshll.u32 %s2168, 4
          %s2180 = int_to_ptr.vmem [resolvable:$true] %s2179
          %2185 = dma.vmem_to_hbm [thread:$0]  %s2180, 256, %s2178, %s2165, 64, 128, 4
        $region48: #{_lambda_.7} parent=31 // pred_fallthru
          _
      $region32: #{_lambda_.7} parent=5 // pred_fallthru
        _
      %p2186 = scmp.le.s32.totalorder 2, %s18
      // Predicated region
      $region49: #{_lambda_.7} parent=5 // pred_check
        %p2187 = pneg %p2186
      $region50: #{_lambda_.7} parent=5 // pred_check_branch
        %2189 = sbr.rel (%p2187) target = $region52
      $region51: #{_lambda_.7} parent=5 // pred_region
        %s2190 = ssub.s32 %s18, 2
        // Predicated region
        $region53: #{_lambda_.7} parent=51 // pred_check
          %p2191 = pneg %p139
        $region54: #{_lambda_.7} parent=51 // pred_check_branch
          %2193 = sbr.rel (%p2191) target = $region56
        $region55: #{_lambda_.7} parent=51 // pred_region
          %s2194 = sand.u32 %s124, 1
          %s2195 = scalar_lea.sflag [#allocation4], %s2194
          %s2196 = sand.u32 %s124, 1
          %s2197 = smul.addr %s2196, 16
          %s2198 = scalar_lea.vmem [#allocation8], %s2197
          %2199 = dma.done %s2195, 256
        $region56: #{_lambda_.7} parent=51 // pred_fallthru
          _
      $region52: #{_lambda_.7} parent=5 // pred_fallthru
        _
    $region6: #{_lambda_.7} parent=1 // loop_footer
      %s22 = sadd.s32 1, %s18
    $region7: #{_lambda_.7} parent=1 // loop_footer_branch
      %17 = sbr.rel target = $region3
    $region8: #{_lambda_.7} parent=1 // loop_exit
      _
    %2200 = vsyncpa [#allocation3], 1
    %s2201 = scalar_lea.sflag [#allocation3], 1
    %2202 = vsyncpa %s2201, 1
    %2203 = vsyncpa [#allocation6], 1
    %s2204 = scalar_lea.sflag [#allocation6], 1
    %2205 = vsyncpa %s2204, 1
    %2206 = vsyncpa [#allocation4], 1
    %s2207 = scalar_lea.sflag [#allocation4], 1
    %2208 = vsyncpa %s2207, 1

// kernel: _lambda_.9
$region0: #{_lambda_.9}
  #allocation0 [shape = 'u32[]', space=smem, size = 0x4, offset = 0x4, fixed_abs, tag = 'smem constant byte address 0x4 - core index']
  #allocation1 [shape = 'u32[144,128]{1,0:T(1,128)}', space=vmem, size = 0x12000, scoped, tag = 'internal scratch']
  #allocation2 [shape = 'f32[1,1]{1,0:T(1,128)S(1)}', space=vmem, size = 0x200, scoped, tag = 'scoped memory for _lambda_.9']
  %s0 = inlined_call_operand.hbm [shape: bf16[2,44,512], index: 0, kind: input, shape index: {}]
  %s1 = inlined_call_operand.hbm [shape: bf16[16,1,512], index: 1, kind: input, shape index: {}]
  %s2 = inlined_call_operand.<no memory space> [shape: f32[1,1], index: 2, kind: input, shape index: {}]
  %s3 = inlined_call_operand.hbm [shape: f32[2,16,1], index: 3, kind: output, shape index: {}]
  %s4 = sld [smem:[#allocation0]]
  $region53: #{_lambda_.9} parent=0
    _
  %s6 = ssub.s32 1, %s4
  %s7 = scalar_select 0, %s6, %s4
  %v8 = vstv %s2
  %9 = vst [vmem:[#allocation2] sm:$0x1] %v8
  $region1: #{_lambda_.9} parent=0
    #allocation3 [shape = 'u8[98304]{0}', space=vmem, size = 0x18000, scoped, tag = 'input window, operand 0']
    #allocation4 [shape = 's32[2]{0}', space=sflag, size = 0x8, scoped, tag = 'scoped memory for _lambda_.9']
    #allocation5 [shape = 's32[2]{0}', space=sflag, size = 0x8, scoped, tag = 'scoped memory for _lambda_.9']
    #allocation6 [shape = 'u8[32768]{0}', space=vmem, size = 0x8000, scoped, tag = 'input window, operand 1, single buffered']
    #allocation7 [shape = 's32[1]{0}', space=sflag, size = 0x4, scoped, tag = 'scoped memory for _lambda_.9']
    #allocation8 [shape = 'u8[16384]{0}', space=vmem, size = 0x4000, scoped, tag = 'output window, operand 0']
    %10 = vsyncpa [#allocation4], 0
    %s11 = scalar_lea.sflag [#allocation4], 1
    %12 = vsyncpa %s11, 0
    %13 = vsyncpa [#allocation7], 0
    %14 = vsyncpa [#allocation5], 0
    %s15 = scalar_lea.sflag [#allocation5], 1
    %16 = vsyncpa %s15, 0
    loop: start=0, step=1, limit=4
    $region2: #{_lambda_.9} parent=1 // loop_pre_header
      _
    $region3: #{_lambda_.9} parent=1 // loop_header
      %s18 = sphi 0, %s22
      %p19 = scmp.ge.s32.totalorder %s18, 4
      %s25 = sphi 0, %s37
      %s26 = sphi 0, %s33
      %s27 = sphi 0, %s25
      %s28 = sphi 0, %s26
      %s29 = sphi 0, %s27
      %s30 = sphi 0, %s28
      %s40 = sphi 0, %s42
      %s43 = sphi 0, %s40
      %s44 = sphi 0, %s43
      %s60 = sphi 0, %s44
      %s64 = sphi 0, %s64
      %s66 = sphi 0, %s64
      %s67 = sphi 0, %s66
      %s81 = sphi 0, %s67
      %s87 = sphi 0, %s89
      %s90 = sphi 0, %s87
      %s91 = sphi 0, %s90
      %s107 = sphi 0, %s91
      %s115 = sphi 0, %s117
      %s118 = sphi 0, %s115
      %s119 = sphi 0, %s118
      %s135 = sphi 0, %s119
    $region4: #{_lambda_.9} parent=1 // loop_header_branch
      %21 = sbr.rel (%p19) target = $region8
    $region5: #{_lambda_.9} parent=1 // loop_body
      %s23 = ssub.s32 %s18, 1
      %s24 = ssub.s32 %s18, 2
      %s31 = sadd.s32 1, %s26
      %p32 = scmp.ge.s32.totalorder %s31, 1
      %s33 = scalar_select %p32, 0, %s31
      %s34 = sadd.s32 1, %s25
      %s35 = scalar_select %p32, %s34, %s25
      %p36 = scmp.ge.s32.totalorder %s35, 2
      %s37 = scalar_select %p36, 0, %s35
      %s38 = ssub.s32 %s25, %s37
      %p39 = scmp.eq.s32.totalorder %s38, 0
      %s41 = sadd.s32 %s40, 1
      %s42 = scalar_select %p39, %s40, %s41
      %p45 = pneg %p39
      %p46 = scmp.eq.s32.totalorder %s18, 1
      %p47 = por %p45, %p46
      %p48 = scmp.ne.s32.totalorder %s40, %s43
      %p49 = scmp.eq.s32.totalorder %s18, 0
      %p50 = por %p48, %p49
      %p51 = scmp.ne.s32.totalorder %s40, %s43
      %p52 = scmp.eq.s32.totalorder %s23, 1
      %p53 = por %p51, %p52
      %p54 = scmp.ne.s32.totalorder %s43, %s44
      %p55 = scmp.eq.s32.totalorder %s23, 0
      %p56 = por %p54, %p55
      %p57 = scmp.ne.s32.totalorder %s43, %s44
      %p58 = scmp.eq.s32.totalorder %s24, 1
      %p59 = por %p57, %p58
      %p61 = scmp.ne.s32.totalorder %s44, %s60
      %p62 = scmp.eq.s32.totalorder %s24, 0
      %p63 = por %p61, %p62
      %s65 = sadd.s32 %s64, 1
      %p68 = scmp.eq.s32.totalorder %s18, 1
      %p69 = scmp.ne.s32.totalorder %s64, %s66
      %p70 = scmp.eq.s32.totalorder %s18, 0
      %p71 = por %p69, %p70
      %p72 = scmp.ne.s32.totalorder %s64, %s66
      %p73 = scmp.eq.s32.totalorder %s23, 1
      %p74 = por %p72, %p73
      %p75 = scmp.ne.s32.totalorder %s66, %s67
      %p76 = scmp.eq.s32.totalorder %s23, 0
      %p77 = por %p75, %p76
      %p78 = scmp.ne.s32.totalorder %s66, %s67
      %p79 = scmp.eq.s32.totalorder %s24, 1
      %p80 = por %p78, %p79
      %p82 = scmp.ne.s32.totalorder %s67, %s81
      %p83 = scmp.eq.s32.totalorder %s24, 0
      %p84 = por %p82, %p83
      %s85 = ssub.s32 %s26, %s33
      %p86 = scmp.eq.s32.totalorder %s85, 0
      %s88 = sadd.s32 %s87, 1
      %s89 = scalar_select %p86, %s87, %s88
      %p92 = pneg %p86
      %p93 = scmp.eq.s32.totalorder %s18, 1
      %p94 = por %p92, %p93
      %p95 = scmp.ne.s32.totalorder %s87, %s90
      %p96 = scmp.eq.s32.totalorder %s18, 0
      %p97 = por %p95, %p96
      %p98 = scmp.ne.s32.totalorder %s87, %s90
      %p99 = scmp.eq.s32.totalorder %s23, 1
      %p100 = por %p98, %p99
      %p101 = scmp.ne.s32.totalorder %s90, %s91
      %p102 = scmp.eq.s32.totalorder %s23, 0
      %p103 = por %p101, %p102
      %p104 = scmp.ne.s32.totalorder %s90, %s91
      %p105 = scmp.eq.s32.totalorder %s24, 1
      %p106 = por %p104, %p105
      %p108 = scmp.ne.s32.totalorder %s91, %s107
      %p109 = scmp.eq.s32.totalorder %s24, 0
      %p110 = por %p108, %p109
      %s111 = ssub.s32 %s25, %s37
      %s112 = ssub.s32 %s26, %s33
      %s113 = sor.u32 %s111, %s112
      %p114 = scmp.eq.s32.totalorder %s113, 0
      %s116 = sadd.s32 %s115, 1
      %s117 = scalar_select %p114, %s115, %s116
      %p120 = pneg %p114
      %p121 = scmp.eq.s32.totalorder %s18, 1
      %p122 = por %p120, %p121
      %p123 = scmp.ne.s32.totalorder %s115, %s118
      %p124 = scmp.eq.s32.totalorder %s18, 0
      %p125 = por %p123, %p124
      %p126 = scmp.ne.s32.totalorder %s115, %s118
      %p127 = scmp.eq.s32.totalorder %s23, 1
      %p128 = por %p126, %p127
      %p129 = scmp.ne.s32.totalorder %s118, %s119
      %p130 = scmp.eq.s32.totalorder %s23, 0
      %p131 = por %p129, %p130
      %p132 = scmp.ne.s32.totalorder %s118, %s119
      %p133 = scmp.eq.s32.totalorder %s24, 1
      %p134 = por %p132, %p133
      %p136 = scmp.ne.s32.totalorder %s119, %s135
      %p137 = scmp.eq.s32.totalorder %s24, 0
      %p138 = por %p136, %p137
      %p139 = scmp.le.s32.totalorder 1, %s18
      %p140 = scmp.lt.s32.totalorder %s18, 3
      %p141 = pnand %p139, %p140
      %p142 = pneg %p141
      // Predicated region
      $region9: #{_lambda_.9} parent=5 // pred_check
        _
      $region10: #{_lambda_.9} parent=5 // pred_check_branch
        %144 = sbr.rel (%p141) target = $region12
      $region11: #{_lambda_.9} parent=5 // pred_region
        %s145 = ssub.s32 %s18, 1
        // Predicated region
        $region13: #{_lambda_.9} parent=11 // pred_check
          %p146 = pneg %p77
        $region14: #{_lambda_.9} parent=11 // pred_check_branch
          %148 = sbr.rel (%p146) target = $region16
        $region15: #{_lambda_.9} parent=11 // pred_region
          %s150 = ssub.s32 1024, 1024
          %151 = vsyncadd [#allocation7], %s150
          %s152 = sshll.u32 [#allocation6], 4
          %s153 = int_to_ptr.vmem [resolvable:$true] %s152
          %158 = dma.hbm_to_vmem [thread:$0]  %s1, 1024, %s153, [#allocation7], 64, 64, 4
        $region16: #{_lambda_.9} parent=11 // pred_fallthru
          _
        // Predicated region
        $region17: #{_lambda_.9} parent=11 // pred_check
          %p159 = pneg %p103
        $region18: #{_lambda_.9} parent=11 // pred_check_branch
          %161 = sbr.rel (%p159) target = $region20
        $region19: #{_lambda_.9} parent=11 // pred_region
          %p162 = scmp.lt.s32.totalorder %s28, 0
          %s163 = scalar_select %p162, %s28, 0
          %s164 = scalar_lea.vmem [#allocation2], %s163
        $region20: #{_lambda_.9} parent=11 // pred_fallthru
          _
      $region12: #{_lambda_.9} parent=5 // pred_fallthru
        _
      %p165 = scmp.lt.s32.totalorder %s18, 2
      // Predicated region
      $region21: #{_lambda_.9} parent=5 // pred_check
        %p166 = pneg %p165
      $region22: #{_lambda_.9} parent=5 // pred_check_branch
        %168 = sbr.rel (%p166) target = $region24
      $region23: #{_lambda_.9} parent=5 // pred_region
        // Predicated region
        $region25: #{_lambda_.9} parent=23 // pred_check
          %p169 = pneg %p50
        $region26: #{_lambda_.9} parent=23 // pred_check_branch
          %171 = sbr.rel (%p169) target = $region28
        $region27: #{_lambda_.9} parent=23 // pred_region
          %s172 = sand.u32 %s40, 1
          %s173 = scalar_lea.sflag [#allocation4], %s172
          %s174 = sand.u32 %s40, 1
          %s175 = smul.addr %s174, 96
          %s176 = scalar_lea.vmem [#allocation3], %s175
          %s178 = ssub.s32 1536, 1536
          %179 = vsyncadd %s173, %s178
          %s180 = smul.addr %s25, 24
          %s181 = smul.addr %s180, 64
          %s182 = scalar_lea.hbm %s0, %s181
          %s183 = sshll.u32 %s176, 4
          %s184 = int_to_ptr.vmem [resolvable:$true] %s183
          %189 = dma.hbm_to_vmem [thread:$0]  %s182, 1536, %s184, %s173, 256, 256, 16
        $region28: #{_lambda_.9} parent=23 // pred_fallthru
          _
      $region24: #{_lambda_.9} parent=5 // pred_fallthru
        _
      %p190 = scmp.le.s32.totalorder 1, %s18
      %p191 = scmp.lt.s32.totalorder %s18, 3
      %p192 = pnand %p190, %p191
      %p193 = pneg %p192
      // Predicated region
      $region29: #{_lambda_.9} parent=5 // pred_check
        _
      $region30: #{_lambda_.9} parent=5 // pred_check_branch
        %195 = sbr.rel (%p192) target = $region32
      $region31: #{_lambda_.9} parent=5 // pred_region
        %s196 = ssub.s32 %s18, 1
        %s197 = sand.u32 %s43, 1
        %s198 = scalar_lea.sflag [#allocation4], %s197
        %s199 = sand.u32 %s43, 1
        %s200 = smul.addr %s199, 96
        %s201 = scalar_lea.vmem [#allocation3], %s200
        // Predicated region
        $region33: #{_lambda_.9} parent=31 // pred_check
          %p202 = pneg %p56
        $region34: #{_lambda_.9} parent=31 // pred_check_branch
          %204 = sbr.rel (%p202) target = $region36
        $region35: #{_lambda_.9} parent=31 // pred_region
          %205 = dma.done %s198, 1536
        $region36: #{_lambda_.9} parent=31 // pred_fallthru
          _
        // Predicated region
        $region37: #{_lambda_.9} parent=31 // pred_check
          %p206 = pneg %p77
        $region38: #{_lambda_.9} parent=31 // pred_check_branch
          %208 = sbr.rel (%p206) target = $region40
        $region39: #{_lambda_.9} parent=31 // pred_region
          %209 = dma.done [#allocation7], 1024
        $region40: #{_lambda_.9} parent=31 // pred_fallthru
          _
        %s210 = sand.u32 %s43, 1
        %s211 = scalar_lea.sflag [#allocation4], %s210
        %s212 = sand.u32 %s43, 1
        %s213 = smul.addr %s212, 96
        %s214 = scalar_lea.vmem [#allocation3], %s213
        %p215 = pneg %p56
        %p216 = pneg %p53
        %p217 = pneg %p77
        %p218 = pneg %p74
        %p219 = scmp.lt.s32.totalorder %s28, 0
        %s220 = scalar_select %p219, %s28, 0
        %s221 = scalar_lea.vmem [#allocation2], %s220
        %p222 = pneg %p103
        %p223 = pneg %p100
        %p224 = pneg %p131
        %p225 = pneg %p128
        %s226 = sand.u32 %s118, 1
        %s227 = scalar_lea.sflag [#allocation5], %s226
        %s228 = sand.u32 %s118, 1
        %s229 = smul.addr %s228, 16
        %s230 = scalar_lea.vmem [#allocation8], %s229
        %p231 = scmp.lt.s32.totalorder %s28, 0
        %s232 = scalar_select %p231, %s28, 0
        %s233 = scalar_lea.vmem [#allocation2], %s232
        %v234 = vld [vmem:[%s201] sm:$0xff]
        %v235 = vld [vmem:[%s201 + $0x8] sm:$0xff]
        %v236 = vld [vmem:[%s201 + $0x10] sm:$0xff]
        %v237 = vld [vmem:[%s201 + $0x18] sm:$0xff]
        %v238 = vunpack.c.l.bf16 %v234
        %v239 = vunpack.c.h.bf16 %v234
        %v240 = vunpack.c.l.bf16 %v235
        %v241 = vunpack.c.h.bf16 %v235
        %v242 = vunpack.c.l.bf16 %v236
        %v243 = vunpack.c.h.bf16 %v236
        %v244 = vunpack.c.l.bf16 %v237
        %v245 = vunpack.c.h.bf16 %v237
        %v246 = vld [vmem:[#allocation6] sm:$0xf]
        %v247 = vunpack.c.l.bf16 %v246
        %v249 = vlaneseq
        %v250 = vshrl.u32 %v249, 7
        %v251 = vsub.s32 0, %v250
        %v252 = vrot.slane %v247, %v251
        %v253 = vlaneseq
        %v254 = vshrl.u32 %v253, 7
        %v255 = vsub.s32 2, %v254
        %v256 = vrot.slane %v247, %v255
        %v257 = vlaneseq
        %v258 = vshrl.u32 %v257, 7
        %v259 = vsub.s32 4, %v258
        %v260 = vrot.slane %v247, %v259
        %v261 = vlaneseq
        %v262 = vshrl.u32 %v261, 7
        %v263 = vsub.s32 6, %v262
        %v264 = vrot.slane %v247, %v263
        %v269 = vlaneseq
        %v270 = vshrl.u32 %v269, 7
        %v271 = vsub.s32 0, %v270
        %v272 = vrot.slane %v252, %v271
        %v273 = vlaneseq
        %v274 = vshrl.u32 %v273, 7
        %v275 = vsub.s32 0, %v274
        %v276 = vrot.slane %v256, %v275
        %v277 = vlaneseq
        %v278 = vshrl.u32 %v277, 7
        %v279 = vsub.s32 0, %v278
        %v280 = vrot.slane %v260, %v279
        %v281 = vlaneseq
        %v282 = vshrl.u32 %v281, 7
        %v283 = vsub.s32 0, %v282
        %v284 = vrot.slane %v264, %v283
        %v285 = vmul.f32 %v238, %v272
        %v286 = vmul.f32 %v239, %v276
        %v287 = vmul.f32 %v240, %v280
        %v288 = vmul.f32 %v241, %v284
        %v289 = vmul.f32 %v242, %v272
        %v290 = vmul.f32 %v243, %v276
        %v291 = vmul.f32 %v244, %v280
        %v292 = vmul.f32 %v245, %v284
        %v293 = vadd.f32 %v285, %v286
        %v294 = vadd.f32 %v293, %v287
        %v295 = vadd.f32 %v294, %v288
        %296 = vadd.xlane.f32.xlu0 %v295
        %v297 = vpop.xlane.xlu0 %296
        %v298 = vadd.f32 %v289, %v290
        %v299 = vadd.f32 %v298, %v291
        %v300 = vadd.f32 %v299, %v292
        %301 = vadd.xlane.f32.xlu0 %v300
        %v302 = vpop.xlane.xlu0 %301
        %v303 = vadd.f32 %v297, 0.0
        %v304 = vadd.f32 %v302, 0.0
        %v305 = vld [vmem:[%s201 + $0x20] sm:$0x11]
        %v306 = vld [vmem:[%s201 + $0x28] sm:$0x11]
        %v307 = vunpack.c.l.bf16 %v305
        %v308 = vunpack.c.h.bf16 %v305
        %v309 = vunpack.c.l.bf16 %v306
        %v310 = vunpack.c.h.bf16 %v306
        %s311 = scalar_lea.vmem [#allocation6], 4
        %v312 = vld [vmem:[%s311] sm:$0xf]
        %v313 = vunpack.c.l.bf16 %v312
        %v315 = vlaneseq
        %v316 = vshrl.u32 %v315, 7
        %v317 = vsub.s32 0, %v316
        %v318 = vrot.slane %v313, %v317
        %v319 = vlaneseq
        %v320 = vshrl.u32 %v319, 7
        %v321 = vsub.s32 2, %v320
        %v322 = vrot.slane %v313, %v321
        %v323 = vlaneseq
        %v324 = vshrl.u32 %v323, 7
        %v325 = vsub.s32 4, %v324
        %v326 = vrot.slane %v313, %v325
        %v327 = vlaneseq
        %v328 = vshrl.u32 %v327, 7
        %v329 = vsub.s32 6, %v328
        %v330 = vrot.slane %v313, %v329
        %v335 = vlaneseq
        %v336 = vshrl.u32 %v335, 7
        %v337 = vsub.s32 0, %v336
        %v338 = vrot.slane %v318, %v337
        %v339 = vlaneseq
        %v340 = vshrl.u32 %v339, 7
        %v341 = vsub.s32 0, %v340
        %v342 = vrot.slane %v322, %v341
        %v343 = vlaneseq
        %v344 = vshrl.u32 %v343, 7
        %v345 = vsub.s32 0, %v344
        %v346 = vrot.slane %v326, %v345
        %v347 = vlaneseq
        %v348 = vshrl.u32 %v347, 7
        %v349 = vsub.s32 0, %v348
        %v350 = vrot.slane %v330, %v349
        %v351 = vmul.f32 %v238, %v338
        %v352 = vmul.f32 %v239, %v342
        %v353 = vmul.f32 %v240, %v346
        %v354 = vmul.f32 %v241, %v350
        %v355 = vmul.f32 %v242, %v338
        %v356 = vmul.f32 %v243, %v342
        %v357 = vmul.f32 %v244, %v346
        %v358 = vmul.f32 %v245, %v350
        %v359 = vmul.f32 %v307, %v338
        %v360 = vmul.f32 %v308, %v342
        %v361 = vmul.f32 %v309, %v346
        %v362 = vmul.f32 %v310, %v350
        %vm363 = vcmask 1047553
        %v364 = vsel %vm363, %v351, 0.0
        %v365 = vsel %vm363, %v352, 0.0
        %v366 = vadd.f32 %v364, %v365
        %v367 = vsel %vm363, %v353, 0.0
        %v368 = vadd.f32 %v366, %v367
        %v369 = vsel %vm363, %v354, 0.0
        %v370 = vadd.f32 %v368, %v369
        %371 = vadd.xlane.f32.xlu0 %v370
        %v372 = vpop.xlane.xlu0 %371
        %v373 = vadd.f32 %v355, %v356
        %v374 = vadd.f32 %v373, %v357
        %v375 = vadd.f32 %v374, %v358
        %376 = vadd.xlane.f32.xlu0 %v375
        %v377 = vpop.xlane.xlu0 %376
        %vm378 = vcmask 1040384
        %v379 = vsel %vm378, %v359, 0.0
        %v380 = vsel %vm378, %v360, 0.0
        %v381 = vadd.f32 %v379, %v380
        %v382 = vsel %vm378, %v361, 0.0
        %v383 = vadd.f32 %v381, %v382
        %v384 = vsel %vm378, %v362, 0.0
        %v385 = vadd.f32 %v383, %v384
        %386 = vadd.xlane.f32.xlu0 %v385
        %v387 = vpop.xlane.xlu0 %386
        %vm391 = vcmask 1046528
        %v392 = vrot.slane %v372, 1
        %v393 = vrot.slane %v377, 1
        %v394 = vsel %vm391, %v392, %v393
        %v395 = vrot.slane %v387, 1
        %v396 = vsel %vm391, %v393, %v395
        %v399 = vadd.f32 %v303, %v394
        %v400 = vadd.f32 %v304, %v396
        %v401 = vld [vmem:[%s201] sm:$0xee]
        %v402 = vld [vmem:[%s201 + $0x8] sm:$0xee]
        %v403 = vunpack.c.l.bf16 %v401
        %v404 = vunpack.c.h.bf16 %v401
        %v405 = vunpack.c.l.bf16 %v402
        %v406 = vunpack.c.h.bf16 %v402
        %s407 = scalar_lea.vmem [#allocation6], 8
        %v408 = vld [vmem:[%s407] sm:$0xf]
        %v409 = vunpack.c.l.bf16 %v408
        %v411 = vlaneseq
        %v412 = vshrl.u32 %v411, 7
        %v413 = vsub.s32 0, %v412
        %v414 = vrot.slane %v409, %v413
        %v415 = vlaneseq
        %v416 = vshrl.u32 %v415, 7
        %v417 = vsub.s32 2, %v416
        %v418 = vrot.slane %v409, %v417
        %v419 = vlaneseq
        %v420 = vshrl.u32 %v419, 7
        %v421 = vsub.s32 4, %v420
        %v422 = vrot.slane %v409, %v421
        %v423 = vlaneseq
        %v424 = vshrl.u32 %v423, 7
        %v425 = vsub.s32 6, %v424
        %v426 = vrot.slane %v409, %v425
        %v431 = vlaneseq
        %v432 = vshrl.u32 %v431, 7
        %v433 = vsub.s32 0, %v432
        %v434 = vrot.slane %v414, %v433
        %v435 = vlaneseq
        %v436 = vshrl.u32 %v435, 7
        %v437 = vsub.s32 0, %v436
        %v438 = vrot.slane %v418, %v437
        %v439 = vlaneseq
        %v440 = vshrl.u32 %v439, 7
        %v441 = vsub.s32 0, %v440
        %v442 = vrot.slane %v422, %v441
        %v443 = vlaneseq
        %v444 = vshrl.u32 %v443, 7
        %v445 = vsub.s32 0, %v444
        %v446 = vrot.slane %v426, %v445
        %v447 = vmul.f32 %v403, %v434
        %v448 = vmul.f32 %v404, %v438
        %v449 = vmul.f32 %v405, %v442
        %v450 = vmul.f32 %v406, %v446
        %v451 = vmul.f32 %v242, %v434
        %v452 = vmul.f32 %v243, %v438
        %v453 = vmul.f32 %v244, %v442
        %v454 = vmul.f32 %v245, %v446
        %v455 = vmul.f32 %v307, %v434
        %v456 = vmul.f32 %v308, %v438
        %v457 = vmul.f32 %v309, %v442
        %v458 = vmul.f32 %v310, %v446
        %vm459 = vcmask 1047554
        %v460 = vsel %vm459, %v447, 0.0
        %v461 = vsel %vm459, %v448, 0.0
        %v462 = vadd.f32 %v460, %v461
        %v463 = vsel %vm459, %v449, 0.0
        %v464 = vadd.f32 %v462, %v463
        %v465 = vsel %vm459, %v450, 0.0
        %v466 = vadd.f32 %v464, %v465
        %467 = vadd.xlane.f32.xlu0 %v466
        %v468 = vpop.xlane.xlu0 %467
        %v469 = vadd.f32 %v451, %v452
        %v470 = vadd.f32 %v469, %v453
        %v471 = vadd.f32 %v470, %v454
        %472 = vadd.xlane.f32.xlu0 %v471
        %v473 = vpop.xlane.xlu0 %472
        %vm474 = vcmask 1041408
        %v475 = vsel %vm474, %v455, 0.0
        %v476 = vsel %vm474, %v456, 0.0
        %v477 = vadd.f32 %v475, %v476
        %v478 = vsel %vm474, %v457, 0.0
        %v479 = vadd.f32 %v477, %v478
        %v480 = vsel %vm474, %v458, 0.0
        %v481 = vadd.f32 %v479, %v480
        %482 = vadd.xlane.f32.xlu0 %v481
        %v483 = vpop.xlane.xlu0 %482
        %vm487 = vcmask 1045504
        %v488 = vrot.slane %v468, 2
        %v489 = vrot.slane %v473, 2
        %v490 = vsel %vm487, %v488, %v489
        %v491 = vrot.slane %v483, 2
        %v492 = vsel %vm487, %v489, %v491
        %v495 = vadd.f32 %v399, %v490
        %v496 = vadd.f32 %v400, %v492
        %v497 = vld [vmem:[%s201 + $0x20] sm:$0x33]
        %v498 = vld [vmem:[%s201 + $0x28] sm:$0x33]
        %v499 = vunpack.c.l.bf16 %v497
        %v500 = vunpack.c.h.bf16 %v497
        %v501 = vunpack.c.l.bf16 %v498
        %v502 = vunpack.c.h.bf16 %v498
        %s503 = scalar_lea.vmem [#allocation6], 12
        %v504 = vld [vmem:[%s503] sm:$0xf]
        %v505 = vunpack.c.l.bf16 %v504
        %v507 = vlaneseq
        %v508 = vshrl.u32 %v507, 7
        %v509 = vsub.s32 0, %v508
        %v510 = vrot.slane %v505, %v509
        %v511 = vlaneseq
        %v512 = vshrl.u32 %v511, 7
        %v513 = vsub.s32 2, %v512
        %v514 = vrot.slane %v505, %v513
        %v515 = vlaneseq
        %v516 = vshrl.u32 %v515, 7
        %v517 = vsub.s32 4, %v516
        %v518 = vrot.slane %v505, %v517
        %v519 = vlaneseq
        %v520 = vshrl.u32 %v519, 7
        %v521 = vsub.s32 6, %v520
        %v522 = vrot.slane %v505, %v521
        %v527 = vlaneseq
        %v528 = vshrl.u32 %v527, 7
        %v529 = vsub.s32 0, %v528
        %v530 = vrot.slane %v510, %v529
        %v531 = vlaneseq
        %v532 = vshrl.u32 %v531, 7
        %v533 = vsub.s32 0, %v532
        %v534 = vrot.slane %v514, %v533
        %v535 = vlaneseq
        %v536 = vshrl.u32 %v535, 7
        %v537 = vsub.s32 0, %v536
        %v538 = vrot.slane %v518, %v537
        %v539 = vlaneseq
        %v540 = vshrl.u32 %v539, 7
        %v541 = vsub.s32 0, %v540
        %v542 = vrot.slane %v522, %v541
        %v543 = vmul.f32 %v403, %v530
        %v544 = vmul.f32 %v404, %v534
        %v545 = vmul.f32 %v405, %v538
        %v546 = vmul.f32 %v406, %v542
        %v547 = vmul.f32 %v242, %v530
        %v548 = vmul.f32 %v243, %v534
        %v549 = vmul.f32 %v244, %v538
        %v550 = vmul.f32 %v245, %v542
        %v551 = vmul.f32 %v499, %v530
        %v552 = vmul.f32 %v500, %v534
        %v553 = vmul.f32 %v501, %v538
        %v554 = vmul.f32 %v502, %v542
        %vm555 = vcmask 1047555
        %v556 = vsel %vm555, %v543, 0.0
        %v557 = vsel %vm555, %v544, 0.0
        %v558 = vadd.f32 %v556, %v557
        %v559 = vsel %vm555, %v545, 0.0
        %v560 = vadd.f32 %v558, %v559
        %v561 = vsel %vm555, %v546, 0.0
        %v562 = vadd.f32 %v560, %v561
        %563 = vadd.xlane.f32.xlu0 %v562
        %v564 = vpop.xlane.xlu0 %563
        %v565 = vadd.f32 %v547, %v548
        %v566 = vadd.f32 %v565, %v549
        %v567 = vadd.f32 %v566, %v550
        %568 = vadd.xlane.f32.xlu0 %v567
        %v569 = vpop.xlane.xlu0 %568
        %vm570 = vcmask 1042432
        %v571 = vsel %vm570, %v551, 0.0
        %v572 = vsel %vm570, %v552, 0.0
        %v573 = vadd.f32 %v571, %v572
        %v574 = vsel %vm570, %v553, 0.0
        %v575 = vadd.f32 %v573, %v574
        %v576 = vsel %vm570, %v554, 0.0
        %v577 = vadd.f32 %v575, %v576
        %578 = vadd.xlane.f32.xlu0 %v577
        %v579 = vpop.xlane.xlu0 %578
        %vm583 = vcmask 1044480
        %v584 = vrot.slane %v564, 3
        %v585 = vrot.slane %v569, 3
        %v586 = vsel %vm583, %v584, %v585
        %v587 = vrot.slane %v579, 3
        %v588 = vsel %vm583, %v585, %v587
        %v591 = vadd.f32 %v495, %v586
        %v592 = vadd.f32 %v496, %v588
        %v593 = vld [vmem:[%s201 + $0x20] sm:$0xff]
        %v594 = vld [vmem:[%s201 + $0x28] sm:$0xff]
        %v595 = vunpack.c.l.bf16 %v593
        %v596 = vunpack.c.h.bf16 %v593
        %v597 = vunpack.c.l.bf16 %v594
        %v598 = vunpack.c.h.bf16 %v594
        %s599 = scalar_lea.vmem [#allocation6], 16
        %v600 = vld [vmem:[%s599] sm:$0xf]
        %v601 = vunpack.c.l.bf16 %v600
        %v603 = vlaneseq
        %v604 = vshrl.u32 %v603, 7
        %v605 = vsub.s32 0, %v604
        %v606 = vrot.slane %v601, %v605
        %v607 = vlaneseq
        %v608 = vshrl.u32 %v607, 7
        %v609 = vsub.s32 2, %v608
        %v610 = vrot.slane %v601, %v609
        %v611 = vlaneseq
        %v612 = vshrl.u32 %v611, 7
        %v613 = vsub.s32 4, %v612
        %v614 = vrot.slane %v601, %v613
        %v615 = vlaneseq
        %v616 = vshrl.u32 %v615, 7
        %v617 = vsub.s32 6, %v616
        %v618 = vrot.slane %v601, %v617
        %v623 = vlaneseq
        %v624 = vshrl.u32 %v623, 7
        %v625 = vsub.s32 0, %v624
        %v626 = vrot.slane %v606, %v625
        %v627 = vlaneseq
        %v628 = vshrl.u32 %v627, 7
        %v629 = vsub.s32 0, %v628
        %v630 = vrot.slane %v610, %v629
        %v631 = vlaneseq
        %v632 = vshrl.u32 %v631, 7
        %v633 = vsub.s32 0, %v632
        %v634 = vrot.slane %v614, %v633
        %v635 = vlaneseq
        %v636 = vshrl.u32 %v635, 7
        %v637 = vsub.s32 0, %v636
        %v638 = vrot.slane %v618, %v637
        %v639 = vmul.f32 %v242, %v626
        %v640 = vmul.f32 %v243, %v630
        %v641 = vmul.f32 %v244, %v634
        %v642 = vmul.f32 %v245, %v638
        %v643 = vmul.f32 %v595, %v626
        %v644 = vmul.f32 %v596, %v630
        %v645 = vmul.f32 %v597, %v634
        %v646 = vmul.f32 %v598, %v638
        %v647 = vadd.f32 %v639, %v640
        %v648 = vadd.f32 %v647, %v641
        %v649 = vadd.f32 %v648, %v642
        %650 = vadd.xlane.f32.xlu0 %v649
        %v651 = vpop.xlane.xlu0 %650
        %v652 = vadd.f32 %v643, %v644
        %v653 = vadd.f32 %v652, %v645
        %v654 = vadd.f32 %v653, %v646
        %655 = vadd.xlane.f32.xlu0 %v654
        %v656 = vpop.xlane.xlu0 %655
        %v657 = vadd.f32 %v591, %v651
        %v658 = vadd.f32 %v592, %v656
        %v659 = vld [vmem:[%s201 + $0x30] sm:$0x11]
        %v660 = vld [vmem:[%s201 + $0x38] sm:$0x11]
        %v661 = vunpack.c.l.bf16 %v659
        %v662 = vunpack.c.h.bf16 %v659
        %v663 = vunpack.c.l.bf16 %v660
        %v664 = vunpack.c.h.bf16 %v660
        %s665 = scalar_lea.vmem [#allocation6], 20
        %v666 = vld [vmem:[%s665] sm:$0xf]
        %v667 = vunpack.c.l.bf16 %v666
        %v669 = vlaneseq
        %v670 = vshrl.u32 %v669, 7
        %v671 = vsub.s32 0, %v670
        %v672 = vrot.slane %v667, %v671
        %v673 = vlaneseq
        %v674 = vshrl.u32 %v673, 7
        %v675 = vsub.s32 2, %v674
        %v676 = vrot.slane %v667, %v675
        %v677 = vlaneseq
        %v678 = vshrl.u32 %v677, 7
        %v679 = vsub.s32 4, %v678
        %v680 = vrot.slane %v667, %v679
        %v681 = vlaneseq
        %v682 = vshrl.u32 %v681, 7
        %v683 = vsub.s32 6, %v682
        %v684 = vrot.slane %v667, %v683
        %v689 = vlaneseq
        %v690 = vshrl.u32 %v689, 7
        %v691 = vsub.s32 0, %v690
        %v692 = vrot.slane %v672, %v691
        %v693 = vlaneseq
        %v694 = vshrl.u32 %v693, 7
        %v695 = vsub.s32 0, %v694
        %v696 = vrot.slane %v676, %v695
        %v697 = vlaneseq
        %v698 = vshrl.u32 %v697, 7
        %v699 = vsub.s32 0, %v698
        %v700 = vrot.slane %v680, %v699
        %v701 = vlaneseq
        %v702 = vshrl.u32 %v701, 7
        %v703 = vsub.s32 0, %v702
        %v704 = vrot.slane %v684, %v703
        %v705 = vmul.f32 %v242, %v692
        %v706 = vmul.f32 %v243, %v696
        %v707 = vmul.f32 %v244, %v700
        %v708 = vmul.f32 %v245, %v704
        %v709 = vmul.f32 %v595, %v692
        %v710 = vmul.f32 %v596, %v696
        %v711 = vmul.f32 %v597, %v700
        %v712 = vmul.f32 %v598, %v704
        %v713 = vmul.f32 %v661, %v692
        %v714 = vmul.f32 %v662, %v696
        %v715 = vmul.f32 %v663, %v700
        %v716 = vmul.f32 %v664, %v704
        %v717 = vsel %vm363, %v705, 0.0
        %v718 = vsel %vm363, %v706, 0.0
        %v719 = vadd.f32 %v717, %v718
        %v720 = vsel %vm363, %v707, 0.0
        %v721 = vadd.f32 %v719, %v720
        %v722 = vsel %vm363, %v708, 0.0
        %v723 = vadd.f32 %v721, %v722
        %724 = vadd.xlane.f32.xlu0 %v723
        %v725 = vpop.xlane.xlu0 %724
        %v726 = vadd.f32 %v709, %v710
        %v727 = vadd.f32 %v726, %v711
        %v728 = vadd.f32 %v727, %v712
        %729 = vadd.xlane.f32.xlu0 %v728
        %v730 = vpop.xlane.xlu0 %729
        %v731 = vsel %vm378, %v713, 0.0
        %v732 = vsel %vm378, %v714, 0.0
        %v733 = vadd.f32 %v731, %v732
        %v734 = vsel %vm378, %v715, 0.0
        %v735 = vadd.f32 %v733, %v734
        %v736 = vsel %vm378, %v716, 0.0
        %v737 = vadd.f32 %v735, %v736
        %738 = vadd.xlane.f32.xlu0 %v737
        %v739 = vpop.xlane.xlu0 %738
        %v743 = vrot.slane %v725, 1
        %v744 = vrot.slane %v730, 1
        %v745 = vsel %vm391, %v743, %v744
        %v746 = vrot.slane %v739, 1
        %v747 = vsel %vm391, %v744, %v746
        %v750 = vadd.f32 %v657, %v745
        %v751 = vadd.f32 %v658, %v747
        %v752 = vld [vmem:[%s201 + $0x10] sm:$0xee]
        %v753 = vld [vmem:[%s201 + $0x18] sm:$0xee]
        %v754 = vunpack.c.l.bf16 %v752
        %v755 = vunpack.c.h.bf16 %v752
        %v756 = vunpack.c.l.bf16 %v753
        %v757 = vunpack.c.h.bf16 %v753
        %s758 = scalar_lea.vmem [#allocation6], 24
        %v759 = vld [vmem:[%s758] sm:$0xf]
        %v760 = vunpack.c.l.bf16 %v759
        %v762 = vlaneseq
        %v763 = vshrl.u32 %v762, 7
        %v764 = vsub.s32 0, %v763
        %v765 = vrot.slane %v760, %v764
        %v766 = vlaneseq
        %v767 = vshrl.u32 %v766, 7
        %v768 = vsub.s32 2, %v767
        %v769 = vrot.slane %v760, %v768
        %v770 = vlaneseq
        %v771 = vshrl.u32 %v770, 7
        %v772 = vsub.s32 4, %v771
        %v773 = vrot.slane %v760, %v772
        %v774 = vlaneseq
        %v775 = vshrl.u32 %v774, 7
        %v776 = vsub.s32 6, %v775
        %v777 = vrot.slane %v760, %v776
        %v782 = vlaneseq
        %v783 = vshrl.u32 %v782, 7
        %v784 = vsub.s32 0, %v783
        %v785 = vrot.slane %v765, %v784
        %v786 = vlaneseq
        %v787 = vshrl.u32 %v786, 7
        %v788 = vsub.s32 0, %v787
        %v789 = vrot.slane %v769, %v788
        %v790 = vlaneseq
        %v791 = vshrl.u32 %v790, 7
        %v792 = vsub.s32 0, %v791
        %v793 = vrot.slane %v773, %v792
        %v794 = vlaneseq
        %v795 = vshrl.u32 %v794, 7
        %v796 = vsub.s32 0, %v795
        %v797 = vrot.slane %v777, %v796
        %v798 = vmul.f32 %v754, %v785
        %v799 = vmul.f32 %v755, %v789
        %v800 = vmul.f32 %v756, %v793
        %v801 = vmul.f32 %v757, %v797
        %v802 = vmul.f32 %v595, %v785
        %v803 = vmul.f32 %v596, %v789
        %v804 = vmul.f32 %v597, %v793
        %v805 = vmul.f32 %v598, %v797
        %v806 = vmul.f32 %v661, %v785
        %v807 = vmul.f32 %v662, %v789
        %v808 = vmul.f32 %v663, %v793
        %v809 = vmul.f32 %v664, %v797
        %v810 = vsel %vm459, %v798, 0.0
        %v811 = vsel %vm459, %v799, 0.0
        %v812 = vadd.f32 %v810, %v811
        %v813 = vsel %vm459, %v800, 0.0
        %v814 = vadd.f32 %v812, %v813
        %v815 = vsel %vm459, %v801, 0.0
        %v816 = vadd.f32 %v814, %v815
        %817 = vadd.xlane.f32.xlu0 %v816
        %v818 = vpop.xlane.xlu0 %817
        %v819 = vadd.f32 %v802, %v803
        %v820 = vadd.f32 %v819, %v804
        %v821 = vadd.f32 %v820, %v805
        %822 = vadd.xlane.f32.xlu0 %v821
        %v823 = vpop.xlane.xlu0 %822
        %v824 = vsel %vm474, %v806, 0.0
        %v825 = vsel %vm474, %v807, 0.0
        %v826 = vadd.f32 %v824, %v825
        %v827 = vsel %vm474, %v808, 0.0
        %v828 = vadd.f32 %v826, %v827
        %v829 = vsel %vm474, %v809, 0.0
        %v830 = vadd.f32 %v828, %v829
        %831 = vadd.xlane.f32.xlu0 %v830
        %v832 = vpop.xlane.xlu0 %831
        %v836 = vrot.slane %v818, 2
        %v837 = vrot.slane %v823, 2
        %v838 = vsel %vm487, %v836, %v837
        %v839 = vrot.slane %v832, 2
        %v840 = vsel %vm487, %v837, %v839
        %v843 = vadd.f32 %v750, %v838
        %v844 = vadd.f32 %v751, %v840
        %v845 = vld [vmem:[%s201 + $0x30] sm:$0x33]
        %v846 = vld [vmem:[%s201 + $0x38] sm:$0x33]
        %v847 = vunpack.c.l.bf16 %v845
        %v848 = vunpack.c.h.bf16 %v845
        %v849 = vunpack.c.l.bf16 %v846
        %v850 = vunpack.c.h.bf16 %v846
        %s851 = scalar_lea.vmem [#allocation6], 28
        %v852 = vld [vmem:[%s851] sm:$0xf]
        %v853 = vunpack.c.l.bf16 %v852
        %v855 = vlaneseq
        %v856 = vshrl.u32 %v855, 7
        %v857 = vsub.s32 0, %v856
        %v858 = vrot.slane %v853, %v857
        %v859 = vlaneseq
        %v860 = vshrl.u32 %v859, 7
        %v861 = vsub.s32 2, %v860
        %v862 = vrot.slane %v853, %v861
        %v863 = vlaneseq
        %v864 = vshrl.u32 %v863, 7
        %v865 = vsub.s32 4, %v864
        %v866 = vrot.slane %v853, %v865
        %v867 = vlaneseq
        %v868 = vshrl.u32 %v867, 7
        %v869 = vsub.s32 6, %v868
        %v870 = vrot.slane %v853, %v869
        %v875 = vlaneseq
        %v876 = vshrl.u32 %v875, 7
        %v877 = vsub.s32 0, %v876
        %v878 = vrot.slane %v858, %v877
        %v879 = vlaneseq
        %v880 = vshrl.u32 %v879, 7
        %v881 = vsub.s32 0, %v880
        %v882 = vrot.slane %v862, %v881
        %v883 = vlaneseq
        %v884 = vshrl.u32 %v883, 7
        %v885 = vsub.s32 0, %v884
        %v886 = vrot.slane %v866, %v885
        %v887 = vlaneseq
        %v888 = vshrl.u32 %v887, 7
        %v889 = vsub.s32 0, %v888
        %v890 = vrot.slane %v870, %v889
        %v891 = vmul.f32 %v754, %v878
        %v892 = vmul.f32 %v755, %v882
        %v893 = vmul.f32 %v756, %v886
        %v894 = vmul.f32 %v757, %v890
        %v895 = vmul.f32 %v595, %v878
        %v896 = vmul.f32 %v596, %v882
        %v897 = vmul.f32 %v597, %v886
        %v898 = vmul.f32 %v598, %v890
        %v899 = vmul.f32 %v847, %v878
        %v900 = vmul.f32 %v848, %v882
        %v901 = vmul.f32 %v849, %v886
        %v902 = vmul.f32 %v850, %v890
        %v903 = vsel %vm555, %v891, 0.0
        %v904 = vsel %vm555, %v892, 0.0
        %v905 = vadd.f32 %v903, %v904
        %v906 = vsel %vm555, %v893, 0.0
        %v907 = vadd.f32 %v905, %v906
        %v908 = vsel %vm555, %v894, 0.0
        %v909 = vadd.f32 %v907, %v908
        %910 = vadd.xlane.f32.xlu0 %v909
        %v911 = vpop.xlane.xlu0 %910
        %v912 = vadd.f32 %v895, %v896
        %v913 = vadd.f32 %v912, %v897
        %v914 = vadd.f32 %v913, %v898
        %915 = vadd.xlane.f32.xlu0 %v914
        %v916 = vpop.xlane.xlu0 %915
        %v917 = vsel %vm570, %v899, 0.0
        %v918 = vsel %vm570, %v900, 0.0
        %v919 = vadd.f32 %v917, %v918
        %v920 = vsel %vm570, %v901, 0.0
        %v921 = vadd.f32 %v919, %v920
        %v922 = vsel %vm570, %v902, 0.0
        %v923 = vadd.f32 %v921, %v922
        %924 = vadd.xlane.f32.xlu0 %v923
        %v925 = vpop.xlane.xlu0 %924
        %v929 = vrot.slane %v911, 3
        %v930 = vrot.slane %v916, 3
        %v931 = vsel %vm583, %v929, %v930
        %v932 = vrot.slane %v925, 3
        %v933 = vsel %vm583, %v930, %v932
        %v936 = vadd.f32 %v843, %v931
        %v937 = vadd.f32 %v844, %v933
        %v938 = vld [vmem:[%s201 + $0x30] sm:$0xff]
        %v939 = vld [vmem:[%s201 + $0x38] sm:$0xff]
        %v940 = vunpack.c.l.bf16 %v938
        %v941 = vunpack.c.h.bf16 %v938
        %v942 = vunpack.c.l.bf16 %v939
        %v943 = vunpack.c.h.bf16 %v939
        %s944 = scalar_lea.vmem [#allocation6], 32
        %v945 = vld [vmem:[%s944] sm:$0xf]
        %v946 = vunpack.c.l.bf16 %v945
        %v948 = vlaneseq
        %v949 = vshrl.u32 %v948, 7
        %v950 = vsub.s32 0, %v949
        %v951 = vrot.slane %v946, %v950
        %v952 = vlaneseq
        %v953 = vshrl.u32 %v952, 7
        %v954 = vsub.s32 2, %v953
        %v955 = vrot.slane %v946, %v954
        %v956 = vlaneseq
        %v957 = vshrl.u32 %v956, 7
        %v958 = vsub.s32 4, %v957
        %v959 = vrot.slane %v946, %v958
        %v960 = vlaneseq
        %v961 = vshrl.u32 %v960, 7
        %v962 = vsub.s32 6, %v961
        %v963 = vrot.slane %v946, %v962
        %v968 = vlaneseq
        %v969 = vshrl.u32 %v968, 7
        %v970 = vsub.s32 0, %v969
        %v971 = vrot.slane %v951, %v970
        %v972 = vlaneseq
        %v973 = vshrl.u32 %v972, 7
        %v974 = vsub.s32 0, %v973
        %v975 = vrot.slane %v955, %v974
        %v976 = vlaneseq
        %v977 = vshrl.u32 %v976, 7
        %v978 = vsub.s32 0, %v977
        %v979 = vrot.slane %v959, %v978
        %v980 = vlaneseq
        %v981 = vshrl.u32 %v980, 7
        %v982 = vsub.s32 0, %v981
        %v983 = vrot.slane %v963, %v982
        %v984 = vmul.f32 %v595, %v971
        %v985 = vmul.f32 %v596, %v975
        %v986 = vmul.f32 %v597, %v979
        %v987 = vmul.f32 %v598, %v983
        %v988 = vmul.f32 %v940, %v971
        %v989 = vmul.f32 %v941, %v975
        %v990 = vmul.f32 %v942, %v979
        %v991 = vmul.f32 %v943, %v983
        %v992 = vadd.f32 %v984, %v985
        %v993 = vadd.f32 %v992, %v986
        %v994 = vadd.f32 %v993, %v987
        %995 = vadd.xlane.f32.xlu0 %v994
        %v996 = vpop.xlane.xlu0 %995
        %v997 = vadd.f32 %v988, %v989
        %v998 = vadd.f32 %v997, %v990
        %v999 = vadd.f32 %v998, %v991
        %1000 = vadd.xlane.f32.xlu0 %v999
        %v1001 = vpop.xlane.xlu0 %1000
        %v1002 = vadd.f32 %v936, %v996
        %v1003 = vadd.f32 %v937, %v1001
        %v1004 = vld [vmem:[%s201 + $0x40] sm:$0x11]
        %v1005 = vld [vmem:[%s201 + $0x48] sm:$0x11]
        %v1006 = vunpack.c.l.bf16 %v1004
        %v1007 = vunpack.c.h.bf16 %v1004
        %v1008 = vunpack.c.l.bf16 %v1005
        %v1009 = vunpack.c.h.bf16 %v1005
        %s1010 = scalar_lea.vmem [#allocation6], 36
        %v1011 = vld [vmem:[%s1010] sm:$0xf]
        %v1012 = vunpack.c.l.bf16 %v1011
        %v1014 = vlaneseq
        %v1015 = vshrl.u32 %v1014, 7
        %v1016 = vsub.s32 0, %v1015
        %v1017 = vrot.slane %v1012, %v1016
        %v1018 = vlaneseq
        %v1019 = vshrl.u32 %v1018, 7
        %v1020 = vsub.s32 2, %v1019
        %v1021 = vrot.slane %v1012, %v1020
        %v1022 = vlaneseq
        %v1023 = vshrl.u32 %v1022, 7
        %v1024 = vsub.s32 4, %v1023
        %v1025 = vrot.slane %v1012, %v1024
        %v1026 = vlaneseq
        %v1027 = vshrl.u32 %v1026, 7
        %v1028 = vsub.s32 6, %v1027
        %v1029 = vrot.slane %v1012, %v1028
        %v1034 = vlaneseq
        %v1035 = vshrl.u32 %v1034, 7
        %v1036 = vsub.s32 0, %v1035
        %v1037 = vrot.slane %v1017, %v1036
        %v1038 = vlaneseq
        %v1039 = vshrl.u32 %v1038, 7
        %v1040 = vsub.s32 0, %v1039
        %v1041 = vrot.slane %v1021, %v1040
        %v1042 = vlaneseq
        %v1043 = vshrl.u32 %v1042, 7
        %v1044 = vsub.s32 0, %v1043
        %v1045 = vrot.slane %v1025, %v1044
        %v1046 = vlaneseq
        %v1047 = vshrl.u32 %v1046, 7
        %v1048 = vsub.s32 0, %v1047
        %v1049 = vrot.slane %v1029, %v1048
        %v1050 = vmul.f32 %v595, %v1037
        %v1051 = vmul.f32 %v596, %v1041
        %v1052 = vmul.f32 %v597, %v1045
        %v1053 = vmul.f32 %v598, %v1049
        %v1054 = vmul.f32 %v940, %v1037
        %v1055 = vmul.f32 %v941, %v1041
        %v1056 = vmul.f32 %v942, %v1045
        %v1057 = vmul.f32 %v943, %v1049
        %v1058 = vmul.f32 %v1006, %v1037
        %v1059 = vmul.f32 %v1007, %v1041
        %v1060 = vmul.f32 %v1008, %v1045
        %v1061 = vmul.f32 %v1009, %v1049
        %v1062 = vsel %vm363, %v1050, 0.0
        %v1063 = vsel %vm363, %v1051, 0.0
        %v1064 = vadd.f32 %v1062, %v1063
        %v1065 = vsel %vm363, %v1052, 0.0
        %v1066 = vadd.f32 %v1064, %v1065
        %v1067 = vsel %vm363, %v1053, 0.0
        %v1068 = vadd.f32 %v1066, %v1067
        %1069 = vadd.xlane.f32.xlu0 %v1068
        %v1070 = vpop.xlane.xlu0 %1069
        %v1071 = vadd.f32 %v1054, %v1055
        %v1072 = vadd.f32 %v1071, %v1056
        %v1073 = vadd.f32 %v1072, %v1057
        %1074 = vadd.xlane.f32.xlu0 %v1073
        %v1075 = vpop.xlane.xlu0 %1074
        %v1076 = vsel %vm378, %v1058, 0.0
        %v1077 = vsel %vm378, %v1059, 0.0
        %v1078 = vadd.f32 %v1076, %v1077
        %v1079 = vsel %vm378, %v1060, 0.0
        %v1080 = vadd.f32 %v1078, %v1079
        %v1081 = vsel %vm378, %v1061, 0.0
        %v1082 = vadd.f32 %v1080, %v1081
        %1083 = vadd.xlane.f32.xlu0 %v1082
        %v1084 = vpop.xlane.xlu0 %1083
        %v1088 = vrot.slane %v1070, 1
        %v1089 = vrot.slane %v1075, 1
        %v1090 = vsel %vm391, %v1088, %v1089
        %v1091 = vrot.slane %v1084, 1
        %v1092 = vsel %vm391, %v1089, %v1091
        %v1095 = vadd.f32 %v1002, %v1090
        %v1096 = vadd.f32 %v1003, %v1092
        %v1097 = vld [vmem:[%s201 + $0x20] sm:$0xee]
        %v1098 = vld [vmem:[%s201 + $0x28] sm:$0xee]
        %v1099 = vunpack.c.l.bf16 %v1097
        %v1100 = vunpack.c.h.bf16 %v1097
        %v1101 = vunpack.c.l.bf16 %v1098
        %v1102 = vunpack.c.h.bf16 %v1098
        %s1103 = scalar_lea.vmem [#allocation6], 40
        %v1104 = vld [vmem:[%s1103] sm:$0xf]
        %v1105 = vunpack.c.l.bf16 %v1104
        %v1107 = vlaneseq
        %v1108 = vshrl.u32 %v1107, 7
        %v1109 = vsub.s32 0, %v1108
        %v1110 = vrot.slane %v1105, %v1109
        %v1111 = vlaneseq
        %v1112 = vshrl.u32 %v1111, 7
        %v1113 = vsub.s32 2, %v1112
        %v1114 = vrot.slane %v1105, %v1113
        %v1115 = vlaneseq
        %v1116 = vshrl.u32 %v1115, 7
        %v1117 = vsub.s32 4, %v1116
        %v1118 = vrot.slane %v1105, %v1117
        %v1119 = vlaneseq
        %v1120 = vshrl.u32 %v1119, 7
        %v1121 = vsub.s32 6, %v1120
        %v1122 = vrot.slane %v1105, %v1121
        %v1127 = vlaneseq
        %v1128 = vshrl.u32 %v1127, 7
        %v1129 = vsub.s32 0, %v1128
        %v1130 = vrot.slane %v1110, %v1129
        %v1131 = vlaneseq
        %v1132 = vshrl.u32 %v1131, 7
        %v1133 = vsub.s32 0, %v1132
        %v1134 = vrot.slane %v1114, %v1133
        %v1135 = vlaneseq
        %v1136 = vshrl.u32 %v1135, 7
        %v1137 = vsub.s32 0, %v1136
        %v1138 = vrot.slane %v1118, %v1137
        %v1139 = vlaneseq
        %v1140 = vshrl.u32 %v1139, 7
        %v1141 = vsub.s32 0, %v1140
        %v1142 = vrot.slane %v1122, %v1141
        %v1143 = vmul.f32 %v1099, %v1130
        %v1144 = vmul.f32 %v1100, %v1134
        %v1145 = vmul.f32 %v1101, %v1138
        %v1146 = vmul.f32 %v1102, %v1142
        %v1147 = vmul.f32 %v940, %v1130
        %v1148 = vmul.f32 %v941, %v1134
        %v1149 = vmul.f32 %v942, %v1138
        %v1150 = vmul.f32 %v943, %v1142
        %v1151 = vmul.f32 %v1006, %v1130
        %v1152 = vmul.f32 %v1007, %v1134
        %v1153 = vmul.f32 %v1008, %v1138
        %v1154 = vmul.f32 %v1009, %v1142
        %v1155 = vsel %vm459, %v1143, 0.0
        %v1156 = vsel %vm459, %v1144, 0.0
        %v1157 = vadd.f32 %v1155, %v1156
        %v1158 = vsel %vm459, %v1145, 0.0
        %v1159 = vadd.f32 %v1157, %v1158
        %v1160 = vsel %vm459, %v1146, 0.0
        %v1161 = vadd.f32 %v1159, %v1160
        %1162 = vadd.xlane.f32.xlu0 %v1161
        %v1163 = vpop.xlane.xlu0 %1162
        %v1164 = vadd.f32 %v1147, %v1148
        %v1165 = vadd.f32 %v1164, %v1149
        %v1166 = vadd.f32 %v1165, %v1150
        %1167 = vadd.xlane.f32.xlu0 %v1166
        %v1168 = vpop.xlane.xlu0 %1167
        %v1169 = vsel %vm474, %v1151, 0.0
        %v1170 = vsel %vm474, %v1152, 0.0
        %v1171 = vadd.f32 %v1169, %v1170
        %v1172 = vsel %vm474, %v1153, 0.0
        %v1173 = vadd.f32 %v1171, %v1172
        %v1174 = vsel %vm474, %v1154, 0.0
        %v1175 = vadd.f32 %v1173, %v1174
        %1176 = vadd.xlane.f32.xlu0 %v1175
        %v1177 = vpop.xlane.xlu0 %1176
        %v1181 = vrot.slane %v1163, 2
        %v1182 = vrot.slane %v1168, 2
        %v1183 = vsel %vm487, %v1181, %v1182
        %v1184 = vrot.slane %v1177, 2
        %v1185 = vsel %vm487, %v1182, %v1184
        %v1188 = vadd.f32 %v1095, %v1183
        %v1189 = vadd.f32 %v1096, %v1185
        %v1190 = vld [vmem:[%s201 + $0x40] sm:$0x33]
        %v1191 = vld [vmem:[%s201 + $0x48] sm:$0x33]
        %v1192 = vunpack.c.l.bf16 %v1190
        %v1193 = vunpack.c.h.bf16 %v1190
        %v1194 = vunpack.c.l.bf16 %v1191
        %v1195 = vunpack.c.h.bf16 %v1191
        %s1196 = scalar_lea.vmem [#allocation6], 44
        %v1197 = vld [vmem:[%s1196] sm:$0xf]
        %v1198 = vunpack.c.l.bf16 %v1197
        %v1200 = vlaneseq
        %v1201 = vshrl.u32 %v1200, 7
        %v1202 = vsub.s32 0, %v1201
        %v1203 = vrot.slane %v1198, %v1202
        %v1204 = vlaneseq
        %v1205 = vshrl.u32 %v1204, 7
        %v1206 = vsub.s32 2, %v1205
        %v1207 = vrot.slane %v1198, %v1206
        %v1208 = vlaneseq
        %v1209 = vshrl.u32 %v1208, 7
        %v1210 = vsub.s32 4, %v1209
        %v1211 = vrot.slane %v1198, %v1210
        %v1212 = vlaneseq
        %v1213 = vshrl.u32 %v1212, 7
        %v1214 = vsub.s32 6, %v1213
        %v1215 = vrot.slane %v1198, %v1214
        %v1220 = vlaneseq
        %v1221 = vshrl.u32 %v1220, 7
        %v1222 = vsub.s32 0, %v1221
        %v1223 = vrot.slane %v1203, %v1222
        %v1224 = vlaneseq
        %v1225 = vshrl.u32 %v1224, 7
        %v1226 = vsub.s32 0, %v1225
        %v1227 = vrot.slane %v1207, %v1226
        %v1228 = vlaneseq
        %v1229 = vshrl.u32 %v1228, 7
        %v1230 = vsub.s32 0, %v1229
        %v1231 = vrot.slane %v1211, %v1230
        %v1232 = vlaneseq
        %v1233 = vshrl.u32 %v1232, 7
        %v1234 = vsub.s32 0, %v1233
        %v1235 = vrot.slane %v1215, %v1234
        %v1236 = vmul.f32 %v1099, %v1223
        %v1237 = vmul.f32 %v1100, %v1227
        %v1238 = vmul.f32 %v1101, %v1231
        %v1239 = vmul.f32 %v1102, %v1235
        %v1240 = vmul.f32 %v940, %v1223
        %v1241 = vmul.f32 %v941, %v1227
        %v1242 = vmul.f32 %v942, %v1231
        %v1243 = vmul.f32 %v943, %v1235
        %v1244 = vmul.f32 %v1192, %v1223
        %v1245 = vmul.f32 %v1193, %v1227
        %v1246 = vmul.f32 %v1194, %v1231
        %v1247 = vmul.f32 %v1195, %v1235
        %v1248 = vsel %vm555, %v1236, 0.0
        %v1249 = vsel %vm555, %v1237, 0.0
        %v1250 = vadd.f32 %v1248, %v1249
        %v1251 = vsel %vm555, %v1238, 0.0
        %v1252 = vadd.f32 %v1250, %v1251
        %v1253 = vsel %vm555, %v1239, 0.0
        %v1254 = vadd.f32 %v1252, %v1253
        %1255 = vadd.xlane.f32.xlu0 %v1254
        %v1256 = vpop.xlane.xlu0 %1255
        %v1257 = vadd.f32 %v1240, %v1241
        %v1258 = vadd.f32 %v1257, %v1242
        %v1259 = vadd.f32 %v1258, %v1243
        %1260 = vadd.xlane.f32.xlu0 %v1259
        %v1261 = vpop.xlane.xlu0 %1260
        %v1262 = vsel %vm570, %v1244, 0.0
        %v1263 = vsel %vm570, %v1245, 0.0
        %v1264 = vadd.f32 %v1262, %v1263
        %v1265 = vsel %vm570, %v1246, 0.0
        %v1266 = vadd.f32 %v1264, %v1265
        %v1267 = vsel %vm570, %v1247, 0.0
        %v1268 = vadd.f32 %v1266, %v1267
        %1269 = vadd.xlane.f32.xlu0 %v1268
        %v1270 = vpop.xlane.xlu0 %1269
        %v1274 = vrot.slane %v1256, 3
        %v1275 = vrot.slane %v1261, 3
        %v1276 = vsel %vm583, %v1274, %v1275
        %v1277 = vrot.slane %v1270, 3
        %v1278 = vsel %vm583, %v1275, %v1277
        %v1281 = vadd.f32 %v1188, %v1276
        %v1282 = vadd.f32 %v1189, %v1278
        %v1283 = vld [vmem:[%s201 + $0x40] sm:$0xff]
        %v1284 = vld [vmem:[%s201 + $0x48] sm:$0xff]
        %v1285 = vunpack.c.l.bf16 %v1283
        %v1286 = vunpack.c.h.bf16 %v1283
        %v1287 = vunpack.c.l.bf16 %v1284
        %v1288 = vunpack.c.h.bf16 %v1284
        %s1289 = scalar_lea.vmem [#allocation6], 48
        %v1290 = vld [vmem:[%s1289] sm:$0xf]
        %v1291 = vunpack.c.l.bf16 %v1290
        %v1293 = vlaneseq
        %v1294 = vshrl.u32 %v1293, 7
        %v1295 = vsub.s32 0, %v1294
        %v1296 = vrot.slane %v1291, %v1295
        %v1297 = vlaneseq
        %v1298 = vshrl.u32 %v1297, 7
        %v1299 = vsub.s32 2, %v1298
        %v1300 = vrot.slane %v1291, %v1299
        %v1301 = vlaneseq
        %v1302 = vshrl.u32 %v1301, 7
        %v1303 = vsub.s32 4, %v1302
        %v1304 = vrot.slane %v1291, %v1303
        %v1305 = vlaneseq
        %v1306 = vshrl.u32 %v1305, 7
        %v1307 = vsub.s32 6, %v1306
        %v1308 = vrot.slane %v1291, %v1307
        %v1313 = vlaneseq
        %v1314 = vshrl.u32 %v1313, 7
        %v1315 = vsub.s32 0, %v1314
        %v1316 = vrot.slane %v1296, %v1315
        %v1317 = vlaneseq
        %v1318 = vshrl.u32 %v1317, 7
        %v1319 = vsub.s32 0, %v1318
        %v1320 = vrot.slane %v1300, %v1319
        %v1321 = vlaneseq
        %v1322 = vshrl.u32 %v1321, 7
        %v1323 = vsub.s32 0, %v1322
        %v1324 = vrot.slane %v1304, %v1323
        %v1325 = vlaneseq
        %v1326 = vshrl.u32 %v1325, 7
        %v1327 = vsub.s32 0, %v1326
        %v1328 = vrot.slane %v1308, %v1327
        %v1329 = vmul.f32 %v940, %v1316
        %v1330 = vmul.f32 %v941, %v1320
        %v1331 = vmul.f32 %v942, %v1324
        %v1332 = vmul.f32 %v943, %v1328
        %v1333 = vmul.f32 %v1285, %v1316
        %v1334 = vmul.f32 %v1286, %v1320
        %v1335 = vmul.f32 %v1287, %v1324
        %v1336 = vmul.f32 %v1288, %v1328
        %v1337 = vadd.f32 %v1329, %v1330
        %v1338 = vadd.f32 %v1337, %v1331
        %v1339 = vadd.f32 %v1338, %v1332
        %1340 = vadd.xlane.f32.xlu0 %v1339
        %v1341 = vpop.xlane.xlu0 %1340
        %v1342 = vadd.f32 %v1333, %v1334
        %v1343 = vadd.f32 %v1342, %v1335
        %v1344 = vadd.f32 %v1343, %v1336
        %1345 = vadd.xlane.f32.xlu0 %v1344
        %v1346 = vpop.xlane.xlu0 %1345
        %v1347 = vadd.f32 %v1281, %v1341
        %v1348 = vadd.f32 %v1282, %v1346
        %v1349 = vld [vmem:[%s201 + $0x50] sm:$0x11]
        %v1350 = vld [vmem:[%s201 + $0x58] sm:$0x11]
        %v1351 = vunpack.c.l.bf16 %v1349
        %v1352 = vunpack.c.h.bf16 %v1349
        %v1353 = vunpack.c.l.bf16 %v1350
        %v1354 = vunpack.c.h.bf16 %v1350
        %s1355 = scalar_lea.vmem [#allocation6], 52
        %v1356 = vld [vmem:[%s1355] sm:$0xf]
        %v1357 = vunpack.c.l.bf16 %v1356
        %v1359 = vlaneseq
        %v1360 = vshrl.u32 %v1359, 7
        %v1361 = vsub.s32 0, %v1360
        %v1362 = vrot.slane %v1357, %v1361
        %v1363 = vlaneseq
        %v1364 = vshrl.u32 %v1363, 7
        %v1365 = vsub.s32 2, %v1364
        %v1366 = vrot.slane %v1357, %v1365
        %v1367 = vlaneseq
        %v1368 = vshrl.u32 %v1367, 7
        %v1369 = vsub.s32 4, %v1368
        %v1370 = vrot.slane %v1357, %v1369
        %v1371 = vlaneseq
        %v1372 = vshrl.u32 %v1371, 7
        %v1373 = vsub.s32 6, %v1372
        %v1374 = vrot.slane %v1357, %v1373
        %v1379 = vlaneseq
        %v1380 = vshrl.u32 %v1379, 7
        %v1381 = vsub.s32 0, %v1380
        %v1382 = vrot.slane %v1362, %v1381
        %v1383 = vlaneseq
        %v1384 = vshrl.u32 %v1383, 7
        %v1385 = vsub.s32 0, %v1384
        %v1386 = vrot.slane %v1366, %v1385
        %v1387 = vlaneseq
        %v1388 = vshrl.u32 %v1387, 7
        %v1389 = vsub.s32 0, %v1388
        %v1390 = vrot.slane %v1370, %v1389
        %v1391 = vlaneseq
        %v1392 = vshrl.u32 %v1391, 7
        %v1393 = vsub.s32 0, %v1392
        %v1394 = vrot.slane %v1374, %v1393
        %v1395 = vmul.f32 %v940, %v1382
        %v1396 = vmul.f32 %v941, %v1386
        %v1397 = vmul.f32 %v942, %v1390
        %v1398 = vmul.f32 %v943, %v1394
        %v1399 = vmul.f32 %v1285, %v1382
        %v1400 = vmul.f32 %v1286, %v1386
        %v1401 = vmul.f32 %v1287, %v1390
        %v1402 = vmul.f32 %v1288, %v1394
        %v1403 = vmul.f32 %v1351, %v1382
        %v1404 = vmul.f32 %v1352, %v1386
        %v1405 = vmul.f32 %v1353, %v1390
        %v1406 = vmul.f32 %v1354, %v1394
        %v1407 = vsel %vm363, %v1395, 0.0
        %v1408 = vsel %vm363, %v1396, 0.0
        %v1409 = vadd.f32 %v1407, %v1408
        %v1410 = vsel %vm363, %v1397, 0.0
        %v1411 = vadd.f32 %v1409, %v1410
        %v1412 = vsel %vm363, %v1398, 0.0
        %v1413 = vadd.f32 %v1411, %v1412
        %1414 = vadd.xlane.f32.xlu0 %v1413
        %v1415 = vpop.xlane.xlu0 %1414
        %v1416 = vadd.f32 %v1399, %v1400
        %v1417 = vadd.f32 %v1416, %v1401
        %v1418 = vadd.f32 %v1417, %v1402
        %1419 = vadd.xlane.f32.xlu0 %v1418
        %v1420 = vpop.xlane.xlu0 %1419
        %v1421 = vsel %vm378, %v1403, 0.0
        %v1422 = vsel %vm378, %v1404, 0.0
        %v1423 = vadd.f32 %v1421, %v1422
        %v1424 = vsel %vm378, %v1405, 0.0
        %v1425 = vadd.f32 %v1423, %v1424
        %v1426 = vsel %vm378, %v1406, 0.0
        %v1427 = vadd.f32 %v1425, %v1426
        %1428 = vadd.xlane.f32.xlu0 %v1427
        %v1429 = vpop.xlane.xlu0 %1428
        %v1433 = vrot.slane %v1415, 1
        %v1434 = vrot.slane %v1420, 1
        %v1435 = vsel %vm391, %v1433, %v1434
        %v1436 = vrot.slane %v1429, 1
        %v1437 = vsel %vm391, %v1434, %v1436
        %v1440 = vadd.f32 %v1347, %v1435
        %v1441 = vadd.f32 %v1348, %v1437
        %v1442 = vld [vmem:[%s201 + $0x30] sm:$0xee]
        %v1443 = vld [vmem:[%s201 + $0x38] sm:$0xee]
        %v1444 = vunpack.c.l.bf16 %v1442
        %v1445 = vunpack.c.h.bf16 %v1442
        %v1446 = vunpack.c.l.bf16 %v1443
        %v1447 = vunpack.c.h.bf16 %v1443
        %s1448 = scalar_lea.vmem [#allocation6], 56
        %v1449 = vld [vmem:[%s1448] sm:$0xf]
        %v1450 = vunpack.c.l.bf16 %v1449
        %v1452 = vlaneseq
        %v1453 = vshrl.u32 %v1452, 7
        %v1454 = vsub.s32 0, %v1453
        %v1455 = vrot.slane %v1450, %v1454
        %v1456 = vlaneseq
        %v1457 = vshrl.u32 %v1456, 7
        %v1458 = vsub.s32 2, %v1457
        %v1459 = vrot.slane %v1450, %v1458
        %v1460 = vlaneseq
        %v1461 = vshrl.u32 %v1460, 7
        %v1462 = vsub.s32 4, %v1461
        %v1463 = vrot.slane %v1450, %v1462
        %v1464 = vlaneseq
        %v1465 = vshrl.u32 %v1464, 7
        %v1466 = vsub.s32 6, %v1465
        %v1467 = vrot.slane %v1450, %v1466
        %v1472 = vlaneseq
        %v1473 = vshrl.u32 %v1472, 7
        %v1474 = vsub.s32 0, %v1473
        %v1475 = vrot.slane %v1455, %v1474
        %v1476 = vlaneseq
        %v1477 = vshrl.u32 %v1476, 7
        %v1478 = vsub.s32 0, %v1477
        %v1479 = vrot.slane %v1459, %v1478
        %v1480 = vlaneseq
        %v1481 = vshrl.u32 %v1480, 7
        %v1482 = vsub.s32 0, %v1481
        %v1483 = vrot.slane %v1463, %v1482
        %v1484 = vlaneseq
        %v1485 = vshrl.u32 %v1484, 7
        %v1486 = vsub.s32 0, %v1485
        %v1487 = vrot.slane %v1467, %v1486
        %v1488 = vmul.f32 %v1444, %v1475
        %v1489 = vmul.f32 %v1445, %v1479
        %v1490 = vmul.f32 %v1446, %v1483
        %v1491 = vmul.f32 %v1447, %v1487
        %v1492 = vmul.f32 %v1285, %v1475
        %v1493 = vmul.f32 %v1286, %v1479
        %v1494 = vmul.f32 %v1287, %v1483
        %v1495 = vmul.f32 %v1288, %v1487
        %v1496 = vmul.f32 %v1351, %v1475
        %v1497 = vmul.f32 %v1352, %v1479
        %v1498 = vmul.f32 %v1353, %v1483
        %v1499 = vmul.f32 %v1354, %v1487
        %v1500 = vsel %vm459, %v1488, 0.0
        %v1501 = vsel %vm459, %v1489, 0.0
        %v1502 = vadd.f32 %v1500, %v1501
        %v1503 = vsel %vm459, %v1490, 0.0
        %v1504 = vadd.f32 %v1502, %v1503
        %v1505 = vsel %vm459, %v1491, 0.0
        %v1506 = vadd.f32 %v1504, %v1505
        %1507 = vadd.xlane.f32.xlu0 %v1506
        %v1508 = vpop.xlane.xlu0 %1507
        %v1509 = vadd.f32 %v1492, %v1493
        %v1510 = vadd.f32 %v1509, %v1494
        %v1511 = vadd.f32 %v1510, %v1495
        %1512 = vadd.xlane.f32.xlu0 %v1511
        %v1513 = vpop.xlane.xlu0 %1512
        %v1514 = vsel %vm474, %v1496, 0.0
        %v1515 = vsel %vm474, %v1497, 0.0
        %v1516 = vadd.f32 %v1514, %v1515
        %v1517 = vsel %vm474, %v1498, 0.0
        %v1518 = vadd.f32 %v1516, %v1517
        %v1519 = vsel %vm474, %v1499, 0.0
        %v1520 = vadd.f32 %v1518, %v1519
        %1521 = vadd.xlane.f32.xlu0 %v1520
        %v1522 = vpop.xlane.xlu0 %1521
        %v1526 = vrot.slane %v1508, 2
        %v1527 = vrot.slane %v1513, 2
        %v1528 = vsel %vm487, %v1526, %v1527
        %v1529 = vrot.slane %v1522, 2
        %v1530 = vsel %vm487, %v1527, %v1529
        %v1533 = vadd.f32 %v1440, %v1528
        %v1534 = vadd.f32 %v1441, %v1530
        %v1535 = vld [vmem:[%s201 + $0x50] sm:$0x33]
        %v1536 = vld [vmem:[%s201 + $0x58] sm:$0x33]
        %v1537 = vunpack.c.l.bf16 %v1535
        %v1538 = vunpack.c.h.bf16 %v1535
        %v1539 = vunpack.c.l.bf16 %v1536
        %v1540 = vunpack.c.h.bf16 %v1536
        %s1541 = scalar_lea.vmem [#allocation6], 60
        %v1542 = vld [vmem:[%s1541] sm:$0xf]
        %v1543 = vunpack.c.l.bf16 %v1542
        %v1545 = vlaneseq
        %v1546 = vshrl.u32 %v1545, 7
        %v1547 = vsub.s32 0, %v1546
        %v1548 = vrot.slane %v1543, %v1547
        %v1549 = vlaneseq
        %v1550 = vshrl.u32 %v1549, 7
        %v1551 = vsub.s32 2, %v1550
        %v1552 = vrot.slane %v1543, %v1551
        %v1553 = vlaneseq
        %v1554 = vshrl.u32 %v1553, 7
        %v1555 = vsub.s32 4, %v1554
        %v1556 = vrot.slane %v1543, %v1555
        %v1557 = vlaneseq
        %v1558 = vshrl.u32 %v1557, 7
        %v1559 = vsub.s32 6, %v1558
        %v1560 = vrot.slane %v1543, %v1559
        %v1565 = vlaneseq
        %v1566 = vshrl.u32 %v1565, 7
        %v1567 = vsub.s32 0, %v1566
        %v1568 = vrot.slane %v1548, %v1567
        %v1569 = vlaneseq
        %v1570 = vshrl.u32 %v1569, 7
        %v1571 = vsub.s32 0, %v1570
        %v1572 = vrot.slane %v1552, %v1571
        %v1573 = vlaneseq
        %v1574 = vshrl.u32 %v1573, 7
        %v1575 = vsub.s32 0, %v1574
        %v1576 = vrot.slane %v1556, %v1575
        %v1577 = vlaneseq
        %v1578 = vshrl.u32 %v1577, 7
        %v1579 = vsub.s32 0, %v1578
        %v1580 = vrot.slane %v1560, %v1579
        %v1581 = vmul.f32 %v1444, %v1568
        %v1582 = vmul.f32 %v1445, %v1572
        %v1583 = vmul.f32 %v1446, %v1576
        %v1584 = vmul.f32 %v1447, %v1580
        %v1585 = vmul.f32 %v1285, %v1568
        %v1586 = vmul.f32 %v1286, %v1572
        %v1587 = vmul.f32 %v1287, %v1576
        %v1588 = vmul.f32 %v1288, %v1580
        %v1589 = vmul.f32 %v1537, %v1568
        %v1590 = vmul.f32 %v1538, %v1572
        %v1591 = vmul.f32 %v1539, %v1576
        %v1592 = vmul.f32 %v1540, %v1580
        %v1593 = vsel %vm555, %v1581, 0.0
        %v1594 = vsel %vm555, %v1582, 0.0
        %v1595 = vadd.f32 %v1593, %v1594
        %v1596 = vsel %vm555, %v1583, 0.0
        %v1597 = vadd.f32 %v1595, %v1596
        %v1598 = vsel %vm555, %v1584, 0.0
        %v1599 = vadd.f32 %v1597, %v1598
        %1600 = vadd.xlane.f32.xlu0 %v1599
        %v1601 = vpop.xlane.xlu0 %1600
        %v1602 = vadd.f32 %v1585, %v1586
        %v1603 = vadd.f32 %v1602, %v1587
        %v1604 = vadd.f32 %v1603, %v1588
        %1605 = vadd.xlane.f32.xlu0 %v1604
        %v1606 = vpop.xlane.xlu0 %1605
        %v1607 = vsel %vm570, %v1589, 0.0
        %v1608 = vsel %vm570, %v1590, 0.0
        %v1609 = vadd.f32 %v1607, %v1608
        %v1610 = vsel %vm570, %v1591, 0.0
        %v1611 = vadd.f32 %v1609, %v1610
        %v1612 = vsel %vm570, %v1592, 0.0
        %v1613 = vadd.f32 %v1611, %v1612
        %1614 = vadd.xlane.f32.xlu0 %v1613
        %v1615 = vpop.xlane.xlu0 %1614
        %v1619 = vrot.slane %v1601, 3
        %v1620 = vrot.slane %v1606, 3
        %v1621 = vsel %vm583, %v1619, %v1620
        %v1622 = vrot.slane %v1615, 3
        %v1623 = vsel %vm583, %v1620, %v1622
        %v1626 = vadd.f32 %v1533, %v1621
        %v1627 = vadd.f32 %v1534, %v1623
        %v1628 = vld [vmem:[%s233] sm:$0x1]
        %v1630 = vlaneseq
        %v1631 = vshrl.u32 %v1630, 7
        %v1632 = vsub.s32 0, %v1631
        %v1633 = vrot.slane %v1628, %v1632
        %v1635 = vadd.f32 %v1626, %v1633
        %v1636 = vadd.f32 %v1627, %v1633
        %vm1637 = vcmask 7168
        %1638 = vst.msk [vmem:[%s230] sm:$0xff] %vm1637, %v1635
        %1639 = vst.msk [vmem:[%s230 + $0x8] sm:$0xff] %vm1637, %v1636
        %s1640 = sand.u32 %s118, 1
        %s1641 = scalar_lea.sflag [#allocation5], %s1640
        %s1642 = sand.u32 %s118, 1
        %s1643 = smul.addr %s1642, 16
        %s1644 = scalar_lea.vmem [#allocation8], %s1643
        // Predicated region
        $region41: #{_lambda_.9} parent=31 // pred_check
          %p1645 = pneg %p128
        $region42: #{_lambda_.9} parent=31 // pred_check_branch
          %1647 = sbr.rel (%p1645) target = $region44
        $region43: #{_lambda_.9} parent=31 // pred_region
          %s1649 = ssub.s32 256, 256
          %1650 = vsyncadd %s1641, %s1649
          %s1651 = smul.addr %s27, 2
          %s1652 = sadd.s32 %s28, %s1651
          %s1653 = smul.addr %s1652, 128
          %s1654 = scalar_lea.hbm %s3, %s1653
          %s1655 = sshll.u32 %s1644, 4
          %s1656 = int_to_ptr.vmem [resolvable:$true] %s1655
          %1661 = dma.vmem_to_hbm [thread:$0]  %s1656, 256, %s1654, %s1641, 128, 128, 8
        $region44: #{_lambda_.9} parent=31 // pred_fallthru
          _
      $region32: #{_lambda_.9} parent=5 // pred_fallthru
        _
      %p1662 = scmp.le.s32.totalorder 2, %s18
      // Predicated region
      $region45: #{_lambda_.9} parent=5 // pred_check
        %p1663 = pneg %p1662
      $region46: #{_lambda_.9} parent=5 // pred_check_branch
        %1665 = sbr.rel (%p1663) target = $region48
      $region47: #{_lambda_.9} parent=5 // pred_region
        %s1666 = ssub.s32 %s18, 2
        // Predicated region
        $region49: #{_lambda_.9} parent=47 // pred_check
          %p1667 = pneg %p134
        $region50: #{_lambda_.9} parent=47 // pred_check_branch
          %1669 = sbr.rel (%p1667) target = $region52
        $region51: #{_lambda_.9} parent=47 // pred_region
          %s1670 = sand.u32 %s119, 1
          %s1671 = scalar_lea.sflag [#allocation5], %s1670
          %s1672 = sand.u32 %s119, 1
          %s1673 = smul.addr %s1672, 16
          %s1674 = scalar_lea.vmem [#allocation8], %s1673
          %1675 = dma.done %s1671, 256
        $region52: #{_lambda_.9} parent=47 // pred_fallthru
          _
      $region48: #{_lambda_.9} parent=5 // pred_fallthru
        _
    $region6: #{_lambda_.9} parent=1 // loop_footer
      %s22 = sadd.s32 1, %s18
    $region7: #{_lambda_.9} parent=1 // loop_footer_branch
      %17 = sbr.rel target = $region3
    $region8: #{_lambda_.9} parent=1 // loop_exit
      _
    %1676 = vsyncpa [#allocation4], 1
    %s1677 = scalar_lea.sflag [#allocation4], 1
    %1678 = vsyncpa %s1677, 1
    %1679 = vsyncpa [#allocation7], 1
    %1680 = vsyncpa [#allocation5], 1
    %s1681 = scalar_lea.sflag [#allocation5], 1
    %1682 = vsyncpa %s1681, 1

// kernel: _lambda_.8
$region0: #{_lambda_.8}
  #allocation0 [shape = 'u32[]', space=smem, size = 0x4, offset = 0x4, fixed_abs, tag = 'smem constant byte address 0x4 - core index']
  #allocation1 [shape = 'u32[144,128]{1,0:T(1,128)}', space=vmem, size = 0x12000, scoped, tag = 'internal scratch']
  %s0 = inlined_call_operand.hbm [shape: bf16[2,52,256], index: 0, kind: input, shape index: {}]
  %s1 = inlined_call_operand.hbm [shape: bf16[16,256,512], index: 1, kind: input, shape index: {}]
  %s2 = inlined_call_operand.hbm [shape: f32[1,512], index: 2, kind: input, shape index: {}]
  %s3 = inlined_call_operand.hbm [shape: bf16[2,24,512], index: 3, kind: output, shape index: {}]
  %s4 = sld [smem:[#allocation0]]
  $region57: #{_lambda_.8} parent=0
    _
  %s6 = ssub.s32 1, %s4
  %s7 = scalar_select 0, %s6, %s4
  $region1: #{_lambda_.8} parent=0
    #allocation2 [shape = 'u8[57344]{0}', space=vmem, size = 0xe000, scoped, tag = 'input window, operand 0']
    #allocation3 [shape = 's32[2]{0}', space=sflag, size = 0x8, scoped, tag = 'scoped memory for _lambda_.8']
    #allocation4 [shape = 's32[2]{0}', space=sflag, size = 0x8, scoped, tag = 'scoped memory for _lambda_.8']
    #allocation5 [shape = 'u8[2097152]{0}', space=vmem, size = 0x200000, scoped, tag = 'input window, operand 1']
    #allocation6 [shape = 's32[2]{0}', space=sflag, size = 0x8, scoped, tag = 'scoped memory for _lambda_.8']
    #allocation7 [shape = 'u8[1024]{0}', space=vmem, size = 0x400, scoped, tag = 'input window, operand 2']
    #allocation8 [shape = 'u8[12288]{0}', space=vmem, size = 0x3000, scoped, tag = 'output window, operand 0']
    %8 = vsyncpa [#allocation3], 0
    %s9 = scalar_lea.sflag [#allocation3], 1
    %10 = vsyncpa %s9, 0
    %11 = vsyncpa [#allocation6], 0
    %s12 = scalar_lea.sflag [#allocation6], 1
    %13 = vsyncpa %s12, 0
    %14 = vsyncpa [#allocation4], 0
    %s15 = scalar_lea.sflag [#allocation4], 1
    %16 = vsyncpa %s15, 0
    loop: start=0, step=1, limit=10
    $region2: #{_lambda_.8} parent=1 // loop_pre_header
      _
    $region3: #{_lambda_.8} parent=1 // loop_header
      %s18 = sphi 0, %s22
      %p19 = scmp.ge.s32.totalorder %s18, 10
      %s25 = sphi 0, %s37
      %s26 = sphi 0, %s33
      %s27 = sphi 0, %s25
      %s28 = sphi 0, %s26
      %s29 = sphi 0, %s27
      %s30 = sphi 0, %s28
      %s40 = sphi 0, %s42
      %s43 = sphi 0, %s40
      %s44 = sphi 0, %s43
      %s60 = sphi 0, %s44
      %s66 = sphi 0, %s68
      %s69 = sphi 0, %s66
      %s70 = sphi 0, %s69
      %s86 = sphi 0, %s70
      %s92 = sphi 0, %s94
      %s95 = sphi 0, %s92
      %s96 = sphi 0, %s95
      %s112 = sphi 0, %s96
      %s120 = sphi 0, %s122
      %s123 = sphi 0, %s120
      %s124 = sphi 0, %s123
      %s140 = sphi 0, %s124
    $region4: #{_lambda_.8} parent=1 // loop_header_branch
      %21 = sbr.rel (%p19) target = $region8
    $region5: #{_lambda_.8} parent=1 // loop_body
      %s23 = ssub.s32 %s18, 1
      %s24 = ssub.s32 %s18, 2
      %s31 = sadd.s32 1, %s26
      %p32 = scmp.ge.s32.totalorder %s31, 4
      %s33 = scalar_select %p32, 0, %s31
      %s34 = sadd.s32 1, %s25
      %s35 = scalar_select %p32, %s34, %s25
      %p36 = scmp.ge.s32.totalorder %s35, 2
      %s37 = scalar_select %p36, 0, %s35
      %s38 = ssub.s32 %s25, %s37
      %p39 = scmp.eq.s32.totalorder %s38, 0
      %s41 = sadd.s32 %s40, 1
      %s42 = scalar_select %p39, %s40, %s41
      %p45 = pneg %p39
      %p46 = scmp.eq.s32.totalorder %s18, 7
      %p47 = por %p45, %p46
      %p48 = scmp.ne.s32.totalorder %s40, %s43
      %p49 = scmp.eq.s32.totalorder %s18, 0
      %p50 = por %p48, %p49
      %p51 = scmp.ne.s32.totalorder %s40, %s43
      %p52 = scmp.eq.s32.totalorder %s23, 7
      %p53 = por %p51, %p52
      %p54 = scmp.ne.s32.totalorder %s43, %s44
      %p55 = scmp.eq.s32.totalorder %s23, 0
      %p56 = por %p54, %p55
      %p57 = scmp.ne.s32.totalorder %s43, %s44
      %p58 = scmp.eq.s32.totalorder %s24, 7
      %p59 = por %p57, %p58
      %p61 = scmp.ne.s32.totalorder %s44, %s60
      %p62 = scmp.eq.s32.totalorder %s24, 0
      %p63 = por %p61, %p62
      %s64 = ssub.s32 %s26, %s33
      %p65 = scmp.eq.s32.totalorder %s64, 0
      %s67 = sadd.s32 %s66, 1
      %s68 = scalar_select %p65, %s66, %s67
      %p71 = pneg %p65
      %p72 = scmp.eq.s32.totalorder %s18, 7
      %p73 = por %p71, %p72
      %p74 = scmp.ne.s32.totalorder %s66, %s69
      %p75 = scmp.eq.s32.totalorder %s18, 0
      %p76 = por %p74, %p75
      %p77 = scmp.ne.s32.totalorder %s66, %s69
      %p78 = scmp.eq.s32.totalorder %s23, 7
      %p79 = por %p77, %p78
      %p80 = scmp.ne.s32.totalorder %s69, %s70
      %p81 = scmp.eq.s32.totalorder %s23, 0
      %p82 = por %p80, %p81
      %p83 = scmp.ne.s32.totalorder %s69, %s70
      %p84 = scmp.eq.s32.totalorder %s24, 7
      %p85 = por %p83, %p84
      %p87 = scmp.ne.s32.totalorder %s70, %s86
      %p88 = scmp.eq.s32.totalorder %s24, 0
      %p89 = por %p87, %p88
      %s90 = ssub.s32 %s26, %s33
      %p91 = scmp.eq.s32.totalorder %s90, 0
      %s93 = sadd.s32 %s92, 1
      %s94 = scalar_select %p91, %s92, %s93
      %p97 = pneg %p91
      %p98 = scmp.eq.s32.totalorder %s18, 7
      %p99 = por %p97, %p98
      %p100 = scmp.ne.s32.totalorder %s92, %s95
      %p101 = scmp.eq.s32.totalorder %s18, 0
      %p102 = por %p100, %p101
      %p103 = scmp.ne.s32.totalorder %s92, %s95
      %p104 = scmp.eq.s32.totalorder %s23, 7
      %p105 = por %p103, %p104
      %p106 = scmp.ne.s32.totalorder %s95, %s96
      %p107 = scmp.eq.s32.totalorder %s23, 0
      %p108 = por %p106, %p107
      %p109 = scmp.ne.s32.totalorder %s95, %s96
      %p110 = scmp.eq.s32.totalorder %s24, 7
      %p111 = por %p109, %p110
      %p113 = scmp.ne.s32.totalorder %s96, %s112
      %p114 = scmp.eq.s32.totalorder %s24, 0
      %p115 = por %p113, %p114
      %s116 = ssub.s32 %s25, %s37
      %s117 = ssub.s32 %s26, %s33
      %s118 = sor.u32 %s116, %s117
      %p119 = scmp.eq.s32.totalorder %s118, 0
      %s121 = sadd.s32 %s120, 1
      %s122 = scalar_select %p119, %s120, %s121
      %p125 = pneg %p119
      %p126 = scmp.eq.s32.totalorder %s18, 7
      %p127 = por %p125, %p126
      %p128 = scmp.ne.s32.totalorder %s120, %s123
      %p129 = scmp.eq.s32.totalorder %s18, 0
      %p130 = por %p128, %p129
      %p131 = scmp.ne.s32.totalorder %s120, %s123
      %p132 = scmp.eq.s32.totalorder %s23, 7
      %p133 = por %p131, %p132
      %p134 = scmp.ne.s32.totalorder %s123, %s124
      %p135 = scmp.eq.s32.totalorder %s23, 0
      %p136 = por %p134, %p135
      %p137 = scmp.ne.s32.totalorder %s123, %s124
      %p138 = scmp.eq.s32.totalorder %s24, 7
      %p139 = por %p137, %p138
      %p141 = scmp.ne.s32.totalorder %s124, %s140
      %p142 = scmp.eq.s32.totalorder %s24, 0
      %p143 = por %p141, %p142
      %p144 = scmp.le.s32.totalorder 1, %s18
      %p145 = scmp.lt.s32.totalorder %s18, 9
      %p146 = pnand %p144, %p145
      %p147 = pneg %p146
      // Predicated region
      $region9: #{_lambda_.8} parent=5 // pred_check
        _
      $region10: #{_lambda_.8} parent=5 // pred_check_branch
        %149 = sbr.rel (%p146) target = $region12
      $region11: #{_lambda_.8} parent=5 // pred_region
        %s150 = ssub.s32 %s18, 1
      $region12: #{_lambda_.8} parent=5 // pred_fallthru
        _
      %p151 = scmp.lt.s32.totalorder %s18, 8
      // Predicated region
      $region13: #{_lambda_.8} parent=5 // pred_check
        %p152 = pneg %p151
      $region14: #{_lambda_.8} parent=5 // pred_check_branch
        %154 = sbr.rel (%p152) target = $region16
      $region15: #{_lambda_.8} parent=5 // pred_region
        // Predicated region
        $region17: #{_lambda_.8} parent=15 // pred_check
          %p155 = pneg %p50
        $region18: #{_lambda_.8} parent=15 // pred_check_branch
          %157 = sbr.rel (%p155) target = $region20
        $region19: #{_lambda_.8} parent=15 // pred_region
          %s158 = sand.u32 %s40, 1
          %s159 = scalar_lea.sflag [#allocation3], %s158
          %s160 = sand.u32 %s40, 1
          %s161 = smul.addr %s160, 56
          %s162 = scalar_lea.vmem [#allocation2], %s161
          %s164 = ssub.s32 896, 896
          %165 = vsyncadd %s159, %s164
          %s166 = smul.addr %s25, 14
          %s167 = smul.addr %s166, 64
          %s168 = scalar_lea.hbm %s0, %s167
          %s169 = sshll.u32 %s162, 4
          %s170 = int_to_ptr.vmem [resolvable:$true] %s169
          %175 = dma.hbm_to_vmem [thread:$0]  %s168, 896, %s170, %s159, 128, 128, 8
        $region20: #{_lambda_.8} parent=15 // pred_fallthru
          _
        // Predicated region
        $region21: #{_lambda_.8} parent=15 // pred_check
          %p176 = pneg %p76
        $region22: #{_lambda_.8} parent=15 // pred_check_branch
          %178 = sbr.rel (%p176) target = $region24
        $region23: #{_lambda_.8} parent=15 // pred_region
          %s179 = sand.u32 %s18, 1
          %s180 = scalar_lea.sflag [#allocation6], %s179
          %s181 = sand.u32 %s66, 1
          %s182 = smul.addr %s181, 2048
          %s183 = scalar_lea.vmem [#allocation5], %s182
          %s185 = ssub.s32 32768, 32768
          %186 = vsyncadd %s180, %s185
          %s187 = smul.addr %s26, 64
          %s188 = scalar_lea.hbm %s1, %s187
          %s189 = sshll.u32 %s183, 4
          %s190 = int_to_ptr.vmem [resolvable:$true] %s189
          %195 = dma.hbm_to_vmem [thread:$0]  %s188, 32768, %s190, %s180, 256, 64, 4
        $region24: #{_lambda_.8} parent=15 // pred_fallthru
          _
        // Predicated region
        $region25: #{_lambda_.8} parent=15 // pred_check
          %p196 = pneg %p102
        $region26: #{_lambda_.8} parent=15 // pred_check_branch
          %198 = sbr.rel (%p196) target = $region28
        $region27: #{_lambda_.8} parent=15 // pred_region
          %s199 = sand.u32 %s18, 1
          %s200 = scalar_lea.sflag [#allocation6], %s199
          %s201 = sand.u32 %s92, 1
          %s202 = scalar_lea.vmem [#allocation7], %s201
          %s204 = ssub.s32 16, 16
          %205 = vsyncadd %s200, %s204
          %s206 = smul.addr %s26, 16
          %s207 = scalar_lea.hbm %s2, %s206
          %s209 = sshll.u32 %s202, 4
          %s210 = int_to_ptr.vmem [resolvable:$true] %s209
          %212 = dma.hbm_to_vmem [thread:$0]  %s207, 16, %s210, %s200
        $region28: #{_lambda_.8} parent=15 // pred_fallthru
          _
      $region16: #{_lambda_.8} parent=5 // pred_fallthru
        _
      %p213 = scmp.le.s32.totalorder 1, %s18
      %p214 = scmp.lt.s32.totalorder %s18, 9
      %p215 = pnand %p213, %p214
      %p216 = pneg %p215
      // Predicated region
      $region29: #{_lambda_.8} parent=5 // pred_check
        _
      $region30: #{_lambda_.8} parent=5 // pred_check_branch
        %218 = sbr.rel (%p215) target = $region32
      $region31: #{_lambda_.8} parent=5 // pred_region
        %s219 = ssub.s32 %s18, 1
        %s220 = sand.u32 %s43, 1
        %s221 = scalar_lea.sflag [#allocation3], %s220
        %s222 = sand.u32 %s43, 1
        %s223 = smul.addr %s222, 56
        %s224 = scalar_lea.vmem [#allocation2], %s223
        // Predicated region
        $region33: #{_lambda_.8} parent=31 // pred_check
          %p225 = pneg %p56
        $region34: #{_lambda_.8} parent=31 // pred_check_branch
          %227 = sbr.rel (%p225) target = $region36
        $region35: #{_lambda_.8} parent=31 // pred_region
          %228 = dma.done %s221, 896
        $region36: #{_lambda_.8} parent=31 // pred_fallthru
          _
        %s229 = sand.u32 %s23, 1
        %s230 = scalar_lea.sflag [#allocation6], %s229
        %s231 = sand.u32 %s69, 1
        %s232 = smul.addr %s231, 2048
        %s233 = scalar_lea.vmem [#allocation5], %s232
        // Predicated region
        $region37: #{_lambda_.8} parent=31 // pred_check
          %p234 = pneg %p82
        $region38: #{_lambda_.8} parent=31 // pred_check_branch
          %236 = sbr.rel (%p234) target = $region40
        $region39: #{_lambda_.8} parent=31 // pred_region
          %237 = dma.done %s230, 32768
        $region40: #{_lambda_.8} parent=31 // pred_fallthru
          _
        %s238 = sand.u32 %s23, 1
        %s239 = scalar_lea.sflag [#allocation6], %s238
        %s240 = sand.u32 %s95, 1
        %s241 = scalar_lea.vmem [#allocation7], %s240
        // Predicated region
        $region41: #{_lambda_.8} parent=31 // pred_check
          %p242 = pneg %p108
        $region42: #{_lambda_.8} parent=31 // pred_check_branch
          %244 = sbr.rel (%p242) target = $region44
        $region43: #{_lambda_.8} parent=31 // pred_region
          %245 = dma.done %s239, 16
        $region44: #{_lambda_.8} parent=31 // pred_fallthru
          _
        %s246 = sand.u32 %s43, 1
        %s247 = scalar_lea.sflag [#allocation3], %s246
        %s248 = sand.u32 %s43, 1
        %s249 = smul.addr %s248, 56
        %s250 = scalar_lea.vmem [#allocation2], %s249
        %p251 = pneg %p56
        %p252 = pneg %p53
        %s253 = sand.u32 %s23, 1
        %s254 = scalar_lea.sflag [#allocation6], %s253
        %s255 = sand.u32 %s69, 1
        %s256 = smul.addr %s255, 2048
        %s257 = scalar_lea.vmem [#allocation5], %s256
        %p258 = pneg %p82
        %p259 = pneg %p79
        %s260 = sand.u32 %s23, 1
        %s261 = scalar_lea.sflag [#allocation6], %s260
        %s262 = sand.u32 %s95, 1
        %s263 = scalar_lea.vmem [#allocation7], %s262
        %p264 = pneg %p108
        %p265 = pneg %p105
        %p266 = pneg %p136
        %p267 = pneg %p133
        %s268 = sand.u32 %s123, 1
        %s269 = scalar_lea.sflag [#allocation4], %s268
        %s270 = sand.u32 %s123, 1
        %s271 = smul.addr %s270, 12
        %s272 = scalar_lea.vmem [#allocation8], %s271
        %v274 = vld [vmem:[%s224] sm:$0xff]
        %v275 = vld [vmem:[%s224 + $0x8] sm:$0xff]
        %v276 = vld [vmem:[%s224 + $0x10] sm:$0xff]
        %v277 = vld [vmem:[%s233] sm:$0xf]
        %v278 = vld [vmem:[%s233 + $0x4] sm:$0xf]
        %v279 = vld [vmem:[%s233 + $0x8] sm:$0xf]
        %v280 = vld [vmem:[%s233 + $0xc] sm:$0xf]
        %v281 = vld [vmem:[%s233 + $0x10] sm:$0xf]
        %v282 = vld [vmem:[%s233 + $0x14] sm:$0xf]
        %v283 = vld [vmem:[%s233 + $0x18] sm:$0xf]
        %v284 = vld [vmem:[%s233 + $0x1c] sm:$0xf]
        %v285 = vld [vmem:[%s233 + $0x20] sm:$0xf]
        %v286 = vld [vmem:[%s233 + $0x24] sm:$0xf]
        %v287 = vld [vmem:[%s233 + $0x28] sm:$0xf]
        %v288 = vld [vmem:[%s233 + $0x2c] sm:$0xf]
        %v289 = vld [vmem:[%s233 + $0x30] sm:$0xf]
        %v290 = vld [vmem:[%s233 + $0x34] sm:$0xf]
        %v291 = vld [vmem:[%s233 + $0x38] sm:$0xf]
        %v292 = vld [vmem:[%s233 + $0x3c] sm:$0xf]
        %v293 = vld [vmem:[%s233 + $0x40] sm:$0xf]
        %v294 = vld [vmem:[%s233 + $0x44] sm:$0xf]
        %v295 = vld [vmem:[%s233 + $0x48] sm:$0xf]
        %v296 = vld [vmem:[%s233 + $0x4c] sm:$0xf]
        %v297 = vld [vmem:[%s233 + $0x50] sm:$0xf]
        %v298 = vld [vmem:[%s233 + $0x54] sm:$0xf]
        %v299 = vld [vmem:[%s233 + $0x58] sm:$0xf]
        %v300 = vld [vmem:[%s233 + $0x5c] sm:$0xf]
        %v301 = vld [vmem:[%s233 + $0x60] sm:$0xf]
        %v302 = vld [vmem:[%s233 + $0x64] sm:$0xf]
        %v303 = vld [vmem:[%s233 + $0x68] sm:$0xf]
        %v304 = vld [vmem:[%s233 + $0x6c] sm:$0xf]
        %v305 = vld [vmem:[%s233 + $0x70] sm:$0xf]
        %v306 = vld [vmem:[%s233 + $0x74] sm:$0xf]
        %v307 = vld [vmem:[%s233 + $0x78] sm:$0xf]
        %v308 = vld [vmem:[%s233 + $0x7c] sm:$0xf]
        %v309 = vld [vmem:[%s224 + $0x18] sm:$0x11]
        %s310 = scalar_lea.vmem %s233, 128 [#allocation5]
        %v311 = vld [vmem:[%s310] sm:$0xf]
        %v312 = vld [vmem:[%s310 + $0x4] sm:$0xf]
        %v313 = vld [vmem:[%s310 + $0x8] sm:$0xf]
        %v314 = vld [vmem:[%s310 + $0xc] sm:$0xf]
        %v315 = vld [vmem:[%s310 + $0x10] sm:$0xf]
        %v316 = vld [vmem:[%s310 + $0x14] sm:$0xf]
        %v317 = vld [vmem:[%s310 + $0x18] sm:$0xf]
        %v318 = vld [vmem:[%s310 + $0x1c] sm:$0xf]
        %v319 = vld [vmem:[%s310 + $0x20] sm:$0xf]
        %v320 = vld [vmem:[%s310 + $0x24] sm:$0xf]
        %v321 = vld [vmem:[%s310 + $0x28] sm:$0xf]
        %v322 = vld [vmem:[%s310 + $0x2c] sm:$0xf]
        %v323 = vld [vmem:[%s310 + $0x30] sm:$0xf]
        %v324 = vld [vmem:[%s310 + $0x34] sm:$0xf]
        %v325 = vld [vmem:[%s310 + $0x38] sm:$0xf]
        %v326 = vld [vmem:[%s310 + $0x3c] sm:$0xf]
        %v327 = vld [vmem:[%s310 + $0x40] sm:$0xf]
        %v328 = vld [vmem:[%s310 + $0x44] sm:$0xf]
        %v329 = vld [vmem:[%s310 + $0x48] sm:$0xf]
        %v330 = vld [vmem:[%s310 + $0x4c] sm:$0xf]
        %v331 = vld [vmem:[%s310 + $0x50] sm:$0xf]
        %v332 = vld [vmem:[%s310 + $0x54] sm:$0xf]
        %v333 = vld [vmem:[%s310 + $0x58] sm:$0xf]
        %v334 = vld [vmem:[%s310 + $0x5c] sm:$0xf]
        %v335 = vld [vmem:[%s310 + $0x60] sm:$0xf]
        %v336 = vld [vmem:[%s310 + $0x64] sm:$0xf]
        %v337 = vld [vmem:[%s310 + $0x68] sm:$0xf]
        %v338 = vld [vmem:[%s310 + $0x6c] sm:$0xf]
        %v339 = vld [vmem:[%s310 + $0x70] sm:$0xf]
        %v340 = vld [vmem:[%s310 + $0x74] sm:$0xf]
        %v341 = vld [vmem:[%s310 + $0x78] sm:$0xf]
        %v342 = vld [vmem:[%s310 + $0x7c] sm:$0xf]
        %v347 = vunpack.c.l.b16 %v274
        %v348 = vunpack.c.h.b16 %v274
        %v349 = vunpack.c.l.b16 %v275
        %v350 = vunpack.c.h.b16 %v275
        %v351 = vunpack.c.l.b16 %v276
        %v352 = vunpack.c.h.b16 %v276
        %v353 = vunpack.c.l.b16 %v309
        %v354 = vunpack.c.h.b16 %v309
        %v355 = vpack.c.b16 %v349, %v347
        %v356 = vpack.c.b16 %v350, %v348
        %v357 = vpack.c.b16 %v353, %v351
        %v358 = vpack.c.b16 %v354, %v352
        %vm359 = vsmask.f32 7424
        %v361 = vshrl.u32 %v355, 16
        %v363 = vshll.u32 %v355, 16
        %v365 = vrot.slane %v363, 1
        %v366 = vor.u32 %v361, %v365
        %v368 = vshll.u32 %v357, 16
        %v370 = vrot.slane %v368, 1
        %v371 = vsel %vm359, %v366, %v370
        %v373 = vshrl.u32 %v356, 16
        %v375 = vshll.u32 %v356, 16
        %v377 = vrot.slane %v375, 1
        %v378 = vor.u32 %v373, %v377
        %v380 = vshll.u32 %v358, 16
        %v382 = vrot.slane %v380, 1
        %v383 = vsel %vm359, %v378, %v382
        %v384 = vshrl.u32 %v357, 16
        %v386 = vor.u32 %v384, %v370
        %v387 = vshrl.u32 %v358, 16
        %v389 = vor.u32 %v387, %v382
        %v426 = vunpack.c.l.b16 %v311
        %v427 = vunpack.c.l.b16 %v312
        %v428 = vunpack.c.l.b16 %v313
        %v429 = vunpack.c.l.b16 %v314
        %v430 = vunpack.c.l.b16 %v315
        %v431 = vunpack.c.l.b16 %v316
        %v432 = vunpack.c.l.b16 %v317
        %v433 = vunpack.c.l.b16 %v318
        %v434 = vunpack.c.l.b16 %v319
        %v435 = vunpack.c.l.b16 %v320
        %v436 = vunpack.c.l.b16 %v321
        %v437 = vunpack.c.l.b16 %v322
        %v438 = vunpack.c.l.b16 %v323
        %v439 = vunpack.c.l.b16 %v324
        %v440 = vunpack.c.l.b16 %v325
        %v441 = vunpack.c.l.b16 %v326
        %v442 = vunpack.c.l.b16 %v327
        %v443 = vunpack.c.l.b16 %v328
        %v444 = vunpack.c.l.b16 %v329
        %v445 = vunpack.c.l.b16 %v330
        %v446 = vunpack.c.l.b16 %v331
        %v447 = vunpack.c.l.b16 %v332
        %v448 = vunpack.c.l.b16 %v333
        %v449 = vunpack.c.l.b16 %v334
        %v450 = vunpack.c.l.b16 %v335
        %v451 = vunpack.c.l.b16 %v336
        %v452 = vunpack.c.l.b16 %v337
        %v453 = vunpack.c.l.b16 %v338
        %v454 = vunpack.c.l.b16 %v339
        %v455 = vunpack.c.l.b16 %v340
        %v456 = vunpack.c.l.b16 %v341
        %v457 = vunpack.c.l.b16 %v342
        %v458 = vpack.c.b16 %v427, %v426
        %v459 = vpack.c.b16 %v429, %v428
        %v460 = vpack.c.b16 %v431, %v430
        %v461 = vpack.c.b16 %v433, %v432
        %v462 = vpack.c.b16 %v435, %v434
        %v463 = vpack.c.b16 %v437, %v436
        %v464 = vpack.c.b16 %v439, %v438
        %v465 = vpack.c.b16 %v441, %v440
        %v466 = vpack.c.b16 %v443, %v442
        %v467 = vpack.c.b16 %v445, %v444
        %v468 = vpack.c.b16 %v447, %v446
        %v469 = vpack.c.b16 %v449, %v448
        %v470 = vpack.c.b16 %v451, %v450
        %v471 = vpack.c.b16 %v453, %v452
        %v472 = vpack.c.b16 %v455, %v454
        %v473 = vpack.c.b16 %v457, %v456
        %490 = vmatprep.subr.bf16.mxu0 0
        %491 = vmatpush1.bf16.msra.mxu0 %v458
        %492 = vmatprep.subr.bf16.mxu0 0
        %493 = vmatpush1.bf16.msra.mxu0 %v459
        %494 = vmatprep.subr.bf16.mxu0 0
        %495 = vmatpush1.bf16.msra.mxu0 %v460
        %496 = vmatprep.subr.bf16.mxu0 0
        %497 = vmatpush1.bf16.msra.mxu0 %v461
        %498 = vmatprep.subr.bf16.mxu0 0
        %499 = vmatpush1.bf16.msra.mxu0 %v462
        %500 = vmatprep.subr.bf16.mxu0 0
        %501 = vmatpush1.bf16.msra.mxu0 %v463
        %502 = vmatprep.subr.bf16.mxu0 0
        %503 = vmatpush1.bf16.msra.mxu0 %v464
        %504 = vmatprep.subr.bf16.mxu0 0
        %505 = vmatpush1.bf16.msra.mxu0 %v465
        %506 = vmatprep.subr.bf16.mxu0 0
        %507 = vmatpush1.bf16.msra.mxu0 %v466
        %508 = vmatprep.subr.bf16.mxu0 0
        %509 = vmatpush1.bf16.msra.mxu0 %v467
        %510 = vmatprep.subr.bf16.mxu0 0
        %511 = vmatpush1.bf16.msra.mxu0 %v468
        %512 = vmatprep.subr.bf16.mxu0 0
        %513 = vmatpush1.bf16.msra.mxu0 %v469
        %514 = vmatprep.subr.bf16.mxu0 0
        %515 = vmatpush1.bf16.msra.mxu0 %v470
        %516 = vmatprep.subr.bf16.mxu0 0
        %517 = vmatpush1.bf16.msra.mxu0 %v471
        %518 = vmatprep.subr.bf16.mxu0 0
        %519 = vmatpush1.bf16.msra.mxu0 %v472
        %520 = vmatprep.subr.bf16.mxu0 0
        %521 = vmatpush1.bf16.msra.mxu0 %v473
        %522 = vmatprep.mubr.bf16.mxu0 %v383
        %523 = vmatmul.mubr.bf16.gmra.mrb[0].mxu0 %v371
        %v524 = vpop.f32.mrb[0].mxu0
        %v525 = vadd.f32 0.0, %v524
        %v526 = vpop.f32.mrb[0].mxu0
        %v527 = vpop.f32.mrb[0].mxu0
        %v528 = vadd.f32 0.0, %v527
        %v529 = vpop.f32.mrb[0].mxu0
        %530 = vmatprep.mubr.bf16.mxu0 %v389
        %531 = vmatmul.mubr.bf16.gmra.mrb[0].mxu0 %v386
        %v532 = vpop.f32.mrb[0].mxu0
        %v533 = vadd.f32 0.0, %v532
        %v534 = vpop.f32.mrb[0].mxu0
        %v535 = vpop.f32.mrb[0].mxu0
        %v536 = vpop.f32.mrb[0].mxu0
        %537 = vdwg.mxu0
        %v538 = vpack.c.b16 %v351, %v351
        %v539 = vpack.c.b16 %v352, %v352
        %v576 = vunpack.c.l.b16 %v277
        %v577 = vunpack.c.l.b16 %v278
        %v578 = vunpack.c.l.b16 %v279
        %v579 = vunpack.c.l.b16 %v280
        %v580 = vunpack.c.l.b16 %v281
        %v581 = vunpack.c.l.b16 %v282
        %v582 = vunpack.c.l.b16 %v283
        %v583 = vunpack.c.l.b16 %v284
        %v584 = vunpack.c.l.b16 %v285
        %v585 = vunpack.c.l.b16 %v286
        %v586 = vunpack.c.l.b16 %v287
        %v587 = vunpack.c.l.b16 %v288
        %v588 = vunpack.c.l.b16 %v289
        %v589 = vunpack.c.l.b16 %v290
        %v590 = vunpack.c.l.b16 %v291
        %v591 = vunpack.c.l.b16 %v292
        %v592 = vunpack.c.l.b16 %v293
        %v593 = vunpack.c.l.b16 %v294
        %v594 = vunpack.c.l.b16 %v295
        %v595 = vunpack.c.l.b16 %v296
        %v596 = vunpack.c.l.b16 %v297
        %v597 = vunpack.c.l.b16 %v298
        %v598 = vunpack.c.l.b16 %v299
        %v599 = vunpack.c.l.b16 %v300
        %v600 = vunpack.c.l.b16 %v301
        %v601 = vunpack.c.l.b16 %v302
        %v602 = vunpack.c.l.b16 %v303
        %v603 = vunpack.c.l.b16 %v304
        %v604 = vunpack.c.l.b16 %v305
        %v605 = vunpack.c.l.b16 %v306
        %v606 = vunpack.c.l.b16 %v307
        %v607 = vunpack.c.l.b16 %v308
        %v608 = vpack.c.b16 %v577, %v576
        %v609 = vpack.c.b16 %v579, %v578
        %v610 = vpack.c.b16 %v581, %v580
        %v611 = vpack.c.b16 %v583, %v582
        %v612 = vpack.c.b16 %v585, %v584
        %v613 = vpack.c.b16 %v587, %v586
        %v614 = vpack.c.b16 %v589, %v588
        %v615 = vpack.c.b16 %v591, %v590
        %v616 = vpack.c.b16 %v593, %v592
        %v617 = vpack.c.b16 %v595, %v594
        %v618 = vpack.c.b16 %v597, %v596
        %v619 = vpack.c.b16 %v599, %v598
        %v620 = vpack.c.b16 %v601, %v600
        %v621 = vpack.c.b16 %v603, %v602
        %v622 = vpack.c.b16 %v605, %v604
        %v623 = vpack.c.b16 %v607, %v606
        %640 = vmatprep.subr.bf16.mxu0 0
        %641 = vmatpush1.bf16.msra.mxu0 %v608
        %642 = vmatprep.subr.bf16.mxu0 0
        %643 = vmatpush1.bf16.msra.mxu0 %v609
        %644 = vmatprep.subr.bf16.mxu0 0
        %645 = vmatpush1.bf16.msra.mxu0 %v610
        %646 = vmatprep.subr.bf16.mxu0 0
        %647 = vmatpush1.bf16.msra.mxu0 %v611
        %648 = vmatprep.subr.bf16.mxu0 0
        %649 = vmatpush1.bf16.msra.mxu0 %v612
        %650 = vmatprep.subr.bf16.mxu0 0
        %651 = vmatpush1.bf16.msra.mxu0 %v613
        %652 = vmatprep.subr.bf16.mxu0 0
        %653 = vmatpush1.bf16.msra.mxu0 %v614
        %654 = vmatprep.subr.bf16.mxu0 0
        %655 = vmatpush1.bf16.msra.mxu0 %v615
        %656 = vmatprep.subr.bf16.mxu0 0
        %657 = vmatpush1.bf16.msra.mxu0 %v616
        %658 = vmatprep.subr.bf16.mxu0 0
        %659 = vmatpush1.bf16.msra.mxu0 %v617
        %660 = vmatprep.subr.bf16.mxu0 0
        %661 = vmatpush1.bf16.msra.mxu0 %v618
        %662 = vmatprep.subr.bf16.mxu0 0
        %663 = vmatpush1.bf16.msra.mxu0 %v619
        %664 = vmatprep.subr.bf16.mxu0 0
        %665 = vmatpush1.bf16.msra.mxu0 %v620
        %666 = vmatprep.subr.bf16.mxu0 0
        %667 = vmatpush1.bf16.msra.mxu0 %v621
        %668 = vmatprep.subr.bf16.mxu0 0
        %669 = vmatpush1.bf16.msra.mxu0 %v622
        %670 = vmatprep.subr.bf16.mxu0 0
        %671 = vmatpush1.bf16.msra.mxu0 %v623
        %672 = vmatprep.mubr.bf16.mxu0 %v356
        %673 = vmatmul.mubr.bf16.gmra.mrb[0].mxu0 %v355
        %v674 = vpop.f32.mrb[0].mxu0
        %v675 = vadd.f32 %v525, %v674
        %v676 = vpop.f32.mrb[0].mxu0
        %v677 = vpop.f32.mrb[0].mxu0
        %v678 = vadd.f32 %v528, %v677
        %v679 = vpop.f32.mrb[0].mxu0
        %680 = vmatprep.mubr.bf16.mxu0 %v539
        %681 = vmatmul.mubr.bf16.gmra.mrb[0].mxu0 %v538
        %v682 = vpop.f32.mrb[0].mxu0
        %v683 = vadd.f32 %v533, %v682
        %v684 = vpop.f32.mrb[0].mxu0
        %v685 = vpop.f32.mrb[0].mxu0
        %v686 = vpop.f32.mrb[0].mxu0
        %687 = vdwg.mxu0
        %v688 = vld [vmem:[%s224] sm:$0xee]
        %s689 = scalar_lea.vmem %s233, 256 [#allocation5]
        %v690 = vld [vmem:[%s689] sm:$0xf]
        %v691 = vld [vmem:[%s689 + $0x4] sm:$0xf]
        %v692 = vld [vmem:[%s689 + $0x8] sm:$0xf]
        %v693 = vld [vmem:[%s689 + $0xc] sm:$0xf]
        %v694 = vld [vmem:[%s689 + $0x10] sm:$0xf]
        %v695 = vld [vmem:[%s689 + $0x14] sm:$0xf]
        %v696 = vld [vmem:[%s689 + $0x18] sm:$0xf]
        %v697 = vld [vmem:[%s689 + $0x1c] sm:$0xf]
        %v698 = vld [vmem:[%s689 + $0x20] sm:$0xf]
        %v699 = vld [vmem:[%s689 + $0x24] sm:$0xf]
        %v700 = vld [vmem:[%s689 + $0x28] sm:$0xf]
        %v701 = vld [vmem:[%s689 + $0x2c] sm:$0xf]
        %v702 = vld [vmem:[%s689 + $0x30] sm:$0xf]
        %v703 = vld [vmem:[%s689 + $0x34] sm:$0xf]
        %v704 = vld [vmem:[%s689 + $0x38] sm:$0xf]
        %v705 = vld [vmem:[%s689 + $0x3c] sm:$0xf]
        %v706 = vld [vmem:[%s689 + $0x40] sm:$0xf]
        %v707 = vld [vmem:[%s689 + $0x44] sm:$0xf]
        %v708 = vld [vmem:[%s689 + $0x48] sm:$0xf]
        %v709 = vld [vmem:[%s689 + $0x4c] sm:$0xf]
        %v710 = vld [vmem:[%s689 + $0x50] sm:$0xf]
        %v711 = vld [vmem:[%s689 + $0x54] sm:$0xf]
        %v712 = vld [vmem:[%s689 + $0x58] sm:$0xf]
        %v713 = vld [vmem:[%s689 + $0x5c] sm:$0xf]
        %v714 = vld [vmem:[%s689 + $0x60] sm:$0xf]
        %v715 = vld [vmem:[%s689 + $0x64] sm:$0xf]
        %v716 = vld [vmem:[%s689 + $0x68] sm:$0xf]
        %v717 = vld [vmem:[%s689 + $0x6c] sm:$0xf]
        %v718 = vld [vmem:[%s689 + $0x70] sm:$0xf]
        %v719 = vld [vmem:[%s689 + $0x74] sm:$0xf]
        %v720 = vld [vmem:[%s689 + $0x78] sm:$0xf]
        %v721 = vld [vmem:[%s689 + $0x7c] sm:$0xf]
        %v723 = vunpack.c.l.b16 %v688
        %v724 = vunpack.c.h.b16 %v688
        %v725 = vpack.c.b16 %v349, %v723
        %v726 = vpack.c.b16 %v350, %v724
        %vm727 = vcmask 1046528
        %v728 = vrot.slane %v725, 1
        %v729 = vrot.slane %v357, 1
        %v730 = vsel %vm727, %v728, %v729
        %v731 = vrot.slane %v726, 1
        %v732 = vrot.slane %v358, 1
        %v733 = vsel %vm727, %v731, %v732
        %v770 = vunpack.c.l.b16 %v690
        %v771 = vunpack.c.l.b16 %v691
        %v772 = vunpack.c.l.b16 %v692
        %v773 = vunpack.c.l.b16 %v693
        %v774 = vunpack.c.l.b16 %v694
        %v775 = vunpack.c.l.b16 %v695
        %v776 = vunpack.c.l.b16 %v696
        %v777 = vunpack.c.l.b16 %v697
        %v778 = vunpack.c.l.b16 %v698
        %v779 = vunpack.c.l.b16 %v699
        %v780 = vunpack.c.l.b16 %v700
        %v781 = vunpack.c.l.b16 %v701
        %v782 = vunpack.c.l.b16 %v702
        %v783 = vunpack.c.l.b16 %v703
        %v784 = vunpack.c.l.b16 %v704
        %v785 = vunpack.c.l.b16 %v705
        %v786 = vunpack.c.l.b16 %v706
        %v787 = vunpack.c.l.b16 %v707
        %v788 = vunpack.c.l.b16 %v708
        %v789 = vunpack.c.l.b16 %v709
        %v790 = vunpack.c.l.b16 %v710
        %v791 = vunpack.c.l.b16 %v711
        %v792 = vunpack.c.l.b16 %v712
        %v793 = vunpack.c.l.b16 %v713
        %v794 = vunpack.c.l.b16 %v714
        %v795 = vunpack.c.l.b16 %v715
        %v796 = vunpack.c.l.b16 %v716
        %v797 = vunpack.c.l.b16 %v717
        %v798 = vunpack.c.l.b16 %v718
        %v799 = vunpack.c.l.b16 %v719
        %v800 = vunpack.c.l.b16 %v720
        %v801 = vunpack.c.l.b16 %v721
        %v802 = vpack.c.b16 %v771, %v770
        %v803 = vpack.c.b16 %v773, %v772
        %v804 = vpack.c.b16 %v775, %v774
        %v805 = vpack.c.b16 %v777, %v776
        %v806 = vpack.c.b16 %v779, %v778
        %v807 = vpack.c.b16 %v781, %v780
        %v808 = vpack.c.b16 %v783, %v782
        %v809 = vpack.c.b16 %v785, %v784
        %v810 = vpack.c.b16 %v787, %v786
        %v811 = vpack.c.b16 %v789, %v788
        %v812 = vpack.c.b16 %v791, %v790
        %v813 = vpack.c.b16 %v793, %v792
        %v814 = vpack.c.b16 %v795, %v794
        %v815 = vpack.c.b16 %v797, %v796
        %v816 = vpack.c.b16 %v799, %v798
        %v817 = vpack.c.b16 %v801, %v800
        %834 = vmatprep.subr.bf16.mxu0 0
        %835 = vmatpush1.bf16.msra.mxu0 %v802
        %836 = vmatprep.subr.bf16.mxu0 0
        %837 = vmatpush1.bf16.msra.mxu0 %v803
        %838 = vmatprep.subr.bf16.mxu0 0
        %839 = vmatpush1.bf16.msra.mxu0 %v804
        %840 = vmatprep.subr.bf16.mxu0 0
        %841 = vmatpush1.bf16.msra.mxu0 %v805
        %842 = vmatprep.subr.bf16.mxu0 0
        %843 = vmatpush1.bf16.msra.mxu0 %v806
        %844 = vmatprep.subr.bf16.mxu0 0
        %845 = vmatpush1.bf16.msra.mxu0 %v807
        %846 = vmatprep.subr.bf16.mxu0 0
        %847 = vmatpush1.bf16.msra.mxu0 %v808
        %848 = vmatprep.subr.bf16.mxu0 0
        %849 = vmatpush1.bf16.msra.mxu0 %v809
        %850 = vmatprep.subr.bf16.mxu0 0
        %851 = vmatpush1.bf16.msra.mxu0 %v810
        %852 = vmatprep.subr.bf16.mxu0 0
        %853 = vmatpush1.bf16.msra.mxu0 %v811
        %854 = vmatprep.subr.bf16.mxu0 0
        %855 = vmatpush1.bf16.msra.mxu0 %v812
        %856 = vmatprep.subr.bf16.mxu0 0
        %857 = vmatpush1.bf16.msra.mxu0 %v813
        %858 = vmatprep.subr.bf16.mxu0 0
        %859 = vmatpush1.bf16.msra.mxu0 %v814
        %860 = vmatprep.subr.bf16.mxu0 0
        %861 = vmatpush1.bf16.msra.mxu0 %v815
        %862 = vmatprep.subr.bf16.mxu0 0
        %863 = vmatpush1.bf16.msra.mxu0 %v816
        %864 = vmatprep.subr.bf16.mxu0 0
        %865 = vmatpush1.bf16.msra.mxu0 %v817
        %866 = vmatprep.mubr.bf16.mxu0 %v733
        %867 = vmatmul.mubr.bf16.gmra.mrb[0].mxu0 %v730
        %v868 = vpop.f32.mrb[0].mxu0
        %v869 = vadd.f32 0.0, %v868
        %v870 = vpop.f32.mrb[0].mxu0
        %v871 = vpop.f32.mrb[0].mxu0
        %v872 = vadd.f32 0.0, %v871
        %v873 = vpop.f32.mrb[0].mxu0
        %874 = vmatprep.mubr.bf16.mxu0 %v732
        %875 = vmatmul.mubr.bf16.gmra.mrb[0].mxu0 %v729
        %v876 = vpop.f32.mrb[0].mxu0
        %v877 = vadd.f32 0.0, %v876
        %v878 = vpop.f32.mrb[0].mxu0
        %v879 = vpop.f32.mrb[0].mxu0
        %v880 = vpop.f32.mrb[0].mxu0
        %881 = vdwg.mxu0
        %v882 = vadd.f32 %v675, %v869
        %v883 = vadd.f32 %v678, %v872
        %v884 = vadd.f32 %v683, %v877
        %v885 = vld [vmem:[%s224 + $0x18] sm:$0x33]
        %s886 = scalar_lea.vmem %s233, 384 [#allocation5]
        %v887 = vld [vmem:[%s886] sm:$0xf]
        %v888 = vld [vmem:[%s886 + $0x4] sm:$0xf]
        %v889 = vld [vmem:[%s886 + $0x8] sm:$0xf]
        %v890 = vld [vmem:[%s886 + $0xc] sm:$0xf]
        %v891 = vld [vmem:[%s886 + $0x10] sm:$0xf]
        %v892 = vld [vmem:[%s886 + $0x14] sm:$0xf]
        %v893 = vld [vmem:[%s886 + $0x18] sm:$0xf]
        %v894 = vld [vmem:[%s886 + $0x1c] sm:$0xf]
        %v895 = vld [vmem:[%s886 + $0x20] sm:$0xf]
        %v896 = vld [vmem:[%s886 + $0x24] sm:$0xf]
        %v897 = vld [vmem:[%s886 + $0x28] sm:$0xf]
        %v898 = vld [vmem:[%s886 + $0x2c] sm:$0xf]
        %v899 = vld [vmem:[%s886 + $0x30] sm:$0xf]
        %v900 = vld [vmem:[%s886 + $0x34] sm:$0xf]
        %v901 = vld [vmem:[%s886 + $0x38] sm:$0xf]
        %v902 = vld [vmem:[%s886 + $0x3c] sm:$0xf]
        %v903 = vld [vmem:[%s886 + $0x40] sm:$0xf]
        %v904 = vld [vmem:[%s886 + $0x44] sm:$0xf]
        %v905 = vld [vmem:[%s886 + $0x48] sm:$0xf]
        %v906 = vld [vmem:[%s886 + $0x4c] sm:$0xf]
        %v907 = vld [vmem:[%s886 + $0x50] sm:$0xf]
        %v908 = vld [vmem:[%s886 + $0x54] sm:$0xf]
        %v909 = vld [vmem:[%s886 + $0x58] sm:$0xf]
        %v910 = vld [vmem:[%s886 + $0x5c] sm:$0xf]
        %v911 = vld [vmem:[%s886 + $0x60] sm:$0xf]
        %v912 = vld [vmem:[%s886 + $0x64] sm:$0xf]
        %v913 = vld [vmem:[%s886 + $0x68] sm:$0xf]
        %v914 = vld [vmem:[%s886 + $0x6c] sm:$0xf]
        %v915 = vld [vmem:[%s886 + $0x70] sm:$0xf]
        %v916 = vld [vmem:[%s886 + $0x74] sm:$0xf]
        %v917 = vld [vmem:[%s886 + $0x78] sm:$0xf]
        %v918 = vld [vmem:[%s886 + $0x7c] sm:$0xf]
        %v920 = vunpack.c.l.b16 %v885
        %v921 = vunpack.c.h.b16 %v885
        %v922 = vpack.c.b16 %v920, %v351
        %v923 = vpack.c.b16 %v921, %v352
        %vm924 = vsmask.f32 6400
        %v926 = vshrl.u32 %v725, 16
        %v928 = vrot.slane %v926, 1
        %v929 = vshll.u32 %v725, 16
        %v931 = vrot.slane %v929, 2
        %v932 = vor.u32 %v928, %v931
        %v934 = vshrl.u32 %v922, 16
        %v936 = vrot.slane %v934, 1
        %v937 = vshll.u32 %v922, 16
        %v939 = vrot.slane %v937, 2
        %v940 = vor.u32 %v936, %v939
        %v941 = vsel %vm924, %v932, %v940
        %v943 = vshrl.u32 %v726, 16
        %v945 = vrot.slane %v943, 1
        %v946 = vshll.u32 %v726, 16
        %v948 = vrot.slane %v946, 2
        %v949 = vor.u32 %v945, %v948
        %v951 = vshrl.u32 %v923, 16
        %v953 = vrot.slane %v951, 1
        %v954 = vshll.u32 %v923, 16
        %v956 = vrot.slane %v954, 2
        %v957 = vor.u32 %v953, %v956
        %v958 = vsel %vm924, %v949, %v957
        %v995 = vunpack.c.l.b16 %v887
        %v996 = vunpack.c.l.b16 %v888
        %v997 = vunpack.c.l.b16 %v889
        %v998 = vunpack.c.l.b16 %v890
        %v999 = vunpack.c.l.b16 %v891
        %v1000 = vunpack.c.l.b16 %v892
        %v1001 = vunpack.c.l.b16 %v893
        %v1002 = vunpack.c.l.b16 %v894
        %v1003 = vunpack.c.l.b16 %v895
        %v1004 = vunpack.c.l.b16 %v896
        %v1005 = vunpack.c.l.b16 %v897
        %v1006 = vunpack.c.l.b16 %v898
        %v1007 = vunpack.c.l.b16 %v899
        %v1008 = vunpack.c.l.b16 %v900
        %v1009 = vunpack.c.l.b16 %v901
        %v1010 = vunpack.c.l.b16 %v902
        %v1011 = vunpack.c.l.b16 %v903
        %v1012 = vunpack.c.l.b16 %v904
        %v1013 = vunpack.c.l.b16 %v905
        %v1014 = vunpack.c.l.b16 %v906
        %v1015 = vunpack.c.l.b16 %v907
        %v1016 = vunpack.c.l.b16 %v908
        %v1017 = vunpack.c.l.b16 %v909
        %v1018 = vunpack.c.l.b16 %v910
        %v1019 = vunpack.c.l.b16 %v911
        %v1020 = vunpack.c.l.b16 %v912
        %v1021 = vunpack.c.l.b16 %v913
        %v1022 = vunpack.c.l.b16 %v914
        %v1023 = vunpack.c.l.b16 %v915
        %v1024 = vunpack.c.l.b16 %v916
        %v1025 = vunpack.c.l.b16 %v917
        %v1026 = vunpack.c.l.b16 %v918
        %v1027 = vpack.c.b16 %v996, %v995
        %v1028 = vpack.c.b16 %v998, %v997
        %v1029 = vpack.c.b16 %v1000, %v999
        %v1030 = vpack.c.b16 %v1002, %v1001
        %v1031 = vpack.c.b16 %v1004, %v1003
        %v1032 = vpack.c.b16 %v1006, %v1005
        %v1033 = vpack.c.b16 %v1008, %v1007
        %v1034 = vpack.c.b16 %v1010, %v1009
        %v1035 = vpack.c.b16 %v1012, %v1011
        %v1036 = vpack.c.b16 %v1014, %v1013
        %v1037 = vpack.c.b16 %v1016, %v1015
        %v1038 = vpack.c.b16 %v1018, %v1017
        %v1039 = vpack.c.b16 %v1020, %v1019
        %v1040 = vpack.c.b16 %v1022, %v1021
        %v1041 = vpack.c.b16 %v1024, %v1023
        %v1042 = vpack.c.b16 %v1026, %v1025
        %1059 = vmatprep.subr.bf16.mxu0 0
        %1060 = vmatpush1.bf16.msra.mxu0 %v1027
        %1061 = vmatprep.subr.bf16.mxu0 0
        %1062 = vmatpush1.bf16.msra.mxu0 %v1028
        %1063 = vmatprep.subr.bf16.mxu0 0
        %1064 = vmatpush1.bf16.msra.mxu0 %v1029
        %1065 = vmatprep.subr.bf16.mxu0 0
        %1066 = vmatpush1.bf16.msra.mxu0 %v1030
        %1067 = vmatprep.subr.bf16.mxu0 0
        %1068 = vmatpush1.bf16.msra.mxu0 %v1031
        %1069 = vmatprep.subr.bf16.mxu0 0
        %1070 = vmatpush1.bf16.msra.mxu0 %v1032
        %1071 = vmatprep.subr.bf16.mxu0 0
        %1072 = vmatpush1.bf16.msra.mxu0 %v1033
        %1073 = vmatprep.subr.bf16.mxu0 0
        %1074 = vmatpush1.bf16.msra.mxu0 %v1034
        %1075 = vmatprep.subr.bf16.mxu0 0
        %1076 = vmatpush1.bf16.msra.mxu0 %v1035
        %1077 = vmatprep.subr.bf16.mxu0 0
        %1078 = vmatpush1.bf16.msra.mxu0 %v1036
        %1079 = vmatprep.subr.bf16.mxu0 0
        %1080 = vmatpush1.bf16.msra.mxu0 %v1037
        %1081 = vmatprep.subr.bf16.mxu0 0
        %1082 = vmatpush1.bf16.msra.mxu0 %v1038
        %1083 = vmatprep.subr.bf16.mxu0 0
        %1084 = vmatpush1.bf16.msra.mxu0 %v1039
        %1085 = vmatprep.subr.bf16.mxu0 0
        %1086 = vmatpush1.bf16.msra.mxu0 %v1040
        %1087 = vmatprep.subr.bf16.mxu0 0
        %1088 = vmatpush1.bf16.msra.mxu0 %v1041
        %1089 = vmatprep.subr.bf16.mxu0 0
        %1090 = vmatpush1.bf16.msra.mxu0 %v1042
        %1091 = vmatprep.mubr.bf16.mxu0 %v958
        %1092 = vmatmul.mubr.bf16.gmra.mrb[0].mxu0 %v941
        %v1093 = vpop.f32.mrb[0].mxu0
        %v1094 = vadd.f32 0.0, %v1093
        %v1095 = vpop.f32.mrb[0].mxu0
        %v1096 = vpop.f32.mrb[0].mxu0
        %v1097 = vadd.f32 0.0, %v1096
        %v1098 = vpop.f32.mrb[0].mxu0
        %1099 = vmatprep.mubr.bf16.mxu0 %v957
        %1100 = vmatmul.mubr.bf16.gmra.mrb[0].mxu0 %v940
        %v1101 = vpop.f32.mrb[0].mxu0
        %v1102 = vadd.f32 0.0, %v1101
        %v1103 = vpop.f32.mrb[0].mxu0
        %v1104 = vpop.f32.mrb[0].mxu0
        %v1105 = vpop.f32.mrb[0].mxu0
        %1106 = vdwg.mxu0
        %v1107 = vadd.f32 %v882, %v1094
        %v1108 = vadd.f32 %v883, %v1097
        %v1109 = vadd.f32 %v884, %v1102
        %v1110 = vld [vmem:[%s224 + $0x18] sm:$0xff]
        %s1111 = scalar_lea.vmem %s233, 512 [#allocation5]
        %v1112 = vld [vmem:[%s1111] sm:$0xf]
        %v1113 = vld [vmem:[%s1111 + $0x4] sm:$0xf]
        %v1114 = vld [vmem:[%s1111 + $0x8] sm:$0xf]
        %v1115 = vld [vmem:[%s1111 + $0xc] sm:$0xf]
        %v1116 = vld [vmem:[%s1111 + $0x10] sm:$0xf]
        %v1117 = vld [vmem:[%s1111 + $0x14] sm:$0xf]
        %v1118 = vld [vmem:[%s1111 + $0x18] sm:$0xf]
        %v1119 = vld [vmem:[%s1111 + $0x1c] sm:$0xf]
        %v1120 = vld [vmem:[%s1111 + $0x20] sm:$0xf]
        %v1121 = vld [vmem:[%s1111 + $0x24] sm:$0xf]
        %v1122 = vld [vmem:[%s1111 + $0x28] sm:$0xf]
        %v1123 = vld [vmem:[%s1111 + $0x2c] sm:$0xf]
        %v1124 = vld [vmem:[%s1111 + $0x30] sm:$0xf]
        %v1125 = vld [vmem:[%s1111 + $0x34] sm:$0xf]
        %v1126 = vld [vmem:[%s1111 + $0x38] sm:$0xf]
        %v1127 = vld [vmem:[%s1111 + $0x3c] sm:$0xf]
        %v1128 = vld [vmem:[%s1111 + $0x40] sm:$0xf]
        %v1129 = vld [vmem:[%s1111 + $0x44] sm:$0xf]
        %v1130 = vld [vmem:[%s1111 + $0x48] sm:$0xf]
        %v1131 = vld [vmem:[%s1111 + $0x4c] sm:$0xf]
        %v1132 = vld [vmem:[%s1111 + $0x50] sm:$0xf]
        %v1133 = vld [vmem:[%s1111 + $0x54] sm:$0xf]
        %v1134 = vld [vmem:[%s1111 + $0x58] sm:$0xf]
        %v1135 = vld [vmem:[%s1111 + $0x5c] sm:$0xf]
        %v1136 = vld [vmem:[%s1111 + $0x60] sm:$0xf]
        %v1137 = vld [vmem:[%s1111 + $0x64] sm:$0xf]
        %v1138 = vld [vmem:[%s1111 + $0x68] sm:$0xf]
        %v1139 = vld [vmem:[%s1111 + $0x6c] sm:$0xf]
        %v1140 = vld [vmem:[%s1111 + $0x70] sm:$0xf]
        %v1141 = vld [vmem:[%s1111 + $0x74] sm:$0xf]
        %v1142 = vld [vmem:[%s1111 + $0x78] sm:$0xf]
        %v1143 = vld [vmem:[%s1111 + $0x7c] sm:$0xf]
        %v1145 = vunpack.c.l.b16 %v1110
        %v1146 = vunpack.c.h.b16 %v1110
        %v1147 = vpack.c.b16 %v351, %v349
        %v1148 = vpack.c.b16 %v352, %v350
        %v1149 = vpack.c.b16 %v1145, %v1145
        %v1150 = vpack.c.b16 %v1146, %v1146
        %v1187 = vunpack.c.l.b16 %v1112
        %v1188 = vunpack.c.l.b16 %v1113
        %v1189 = vunpack.c.l.b16 %v1114
        %v1190 = vunpack.c.l.b16 %v1115
        %v1191 = vunpack.c.l.b16 %v1116
        %v1192 = vunpack.c.l.b16 %v1117
        %v1193 = vunpack.c.l.b16 %v1118
        %v1194 = vunpack.c.l.b16 %v1119
        %v1195 = vunpack.c.l.b16 %v1120
        %v1196 = vunpack.c.l.b16 %v1121
        %v1197 = vunpack.c.l.b16 %v1122
        %v1198 = vunpack.c.l.b16 %v1123
        %v1199 = vunpack.c.l.b16 %v1124
        %v1200 = vunpack.c.l.b16 %v1125
        %v1201 = vunpack.c.l.b16 %v1126
        %v1202 = vunpack.c.l.b16 %v1127
        %v1203 = vunpack.c.l.b16 %v1128
        %v1204 = vunpack.c.l.b16 %v1129
        %v1205 = vunpack.c.l.b16 %v1130
        %v1206 = vunpack.c.l.b16 %v1131
        %v1207 = vunpack.c.l.b16 %v1132
        %v1208 = vunpack.c.l.b16 %v1133
        %v1209 = vunpack.c.l.b16 %v1134
        %v1210 = vunpack.c.l.b16 %v1135
        %v1211 = vunpack.c.l.b16 %v1136
        %v1212 = vunpack.c.l.b16 %v1137
        %v1213 = vunpack.c.l.b16 %v1138
        %v1214 = vunpack.c.l.b16 %v1139
        %v1215 = vunpack.c.l.b16 %v1140
        %v1216 = vunpack.c.l.b16 %v1141
        %v1217 = vunpack.c.l.b16 %v1142
        %v1218 = vunpack.c.l.b16 %v1143
        %v1219 = vpack.c.b16 %v1188, %v1187
        %v1220 = vpack.c.b16 %v1190, %v1189
        %v1221 = vpack.c.b16 %v1192, %v1191
        %v1222 = vpack.c.b16 %v1194, %v1193
        %v1223 = vpack.c.b16 %v1196, %v1195
        %v1224 = vpack.c.b16 %v1198, %v1197
        %v1225 = vpack.c.b16 %v1200, %v1199
        %v1226 = vpack.c.b16 %v1202, %v1201
        %v1227 = vpack.c.b16 %v1204, %v1203
        %v1228 = vpack.c.b16 %v1206, %v1205
        %v1229 = vpack.c.b16 %v1208, %v1207
        %v1230 = vpack.c.b16 %v1210, %v1209
        %v1231 = vpack.c.b16 %v1212, %v1211
        %v1232 = vpack.c.b16 %v1214, %v1213
        %v1233 = vpack.c.b16 %v1216, %v1215
        %v1234 = vpack.c.b16 %v1218, %v1217
        %1251 = vmatprep.subr.bf16.mxu0 0
        %1252 = vmatpush1.bf16.msra.mxu0 %v1219
        %1253 = vmatprep.subr.bf16.mxu0 0
        %1254 = vmatpush1.bf16.msra.mxu0 %v1220
        %1255 = vmatprep.subr.bf16.mxu0 0
        %1256 = vmatpush1.bf16.msra.mxu0 %v1221
        %1257 = vmatprep.subr.bf16.mxu0 0
        %1258 = vmatpush1.bf16.msra.mxu0 %v1222
        %1259 = vmatprep.subr.bf16.mxu0 0
        %1260 = vmatpush1.bf16.msra.mxu0 %v1223
        %1261 = vmatprep.subr.bf16.mxu0 0
        %1262 = vmatpush1.bf16.msra.mxu0 %v1224
        %1263 = vmatprep.subr.bf16.mxu0 0
        %1264 = vmatpush1.bf16.msra.mxu0 %v1225
        %1265 = vmatprep.subr.bf16.mxu0 0
        %1266 = vmatpush1.bf16.msra.mxu0 %v1226
        %1267 = vmatprep.subr.bf16.mxu0 0
        %1268 = vmatpush1.bf16.msra.mxu0 %v1227
        %1269 = vmatprep.subr.bf16.mxu0 0
        %1270 = vmatpush1.bf16.msra.mxu0 %v1228
        %1271 = vmatprep.subr.bf16.mxu0 0
        %1272 = vmatpush1.bf16.msra.mxu0 %v1229
        %1273 = vmatprep.subr.bf16.mxu0 0
        %1274 = vmatpush1.bf16.msra.mxu0 %v1230
        %1275 = vmatprep.subr.bf16.mxu0 0
        %1276 = vmatpush1.bf16.msra.mxu0 %v1231
        %1277 = vmatprep.subr.bf16.mxu0 0
        %1278 = vmatpush1.bf16.msra.mxu0 %v1232
        %1279 = vmatprep.subr.bf16.mxu0 0
        %1280 = vmatpush1.bf16.msra.mxu0 %v1233
        %1281 = vmatprep.subr.bf16.mxu0 0
        %1282 = vmatpush1.bf16.msra.mxu0 %v1234
        %1283 = vmatprep.mubr.bf16.mxu0 %v1148
        %1284 = vmatmul.mubr.bf16.gmra.mrb[0].mxu0 %v1147
        %v1285 = vpop.f32.mrb[0].mxu0
        %v1286 = vadd.f32 0.0, %v1285
        %v1287 = vpop.f32.mrb[0].mxu0
        %v1288 = vpop.f32.mrb[0].mxu0
        %v1289 = vadd.f32 0.0, %v1288
        %v1290 = vpop.f32.mrb[0].mxu0
        %1291 = vmatprep.mubr.bf16.mxu0 %v1150
        %1292 = vmatmul.mubr.bf16.gmra.mrb[0].mxu0 %v1149
        %v1293 = vpop.f32.mrb[0].mxu0
        %v1294 = vadd.f32 0.0, %v1293
        %v1295 = vpop.f32.mrb[0].mxu0
        %v1296 = vpop.f32.mrb[0].mxu0
        %v1297 = vpop.f32.mrb[0].mxu0
        %1298 = vdwg.mxu0
        %v1299 = vadd.f32 %v1107, %v1286
        %v1300 = vadd.f32 %v1108, %v1289
        %v1301 = vadd.f32 %v1109, %v1294
        %v1302 = vld [vmem:[%s224 + $0x8] sm:$0xff]
        %v1303 = vld [vmem:[%s224 + $0x10] sm:$0xff]
        %v1304 = vld [vmem:[%s224 + $0x18] sm:$0xff]
        %v1305 = vld [vmem:[%s224 + $0x20] sm:$0x11]
        %s1306 = scalar_lea.vmem %s233, 640 [#allocation5]
        %v1307 = vld [vmem:[%s1306] sm:$0xf]
        %v1308 = vld [vmem:[%s1306 + $0x4] sm:$0xf]
        %v1309 = vld [vmem:[%s1306 + $0x8] sm:$0xf]
        %v1310 = vld [vmem:[%s1306 + $0xc] sm:$0xf]
        %v1311 = vld [vmem:[%s1306 + $0x10] sm:$0xf]
        %v1312 = vld [vmem:[%s1306 + $0x14] sm:$0xf]
        %v1313 = vld [vmem:[%s1306 + $0x18] sm:$0xf]
        %v1314 = vld [vmem:[%s1306 + $0x1c] sm:$0xf]
        %v1315 = vld [vmem:[%s1306 + $0x20] sm:$0xf]
        %v1316 = vld [vmem:[%s1306 + $0x24] sm:$0xf]
        %v1317 = vld [vmem:[%s1306 + $0x28] sm:$0xf]
        %v1318 = vld [vmem:[%s1306 + $0x2c] sm:$0xf]
        %v1319 = vld [vmem:[%s1306 + $0x30] sm:$0xf]
        %v1320 = vld [vmem:[%s1306 + $0x34] sm:$0xf]
        %v1321 = vld [vmem:[%s1306 + $0x38] sm:$0xf]
        %v1322 = vld [vmem:[%s1306 + $0x3c] sm:$0xf]
        %v1323 = vld [vmem:[%s1306 + $0x40] sm:$0xf]
        %v1324 = vld [vmem:[%s1306 + $0x44] sm:$0xf]
        %v1325 = vld [vmem:[%s1306 + $0x48] sm:$0xf]
        %v1326 = vld [vmem:[%s1306 + $0x4c] sm:$0xf]
        %v1327 = vld [vmem:[%s1306 + $0x50] sm:$0xf]
        %v1328 = vld [vmem:[%s1306 + $0x54] sm:$0xf]
        %v1329 = vld [vmem:[%s1306 + $0x58] sm:$0xf]
        %v1330 = vld [vmem:[%s1306 + $0x5c] sm:$0xf]
        %v1331 = vld [vmem:[%s1306 + $0x60] sm:$0xf]
        %v1332 = vld [vmem:[%s1306 + $0x64] sm:$0xf]
        %v1333 = vld [vmem:[%s1306 + $0x68] sm:$0xf]
        %v1334 = vld [vmem:[%s1306 + $0x6c] sm:$0xf]
        %v1335 = vld [vmem:[%s1306 + $0x70] sm:$0xf]
        %v1336 = vld [vmem:[%s1306 + $0x74] sm:$0xf]
        %v1337 = vld [vmem:[%s1306 + $0x78] sm:$0xf]
        %v1338 = vld [vmem:[%s1306 + $0x7c] sm:$0xf]
        %v1343 = vunpack.c.l.b16 %v1302
        %v1344 = vunpack.c.h.b16 %v1302
        %v1345 = vunpack.c.l.b16 %v1303
        %v1346 = vunpack.c.h.b16 %v1303
        %v1347 = vunpack.c.l.b16 %v1304
        %v1348 = vunpack.c.h.b16 %v1304
        %v1349 = vunpack.c.l.b16 %v1305
        %v1350 = vunpack.c.h.b16 %v1305
        %v1351 = vpack.c.b16 %v1345, %v1343
        %v1352 = vpack.c.b16 %v1346, %v1344
        %v1353 = vpack.c.b16 %v1349, %v1347
        %v1354 = vpack.c.b16 %v1350, %v1348
        %v1356 = vshrl.u32 %v1351, 16
        %v1358 = vshll.u32 %v1351, 16
        %v1360 = vrot.slane %v1358, 1
        %v1361 = vor.u32 %v1356, %v1360
        %v1363 = vshll.u32 %v1353, 16
        %v1365 = vrot.slane %v1363, 1
        %v1366 = vsel %vm359, %v1361, %v1365
        %v1368 = vshrl.u32 %v1352, 16
        %v1370 = vshll.u32 %v1352, 16
        %v1372 = vrot.slane %v1370, 1
        %v1373 = vor.u32 %v1368, %v1372
        %v1375 = vshll.u32 %v1354, 16
        %v1377 = vrot.slane %v1375, 1
        %v1378 = vsel %vm359, %v1373, %v1377
        %v1379 = vshrl.u32 %v1353, 16
        %v1381 = vor.u32 %v1379, %v1365
        %v1382 = vshrl.u32 %v1354, 16
        %v1384 = vor.u32 %v1382, %v1377
        %v1421 = vunpack.c.l.b16 %v1307
        %v1422 = vunpack.c.l.b16 %v1308
        %v1423 = vunpack.c.l.b16 %v1309
        %v1424 = vunpack.c.l.b16 %v1310
        %v1425 = vunpack.c.l.b16 %v1311
        %v1426 = vunpack.c.l.b16 %v1312
        %v1427 = vunpack.c.l.b16 %v1313
        %v1428 = vunpack.c.l.b16 %v1314
        %v1429 = vunpack.c.l.b16 %v1315
        %v1430 = vunpack.c.l.b16 %v1316
        %v1431 = vunpack.c.l.b16 %v1317
        %v1432 = vunpack.c.l.b16 %v1318
        %v1433 = vunpack.c.l.b16 %v1319
        %v1434 = vunpack.c.l.b16 %v1320
        %v1435 = vunpack.c.l.b16 %v1321
        %v1436 = vunpack.c.l.b16 %v1322
        %v1437 = vunpack.c.l.b16 %v1323
        %v1438 = vunpack.c.l.b16 %v1324
        %v1439 = vunpack.c.l.b16 %v1325
        %v1440 = vunpack.c.l.b16 %v1326
        %v1441 = vunpack.c.l.b16 %v1327
        %v1442 = vunpack.c.l.b16 %v1328
        %v1443 = vunpack.c.l.b16 %v1329
        %v1444 = vunpack.c.l.b16 %v1330
        %v1445 = vunpack.c.l.b16 %v1331
        %v1446 = vunpack.c.l.b16 %v1332
        %v1447 = vunpack.c.l.b16 %v1333
        %v1448 = vunpack.c.l.b16 %v1334
        %v1449 = vunpack.c.l.b16 %v1335
        %v1450 = vunpack.c.l.b16 %v1336
        %v1451 = vunpack.c.l.b16 %v1337
        %v1452 = vunpack.c.l.b16 %v1338
        %v1453 = vpack.c.b16 %v1422, %v1421
        %v1454 = vpack.c.b16 %v1424, %v1423
        %v1455 = vpack.c.b16 %v1426, %v1425
        %v1456 = vpack.c.b16 %v1428, %v1427
        %v1457 = vpack.c.b16 %v1430, %v1429
        %v1458 = vpack.c.b16 %v1432, %v1431
        %v1459 = vpack.c.b16 %v1434, %v1433
        %v1460 = vpack.c.b16 %v1436, %v1435
        %v1461 = vpack.c.b16 %v1438, %v1437
        %v1462 = vpack.c.b16 %v1440, %v1439
        %v1463 = vpack.c.b16 %v1442, %v1441
        %v1464 = vpack.c.b16 %v1444, %v1443
        %v1465 = vpack.c.b16 %v1446, %v1445
        %v1466 = vpack.c.b16 %v1448, %v1447
        %v1467 = vpack.c.b16 %v1450, %v1449
        %v1468 = vpack.c.b16 %v1452, %v1451
        %1485 = vmatprep.subr.bf16.mxu0 0
        %1486 = vmatpush1.bf16.msra.mxu0 %v1453
        %1487 = vmatprep.subr.bf16.mxu0 0
        %1488 = vmatpush1.bf16.msra.mxu0 %v1454
        %1489 = vmatprep.subr.bf16.mxu0 0
        %1490 = vmatpush1.bf16.msra.mxu0 %v1455
        %1491 = vmatprep.subr.bf16.mxu0 0
        %1492 = vmatpush1.bf16.msra.mxu0 %v1456
        %1493 = vmatprep.subr.bf16.mxu0 0
        %1494 = vmatpush1.bf16.msra.mxu0 %v1457
        %1495 = vmatprep.subr.bf16.mxu0 0
        %1496 = vmatpush1.bf16.msra.mxu0 %v1458
        %1497 = vmatprep.subr.bf16.mxu0 0
        %1498 = vmatpush1.bf16.msra.mxu0 %v1459
        %1499 = vmatprep.subr.bf16.mxu0 0
        %1500 = vmatpush1.bf16.msra.mxu0 %v1460
        %1501 = vmatprep.subr.bf16.mxu0 0
        %1502 = vmatpush1.bf16.msra.mxu0 %v1461
        %1503 = vmatprep.subr.bf16.mxu0 0
        %1504 = vmatpush1.bf16.msra.mxu0 %v1462
        %1505 = vmatprep.subr.bf16.mxu0 0
        %1506 = vmatpush1.bf16.msra.mxu0 %v1463
        %1507 = vmatprep.subr.bf16.mxu0 0
        %1508 = vmatpush1.bf16.msra.mxu0 %v1464
        %1509 = vmatprep.subr.bf16.mxu0 0
        %1510 = vmatpush1.bf16.msra.mxu0 %v1465
        %1511 = vmatprep.subr.bf16.mxu0 0
        %1512 = vmatpush1.bf16.msra.mxu0 %v1466
        %1513 = vmatprep.subr.bf16.mxu0 0
        %1514 = vmatpush1.bf16.msra.mxu0 %v1467
        %1515 = vmatprep.subr.bf16.mxu0 0
        %1516 = vmatpush1.bf16.msra.mxu0 %v1468
        %1517 = vmatprep.mubr.bf16.mxu0 %v1378
        %1518 = vmatmul.mubr.bf16.gmra.mrb[0].mxu0 %v1366
        %v1519 = vpop.f32.mrb[0].mxu0
        %v1520 = vadd.f32 0.0, %v1519
        %v1521 = vpop.f32.mrb[0].mxu0
        %v1522 = vpop.f32.mrb[0].mxu0
        %v1523 = vadd.f32 0.0, %v1522
        %v1524 = vpop.f32.mrb[0].mxu0
        %1525 = vmatprep.mubr.bf16.mxu0 %v1384
        %1526 = vmatmul.mubr.bf16.gmra.mrb[0].mxu0 %v1381
        %v1527 = vpop.f32.mrb[0].mxu0
        %v1528 = vadd.f32 0.0, %v1527
        %v1529 = vpop.f32.mrb[0].mxu0
        %v1530 = vpop.f32.mrb[0].mxu0
        %v1531 = vpop.f32.mrb[0].mxu0
        %1532 = vdwg.mxu0
        %v1533 = vadd.f32 %v1299, %v1520
        %v1534 = vadd.f32 %v1300, %v1523
        %v1535 = vadd.f32 %v1301, %v1528
        %v1536 = vld [vmem:[%s224 + $0x8] sm:$0xee]
        %s1537 = scalar_lea.vmem %s233, 768 [#allocation5]
        %v1538 = vld [vmem:[%s1537] sm:$0xf]
        %v1539 = vld [vmem:[%s1537 + $0x4] sm:$0xf]
        %v1540 = vld [vmem:[%s1537 + $0x8] sm:$0xf]
        %v1541 = vld [vmem:[%s1537 + $0xc] sm:$0xf]
        %v1542 = vld [vmem:[%s1537 + $0x10] sm:$0xf]
        %v1543 = vld [vmem:[%s1537 + $0x14] sm:$0xf]
        %v1544 = vld [vmem:[%s1537 + $0x18] sm:$0xf]
        %v1545 = vld [vmem:[%s1537 + $0x1c] sm:$0xf]
        %v1546 = vld [vmem:[%s1537 + $0x20] sm:$0xf]
        %v1547 = vld [vmem:[%s1537 + $0x24] sm:$0xf]
        %v1548 = vld [vmem:[%s1537 + $0x28] sm:$0xf]
        %v1549 = vld [vmem:[%s1537 + $0x2c] sm:$0xf]
        %v1550 = vld [vmem:[%s1537 + $0x30] sm:$0xf]
        %v1551 = vld [vmem:[%s1537 + $0x34] sm:$0xf]
        %v1552 = vld [vmem:[%s1537 + $0x38] sm:$0xf]
        %v1553 = vld [vmem:[%s1537 + $0x3c] sm:$0xf]
        %v1554 = vld [vmem:[%s1537 + $0x40] sm:$0xf]
        %v1555 = vld [vmem:[%s1537 + $0x44] sm:$0xf]
        %v1556 = vld [vmem:[%s1537 + $0x48] sm:$0xf]
        %v1557 = vld [vmem:[%s1537 + $0x4c] sm:$0xf]
        %v1558 = vld [vmem:[%s1537 + $0x50] sm:$0xf]
        %v1559 = vld [vmem:[%s1537 + $0x54] sm:$0xf]
        %v1560 = vld [vmem:[%s1537 + $0x58] sm:$0xf]
        %v1561 = vld [vmem:[%s1537 + $0x5c] sm:$0xf]
        %v1562 = vld [vmem:[%s1537 + $0x60] sm:$0xf]
        %v1563 = vld [vmem:[%s1537 + $0x64] sm:$0xf]
        %v1564 = vld [vmem:[%s1537 + $0x68] sm:$0xf]
        %v1565 = vld [vmem:[%s1537 + $0x6c] sm:$0xf]
        %v1566 = vld [vmem:[%s1537 + $0x70] sm:$0xf]
        %v1567 = vld [vmem:[%s1537 + $0x74] sm:$0xf]
        %v1568 = vld [vmem:[%s1537 + $0x78] sm:$0xf]
        %v1569 = vld [vmem:[%s1537 + $0x7c] sm:$0xf]
        %v1571 = vunpack.c.l.b16 %v1536
        %v1572 = vunpack.c.h.b16 %v1536
        %v1573 = vpack.c.b16 %v1345, %v1571
        %v1574 = vpack.c.b16 %v1346, %v1572
        %v1575 = vrot.slane %v1573, 1
        %v1576 = vrot.slane %v1353, 1
        %v1577 = vsel %vm727, %v1575, %v1576
        %v1578 = vrot.slane %v1574, 1
        %v1579 = vrot.slane %v1354, 1
        %v1580 = vsel %vm727, %v1578, %v1579
        %v1617 = vunpack.c.l.b16 %v1538
        %v1618 = vunpack.c.l.b16 %v1539
        %v1619 = vunpack.c.l.b16 %v1540
        %v1620 = vunpack.c.l.b16 %v1541
        %v1621 = vunpack.c.l.b16 %v1542
        %v1622 = vunpack.c.l.b16 %v1543
        %v1623 = vunpack.c.l.b16 %v1544
        %v1624 = vunpack.c.l.b16 %v1545
        %v1625 = vunpack.c.l.b16 %v1546
        %v1626 = vunpack.c.l.b16 %v1547
        %v1627 = vunpack.c.l.b16 %v1548
        %v1628 = vunpack.c.l.b16 %v1549
        %v1629 = vunpack.c.l.b16 %v1550
        %v1630 = vunpack.c.l.b16 %v1551
        %v1631 = vunpack.c.l.b16 %v1552
        %v1632 = vunpack.c.l.b16 %v1553
        %v1633 = vunpack.c.l.b16 %v1554
        %v1634 = vunpack.c.l.b16 %v1555
        %v1635 = vunpack.c.l.b16 %v1556
        %v1636 = vunpack.c.l.b16 %v1557
        %v1637 = vunpack.c.l.b16 %v1558
        %v1638 = vunpack.c.l.b16 %v1559
        %v1639 = vunpack.c.l.b16 %v1560
        %v1640 = vunpack.c.l.b16 %v1561
        %v1641 = vunpack.c.l.b16 %v1562
        %v1642 = vunpack.c.l.b16 %v1563
        %v1643 = vunpack.c.l.b16 %v1564
        %v1644 = vunpack.c.l.b16 %v1565
        %v1645 = vunpack.c.l.b16 %v1566
        %v1646 = vunpack.c.l.b16 %v1567
        %v1647 = vunpack.c.l.b16 %v1568
        %v1648 = vunpack.c.l.b16 %v1569
        %v1649 = vpack.c.b16 %v1618, %v1617
        %v1650 = vpack.c.b16 %v1620, %v1619
        %v1651 = vpack.c.b16 %v1622, %v1621
        %v1652 = vpack.c.b16 %v1624, %v1623
        %v1653 = vpack.c.b16 %v1626, %v1625
        %v1654 = vpack.c.b16 %v1628, %v1627
        %v1655 = vpack.c.b16 %v1630, %v1629
        %v1656 = vpack.c.b16 %v1632, %v1631
        %v1657 = vpack.c.b16 %v1634, %v1633
        %v1658 = vpack.c.b16 %v1636, %v1635
        %v1659 = vpack.c.b16 %v1638, %v1637
        %v1660 = vpack.c.b16 %v1640, %v1639
        %v1661 = vpack.c.b16 %v1642, %v1641
        %v1662 = vpack.c.b16 %v1644, %v1643
        %v1663 = vpack.c.b16 %v1646, %v1645
        %v1664 = vpack.c.b16 %v1648, %v1647
        %1681 = vmatprep.subr.bf16.mxu0 0
        %1682 = vmatpush1.bf16.msra.mxu0 %v1649
        %1683 = vmatprep.subr.bf16.mxu0 0
        %1684 = vmatpush1.bf16.msra.mxu0 %v1650
        %1685 = vmatprep.subr.bf16.mxu0 0
        %1686 = vmatpush1.bf16.msra.mxu0 %v1651
        %1687 = vmatprep.subr.bf16.mxu0 0
        %1688 = vmatpush1.bf16.msra.mxu0 %v1652
        %1689 = vmatprep.subr.bf16.mxu0 0
        %1690 = vmatpush1.bf16.msra.mxu0 %v1653
        %1691 = vmatprep.subr.bf16.mxu0 0
        %1692 = vmatpush1.bf16.msra.mxu0 %v1654
        %1693 = vmatprep.subr.bf16.mxu0 0
        %1694 = vmatpush1.bf16.msra.mxu0 %v1655
        %1695 = vmatprep.subr.bf16.mxu0 0
        %1696 = vmatpush1.bf16.msra.mxu0 %v1656
        %1697 = vmatprep.subr.bf16.mxu0 0
        %1698 = vmatpush1.bf16.msra.mxu0 %v1657
        %1699 = vmatprep.subr.bf16.mxu0 0
        %1700 = vmatpush1.bf16.msra.mxu0 %v1658
        %1701 = vmatprep.subr.bf16.mxu0 0
        %1702 = vmatpush1.bf16.msra.mxu0 %v1659
        %1703 = vmatprep.subr.bf16.mxu0 0
        %1704 = vmatpush1.bf16.msra.mxu0 %v1660
        %1705 = vmatprep.subr.bf16.mxu0 0
        %1706 = vmatpush1.bf16.msra.mxu0 %v1661
        %1707 = vmatprep.subr.bf16.mxu0 0
        %1708 = vmatpush1.bf16.msra.mxu0 %v1662
        %1709 = vmatprep.subr.bf16.mxu0 0
        %1710 = vmatpush1.bf16.msra.mxu0 %v1663
        %1711 = vmatprep.subr.bf16.mxu0 0
        %1712 = vmatpush1.bf16.msra.mxu0 %v1664
        %1713 = vmatprep.mubr.bf16.mxu0 %v1580
        %1714 = vmatmul.mubr.bf16.gmra.mrb[0].mxu0 %v1577
        %v1715 = vpop.f32.mrb[0].mxu0
        %v1716 = vadd.f32 0.0, %v1715
        %v1717 = vpop.f32.mrb[0].mxu0
        %v1718 = vpop.f32.mrb[0].mxu0
        %v1719 = vadd.f32 0.0, %v1718
        %v1720 = vpop.f32.mrb[0].mxu0
        %1721 = vmatprep.mubr.bf16.mxu0 %v1579
        %1722 = vmatmul.mubr.bf16.gmra.mrb[0].mxu0 %v1576
        %v1723 = vpop.f32.mrb[0].mxu0
        %v1724 = vadd.f32 0.0, %v1723
        %v1725 = vpop.f32.mrb[0].mxu0
        %v1726 = vpop.f32.mrb[0].mxu0
        %v1727 = vpop.f32.mrb[0].mxu0
        %1728 = vdwg.mxu0
        %v1729 = vadd.f32 %v1533, %v1716
        %v1730 = vadd.f32 %v1534, %v1719
        %v1731 = vadd.f32 %v1535, %v1724
        %v1732 = vld [vmem:[%s224 + $0x20] sm:$0x33]
        %s1733 = scalar_lea.vmem %s233, 896 [#allocation5]
        %v1734 = vld [vmem:[%s1733] sm:$0xf]
        %v1735 = vld [vmem:[%s1733 + $0x4] sm:$0xf]
        %v1736 = vld [vmem:[%s1733 + $0x8] sm:$0xf]
        %v1737 = vld [vmem:[%s1733 + $0xc] sm:$0xf]
        %v1738 = vld [vmem:[%s1733 + $0x10] sm:$0xf]
        %v1739 = vld [vmem:[%s1733 + $0x14] sm:$0xf]
        %v1740 = vld [vmem:[%s1733 + $0x18] sm:$0xf]
        %v1741 = vld [vmem:[%s1733 + $0x1c] sm:$0xf]
        %v1742 = vld [vmem:[%s1733 + $0x20] sm:$0xf]
        %v1743 = vld [vmem:[%s1733 + $0x24] sm:$0xf]
        %v1744 = vld [vmem:[%s1733 + $0x28] sm:$0xf]
        %v1745 = vld [vmem:[%s1733 + $0x2c] sm:$0xf]
        %v1746 = vld [vmem:[%s1733 + $0x30] sm:$0xf]
        %v1747 = vld [vmem:[%s1733 + $0x34] sm:$0xf]
        %v1748 = vld [vmem:[%s1733 + $0x38] sm:$0xf]
        %v1749 = vld [vmem:[%s1733 + $0x3c] sm:$0xf]
        %v1750 = vld [vmem:[%s1733 + $0x40] sm:$0xf]
        %v1751 = vld [vmem:[%s1733 + $0x44] sm:$0xf]
        %v1752 = vld [vmem:[%s1733 + $0x48] sm:$0xf]
        %v1753 = vld [vmem:[%s1733 + $0x4c] sm:$0xf]
        %v1754 = vld [vmem:[%s1733 + $0x50] sm:$0xf]
        %v1755 = vld [vmem:[%s1733 + $0x54] sm:$0xf]
        %v1756 = vld [vmem:[%s1733 + $0x58] sm:$0xf]
        %v1757 = vld [vmem:[%s1733 + $0x5c] sm:$0xf]
        %v1758 = vld [vmem:[%s1733 + $0x60] sm:$0xf]
        %v1759 = vld [vmem:[%s1733 + $0x64] sm:$0xf]
        %v1760 = vld [vmem:[%s1733 + $0x68] sm:$0xf]
        %v1761 = vld [vmem:[%s1733 + $0x6c] sm:$0xf]
        %v1762 = vld [vmem:[%s1733 + $0x70] sm:$0xf]
        %v1763 = vld [vmem:[%s1733 + $0x74] sm:$0xf]
        %v1764 = vld [vmem:[%s1733 + $0x78] sm:$0xf]
        %v1765 = vld [vmem:[%s1733 + $0x7c] sm:$0xf]
        %v1767 = vunpack.c.l.b16 %v1732
        %v1768 = vunpack.c.h.b16 %v1732
        %v1769 = vpack.c.b16 %v1767, %v1347
        %v1770 = vpack.c.b16 %v1768, %v1348
        %v1772 = vshrl.u32 %v1573, 16
        %v1774 = vrot.slane %v1772, 1
        %v1775 = vshll.u32 %v1573, 16
        %v1777 = vrot.slane %v1775, 2
        %v1778 = vor.u32 %v1774, %v1777
        %v1780 = vshrl.u32 %v1769, 16
        %v1782 = vrot.slane %v1780, 1
        %v1783 = vshll.u32 %v1769, 16
        %v1785 = vrot.slane %v1783, 2
        %v1786 = vor.u32 %v1782, %v1785
        %v1787 = vsel %vm924, %v1778, %v1786
        %v1789 = vshrl.u32 %v1574, 16
        %v1791 = vrot.slane %v1789, 1
        %v1792 = vshll.u32 %v1574, 16
        %v1794 = vrot.slane %v1792, 2
        %v1795 = vor.u32 %v1791, %v1794
        %v1797 = vshrl.u32 %v1770, 16
        %v1799 = vrot.slane %v1797, 1
        %v1800 = vshll.u32 %v1770, 16
        %v1802 = vrot.slane %v1800, 2
        %v1803 = vor.u32 %v1799, %v1802
        %v1804 = vsel %vm924, %v1795, %v1803
        %v1841 = vunpack.c.l.b16 %v1734
        %v1842 = vunpack.c.l.b16 %v1735
        %v1843 = vunpack.c.l.b16 %v1736
        %v1844 = vunpack.c.l.b16 %v1737
        %v1845 = vunpack.c.l.b16 %v1738
        %v1846 = vunpack.c.l.b16 %v1739
        %v1847 = vunpack.c.l.b16 %v1740
        %v1848 = vunpack.c.l.b16 %v1741
        %v1849 = vunpack.c.l.b16 %v1742
        %v1850 = vunpack.c.l.b16 %v1743
        %v1851 = vunpack.c.l.b16 %v1744
        %v1852 = vunpack.c.l.b16 %v1745
        %v1853 = vunpack.c.l.b16 %v1746
        %v1854 = vunpack.c.l.b16 %v1747
        %v1855 = vunpack.c.l.b16 %v1748
        %v1856 = vunpack.c.l.b16 %v1749
        %v1857 = vunpack.c.l.b16 %v1750
        %v1858 = vunpack.c.l.b16 %v1751
        %v1859 = vunpack.c.l.b16 %v1752
        %v1860 = vunpack.c.l.b16 %v1753
        %v1861 = vunpack.c.l.b16 %v1754
        %v1862 = vunpack.c.l.b16 %v1755
        %v1863 = vunpack.c.l.b16 %v1756
        %v1864 = vunpack.c.l.b16 %v1757
        %v1865 = vunpack.c.l.b16 %v1758
        %v1866 = vunpack.c.l.b16 %v1759
        %v1867 = vunpack.c.l.b16 %v1760
        %v1868 = vunpack.c.l.b16 %v1761
        %v1869 = vunpack.c.l.b16 %v1762
        %v1870 = vunpack.c.l.b16 %v1763
        %v1871 = vunpack.c.l.b16 %v1764
        %v1872 = vunpack.c.l.b16 %v1765
        %v1873 = vpack.c.b16 %v1842, %v1841
        %v1874 = vpack.c.b16 %v1844, %v1843
        %v1875 = vpack.c.b16 %v1846, %v1845
        %v1876 = vpack.c.b16 %v1848, %v1847
        %v1877 = vpack.c.b16 %v1850, %v1849
        %v1878 = vpack.c.b16 %v1852, %v1851
        %v1879 = vpack.c.b16 %v1854, %v1853
        %v1880 = vpack.c.b16 %v1856, %v1855
        %v1881 = vpack.c.b16 %v1858, %v1857
        %v1882 = vpack.c.b16 %v1860, %v1859
        %v1883 = vpack.c.b16 %v1862, %v1861
        %v1884 = vpack.c.b16 %v1864, %v1863
        %v1885 = vpack.c.b16 %v1866, %v1865
        %v1886 = vpack.c.b16 %v1868, %v1867
        %v1887 = vpack.c.b16 %v1870, %v1869
        %v1888 = vpack.c.b16 %v1872, %v1871
        %1905 = vmatprep.subr.bf16.mxu0 0
        %1906 = vmatpush1.bf16.msra.mxu0 %v1873
        %1907 = vmatprep.subr.bf16.mxu0 0
        %1908 = vmatpush1.bf16.msra.mxu0 %v1874
        %1909 = vmatprep.subr.bf16.mxu0 0
        %1910 = vmatpush1.bf16.msra.mxu0 %v1875
        %1911 = vmatprep.subr.bf16.mxu0 0
        %1912 = vmatpush1.bf16.msra.mxu0 %v1876
        %1913 = vmatprep.subr.bf16.mxu0 0
        %1914 = vmatpush1.bf16.msra.mxu0 %v1877
        %1915 = vmatprep.subr.bf16.mxu0 0
        %1916 = vmatpush1.bf16.msra.mxu0 %v1878
        %1917 = vmatprep.subr.bf16.mxu0 0
        %1918 = vmatpush1.bf16.msra.mxu0 %v1879
        %1919 = vmatprep.subr.bf16.mxu0 0
        %1920 = vmatpush1.bf16.msra.mxu0 %v1880
        %1921 = vmatprep.subr.bf16.mxu0 0
        %1922 = vmatpush1.bf16.msra.mxu0 %v1881
        %1923 = vmatprep.subr.bf16.mxu0 0
        %1924 = vmatpush1.bf16.msra.mxu0 %v1882
        %1925 = vmatprep.subr.bf16.mxu0 0
        %1926 = vmatpush1.bf16.msra.mxu0 %v1883
        %1927 = vmatprep.subr.bf16.mxu0 0
        %1928 = vmatpush1.bf16.msra.mxu0 %v1884
        %1929 = vmatprep.subr.bf16.mxu0 0
        %1930 = vmatpush1.bf16.msra.mxu0 %v1885
        %1931 = vmatprep.subr.bf16.mxu0 0
        %1932 = vmatpush1.bf16.msra.mxu0 %v1886
        %1933 = vmatprep.subr.bf16.mxu0 0
        %1934 = vmatpush1.bf16.msra.mxu0 %v1887
        %1935 = vmatprep.subr.bf16.mxu0 0
        %1936 = vmatpush1.bf16.msra.mxu0 %v1888
        %1937 = vmatprep.mubr.bf16.mxu0 %v1804
        %1938 = vmatmul.mubr.bf16.gmra.mrb[0].mxu0 %v1787
        %v1939 = vpop.f32.mrb[0].mxu0
        %v1940 = vadd.f32 0.0, %v1939
        %v1941 = vpop.f32.mrb[0].mxu0
        %v1942 = vpop.f32.mrb[0].mxu0
        %v1943 = vadd.f32 0.0, %v1942
        %v1944 = vpop.f32.mrb[0].mxu0
        %1945 = vmatprep.mubr.bf16.mxu0 %v1803
        %1946 = vmatmul.mubr.bf16.gmra.mrb[0].mxu0 %v1786
        %v1947 = vpop.f32.mrb[0].mxu0
        %v1948 = vadd.f32 0.0, %v1947
        %v1949 = vpop.f32.mrb[0].mxu0
        %v1950 = vpop.f32.mrb[0].mxu0
        %v1951 = vpop.f32.mrb[0].mxu0
        %1952 = vdwg.mxu0
        %v1953 = vadd.f32 %v1729, %v1940
        %v1954 = vadd.f32 %v1730, %v1943
        %v1955 = vadd.f32 %v1731, %v1948
        %v1956 = vld [vmem:[%s224 + $0x20] sm:$0xff]
        %s1957 = scalar_lea.vmem %s233, 1024 [#allocation5]
        %v1958 = vld [vmem:[%s1957] sm:$0xf]
        %v1959 = vld [vmem:[%s1957 + $0x4] sm:$0xf]
        %v1960 = vld [vmem:[%s1957 + $0x8] sm:$0xf]
        %v1961 = vld [vmem:[%s1957 + $0xc] sm:$0xf]
        %v1962 = vld [vmem:[%s1957 + $0x10] sm:$0xf]
        %v1963 = vld [vmem:[%s1957 + $0x14] sm:$0xf]
        %v1964 = vld [vmem:[%s1957 + $0x18] sm:$0xf]
        %v1965 = vld [vmem:[%s1957 + $0x1c] sm:$0xf]
        %v1966 = vld [vmem:[%s1957 + $0x20] sm:$0xf]
        %v1967 = vld [vmem:[%s1957 + $0x24] sm:$0xf]
        %v1968 = vld [vmem:[%s1957 + $0x28] sm:$0xf]
        %v1969 = vld [vmem:[%s1957 + $0x2c] sm:$0xf]
        %v1970 = vld [vmem:[%s1957 + $0x30] sm:$0xf]
        %v1971 = vld [vmem:[%s1957 + $0x34] sm:$0xf]
        %v1972 = vld [vmem:[%s1957 + $0x38] sm:$0xf]
        %v1973 = vld [vmem:[%s1957 + $0x3c] sm:$0xf]
        %v1974 = vld [vmem:[%s1957 + $0x40] sm:$0xf]
        %v1975 = vld [vmem:[%s1957 + $0x44] sm:$0xf]
        %v1976 = vld [vmem:[%s1957 + $0x48] sm:$0xf]
        %v1977 = vld [vmem:[%s1957 + $0x4c] sm:$0xf]
        %v1978 = vld [vmem:[%s1957 + $0x50] sm:$0xf]
        %v1979 = vld [vmem:[%s1957 + $0x54] sm:$0xf]
        %v1980 = vld [vmem:[%s1957 + $0x58] sm:$0xf]
        %v1981 = vld [vmem:[%s1957 + $0x5c] sm:$0xf]
        %v1982 = vld [vmem:[%s1957 + $0x60] sm:$0xf]
        %v1983 = vld [vmem:[%s1957 + $0x64] sm:$0xf]
        %v1984 = vld [vmem:[%s1957 + $0x68] sm:$0xf]
        %v1985 = vld [vmem:[%s1957 + $0x6c] sm:$0xf]
        %v1986 = vld [vmem:[%s1957 + $0x70] sm:$0xf]
        %v1987 = vld [vmem:[%s1957 + $0x74] sm:$0xf]
        %v1988 = vld [vmem:[%s1957 + $0x78] sm:$0xf]
        %v1989 = vld [vmem:[%s1957 + $0x7c] sm:$0xf]
        %v1991 = vunpack.c.l.b16 %v1956
        %v1992 = vunpack.c.h.b16 %v1956
        %v1993 = vpack.c.b16 %v1347, %v1345
        %v1994 = vpack.c.b16 %v1348, %v1346
        %v1995 = vpack.c.b16 %v1991, %v1991
        %v1996 = vpack.c.b16 %v1992, %v1992
        %v2033 = vunpack.c.l.b16 %v1958
        %v2034 = vunpack.c.l.b16 %v1959
        %v2035 = vunpack.c.l.b16 %v1960
        %v2036 = vunpack.c.l.b16 %v1961
        %v2037 = vunpack.c.l.b16 %v1962
        %v2038 = vunpack.c.l.b16 %v1963
        %v2039 = vunpack.c.l.b16 %v1964
        %v2040 = vunpack.c.l.b16 %v1965
        %v2041 = vunpack.c.l.b16 %v1966
        %v2042 = vunpack.c.l.b16 %v1967
        %v2043 = vunpack.c.l.b16 %v1968
        %v2044 = vunpack.c.l.b16 %v1969
        %v2045 = vunpack.c.l.b16 %v1970
        %v2046 = vunpack.c.l.b16 %v1971
        %v2047 = vunpack.c.l.b16 %v1972
        %v2048 = vunpack.c.l.b16 %v1973
        %v2049 = vunpack.c.l.b16 %v1974
        %v2050 = vunpack.c.l.b16 %v1975
        %v2051 = vunpack.c.l.b16 %v1976
        %v2052 = vunpack.c.l.b16 %v1977
        %v2053 = vunpack.c.l.b16 %v1978
        %v2054 = vunpack.c.l.b16 %v1979
        %v2055 = vunpack.c.l.b16 %v1980
        %v2056 = vunpack.c.l.b16 %v1981
        %v2057 = vunpack.c.l.b16 %v1982
        %v2058 = vunpack.c.l.b16 %v1983
        %v2059 = vunpack.c.l.b16 %v1984
        %v2060 = vunpack.c.l.b16 %v1985
        %v2061 = vunpack.c.l.b16 %v1986
        %v2062 = vunpack.c.l.b16 %v1987
        %v2063 = vunpack.c.l.b16 %v1988
        %v2064 = vunpack.c.l.b16 %v1989
        %v2065 = vpack.c.b16 %v2034, %v2033
        %v2066 = vpack.c.b16 %v2036, %v2035
        %v2067 = vpack.c.b16 %v2038, %v2037
        %v2068 = vpack.c.b16 %v2040, %v2039
        %v2069 = vpack.c.b16 %v2042, %v2041
        %v2070 = vpack.c.b16 %v2044, %v2043
        %v2071 = vpack.c.b16 %v2046, %v2045
        %v2072 = vpack.c.b16 %v2048, %v2047
        %v2073 = vpack.c.b16 %v2050, %v2049
        %v2074 = vpack.c.b16 %v2052, %v2051
        %v2075 = vpack.c.b16 %v2054, %v2053
        %v2076 = vpack.c.b16 %v2056, %v2055
        %v2077 = vpack.c.b16 %v2058, %v2057
        %v2078 = vpack.c.b16 %v2060, %v2059
        %v2079 = vpack.c.b16 %v2062, %v2061
        %v2080 = vpack.c.b16 %v2064, %v2063
        %2097 = vmatprep.subr.bf16.mxu0 0
        %2098 = vmatpush1.bf16.msra.mxu0 %v2065
        %2099 = vmatprep.subr.bf16.mxu0 0
        %2100 = vmatpush1.bf16.msra.mxu0 %v2066
        %2101 = vmatprep.subr.bf16.mxu0 0
        %2102 = vmatpush1.bf16.msra.mxu0 %v2067
        %2103 = vmatprep.subr.bf16.mxu0 0
        %2104 = vmatpush1.bf16.msra.mxu0 %v2068
        %2105 = vmatprep.subr.bf16.mxu0 0
        %2106 = vmatpush1.bf16.msra.mxu0 %v2069
        %2107 = vmatprep.subr.bf16.mxu0 0
        %2108 = vmatpush1.bf16.msra.mxu0 %v2070
        %2109 = vmatprep.subr.bf16.mxu0 0
        %2110 = vmatpush1.bf16.msra.mxu0 %v2071
        %2111 = vmatprep.subr.bf16.mxu0 0
        %2112 = vmatpush1.bf16.msra.mxu0 %v2072
        %2113 = vmatprep.subr.bf16.mxu0 0
        %2114 = vmatpush1.bf16.msra.mxu0 %v2073
        %2115 = vmatprep.subr.bf16.mxu0 0
        %2116 = vmatpush1.bf16.msra.mxu0 %v2074
        %2117 = vmatprep.subr.bf16.mxu0 0
        %2118 = vmatpush1.bf16.msra.mxu0 %v2075
        %2119 = vmatprep.subr.bf16.mxu0 0
        %2120 = vmatpush1.bf16.msra.mxu0 %v2076
        %2121 = vmatprep.subr.bf16.mxu0 0
        %2122 = vmatpush1.bf16.msra.mxu0 %v2077
        %2123 = vmatprep.subr.bf16.mxu0 0
        %2124 = vmatpush1.bf16.msra.mxu0 %v2078
        %2125 = vmatprep.subr.bf16.mxu0 0
        %2126 = vmatpush1.bf16.msra.mxu0 %v2079
        %2127 = vmatprep.subr.bf16.mxu0 0
        %2128 = vmatpush1.bf16.msra.mxu0 %v2080
        %2129 = vmatprep.mubr.bf16.mxu0 %v1994
        %2130 = vmatmul.mubr.bf16.gmra.mrb[0].mxu0 %v1993
        %v2131 = vpop.f32.mrb[0].mxu0
        %v2132 = vadd.f32 0.0, %v2131
        %v2133 = vpop.f32.mrb[0].mxu0
        %v2134 = vpop.f32.mrb[0].mxu0
        %v2135 = vadd.f32 0.0, %v2134
        %v2136 = vpop.f32.mrb[0].mxu0
        %2137 = vmatprep.mubr.bf16.mxu0 %v1996
        %2138 = vmatmul.mubr.bf16.gmra.mrb[0].mxu0 %v1995
        %v2139 = vpop.f32.mrb[0].mxu0
        %v2140 = vadd.f32 0.0, %v2139
        %v2141 = vpop.f32.mrb[0].mxu0
        %v2142 = vpop.f32.mrb[0].mxu0
        %v2143 = vpop.f32.mrb[0].mxu0
        %2144 = vdwg.mxu0
        %v2145 = vadd.f32 %v1953, %v2132
        %v2146 = vadd.f32 %v1954, %v2135
        %v2147 = vadd.f32 %v1955, %v2140
        %v2148 = vld [vmem:[%s224 + $0x10] sm:$0xff]
        %v2149 = vld [vmem:[%s224 + $0x18] sm:$0xff]
        %v2150 = vld [vmem:[%s224 + $0x20] sm:$0xff]
        %v2151 = vld [vmem:[%s224 + $0x28] sm:$0x11]
        %s2152 = scalar_lea.vmem %s233, 1152 [#allocation5]
        %v2153 = vld [vmem:[%s2152] sm:$0xf]
        %v2154 = vld [vmem:[%s2152 + $0x4] sm:$0xf]
        %v2155 = vld [vmem:[%s2152 + $0x8] sm:$0xf]
        %v2156 = vld [vmem:[%s2152 + $0xc] sm:$0xf]
        %v2157 = vld [vmem:[%s2152 + $0x10] sm:$0xf]
        %v2158 = vld [vmem:[%s2152 + $0x14] sm:$0xf]
        %v2159 = vld [vmem:[%s2152 + $0x18] sm:$0xf]
        %v2160 = vld [vmem:[%s2152 + $0x1c] sm:$0xf]
        %v2161 = vld [vmem:[%s2152 + $0x20] sm:$0xf]
        %v2162 = vld [vmem:[%s2152 + $0x24] sm:$0xf]
        %v2163 = vld [vmem:[%s2152 + $0x28] sm:$0xf]
        %v2164 = vld [vmem:[%s2152 + $0x2c] sm:$0xf]
        %v2165 = vld [vmem:[%s2152 + $0x30] sm:$0xf]
        %v2166 = vld [vmem:[%s2152 + $0x34] sm:$0xf]
        %v2167 = vld [vmem:[%s2152 + $0x38] sm:$0xf]
        %v2168 = vld [vmem:[%s2152 + $0x3c] sm:$0xf]
        %v2169 = vld [vmem:[%s2152 + $0x40] sm:$0xf]
        %v2170 = vld [vmem:[%s2152 + $0x44] sm:$0xf]
        %v2171 = vld [vmem:[%s2152 + $0x48] sm:$0xf]
        %v2172 = vld [vmem:[%s2152 + $0x4c] sm:$0xf]
        %v2173 = vld [vmem:[%s2152 + $0x50] sm:$0xf]
        %v2174 = vld [vmem:[%s2152 + $0x54] sm:$0xf]
        %v2175 = vld [vmem:[%s2152 + $0x58] sm:$0xf]
        %v2176 = vld [vmem:[%s2152 + $0x5c] sm:$0xf]
        %v2177 = vld [vmem:[%s2152 + $0x60] sm:$0xf]
        %v2178 = vld [vmem:[%s2152 + $0x64] sm:$0xf]
        %v2179 = vld [vmem:[%s2152 + $0x68] sm:$0xf]
        %v2180 = vld [vmem:[%s2152 + $0x6c] sm:$0xf]
        %v2181 = vld [vmem:[%s2152 + $0x70] sm:$0xf]
        %v2182 = vld [vmem:[%s2152 + $0x74] sm:$0xf]
        %v2183 = vld [vmem:[%s2152 + $0x78] sm:$0xf]
        %v2184 = vld [vmem:[%s2152 + $0x7c] sm:$0xf]
        %v2189 = vunpack.c.l.b16 %v2148
        %v2190 = vunpack.c.h.b16 %v2148
        %v2191 = vunpack.c.l.b16 %v2149
        %v2192 = vunpack.c.h.b16 %v2149
        %v2193 = vunpack.c.l.b16 %v2150
        %v2194 = vunpack.c.h.b16 %v2150
        %v2195 = vunpack.c.l.b16 %v2151
        %v2196 = vunpack.c.h.b16 %v2151
        %v2197 = vpack.c.b16 %v2191, %v2189
        %v2198 = vpack.c.b16 %v2192, %v2190
        %v2199 = vpack.c.b16 %v2195, %v2193
        %v2200 = vpack.c.b16 %v2196, %v2194
        %v2202 = vshrl.u32 %v2197, 16
        %v2204 = vshll.u32 %v2197, 16
        %v2206 = vrot.slane %v2204, 1
        %v2207 = vor.u32 %v2202, %v2206
        %v2209 = vshll.u32 %v2199, 16
        %v2211 = vrot.slane %v2209, 1
        %v2212 = vsel %vm359, %v2207, %v2211
        %v2214 = vshrl.u32 %v2198, 16
        %v2216 = vshll.u32 %v2198, 16
        %v2218 = vrot.slane %v2216, 1
        %v2219 = vor.u32 %v2214, %v2218
        %v2221 = vshll.u32 %v2200, 16
        %v2223 = vrot.slane %v2221, 1
        %v2224 = vsel %vm359, %v2219, %v2223
        %v2225 = vshrl.u32 %v2199, 16
        %v2227 = vor.u32 %v2225, %v2211
        %v2228 = vshrl.u32 %v2200, 16
        %v2230 = vor.u32 %v2228, %v2223
        %v2267 = vunpack.c.l.b16 %v2153
        %v2268 = vunpack.c.l.b16 %v2154
        %v2269 = vunpack.c.l.b16 %v2155
        %v2270 = vunpack.c.l.b16 %v2156
        %v2271 = vunpack.c.l.b16 %v2157
        %v2272 = vunpack.c.l.b16 %v2158
        %v2273 = vunpack.c.l.b16 %v2159
        %v2274 = vunpack.c.l.b16 %v2160
        %v2275 = vunpack.c.l.b16 %v2161
        %v2276 = vunpack.c.l.b16 %v2162
        %v2277 = vunpack.c.l.b16 %v2163
        %v2278 = vunpack.c.l.b16 %v2164
        %v2279 = vunpack.c.l.b16 %v2165
        %v2280 = vunpack.c.l.b16 %v2166
        %v2281 = vunpack.c.l.b16 %v2167
        %v2282 = vunpack.c.l.b16 %v2168
        %v2283 = vunpack.c.l.b16 %v2169
        %v2284 = vunpack.c.l.b16 %v2170
        %v2285 = vunpack.c.l.b16 %v2171
        %v2286 = vunpack.c.l.b16 %v2172
        %v2287 = vunpack.c.l.b16 %v2173
        %v2288 = vunpack.c.l.b16 %v2174
        %v2289 = vunpack.c.l.b16 %v2175
        %v2290 = vunpack.c.l.b16 %v2176
        %v2291 = vunpack.c.l.b16 %v2177
        %v2292 = vunpack.c.l.b16 %v2178
        %v2293 = vunpack.c.l.b16 %v2179
        %v2294 = vunpack.c.l.b16 %v2180
        %v2295 = vunpack.c.l.b16 %v2181
        %v2296 = vunpack.c.l.b16 %v2182
        %v2297 = vunpack.c.l.b16 %v2183
        %v2298 = vunpack.c.l.b16 %v2184
        %v2299 = vpack.c.b16 %v2268, %v2267
        %v2300 = vpack.c.b16 %v2270, %v2269
        %v2301 = vpack.c.b16 %v2272, %v2271
        %v2302 = vpack.c.b16 %v2274, %v2273
        %v2303 = vpack.c.b16 %v2276, %v2275
        %v2304 = vpack.c.b16 %v2278, %v2277
        %v2305 = vpack.c.b16 %v2280, %v2279
        %v2306 = vpack.c.b16 %v2282, %v2281
        %v2307 = vpack.c.b16 %v2284, %v2283
        %v2308 = vpack.c.b16 %v2286, %v2285
        %v2309 = vpack.c.b16 %v2288, %v2287
        %v2310 = vpack.c.b16 %v2290, %v2289
        %v2311 = vpack.c.b16 %v2292, %v2291
        %v2312 = vpack.c.b16 %v2294, %v2293
        %v2313 = vpack.c.b16 %v2296, %v2295
        %v2314 = vpack.c.b16 %v2298, %v2297
        %2331 = vmatprep.subr.bf16.mxu0 0
        %2332 = vmatpush1.bf16.msra.mxu0 %v2299
        %2333 = vmatprep.subr.bf16.mxu0 0
        %2334 = vmatpush1.bf16.msra.mxu0 %v2300
        %2335 = vmatprep.subr.bf16.mxu0 0
        %2336 = vmatpush1.bf16.msra.mxu0 %v2301
        %2337 = vmatprep.subr.bf16.mxu0 0
        %2338 = vmatpush1.bf16.msra.mxu0 %v2302
        %2339 = vmatprep.subr.bf16.mxu0 0
        %2340 = vmatpush1.bf16.msra.mxu0 %v2303
        %2341 = vmatprep.subr.bf16.mxu0 0
        %2342 = vmatpush1.bf16.msra.mxu0 %v2304
        %2343 = vmatprep.subr.bf16.mxu0 0
        %2344 = vmatpush1.bf16.msra.mxu0 %v2305
        %2345 = vmatprep.subr.bf16.mxu0 0
        %2346 = vmatpush1.bf16.msra.mxu0 %v2306
        %2347 = vmatprep.subr.bf16.mxu0 0
        %2348 = vmatpush1.bf16.msra.mxu0 %v2307
        %2349 = vmatprep.subr.bf16.mxu0 0
        %2350 = vmatpush1.bf16.msra.mxu0 %v2308
        %2351 = vmatprep.subr.bf16.mxu0 0
        %2352 = vmatpush1.bf16.msra.mxu0 %v2309
        %2353 = vmatprep.subr.bf16.mxu0 0
        %2354 = vmatpush1.bf16.msra.mxu0 %v2310
        %2355 = vmatprep.subr.bf16.mxu0 0
        %2356 = vmatpush1.bf16.msra.mxu0 %v2311
        %2357 = vmatprep.subr.bf16.mxu0 0
        %2358 = vmatpush1.bf16.msra.mxu0 %v2312
        %2359 = vmatprep.subr.bf16.mxu0 0
        %2360 = vmatpush1.bf16.msra.mxu0 %v2313
        %2361 = vmatprep.subr.bf16.mxu0 0
        %2362 = vmatpush1.bf16.msra.mxu0 %v2314
        %2363 = vmatprep.mubr.bf16.mxu0 %v2224
        %2364 = vmatmul.mubr.bf16.gmra.mrb[0].mxu0 %v2212
        %v2365 = vpop.f32.mrb[0].mxu0
        %v2366 = vadd.f32 0.0, %v2365
        %v2367 = vpop.f32.mrb[0].mxu0
        %v2368 = vpop.f32.mrb[0].mxu0
        %v2369 = vadd.f32 0.0, %v2368
        %v2370 = vpop.f32.mrb[0].mxu0
        %2371 = vmatprep.mubr.bf16.mxu0 %v2230
        %2372 = vmatmul.mubr.bf16.gmra.mrb[0].mxu0 %v2227
        %v2373 = vpop.f32.mrb[0].mxu0
        %v2374 = vadd.f32 0.0, %v2373
        %v2375 = vpop.f32.mrb[0].mxu0
        %v2376 = vpop.f32.mrb[0].mxu0
        %v2377 = vpop.f32.mrb[0].mxu0
        %2378 = vdwg.mxu0
        %v2379 = vadd.f32 %v2145, %v2366
        %v2380 = vadd.f32 %v2146, %v2369
        %v2381 = vadd.f32 %v2147, %v2374
        %v2382 = vld [vmem:[%s224 + $0x10] sm:$0xee]
        %s2383 = scalar_lea.vmem %s233, 1280 [#allocation5]
        %v2384 = vld [vmem:[%s2383] sm:$0xf]
        %v2385 = vld [vmem:[%s2383 + $0x4] sm:$0xf]
        %v2386 = vld [vmem:[%s2383 + $0x8] sm:$0xf]
        %v2387 = vld [vmem:[%s2383 + $0xc] sm:$0xf]
        %v2388 = vld [vmem:[%s2383 + $0x10] sm:$0xf]
        %v2389 = vld [vmem:[%s2383 + $0x14] sm:$0xf]
        %v2390 = vld [vmem:[%s2383 + $0x18] sm:$0xf]
        %v2391 = vld [vmem:[%s2383 + $0x1c] sm:$0xf]
        %v2392 = vld [vmem:[%s2383 + $0x20] sm:$0xf]
        %v2393 = vld [vmem:[%s2383 + $0x24] sm:$0xf]
        %v2394 = vld [vmem:[%s2383 + $0x28] sm:$0xf]
        %v2395 = vld [vmem:[%s2383 + $0x2c] sm:$0xf]
        %v2396 = vld [vmem:[%s2383 + $0x30] sm:$0xf]
        %v2397 = vld [vmem:[%s2383 + $0x34] sm:$0xf]
        %v2398 = vld [vmem:[%s2383 + $0x38] sm:$0xf]
        %v2399 = vld [vmem:[%s2383 + $0x3c] sm:$0xf]
        %v2400 = vld [vmem:[%s2383 + $0x40] sm:$0xf]
        %v2401 = vld [vmem:[%s2383 + $0x44] sm:$0xf]
        %v2402 = vld [vmem:[%s2383 + $0x48] sm:$0xf]
        %v2403 = vld [vmem:[%s2383 + $0x4c] sm:$0xf]
        %v2404 = vld [vmem:[%s2383 + $0x50] sm:$0xf]
        %v2405 = vld [vmem:[%s2383 + $0x54] sm:$0xf]
        %v2406 = vld [vmem:[%s2383 + $0x58] sm:$0xf]
        %v2407 = vld [vmem:[%s2383 + $0x5c] sm:$0xf]
        %v2408 = vld [vmem:[%s2383 + $0x60] sm:$0xf]
        %v2409 = vld [vmem:[%s2383 + $0x64] sm:$0xf]
        %v2410 = vld [vmem:[%s2383 + $0x68] sm:$0xf]
        %v2411 = vld [vmem:[%s2383 + $0x6c] sm:$0xf]
        %v2412 = vld [vmem:[%s2383 + $0x70] sm:$0xf]
        %v2413 = vld [vmem:[%s2383 + $0x74] sm:$0xf]
        %v2414 = vld [vmem:[%s2383 + $0x78] sm:$0xf]
        %v2415 = vld [vmem:[%s2383 + $0x7c] sm:$0xf]
        %v2417 = vunpack.c.l.b16 %v2382
        %v2418 = vunpack.c.h.b16 %v2382
        %v2419 = vpack.c.b16 %v2191, %v2417
        %v2420 = vpack.c.b16 %v2192, %v2418
        %v2421 = vrot.slane %v2419, 1
        %v2422 = vrot.slane %v2199, 1
        %v2423 = vsel %vm727, %v2421, %v2422
        %v2424 = vrot.slane %v2420, 1
        %v2425 = vrot.slane %v2200, 1
        %v2426 = vsel %vm727, %v2424, %v2425
        %v2463 = vunpack.c.l.b16 %v2384
        %v2464 = vunpack.c.l.b16 %v2385
        %v2465 = vunpack.c.l.b16 %v2386
        %v2466 = vunpack.c.l.b16 %v2387
        %v2467 = vunpack.c.l.b16 %v2388
        %v2468 = vunpack.c.l.b16 %v2389
        %v2469 = vunpack.c.l.b16 %v2390
        %v2470 = vunpack.c.l.b16 %v2391
        %v2471 = vunpack.c.l.b16 %v2392
        %v2472 = vunpack.c.l.b16 %v2393
        %v2473 = vunpack.c.l.b16 %v2394
        %v2474 = vunpack.c.l.b16 %v2395
        %v2475 = vunpack.c.l.b16 %v2396
        %v2476 = vunpack.c.l.b16 %v2397
        %v2477 = vunpack.c.l.b16 %v2398
        %v2478 = vunpack.c.l.b16 %v2399
        %v2479 = vunpack.c.l.b16 %v2400
        %v2480 = vunpack.c.l.b16 %v2401
        %v2481 = vunpack.c.l.b16 %v2402
        %v2482 = vunpack.c.l.b16 %v2403
        %v2483 = vunpack.c.l.b16 %v2404
        %v2484 = vunpack.c.l.b16 %v2405
        %v2485 = vunpack.c.l.b16 %v2406
        %v2486 = vunpack.c.l.b16 %v2407
        %v2487 = vunpack.c.l.b16 %v2408
        %v2488 = vunpack.c.l.b16 %v2409
        %v2489 = vunpack.c.l.b16 %v2410
        %v2490 = vunpack.c.l.b16 %v2411
        %v2491 = vunpack.c.l.b16 %v2412
        %v2492 = vunpack.c.l.b16 %v2413
        %v2493 = vunpack.c.l.b16 %v2414
        %v2494 = vunpack.c.l.b16 %v2415
        %v2495 = vpack.c.b16 %v2464, %v2463
        %v2496 = vpack.c.b16 %v2466, %v2465
        %v2497 = vpack.c.b16 %v2468, %v2467
        %v2498 = vpack.c.b16 %v2470, %v2469
        %v2499 = vpack.c.b16 %v2472, %v2471
        %v2500 = vpack.c.b16 %v2474, %v2473
        %v2501 = vpack.c.b16 %v2476, %v2475
        %v2502 = vpack.c.b16 %v2478, %v2477
        %v2503 = vpack.c.b16 %v2480, %v2479
        %v2504 = vpack.c.b16 %v2482, %v2481
        %v2505 = vpack.c.b16 %v2484, %v2483
        %v2506 = vpack.c.b16 %v2486, %v2485
        %v2507 = vpack.c.b16 %v2488, %v2487
        %v2508 = vpack.c.b16 %v2490, %v2489
        %v2509 = vpack.c.b16 %v2492, %v2491
        %v2510 = vpack.c.b16 %v2494, %v2493
        %2527 = vmatprep.subr.bf16.mxu0 0
        %2528 = vmatpush1.bf16.msra.mxu0 %v2495
        %2529 = vmatprep.subr.bf16.mxu0 0
        %2530 = vmatpush1.bf16.msra.mxu0 %v2496
        %2531 = vmatprep.subr.bf16.mxu0 0
        %2532 = vmatpush1.bf16.msra.mxu0 %v2497
        %2533 = vmatprep.subr.bf16.mxu0 0
        %2534 = vmatpush1.bf16.msra.mxu0 %v2498
        %2535 = vmatprep.subr.bf16.mxu0 0
        %2536 = vmatpush1.bf16.msra.mxu0 %v2499
        %2537 = vmatprep.subr.bf16.mxu0 0
        %2538 = vmatpush1.bf16.msra.mxu0 %v2500
        %2539 = vmatprep.subr.bf16.mxu0 0
        %2540 = vmatpush1.bf16.msra.mxu0 %v2501
        %2541 = vmatprep.subr.bf16.mxu0 0
        %2542 = vmatpush1.bf16.msra.mxu0 %v2502
        %2543 = vmatprep.subr.bf16.mxu0 0
        %2544 = vmatpush1.bf16.msra.mxu0 %v2503
        %2545 = vmatprep.subr.bf16.mxu0 0
        %2546 = vmatpush1.bf16.msra.mxu0 %v2504
        %2547 = vmatprep.subr.bf16.mxu0 0
        %2548 = vmatpush1.bf16.msra.mxu0 %v2505
        %2549 = vmatprep.subr.bf16.mxu0 0
        %2550 = vmatpush1.bf16.msra.mxu0 %v2506
        %2551 = vmatprep.subr.bf16.mxu0 0
        %2552 = vmatpush1.bf16.msra.mxu0 %v2507
        %2553 = vmatprep.subr.bf16.mxu0 0
        %2554 = vmatpush1.bf16.msra.mxu0 %v2508
        %2555 = vmatprep.subr.bf16.mxu0 0
        %2556 = vmatpush1.bf16.msra.mxu0 %v2509
        %2557 = vmatprep.subr.bf16.mxu0 0
        %2558 = vmatpush1.bf16.msra.mxu0 %v2510
        %2559 = vmatprep.mubr.bf16.mxu0 %v2426
        %2560 = vmatmul.mubr.bf16.gmra.mrb[0].mxu0 %v2423
        %v2561 = vpop.f32.mrb[0].mxu0
        %v2562 = vadd.f32 0.0, %v2561
        %v2563 = vpop.f32.mrb[0].mxu0
        %v2564 = vpop.f32.mrb[0].mxu0
        %v2565 = vadd.f32 0.0, %v2564
        %v2566 = vpop.f32.mrb[0].mxu0
        %2567 = vmatprep.mubr.bf16.mxu0 %v2425
        %2568 = vmatmul.mubr.bf16.gmra.mrb[0].mxu0 %v2422
        %v2569 = vpop.f32.mrb[0].mxu0
        %v2570 = vadd.f32 0.0, %v2569
        %v2571 = vpop.f32.mrb[0].mxu0
        %v2572 = vpop.f32.mrb[0].mxu0
        %v2573 = vpop.f32.mrb[0].mxu0
        %2574 = vdwg.mxu0
        %v2575 = vadd.f32 %v2379, %v2562
        %v2576 = vadd.f32 %v2380, %v2565
        %v2577 = vadd.f32 %v2381, %v2570
        %v2578 = vld [vmem:[%s224 + $0x28] sm:$0x33]
        %s2579 = scalar_lea.vmem %s233, 1408 [#allocation5]
        %v2580 = vld [vmem:[%s2579] sm:$0xf]
        %v2581 = vld [vmem:[%s2579 + $0x4] sm:$0xf]
        %v2582 = vld [vmem:[%s2579 + $0x8] sm:$0xf]
        %v2583 = vld [vmem:[%s2579 + $0xc] sm:$0xf]
        %v2584 = vld [vmem:[%s2579 + $0x10] sm:$0xf]
        %v2585 = vld [vmem:[%s2579 + $0x14] sm:$0xf]
        %v2586 = vld [vmem:[%s2579 + $0x18] sm:$0xf]
        %v2587 = vld [vmem:[%s2579 + $0x1c] sm:$0xf]
        %v2588 = vld [vmem:[%s2579 + $0x20] sm:$0xf]
        %v2589 = vld [vmem:[%s2579 + $0x24] sm:$0xf]
        %v2590 = vld [vmem:[%s2579 + $0x28] sm:$0xf]
        %v2591 = vld [vmem:[%s2579 + $0x2c] sm:$0xf]
        %v2592 = vld [vmem:[%s2579 + $0x30] sm:$0xf]
        %v2593 = vld [vmem:[%s2579 + $0x34] sm:$0xf]
        %v2594 = vld [vmem:[%s2579 + $0x38] sm:$0xf]
        %v2595 = vld [vmem:[%s2579 + $0x3c] sm:$0xf]
        %v2596 = vld [vmem:[%s2579 + $0x40] sm:$0xf]
        %v2597 = vld [vmem:[%s2579 + $0x44] sm:$0xf]
        %v2598 = vld [vmem:[%s2579 + $0x48] sm:$0xf]
        %v2599 = vld [vmem:[%s2579 + $0x4c] sm:$0xf]
        %v2600 = vld [vmem:[%s2579 + $0x50] sm:$0xf]
        %v2601 = vld [vmem:[%s2579 + $0x54] sm:$0xf]
        %v2602 = vld [vmem:[%s2579 + $0x58] sm:$0xf]
        %v2603 = vld [vmem:[%s2579 + $0x5c] sm:$0xf]
        %v2604 = vld [vmem:[%s2579 + $0x60] sm:$0xf]
        %v2605 = vld [vmem:[%s2579 + $0x64] sm:$0xf]
        %v2606 = vld [vmem:[%s2579 + $0x68] sm:$0xf]
        %v2607 = vld [vmem:[%s2579 + $0x6c] sm:$0xf]
        %v2608 = vld [vmem:[%s2579 + $0x70] sm:$0xf]
        %v2609 = vld [vmem:[%s2579 + $0x74] sm:$0xf]
        %v2610 = vld [vmem:[%s2579 + $0x78] sm:$0xf]
        %v2611 = vld [vmem:[%s2579 + $0x7c] sm:$0xf]
        %v2613 = vunpack.c.l.b16 %v2578
        %v2614 = vunpack.c.h.b16 %v2578
        %v2615 = vpack.c.b16 %v2613, %v2193
        %v2616 = vpack.c.b16 %v2614, %v2194
        %v2618 = vshrl.u32 %v2419, 16
        %v2620 = vrot.slane %v2618, 1
        %v2621 = vshll.u32 %v2419, 16
        %v2623 = vrot.slane %v2621, 2
        %v2624 = vor.u32 %v2620, %v2623
        %v2626 = vshrl.u32 %v2615, 16
        %v2628 = vrot.slane %v2626, 1
        %v2629 = vshll.u32 %v2615, 16
        %v2631 = vrot.slane %v2629, 2
        %v2632 = vor.u32 %v2628, %v2631
        %v2633 = vsel %vm924, %v2624, %v2632
        %v2635 = vshrl.u32 %v2420, 16
        %v2637 = vrot.slane %v2635, 1
        %v2638 = vshll.u32 %v2420, 16
        %v2640 = vrot.slane %v2638, 2
        %v2641 = vor.u32 %v2637, %v2640
        %v2643 = vshrl.u32 %v2616, 16
        %v2645 = vrot.slane %v2643, 1
        %v2646 = vshll.u32 %v2616, 16
        %v2648 = vrot.slane %v2646, 2
        %v2649 = vor.u32 %v2645, %v2648
        %v2650 = vsel %vm924, %v2641, %v2649
        %v2687 = vunpack.c.l.b16 %v2580
        %v2688 = vunpack.c.l.b16 %v2581
        %v2689 = vunpack.c.l.b16 %v2582
        %v2690 = vunpack.c.l.b16 %v2583
        %v2691 = vunpack.c.l.b16 %v2584
        %v2692 = vunpack.c.l.b16 %v2585
        %v2693 = vunpack.c.l.b16 %v2586
        %v2694 = vunpack.c.l.b16 %v2587
        %v2695 = vunpack.c.l.b16 %v2588
        %v2696 = vunpack.c.l.b16 %v2589
        %v2697 = vunpack.c.l.b16 %v2590
        %v2698 = vunpack.c.l.b16 %v2591
        %v2699 = vunpack.c.l.b16 %v2592
        %v2700 = vunpack.c.l.b16 %v2593
        %v2701 = vunpack.c.l.b16 %v2594
        %v2702 = vunpack.c.l.b16 %v2595
        %v2703 = vunpack.c.l.b16 %v2596
        %v2704 = vunpack.c.l.b16 %v2597
        %v2705 = vunpack.c.l.b16 %v2598
        %v2706 = vunpack.c.l.b16 %v2599
        %v2707 = vunpack.c.l.b16 %v2600
        %v2708 = vunpack.c.l.b16 %v2601
        %v2709 = vunpack.c.l.b16 %v2602
        %v2710 = vunpack.c.l.b16 %v2603
        %v2711 = vunpack.c.l.b16 %v2604
        %v2712 = vunpack.c.l.b16 %v2605
        %v2713 = vunpack.c.l.b16 %v2606
        %v2714 = vunpack.c.l.b16 %v2607
        %v2715 = vunpack.c.l.b16 %v2608
        %v2716 = vunpack.c.l.b16 %v2609
        %v2717 = vunpack.c.l.b16 %v2610
        %v2718 = vunpack.c.l.b16 %v2611
        %v2719 = vpack.c.b16 %v2688, %v2687
        %v2720 = vpack.c.b16 %v2690, %v2689
        %v2721 = vpack.c.b16 %v2692, %v2691
        %v2722 = vpack.c.b16 %v2694, %v2693
        %v2723 = vpack.c.b16 %v2696, %v2695
        %v2724 = vpack.c.b16 %v2698, %v2697
        %v2725 = vpack.c.b16 %v2700, %v2699
        %v2726 = vpack.c.b16 %v2702, %v2701
        %v2727 = vpack.c.b16 %v2704, %v2703
        %v2728 = vpack.c.b16 %v2706, %v2705
        %v2729 = vpack.c.b16 %v2708, %v2707
        %v2730 = vpack.c.b16 %v2710, %v2709
        %v2731 = vpack.c.b16 %v2712, %v2711
        %v2732 = vpack.c.b16 %v2714, %v2713
        %v2733 = vpack.c.b16 %v2716, %v2715
        %v2734 = vpack.c.b16 %v2718, %v2717
        %2751 = vmatprep.subr.bf16.mxu0 0
        %2752 = vmatpush1.bf16.msra.mxu0 %v2719
        %2753 = vmatprep.subr.bf16.mxu0 0
        %2754 = vmatpush1.bf16.msra.mxu0 %v2720
        %2755 = vmatprep.subr.bf16.mxu0 0
        %2756 = vmatpush1.bf16.msra.mxu0 %v2721
        %2757 = vmatprep.subr.bf16.mxu0 0
        %2758 = vmatpush1.bf16.msra.mxu0 %v2722
        %2759 = vmatprep.subr.bf16.mxu0 0
        %2760 = vmatpush1.bf16.msra.mxu0 %v2723
        %2761 = vmatprep.subr.bf16.mxu0 0
        %2762 = vmatpush1.bf16.msra.mxu0 %v2724
        %2763 = vmatprep.subr.bf16.mxu0 0
        %2764 = vmatpush1.bf16.msra.mxu0 %v2725
        %2765 = vmatprep.subr.bf16.mxu0 0
        %2766 = vmatpush1.bf16.msra.mxu0 %v2726
        %2767 = vmatprep.subr.bf16.mxu0 0
        %2768 = vmatpush1.bf16.msra.mxu0 %v2727
        %2769 = vmatprep.subr.bf16.mxu0 0
        %2770 = vmatpush1.bf16.msra.mxu0 %v2728
        %2771 = vmatprep.subr.bf16.mxu0 0
        %2772 = vmatpush1.bf16.msra.mxu0 %v2729
        %2773 = vmatprep.subr.bf16.mxu0 0
        %2774 = vmatpush1.bf16.msra.mxu0 %v2730
        %2775 = vmatprep.subr.bf16.mxu0 0
        %2776 = vmatpush1.bf16.msra.mxu0 %v2731
        %2777 = vmatprep.subr.bf16.mxu0 0
        %2778 = vmatpush1.bf16.msra.mxu0 %v2732
        %2779 = vmatprep.subr.bf16.mxu0 0
        %2780 = vmatpush1.bf16.msra.mxu0 %v2733
        %2781 = vmatprep.subr.bf16.mxu0 0
        %2782 = vmatpush1.bf16.msra.mxu0 %v2734
        %2783 = vmatprep.mubr.bf16.mxu0 %v2650
        %2784 = vmatmul.mubr.bf16.gmra.mrb[0].mxu0 %v2633
        %v2785 = vpop.f32.mrb[0].mxu0
        %v2786 = vadd.f32 0.0, %v2785
        %v2787 = vpop.f32.mrb[0].mxu0
        %v2788 = vpop.f32.mrb[0].mxu0
        %v2789 = vadd.f32 0.0, %v2788
        %v2790 = vpop.f32.mrb[0].mxu0
        %2791 = vmatprep.mubr.bf16.mxu0 %v2649
        %2792 = vmatmul.mubr.bf16.gmra.mrb[0].mxu0 %v2632
        %v2793 = vpop.f32.mrb[0].mxu0
        %v2794 = vadd.f32 0.0, %v2793
        %v2795 = vpop.f32.mrb[0].mxu0
        %v2796 = vpop.f32.mrb[0].mxu0
        %v2797 = vpop.f32.mrb[0].mxu0
        %2798 = vdwg.mxu0
        %v2799 = vadd.f32 %v2575, %v2786
        %v2800 = vadd.f32 %v2576, %v2789
        %v2801 = vadd.f32 %v2577, %v2794
        %v2802 = vld [vmem:[%s224 + $0x28] sm:$0xff]
        %s2803 = scalar_lea.vmem %s233, 1536 [#allocation5]
        %v2804 = vld [vmem:[%s2803] sm:$0xf]
        %v2805 = vld [vmem:[%s2803 + $0x4] sm:$0xf]
        %v2806 = vld [vmem:[%s2803 + $0x8] sm:$0xf]
        %v2807 = vld [vmem:[%s2803 + $0xc] sm:$0xf]
        %v2808 = vld [vmem:[%s2803 + $0x10] sm:$0xf]
        %v2809 = vld [vmem:[%s2803 + $0x14] sm:$0xf]
        %v2810 = vld [vmem:[%s2803 + $0x18] sm:$0xf]
        %v2811 = vld [vmem:[%s2803 + $0x1c] sm:$0xf]
        %v2812 = vld [vmem:[%s2803 + $0x20] sm:$0xf]
        %v2813 = vld [vmem:[%s2803 + $0x24] sm:$0xf]
        %v2814 = vld [vmem:[%s2803 + $0x28] sm:$0xf]
        %v2815 = vld [vmem:[%s2803 + $0x2c] sm:$0xf]
        %v2816 = vld [vmem:[%s2803 + $0x30] sm:$0xf]
        %v2817 = vld [vmem:[%s2803 + $0x34] sm:$0xf]
        %v2818 = vld [vmem:[%s2803 + $0x38] sm:$0xf]
        %v2819 = vld [vmem:[%s2803 + $0x3c] sm:$0xf]
        %v2820 = vld [vmem:[%s2803 + $0x40] sm:$0xf]
        %v2821 = vld [vmem:[%s2803 + $0x44] sm:$0xf]
        %v2822 = vld [vmem:[%s2803 + $0x48] sm:$0xf]
        %v2823 = vld [vmem:[%s2803 + $0x4c] sm:$0xf]
        %v2824 = vld [vmem:[%s2803 + $0x50] sm:$0xf]
        %v2825 = vld [vmem:[%s2803 + $0x54] sm:$0xf]
        %v2826 = vld [vmem:[%s2803 + $0x58] sm:$0xf]
        %v2827 = vld [vmem:[%s2803 + $0x5c] sm:$0xf]
        %v2828 = vld [vmem:[%s2803 + $0x60] sm:$0xf]
        %v2829 = vld [vmem:[%s2803 + $0x64] sm:$0xf]
        %v2830 = vld [vmem:[%s2803 + $0x68] sm:$0xf]
        %v2831 = vld [vmem:[%s2803 + $0x6c] sm:$0xf]
        %v2832 = vld [vmem:[%s2803 + $0x70] sm:$0xf]
        %v2833 = vld [vmem:[%s2803 + $0x74] sm:$0xf]
        %v2834 = vld [vmem:[%s2803 + $0x78] sm:$0xf]
        %v2835 = vld [vmem:[%s2803 + $0x7c] sm:$0xf]
        %v2837 = vunpack.c.l.b16 %v2802
        %v2838 = vunpack.c.h.b16 %v2802
        %v2839 = vpack.c.b16 %v2193, %v2191
        %v2840 = vpack.c.b16 %v2194, %v2192
        %v2841 = vpack.c.b16 %v2837, %v2837
        %v2842 = vpack.c.b16 %v2838, %v2838
        %v2879 = vunpack.c.l.b16 %v2804
        %v2880 = vunpack.c.l.b16 %v2805
        %v2881 = vunpack.c.l.b16 %v2806
        %v2882 = vunpack.c.l.b16 %v2807
        %v2883 = vunpack.c.l.b16 %v2808
        %v2884 = vunpack.c.l.b16 %v2809
        %v2885 = vunpack.c.l.b16 %v2810
        %v2886 = vunpack.c.l.b16 %v2811
        %v2887 = vunpack.c.l.b16 %v2812
        %v2888 = vunpack.c.l.b16 %v2813
        %v2889 = vunpack.c.l.b16 %v2814
        %v2890 = vunpack.c.l.b16 %v2815
        %v2891 = vunpack.c.l.b16 %v2816
        %v2892 = vunpack.c.l.b16 %v2817
        %v2893 = vunpack.c.l.b16 %v2818
        %v2894 = vunpack.c.l.b16 %v2819
        %v2895 = vunpack.c.l.b16 %v2820
        %v2896 = vunpack.c.l.b16 %v2821
        %v2897 = vunpack.c.l.b16 %v2822
        %v2898 = vunpack.c.l.b16 %v2823
        %v2899 = vunpack.c.l.b16 %v2824
        %v2900 = vunpack.c.l.b16 %v2825
        %v2901 = vunpack.c.l.b16 %v2826
        %v2902 = vunpack.c.l.b16 %v2827
        %v2903 = vunpack.c.l.b16 %v2828
        %v2904 = vunpack.c.l.b16 %v2829
        %v2905 = vunpack.c.l.b16 %v2830
        %v2906 = vunpack.c.l.b16 %v2831
        %v2907 = vunpack.c.l.b16 %v2832
        %v2908 = vunpack.c.l.b16 %v2833
        %v2909 = vunpack.c.l.b16 %v2834
        %v2910 = vunpack.c.l.b16 %v2835
        %v2911 = vpack.c.b16 %v2880, %v2879
        %v2912 = vpack.c.b16 %v2882, %v2881
        %v2913 = vpack.c.b16 %v2884, %v2883
        %v2914 = vpack.c.b16 %v2886, %v2885
        %v2915 = vpack.c.b16 %v2888, %v2887
        %v2916 = vpack.c.b16 %v2890, %v2889
        %v2917 = vpack.c.b16 %v2892, %v2891
        %v2918 = vpack.c.b16 %v2894, %v2893
        %v2919 = vpack.c.b16 %v2896, %v2895
        %v2920 = vpack.c.b16 %v2898, %v2897
        %v2921 = vpack.c.b16 %v2900, %v2899
        %v2922 = vpack.c.b16 %v2902, %v2901
        %v2923 = vpack.c.b16 %v2904, %v2903
        %v2924 = vpack.c.b16 %v2906, %v2905
        %v2925 = vpack.c.b16 %v2908, %v2907
        %v2926 = vpack.c.b16 %v2910, %v2909
        %2943 = vmatprep.subr.bf16.mxu0 0
        %2944 = vmatpush1.bf16.msra.mxu0 %v2911
        %2945 = vmatprep.subr.bf16.mxu0 0
        %2946 = vmatpush1.bf16.msra.mxu0 %v2912
        %2947 = vmatprep.subr.bf16.mxu0 0
        %2948 = vmatpush1.bf16.msra.mxu0 %v2913
        %2949 = vmatprep.subr.bf16.mxu0 0
        %2950 = vmatpush1.bf16.msra.mxu0 %v2914
        %2951 = vmatprep.subr.bf16.mxu0 0
        %2952 = vmatpush1.bf16.msra.mxu0 %v2915
        %2953 = vmatprep.subr.bf16.mxu0 0
        %2954 = vmatpush1.bf16.msra.mxu0 %v2916
        %2955 = vmatprep.subr.bf16.mxu0 0
        %2956 = vmatpush1.bf16.msra.mxu0 %v2917
        %2957 = vmatprep.subr.bf16.mxu0 0
        %2958 = vmatpush1.bf16.msra.mxu0 %v2918
        %2959 = vmatprep.subr.bf16.mxu0 0
        %2960 = vmatpush1.bf16.msra.mxu0 %v2919
        %2961 = vmatprep.subr.bf16.mxu0 0
        %2962 = vmatpush1.bf16.msra.mxu0 %v2920
        %2963 = vmatprep.subr.bf16.mxu0 0
        %2964 = vmatpush1.bf16.msra.mxu0 %v2921
        %2965 = vmatprep.subr.bf16.mxu0 0
        %2966 = vmatpush1.bf16.msra.mxu0 %v2922
        %2967 = vmatprep.subr.bf16.mxu0 0
        %2968 = vmatpush1.bf16.msra.mxu0 %v2923
        %2969 = vmatprep.subr.bf16.mxu0 0
        %2970 = vmatpush1.bf16.msra.mxu0 %v2924
        %2971 = vmatprep.subr.bf16.mxu0 0
        %2972 = vmatpush1.bf16.msra.mxu0 %v2925
        %2973 = vmatprep.subr.bf16.mxu0 0
        %2974 = vmatpush1.bf16.msra.mxu0 %v2926
        %2975 = vmatprep.mubr.bf16.mxu0 %v2840
        %2976 = vmatmul.mubr.bf16.gmra.mrb[0].mxu0 %v2839
        %v2977 = vpop.f32.mrb[0].mxu0
        %v2978 = vadd.f32 0.0, %v2977
        %v2979 = vpop.f32.mrb[0].mxu0
        %v2980 = vpop.f32.mrb[0].mxu0
        %v2981 = vadd.f32 0.0, %v2980
        %v2982 = vpop.f32.mrb[0].mxu0
        %2983 = vmatprep.mubr.bf16.mxu0 %v2842
        %2984 = vmatmul.mubr.bf16.gmra.mrb[0].mxu0 %v2841
        %v2985 = vpop.f32.mrb[0].mxu0
        %v2986 = vadd.f32 0.0, %v2985
        %v2987 = vpop.f32.mrb[0].mxu0
        %v2988 = vpop.f32.mrb[0].mxu0
        %v2989 = vpop.f32.mrb[0].mxu0
        %2990 = vdwg.mxu0
        %v2991 = vadd.f32 %v2799, %v2978
        %v2992 = vadd.f32 %v2800, %v2981
        %v2993 = vadd.f32 %v2801, %v2986
        %v2994 = vld [vmem:[%s224 + $0x18] sm:$0xff]
        %v2995 = vld [vmem:[%s224 + $0x20] sm:$0xff]
        %v2996 = vld [vmem:[%s224 + $0x28] sm:$0xff]
        %v2997 = vld [vmem:[%s224 + $0x30] sm:$0x11]
        %s2998 = scalar_lea.vmem %s233, 1664 [#allocation5]
        %v2999 = vld [vmem:[%s2998] sm:$0xf]
        %v3000 = vld [vmem:[%s2998 + $0x4] sm:$0xf]
        %v3001 = vld [vmem:[%s2998 + $0x8] sm:$0xf]
        %v3002 = vld [vmem:[%s2998 + $0xc] sm:$0xf]
        %v3003 = vld [vmem:[%s2998 + $0x10] sm:$0xf]
        %v3004 = vld [vmem:[%s2998 + $0x14] sm:$0xf]
        %v3005 = vld [vmem:[%s2998 + $0x18] sm:$0xf]
        %v3006 = vld [vmem:[%s2998 + $0x1c] sm:$0xf]
        %v3007 = vld [vmem:[%s2998 + $0x20] sm:$0xf]
        %v3008 = vld [vmem:[%s2998 + $0x24] sm:$0xf]
        %v3009 = vld [vmem:[%s2998 + $0x28] sm:$0xf]
        %v3010 = vld [vmem:[%s2998 + $0x2c] sm:$0xf]
        %v3011 = vld [vmem:[%s2998 + $0x30] sm:$0xf]
        %v3012 = vld [vmem:[%s2998 + $0x34] sm:$0xf]
        %v3013 = vld [vmem:[%s2998 + $0x38] sm:$0xf]
        %v3014 = vld [vmem:[%s2998 + $0x3c] sm:$0xf]
        %v3015 = vld [vmem:[%s2998 + $0x40] sm:$0xf]
        %v3016 = vld [vmem:[%s2998 + $0x44] sm:$0xf]
        %v3017 = vld [vmem:[%s2998 + $0x48] sm:$0xf]
        %v3018 = vld [vmem:[%s2998 + $0x4c] sm:$0xf]
        %v3019 = vld [vmem:[%s2998 + $0x50] sm:$0xf]
        %v3020 = vld [vmem:[%s2998 + $0x54] sm:$0xf]
        %v3021 = vld [vmem:[%s2998 + $0x58] sm:$0xf]
        %v3022 = vld [vmem:[%s2998 + $0x5c] sm:$0xf]
        %v3023 = vld [vmem:[%s2998 + $0x60] sm:$0xf]
        %v3024 = vld [vmem:[%s2998 + $0x64] sm:$0xf]
        %v3025 = vld [vmem:[%s2998 + $0x68] sm:$0xf]
        %v3026 = vld [vmem:[%s2998 + $0x6c] sm:$0xf]
        %v3027 = vld [vmem:[%s2998 + $0x70] sm:$0xf]
        %v3028 = vld [vmem:[%s2998 + $0x74] sm:$0xf]
        %v3029 = vld [vmem:[%s2998 + $0x78] sm:$0xf]
        %v3030 = vld [vmem:[%s2998 + $0x7c] sm:$0xf]
        %v3035 = vunpack.c.l.b16 %v2994
        %v3036 = vunpack.c.h.b16 %v2994
        %v3037 = vunpack.c.l.b16 %v2995
        %v3038 = vunpack.c.h.b16 %v2995
        %v3039 = vunpack.c.l.b16 %v2996
        %v3040 = vunpack.c.h.b16 %v2996
        %v3041 = vunpack.c.l.b16 %v2997
        %v3042 = vunpack.c.h.b16 %v2997
        %v3043 = vpack.c.b16 %v3037, %v3035
        %v3044 = vpack.c.b16 %v3038, %v3036
        %v3045 = vpack.c.b16 %v3041, %v3039
        %v3046 = vpack.c.b16 %v3042, %v3040
        %v3048 = vshrl.u32 %v3043, 16
        %v3050 = vshll.u32 %v3043, 16
        %v3052 = vrot.slane %v3050, 1
        %v3053 = vor.u32 %v3048, %v3052
        %v3055 = vshll.u32 %v3045, 16
        %v3057 = vrot.slane %v3055, 1
        %v3058 = vsel %vm359, %v3053, %v3057
        %v3060 = vshrl.u32 %v3044, 16
        %v3062 = vshll.u32 %v3044, 16
        %v3064 = vrot.slane %v3062, 1
        %v3065 = vor.u32 %v3060, %v3064
        %v3067 = vshll.u32 %v3046, 16
        %v3069 = vrot.slane %v3067, 1
        %v3070 = vsel %vm359, %v3065, %v3069
        %v3071 = vshrl.u32 %v3045, 16
        %v3073 = vor.u32 %v3071, %v3057
        %v3074 = vshrl.u32 %v3046, 16
        %v3076 = vor.u32 %v3074, %v3069
        %v3113 = vunpack.c.l.b16 %v2999
        %v3114 = vunpack.c.l.b16 %v3000
        %v3115 = vunpack.c.l.b16 %v3001
        %v3116 = vunpack.c.l.b16 %v3002
        %v3117 = vunpack.c.l.b16 %v3003
        %v3118 = vunpack.c.l.b16 %v3004
        %v3119 = vunpack.c.l.b16 %v3005
        %v3120 = vunpack.c.l.b16 %v3006
        %v3121 = vunpack.c.l.b16 %v3007
        %v3122 = vunpack.c.l.b16 %v3008
        %v3123 = vunpack.c.l.b16 %v3009
        %v3124 = vunpack.c.l.b16 %v3010
        %v3125 = vunpack.c.l.b16 %v3011
        %v3126 = vunpack.c.l.b16 %v3012
        %v3127 = vunpack.c.l.b16 %v3013
        %v3128 = vunpack.c.l.b16 %v3014
        %v3129 = vunpack.c.l.b16 %v3015
        %v3130 = vunpack.c.l.b16 %v3016
        %v3131 = vunpack.c.l.b16 %v3017
        %v3132 = vunpack.c.l.b16 %v3018
        %v3133 = vunpack.c.l.b16 %v3019
        %v3134 = vunpack.c.l.b16 %v3020
        %v3135 = vunpack.c.l.b16 %v3021
        %v3136 = vunpack.c.l.b16 %v3022
        %v3137 = vunpack.c.l.b16 %v3023
        %v3138 = vunpack.c.l.b16 %v3024
        %v3139 = vunpack.c.l.b16 %v3025
        %v3140 = vunpack.c.l.b16 %v3026
        %v3141 = vunpack.c.l.b16 %v3027
        %v3142 = vunpack.c.l.b16 %v3028
        %v3143 = vunpack.c.l.b16 %v3029
        %v3144 = vunpack.c.l.b16 %v3030
        %v3145 = vpack.c.b16 %v3114, %v3113
        %v3146 = vpack.c.b16 %v3116, %v3115
        %v3147 = vpack.c.b16 %v3118, %v3117
        %v3148 = vpack.c.b16 %v3120, %v3119
        %v3149 = vpack.c.b16 %v3122, %v3121
        %v3150 = vpack.c.b16 %v3124, %v3123
        %v3151 = vpack.c.b16 %v3126, %v3125
        %v3152 = vpack.c.b16 %v3128, %v3127
        %v3153 = vpack.c.b16 %v3130, %v3129
        %v3154 = vpack.c.b16 %v3132, %v3131
        %v3155 = vpack.c.b16 %v3134, %v3133
        %v3156 = vpack.c.b16 %v3136, %v3135
        %v3157 = vpack.c.b16 %v3138, %v3137
        %v3158 = vpack.c.b16 %v3140, %v3139
        %v3159 = vpack.c.b16 %v3142, %v3141
        %v3160 = vpack.c.b16 %v3144, %v3143
        %3177 = vmatprep.subr.bf16.mxu0 0
        %3178 = vmatpush1.bf16.msra.mxu0 %v3145
        %3179 = vmatprep.subr.bf16.mxu0 0
        %3180 = vmatpush1.bf16.msra.mxu0 %v3146
        %3181 = vmatprep.subr.bf16.mxu0 0
        %3182 = vmatpush1.bf16.msra.mxu0 %v3147
        %3183 = vmatprep.subr.bf16.mxu0 0
        %3184 = vmatpush1.bf16.msra.mxu0 %v3148
        %3185 = vmatprep.subr.bf16.mxu0 0
        %3186 = vmatpush1.bf16.msra.mxu0 %v3149
        %3187 = vmatprep.subr.bf16.mxu0 0
        %3188 = vmatpush1.bf16.msra.mxu0 %v3150
        %3189 = vmatprep.subr.bf16.mxu0 0
        %3190 = vmatpush1.bf16.msra.mxu0 %v3151
        %3191 = vmatprep.subr.bf16.mxu0 0
        %3192 = vmatpush1.bf16.msra.mxu0 %v3152
        %3193 = vmatprep.subr.bf16.mxu0 0
        %3194 = vmatpush1.bf16.msra.mxu0 %v3153
        %3195 = vmatprep.subr.bf16.mxu0 0
        %3196 = vmatpush1.bf16.msra.mxu0 %v3154
        %3197 = vmatprep.subr.bf16.mxu0 0
        %3198 = vmatpush1.bf16.msra.mxu0 %v3155
        %3199 = vmatprep.subr.bf16.mxu0 0
        %3200 = vmatpush1.bf16.msra.mxu0 %v3156
        %3201 = vmatprep.subr.bf16.mxu0 0
        %3202 = vmatpush1.bf16.msra.mxu0 %v3157
        %3203 = vmatprep.subr.bf16.mxu0 0
        %3204 = vmatpush1.bf16.msra.mxu0 %v3158
        %3205 = vmatprep.subr.bf16.mxu0 0
        %3206 = vmatpush1.bf16.msra.mxu0 %v3159
        %3207 = vmatprep.subr.bf16.mxu0 0
        %3208 = vmatpush1.bf16.msra.mxu0 %v3160
        %3209 = vmatprep.mubr.bf16.mxu0 %v3070
        %3210 = vmatmul.mubr.bf16.gmra.mrb[0].mxu0 %v3058
        %v3211 = vpop.f32.mrb[0].mxu0
        %v3212 = vadd.f32 0.0, %v3211
        %v3213 = vpop.f32.mrb[0].mxu0
        %v3214 = vpop.f32.mrb[0].mxu0
        %v3215 = vadd.f32 0.0, %v3214
        %v3216 = vpop.f32.mrb[0].mxu0
        %3217 = vmatprep.mubr.bf16.mxu0 %v3076
        %3218 = vmatmul.mubr.bf16.gmra.mrb[0].mxu0 %v3073
        %v3219 = vpop.f32.mrb[0].mxu0
        %v3220 = vadd.f32 0.0, %v3219
        %v3221 = vpop.f32.mrb[0].mxu0
        %v3222 = vpop.f32.mrb[0].mxu0
        %v3223 = vpop.f32.mrb[0].mxu0
        %3224 = vdwg.mxu0
        %v3225 = vadd.f32 %v2991, %v3212
        %v3226 = vadd.f32 %v2992, %v3215
        %v3227 = vadd.f32 %v2993, %v3220
        %v3228 = vld [vmem:[%s224 + $0x18] sm:$0xee]
        %s3229 = scalar_lea.vmem %s233, 1792 [#allocation5]
        %v3230 = vld [vmem:[%s3229] sm:$0xf]
        %v3231 = vld [vmem:[%s3229 + $0x4] sm:$0xf]
        %v3232 = vld [vmem:[%s3229 + $0x8] sm:$0xf]
        %v3233 = vld [vmem:[%s3229 + $0xc] sm:$0xf]
        %v3234 = vld [vmem:[%s3229 + $0x10] sm:$0xf]
        %v3235 = vld [vmem:[%s3229 + $0x14] sm:$0xf]
        %v3236 = vld [vmem:[%s3229 + $0x18] sm:$0xf]
        %v3237 = vld [vmem:[%s3229 + $0x1c] sm:$0xf]
        %v3238 = vld [vmem:[%s3229 + $0x20] sm:$0xf]
        %v3239 = vld [vmem:[%s3229 + $0x24] sm:$0xf]
        %v3240 = vld [vmem:[%s3229 + $0x28] sm:$0xf]
        %v3241 = vld [vmem:[%s3229 + $0x2c] sm:$0xf]
        %v3242 = vld [vmem:[%s3229 + $0x30] sm:$0xf]
        %v3243 = vld [vmem:[%s3229 + $0x34] sm:$0xf]
        %v3244 = vld [vmem:[%s3229 + $0x38] sm:$0xf]
        %v3245 = vld [vmem:[%s3229 + $0x3c] sm:$0xf]
        %v3246 = vld [vmem:[%s3229 + $0x40] sm:$0xf]
        %v3247 = vld [vmem:[%s3229 + $0x44] sm:$0xf]
        %v3248 = vld [vmem:[%s3229 + $0x48] sm:$0xf]
        %v3249 = vld [vmem:[%s3229 + $0x4c] sm:$0xf]
        %v3250 = vld [vmem:[%s3229 + $0x50] sm:$0xf]
        %v3251 = vld [vmem:[%s3229 + $0x54] sm:$0xf]
        %v3252 = vld [vmem:[%s3229 + $0x58] sm:$0xf]
        %v3253 = vld [vmem:[%s3229 + $0x5c] sm:$0xf]
        %v3254 = vld [vmem:[%s3229 + $0x60] sm:$0xf]
        %v3255 = vld [vmem:[%s3229 + $0x64] sm:$0xf]
        %v3256 = vld [vmem:[%s3229 + $0x68] sm:$0xf]
        %v3257 = vld [vmem:[%s3229 + $0x6c] sm:$0xf]
        %v3258 = vld [vmem:[%s3229 + $0x70] sm:$0xf]
        %v3259 = vld [vmem:[%s3229 + $0x74] sm:$0xf]
        %v3260 = vld [vmem:[%s3229 + $0x78] sm:$0xf]
        %v3261 = vld [vmem:[%s3229 + $0x7c] sm:$0xf]
        %v3263 = vunpack.c.l.b16 %v3228
        %v3264 = vunpack.c.h.b16 %v3228
        %v3265 = vpack.c.b16 %v3037, %v3263
        %v3266 = vpack.c.b16 %v3038, %v3264
        %v3267 = vrot.slane %v3265, 1
        %v3268 = vrot.slane %v3045, 1
        %v3269 = vsel %vm727, %v3267, %v3268
        %v3270 = vrot.slane %v3266, 1
        %v3271 = vrot.slane %v3046, 1
        %v3272 = vsel %vm727, %v3270, %v3271
        %v3309 = vunpack.c.l.b16 %v3230
        %v3310 = vunpack.c.l.b16 %v3231
        %v3311 = vunpack.c.l.b16 %v3232
        %v3312 = vunpack.c.l.b16 %v3233
        %v3313 = vunpack.c.l.b16 %v3234
        %v3314 = vunpack.c.l.b16 %v3235
        %v3315 = vunpack.c.l.b16 %v3236
        %v3316 = vunpack.c.l.b16 %v3237
        %v3317 = vunpack.c.l.b16 %v3238
        %v3318 = vunpack.c.l.b16 %v3239
        %v3319 = vunpack.c.l.b16 %v3240
        %v3320 = vunpack.c.l.b16 %v3241
        %v3321 = vunpack.c.l.b16 %v3242
        %v3322 = vunpack.c.l.b16 %v3243
        %v3323 = vunpack.c.l.b16 %v3244
        %v3324 = vunpack.c.l.b16 %v3245
        %v3325 = vunpack.c.l.b16 %v3246
        %v3326 = vunpack.c.l.b16 %v3247
        %v3327 = vunpack.c.l.b16 %v3248
        %v3328 = vunpack.c.l.b16 %v3249
        %v3329 = vunpack.c.l.b16 %v3250
        %v3330 = vunpack.c.l.b16 %v3251
        %v3331 = vunpack.c.l.b16 %v3252
        %v3332 = vunpack.c.l.b16 %v3253
        %v3333 = vunpack.c.l.b16 %v3254
        %v3334 = vunpack.c.l.b16 %v3255
        %v3335 = vunpack.c.l.b16 %v3256
        %v3336 = vunpack.c.l.b16 %v3257
        %v3337 = vunpack.c.l.b16 %v3258
        %v3338 = vunpack.c.l.b16 %v3259
        %v3339 = vunpack.c.l.b16 %v3260
        %v3340 = vunpack.c.l.b16 %v3261
        %v3341 = vpack.c.b16 %v3310, %v3309
        %v3342 = vpack.c.b16 %v3312, %v3311
        %v3343 = vpack.c.b16 %v3314, %v3313
        %v3344 = vpack.c.b16 %v3316, %v3315
        %v3345 = vpack.c.b16 %v3318, %v3317
        %v3346 = vpack.c.b16 %v3320, %v3319
        %v3347 = vpack.c.b16 %v3322, %v3321
        %v3348 = vpack.c.b16 %v3324, %v3323
        %v3349 = vpack.c.b16 %v3326, %v3325
        %v3350 = vpack.c.b16 %v3328, %v3327
        %v3351 = vpack.c.b16 %v3330, %v3329
        %v3352 = vpack.c.b16 %v3332, %v3331
        %v3353 = vpack.c.b16 %v3334, %v3333
        %v3354 = vpack.c.b16 %v3336, %v3335
        %v3355 = vpack.c.b16 %v3338, %v3337
        %v3356 = vpack.c.b16 %v3340, %v3339
        %3373 = vmatprep.subr.bf16.mxu0 0
        %3374 = vmatpush1.bf16.msra.mxu0 %v3341
        %3375 = vmatprep.subr.bf16.mxu0 0
        %3376 = vmatpush1.bf16.msra.mxu0 %v3342
        %3377 = vmatprep.subr.bf16.mxu0 0
        %3378 = vmatpush1.bf16.msra.mxu0 %v3343
        %3379 = vmatprep.subr.bf16.mxu0 0
        %3380 = vmatpush1.bf16.msra.mxu0 %v3344
        %3381 = vmatprep.subr.bf16.mxu0 0
        %3382 = vmatpush1.bf16.msra.mxu0 %v3345
        %3383 = vmatprep.subr.bf16.mxu0 0
        %3384 = vmatpush1.bf16.msra.mxu0 %v3346
        %3385 = vmatprep.subr.bf16.mxu0 0
        %3386 = vmatpush1.bf16.msra.mxu0 %v3347
        %3387 = vmatprep.subr.bf16.mxu0 0
        %3388 = vmatpush1.bf16.msra.mxu0 %v3348
        %3389 = vmatprep.subr.bf16.mxu0 0
        %3390 = vmatpush1.bf16.msra.mxu0 %v3349
        %3391 = vmatprep.subr.bf16.mxu0 0
        %3392 = vmatpush1.bf16.msra.mxu0 %v3350
        %3393 = vmatprep.subr.bf16.mxu0 0
        %3394 = vmatpush1.bf16.msra.mxu0 %v3351
        %3395 = vmatprep.subr.bf16.mxu0 0
        %3396 = vmatpush1.bf16.msra.mxu0 %v3352
        %3397 = vmatprep.subr.bf16.mxu0 0
        %3398 = vmatpush1.bf16.msra.mxu0 %v3353
        %3399 = vmatprep.subr.bf16.mxu0 0
        %3400 = vmatpush1.bf16.msra.mxu0 %v3354
        %3401 = vmatprep.subr.bf16.mxu0 0
        %3402 = vmatpush1.bf16.msra.mxu0 %v3355
        %3403 = vmatprep.subr.bf16.mxu0 0
        %3404 = vmatpush1.bf16.msra.mxu0 %v3356
        %3405 = vmatprep.mubr.bf16.mxu0 %v3272
        %3406 = vmatmul.mubr.bf16.gmra.mrb[0].mxu0 %v3269
        %v3407 = vpop.f32.mrb[0].mxu0
        %v3408 = vadd.f32 0.0, %v3407
        %v3409 = vpop.f32.mrb[0].mxu0
        %v3410 = vpop.f32.mrb[0].mxu0
        %v3411 = vadd.f32 0.0, %v3410
        %v3412 = vpop.f32.mrb[0].mxu0
        %3413 = vmatprep.mubr.bf16.mxu0 %v3271
        %3414 = vmatmul.mubr.bf16.gmra.mrb[0].mxu0 %v3268
        %v3415 = vpop.f32.mrb[0].mxu0
        %v3416 = vadd.f32 0.0, %v3415
        %v3417 = vpop.f32.mrb[0].mxu0
        %v3418 = vpop.f32.mrb[0].mxu0
        %v3419 = vpop.f32.mrb[0].mxu0
        %3420 = vdwg.mxu0
        %v3421 = vadd.f32 %v3225, %v3408
        %v3422 = vadd.f32 %v3226, %v3411
        %v3423 = vadd.f32 %v3227, %v3416
        %v3424 = vld [vmem:[%s224 + $0x30] sm:$0x33]
        %s3425 = scalar_lea.vmem %s233, 1920 [#allocation5]
        %v3426 = vld [vmem:[%s3425] sm:$0xf]
        %v3427 = vld [vmem:[%s3425 + $0x4] sm:$0xf]
        %v3428 = vld [vmem:[%s3425 + $0x8] sm:$0xf]
        %v3429 = vld [vmem:[%s3425 + $0xc] sm:$0xf]
        %v3430 = vld [vmem:[%s3425 + $0x10] sm:$0xf]
        %v3431 = vld [vmem:[%s3425 + $0x14] sm:$0xf]
        %v3432 = vld [vmem:[%s3425 + $0x18] sm:$0xf]
        %v3433 = vld [vmem:[%s3425 + $0x1c] sm:$0xf]
        %v3434 = vld [vmem:[%s3425 + $0x20] sm:$0xf]
        %v3435 = vld [vmem:[%s3425 + $0x24] sm:$0xf]
        %v3436 = vld [vmem:[%s3425 + $0x28] sm:$0xf]
        %v3437 = vld [vmem:[%s3425 + $0x2c] sm:$0xf]
        %v3438 = vld [vmem:[%s3425 + $0x30] sm:$0xf]
        %v3439 = vld [vmem:[%s3425 + $0x34] sm:$0xf]
        %v3440 = vld [vmem:[%s3425 + $0x38] sm:$0xf]
        %v3441 = vld [vmem:[%s3425 + $0x3c] sm:$0xf]
        %v3442 = vld [vmem:[%s3425 + $0x40] sm:$0xf]
        %v3443 = vld [vmem:[%s3425 + $0x44] sm:$0xf]
        %v3444 = vld [vmem:[%s3425 + $0x48] sm:$0xf]
        %v3445 = vld [vmem:[%s3425 + $0x4c] sm:$0xf]
        %v3446 = vld [vmem:[%s3425 + $0x50] sm:$0xf]
        %v3447 = vld [vmem:[%s3425 + $0x54] sm:$0xf]
        %v3448 = vld [vmem:[%s3425 + $0x58] sm:$0xf]
        %v3449 = vld [vmem:[%s3425 + $0x5c] sm:$0xf]
        %v3450 = vld [vmem:[%s3425 + $0x60] sm:$0xf]
        %v3451 = vld [vmem:[%s3425 + $0x64] sm:$0xf]
        %v3452 = vld [vmem:[%s3425 + $0x68] sm:$0xf]
        %v3453 = vld [vmem:[%s3425 + $0x6c] sm:$0xf]
        %v3454 = vld [vmem:[%s3425 + $0x70] sm:$0xf]
        %v3455 = vld [vmem:[%s3425 + $0x74] sm:$0xf]
        %v3456 = vld [vmem:[%s3425 + $0x78] sm:$0xf]
        %v3457 = vld [vmem:[%s3425 + $0x7c] sm:$0xf]
        %v3459 = vunpack.c.l.b16 %v3424
        %v3460 = vunpack.c.h.b16 %v3424
        %v3461 = vpack.c.b16 %v3459, %v3039
        %v3462 = vpack.c.b16 %v3460, %v3040
        %v3464 = vshrl.u32 %v3265, 16
        %v3466 = vrot.slane %v3464, 1
        %v3467 = vshll.u32 %v3265, 16
        %v3469 = vrot.slane %v3467, 2
        %v3470 = vor.u32 %v3466, %v3469
        %v3472 = vshrl.u32 %v3461, 16
        %v3474 = vrot.slane %v3472, 1
        %v3475 = vshll.u32 %v3461, 16
        %v3477 = vrot.slane %v3475, 2
        %v3478 = vor.u32 %v3474, %v3477
        %v3479 = vsel %vm924, %v3470, %v3478
        %v3481 = vshrl.u32 %v3266, 16
        %v3483 = vrot.slane %v3481, 1
        %v3484 = vshll.u32 %v3266, 16
        %v3486 = vrot.slane %v3484, 2
        %v3487 = vor.u32 %v3483, %v3486
        %v3489 = vshrl.u32 %v3462, 16
        %v3491 = vrot.slane %v3489, 1
        %v3492 = vshll.u32 %v3462, 16
        %v3494 = vrot.slane %v3492, 2
        %v3495 = vor.u32 %v3491, %v3494
        %v3496 = vsel %vm924, %v3487, %v3495
        %v3533 = vunpack.c.l.b16 %v3426
        %v3534 = vunpack.c.l.b16 %v3427
        %v3535 = vunpack.c.l.b16 %v3428
        %v3536 = vunpack.c.l.b16 %v3429
        %v3537 = vunpack.c.l.b16 %v3430
        %v3538 = vunpack.c.l.b16 %v3431
        %v3539 = vunpack.c.l.b16 %v3432
        %v3540 = vunpack.c.l.b16 %v3433
        %v3541 = vunpack.c.l.b16 %v3434
        %v3542 = vunpack.c.l.b16 %v3435
        %v3543 = vunpack.c.l.b16 %v3436
        %v3544 = vunpack.c.l.b16 %v3437
        %v3545 = vunpack.c.l.b16 %v3438
        %v3546 = vunpack.c.l.b16 %v3439
        %v3547 = vunpack.c.l.b16 %v3440
        %v3548 = vunpack.c.l.b16 %v3441
        %v3549 = vunpack.c.l.b16 %v3442
        %v3550 = vunpack.c.l.b16 %v3443
        %v3551 = vunpack.c.l.b16 %v3444
        %v3552 = vunpack.c.l.b16 %v3445
        %v3553 = vunpack.c.l.b16 %v3446
        %v3554 = vunpack.c.l.b16 %v3447
        %v3555 = vunpack.c.l.b16 %v3448
        %v3556 = vunpack.c.l.b16 %v3449
        %v3557 = vunpack.c.l.b16 %v3450
        %v3558 = vunpack.c.l.b16 %v3451
        %v3559 = vunpack.c.l.b16 %v3452
        %v3560 = vunpack.c.l.b16 %v3453
        %v3561 = vunpack.c.l.b16 %v3454
        %v3562 = vunpack.c.l.b16 %v3455
        %v3563 = vunpack.c.l.b16 %v3456
        %v3564 = vunpack.c.l.b16 %v3457
        %v3565 = vpack.c.b16 %v3534, %v3533
        %v3566 = vpack.c.b16 %v3536, %v3535
        %v3567 = vpack.c.b16 %v3538, %v3537
        %v3568 = vpack.c.b16 %v3540, %v3539
        %v3569 = vpack.c.b16 %v3542, %v3541
        %v3570 = vpack.c.b16 %v3544, %v3543
        %v3571 = vpack.c.b16 %v3546, %v3545
        %v3572 = vpack.c.b16 %v3548, %v3547
        %v3573 = vpack.c.b16 %v3550, %v3549
        %v3574 = vpack.c.b16 %v3552, %v3551
        %v3575 = vpack.c.b16 %v3554, %v3553
        %v3576 = vpack.c.b16 %v3556, %v3555
        %v3577 = vpack.c.b16 %v3558, %v3557
        %v3578 = vpack.c.b16 %v3560, %v3559
        %v3579 = vpack.c.b16 %v3562, %v3561
        %v3580 = vpack.c.b16 %v3564, %v3563
        %3597 = vmatprep.subr.bf16.mxu0 0
        %3598 = vmatpush1.bf16.msra.mxu0 %v3565
        %3599 = vmatprep.subr.bf16.mxu0 0
        %3600 = vmatpush1.bf16.msra.mxu0 %v3566
        %3601 = vmatprep.subr.bf16.mxu0 0
        %3602 = vmatpush1.bf16.msra.mxu0 %v3567
        %3603 = vmatprep.subr.bf16.mxu0 0
        %3604 = vmatpush1.bf16.msra.mxu0 %v3568
        %3605 = vmatprep.subr.bf16.mxu0 0
        %3606 = vmatpush1.bf16.msra.mxu0 %v3569
        %3607 = vmatprep.subr.bf16.mxu0 0
        %3608 = vmatpush1.bf16.msra.mxu0 %v3570
        %3609 = vmatprep.subr.bf16.mxu0 0
        %3610 = vmatpush1.bf16.msra.mxu0 %v3571
        %3611 = vmatprep.subr.bf16.mxu0 0
        %3612 = vmatpush1.bf16.msra.mxu0 %v3572
        %3613 = vmatprep.subr.bf16.mxu0 0
        %3614 = vmatpush1.bf16.msra.mxu0 %v3573
        %3615 = vmatprep.subr.bf16.mxu0 0
        %3616 = vmatpush1.bf16.msra.mxu0 %v3574
        %3617 = vmatprep.subr.bf16.mxu0 0
        %3618 = vmatpush1.bf16.msra.mxu0 %v3575
        %3619 = vmatprep.subr.bf16.mxu0 0
        %3620 = vmatpush1.bf16.msra.mxu0 %v3576
        %3621 = vmatprep.subr.bf16.mxu0 0
        %3622 = vmatpush1.bf16.msra.mxu0 %v3577
        %3623 = vmatprep.subr.bf16.mxu0 0
        %3624 = vmatpush1.bf16.msra.mxu0 %v3578
        %3625 = vmatprep.subr.bf16.mxu0 0
        %3626 = vmatpush1.bf16.msra.mxu0 %v3579
        %3627 = vmatprep.subr.bf16.mxu0 0
        %3628 = vmatpush1.bf16.msra.mxu0 %v3580
        %3629 = vmatprep.mubr.bf16.mxu0 %v3496
        %3630 = vmatmul.mubr.bf16.gmra.mrb[0].mxu0 %v3479
        %v3631 = vpop.f32.mrb[0].mxu0
        %v3632 = vadd.f32 0.0, %v3631
        %v3633 = vpop.f32.mrb[0].mxu0
        %v3634 = vpop.f32.mrb[0].mxu0
        %v3635 = vadd.f32 0.0, %v3634
        %v3636 = vpop.f32.mrb[0].mxu0
        %3637 = vmatprep.mubr.bf16.mxu0 %v3495
        %3638 = vmatmul.mubr.bf16.gmra.mrb[0].mxu0 %v3478
        %v3639 = vpop.f32.mrb[0].mxu0
        %v3640 = vadd.f32 0.0, %v3639
        %v3641 = vpop.f32.mrb[0].mxu0
        %v3642 = vpop.f32.mrb[0].mxu0
        %v3643 = vpop.f32.mrb[0].mxu0
        %3644 = vdwg.mxu0
        %v3645 = vadd.f32 %v3421, %v3632
        %v3646 = vadd.f32 %v3422, %v3635
        %v3647 = vadd.f32 %v3423, %v3640
        %v3648 = vld [vmem:[%s241] sm:$0x1]
        %v3650 = vlaneseq
        %v3651 = vshrl.u32 %v3650, 7
        %v3652 = vsub.s32 0, %v3651
        %v3653 = vrot.slane %v3648, %v3652
        %v3655 = vadd.f32 %v3645, %v3653
        %v3656 = vadd.f32 %v3646, %v3653
        %v3657 = vadd.f32 %v3647, %v3653
        %v3658 = vlaneseq
        %v3659 = vshrl.u32 %v3658, 7
        %v3660 = vadd.s32 %v3659, 8
        %v3661 = vadd.s32 %v3659, 16
        %vm3662 = vcmp.lt.s32.totalorder %v3659, 0
        %v3663 = vsub.s32 0, %v3659
        %v3664 = vsel %vm3662, %v3663, %v3659
        %v3665 = vshrl.u32 %v3664, 3
        %v3666 = vand.u32 %v3664, 7
        %v3667 = vsub.s32 0, %v3666
        %v3668 = vsel %vm3662, %v3667, %v3666
        %vm3669 = vcmp.lt.s32.totalorder %v3660, 0
        %v3670 = vsub.s32 0, %v3660
        %v3671 = vsel %vm3669, %v3670, %v3660
        %v3672 = vshrl.u32 %v3671, 3
        %v3673 = vand.u32 %v3671, 7
        %v3674 = vsub.s32 0, %v3673
        %v3675 = vsel %vm3669, %v3674, %v3673
        %vm3676 = vcmp.lt.s32.totalorder %v3661, 0
        %v3677 = vsub.s32 0, %v3661
        %v3678 = vsel %vm3676, %v3677, %v3661
        %v3679 = vshrl.u32 %v3678, 3
        %v3680 = vand.u32 %v3678, 7
        %v3681 = vsub.s32 0, %v3680
        %v3682 = vsel %vm3676, %v3681, %v3680
        %vm3683 = vcmp.ne.s32.totalorder %v3668, 0
        %vm3684 = vcmp.ne.s32.totalorder %v3675, 0
        %vm3685 = vcmp.ne.s32.totalorder %v3682, 0
        %vm3686 = vcmp.lt.s32.totalorder %v3668, 0
        %vm3687 = vcmp.lt.s32.totalorder %v3675, 0
        %vm3688 = vcmp.lt.s32.totalorder %v3682, 0
        %vm3689 = vmand %vm3686, %vm3683
        %vm3690 = vmand %vm3687, %vm3684
        %vm3691 = vmand %vm3688, %vm3685
        %v3692 = vadd.s32 %v3668, 8
        %v3693 = vadd.s32 %v3675, 8
        %v3694 = vadd.s32 %v3682, 8
        %v3695 = vsel %vm3689, %v3692, %v3668
        %v3696 = vsel %vm3690, %v3693, %v3675
        %v3697 = vsel %vm3691, %v3694, %v3682
        %vm3698 = vcmp.lt.s32.totalorder %v3695, 3
        %vm3699 = vcmp.lt.s32.totalorder %v3696, 3
        %vm3700 = vcmp.lt.s32.totalorder %v3697, 3
        %v3701 = vsel %vm3698, 1, 0
        %v3702 = vsel %vm3699, 1, 0
        %v3703 = vsel %vm3700, 1, 0
        %v3704 = vcvt.s32.f32 %v3701
        %v3705 = vcvt.s32.f32 %v3702
        %v3706 = vcvt.s32.f32 %v3703
        %v3707 = vmul.f32 %v3655, %v3704
        %v3708 = vmul.f32 %v3656, %v3705
        %v3709 = vmul.f32 %v3657, %v3706
        %v3710 = vadd.f32 %v3707, %v3708
        %v3711 = vadd.f32 %v3710, %v3709
        %v3712 = vrot.slane %v3711, 4
        %v3713 = vadd.f32 %v3711, %v3712
        %v3714 = vrot.slane %v3713, 2
        %v3715 = vadd.f32 %v3713, %v3714
        %v3716 = vrot.slane %v3715, 1
        %v3717 = vadd.f32 %v3715, %v3716
        %v3718 = vmul.f32 %v3717, 0.11111111
        %v3719 = vsub.f32 %v3655, %v3718
        %v3720 = vsub.f32 %v3656, %v3718
        %v3721 = vsub.f32 %v3657, %v3718
        %v3722 = vmul.f32 %v3719, %v3704
        %v3723 = vmul.f32 %v3720, %v3705
        %v3724 = vmul.f32 %v3721, %v3706
        %v3725 = vmul.f32 %v3722, %v3722
        %v3726 = vmul.f32 %v3723, %v3723
        %v3727 = vmul.f32 %v3724, %v3724
        %v3728 = vadd.f32 %v3725, %v3726
        %v3729 = vadd.f32 %v3728, %v3727
        %v3730 = vrot.slane %v3729, 4
        %v3731 = vadd.f32 %v3729, %v3730
        %v3732 = vrot.slane %v3731, 2
        %v3733 = vadd.f32 %v3731, %v3732
        %v3734 = vrot.slane %v3733, 1
        %v3735 = vadd.f32 %v3733, %v3734
        %v3736 = vmul.f32 %v3735, 0.11111111
        %v3737 = vadd.f32 %v3736, 1e-05
        %v3738 = vrsqrt.pop %v3737
        %v3739 = vmul.f32 %v3719, %v3738
        %v3740 = vmul.f32 %v3720, %v3738
        %v3741 = vmul.f32 %v3721, %v3738
        %vm3742 = vcmp.gt.f32.partialorder %v3739, 0.0
        %vm3743 = vcmp.gt.f32.partialorder %v3740, 0.0
        %vm3744 = vcmp.gt.f32.partialorder %v3741, 0.0
        %v3745 = vmul.f32 %v3739, 0.2
        %v3746 = vmul.f32 %v3740, 0.2
        %v3747 = vmul.f32 %v3741, 0.2
        %v3748 = vsel %vm3742, %v3739, %v3745
        %v3749 = vsel %vm3743, %v3740, %v3746
        %v3750 = vsel %vm3744, %v3741, %v3747
        %v3751 = vpack.c.bf16 %v3749, %v3748
        %v3752 = vpack.c.bf16 %v3750, %v3750
        %v3755 = vunpack.c.l.b16 %v3751
        %v3756 = vunpack.c.h.b16 %v3751
        %v3757 = vunpack.c.l.b16 %v3752
        %v3758 = vpack.c.b16 %v3755, %v3755
        %v3759 = vpack.c.b16 %v3756, %v3756
        %v3760 = vpack.c.b16 %v3757, %v3757
        %3764 = vst [vmem:[%s272] sm:$0xf] %v3758
        %3765 = vst [vmem:[%s272 + $0x4] sm:$0xf] %v3759
        %3766 = vst [vmem:[%s272 + $0x8] sm:$0xf] %v3760
        %s3767 = sand.u32 %s123, 1
        %s3768 = scalar_lea.sflag [#allocation4], %s3767
        %s3769 = sand.u32 %s123, 1
        %s3770 = smul.addr %s3769, 12
        %s3771 = scalar_lea.vmem [#allocation8], %s3770
        // Predicated region
        $region45: #{_lambda_.8} parent=31 // pred_check
          %p3772 = pneg %p133
        $region46: #{_lambda_.8} parent=31 // pred_check_branch
          %3774 = sbr.rel (%p3772) target = $region48
        $region47: #{_lambda_.8} parent=31 // pred_region
          %s3776 = ssub.s32 192, 192
          %3777 = vsyncadd %s3768, %s3776
          %s3778 = smul.addr %s27, 12
          %s3779 = sadd.s32 %s28, %s3778
          %s3780 = smul.addr %s3779, 64
          %s3781 = scalar_lea.hbm %s3, %s3780
          %s3782 = sshll.u32 %s3771, 4
          %s3783 = int_to_ptr.vmem [resolvable:$true] %s3782
          %3788 = dma.vmem_to_hbm [thread:$0]  %s3783, 192, %s3781, %s3768, 64, 256, 4
        $region48: #{_lambda_.8} parent=31 // pred_fallthru
          _
      $region32: #{_lambda_.8} parent=5 // pred_fallthru
        _
      %p3789 = scmp.le.s32.totalorder 2, %s18
      // Predicated region
      $region49: #{_lambda_.8} parent=5 // pred_check
        %p3790 = pneg %p3789
      $region50: #{_lambda_.8} parent=5 // pred_check_branch
        %3792 = sbr.rel (%p3790) target = $region52
      $region51: #{_lambda_.8} parent=5 // pred_region
        %s3793 = ssub.s32 %s18, 2
        // Predicated region
        $region53: #{_lambda_.8} parent=51 // pred_check
          %p3794 = pneg %p139
        $region54: #{_lambda_.8} parent=51 // pred_check_branch
          %3796 = sbr.rel (%p3794) target = $region56
        $region55: #{_lambda_.8} parent=51 // pred_region
          %s3797 = sand.u32 %s124, 1
          %s3798 = scalar_lea.sflag [#allocation4], %s3797
          %s3799 = sand.u32 %s124, 1
          %s3800 = smul.addr %s3799, 12
          %s3801 = scalar_lea.vmem [#allocation8], %s3800
          %3802 = dma.done %s3798, 192
        $region56: #{_lambda_.8} parent=51 // pred_fallthru
          _
      $region52: #{_lambda_.8} parent=5 // pred_fallthru
        _
    $region6: #{_lambda_.8} parent=1 // loop_footer
      %s22 = sadd.s32 1, %s18
    $region7: #{_lambda_.8} parent=1 // loop_footer_branch
      %17 = sbr.rel target = $region3
    $region8: #{_lambda_.8} parent=1 // loop_exit
      _
    %3803 = vsyncpa [#allocation3], 1
    %s3804 = scalar_lea.sflag [#allocation3], 1
    %3805 = vsyncpa %s3804, 1
    %3806 = vsyncpa [#allocation6], 1
    %s3807 = scalar_lea.sflag [#allocation6], 1
    %3808 = vsyncpa %s3807, 1
    %3809 = vsyncpa [#allocation4], 1
    %s3810 = scalar_lea.sflag [#allocation4], 1
    %3811 = vsyncpa %s3810, 1

</llo_original>
